<compile_context>
chip_gen: v5e
topology: v5e:2x2
jax: 0.10.0
libtpu: 0.0.40
codegen_flags: <defaults>
</compile_context>

<pallas_src>
import numpy as np
import jax
import jax.numpy as jnp
from jax import lax
from jax.experimental import pallas as pl
from jax.experimental.pallas import tpu as pltpu

# ----------------------- config (module hyper-params) -----------------------
B = 2
H = W = 8
DIM = 32                  # dim
NUM_HEADS = 4             # num_heads
HEAD_DIM = DIM // NUM_HEADS
SCALE = HEAD_DIM ** -0.5  # qk_scale=None -> head_dim**-0.5
WINDOW = 4                # window_size
SHIFT = WINDOW // 2       # shift_size
DEPTH = 2                 # depth (block 0: shift=0, block 1: shift=WINDOW//2)
MLP_RATIO = 4.0
HIDDEN = int(DIM * MLP_RATIO)
EPS = 1e-5                # nn.LayerNorm default eps
N_TOK = WINDOW * WINDOW                 # tokens per window
NW = (H // WINDOW) * (W // WINDOW)      # windows per image
T_TOK = B * H * W                       # total tokens (128)
SHIFTS = tuple(0 if i % 2 == 0 else SHIFT for i in range(DEPTH))
NEG = -1e9                              # cross-window logits -> exp underflows to exactly 0
NVEC = 8                                # rows in the packed small-vector slab
WCOLS = 4 * DIM + HIDDEN                # 256 columns: [wqkv(96) | wproj(32) | w1(128)]


# ----------------------- reference-exact attention mask -----------------------
def _window_partition_np(x, ws):
    Bx, Hx, Wx, C = x.shape
    x = x.reshape(Bx, Hx // ws, ws, Wx // ws, ws, C)
    return x.transpose(0, 1, 3, 2, 4, 5).reshape(-1, ws, ws, C)


def calculate_attention_mask_np(Hx, Wx, window_size, shift_size):
    Hp = int(np.ceil(Hx / window_size)) * window_size
    Wp = int(np.ceil(Wx / window_size)) * window_size
    img_mask = np.zeros((1, Hp, Wp, 1), dtype=np.float32)
    h_slices = (slice(0, -window_size), slice(-window_size, -shift_size), slice(-shift_size, None))
    w_slices = (slice(0, -window_size), slice(-window_size, -shift_size), slice(-shift_size, None))
    cnt = 0
    for h in h_slices:
        for w in w_slices:
            img_mask[:, h, w, :] = cnt
            cnt += 1
    mw = _window_partition_np(img_mask, window_size).reshape(-1, window_size * window_size)
    attention_mask = mw[:, None, :] - mw[:, :, None]      # (nW, N, N)
    # NOTE: the PyTorch reference returns the RAW difference tensor (its masked_fill
    # result is discarded).  Reproduced exactly.
    return attention_mask.astype(np.float32)


# ----------------------- host-precomputed, token-order masks -----------------------
def _layout_index_np(shift):
    """idx[window_layout_row] = token-major row, for cyclic-roll(shift)+window_partition."""
    ws = WINDOW
    idx = np.empty((T_TOK,), dtype=np.int64)
    r_ = 0
    for b in range(B):
        for hi in range(H // ws):
            for wi in range(W // ws):
                for r in range(ws):
                    for c in range(ws):
                        i = (hi * ws + r + shift) % H
                        j = (wi * ws + c + shift) % W
                        idx[r_] = b * H * W + i * W + j
                        r_ += 1
    return idx


def build_token_order_masks_np(mask_raw):
    """(DEPTH, T, T) additive masks conjugated into token order: M'_d = P_d^T M_d P_d.
    -1e9 between tokens of different (rolled) windows; raw cnt-difference mask inside the
    shifted block's windows (exactly reproducing the reference's RAW mask semantics)."""
    masks = np.empty((DEPTH, T_TOK, T_TOK), np.float32)
    for d, s in enumerate(SHIFTS):
        m_win = np.full((T_TOK, T_TOK), NEG, np.float32)
        for w in range(B * NW):
            sl = slice(w * N_TOK, (w + 1) * N_TOK)
            m_win[sl, sl] = 0.0 if s == 0 else mask_raw[w % NW]
        idx = _layout_index_np(s)                    # window-layout row -> token index
        inv = np.empty(T_TOK, np.int64)
        inv[idx] = np.arange(T_TOK)                  # token index -> window-layout row
        masks[d] = m_win[np.ix_(inv, inv)]           # (P^T M P)[i,j] = M[inv[i], inv[j]]
    return masks


# ----------------------- packed parameter slabs -----------------------
def pack_params_np(params):
    """vecs (DEPTH,8,128) f32, wmat (DEPTH,32,256) f32 = [wqkv|wproj|w1], w2 (DEPTH,128,32) f32."""
    vecs = np.zeros((DEPTH, NVEC, 128), np.float32)
    wmat = np.zeros((DEPTH, DIM, WCOLS), np.float32)
    w2 = np.zeros((DEPTH, HIDDEN, DIM), np.float32)
    for d, p in enumerate(params):
        vecs[d, 0, :DIM] = np.asarray(p['ln1_g']).reshape(-1)
        vecs[d, 1, :DIM] = np.asarray(p['ln1_b']).reshape(-1)
        vecs[d, 2, :DIM] = np.asarray(p['ln2_g']).reshape(-1)
        vecs[d, 3, :DIM] = np.asarray(p['ln2_b']).reshape(-1)
        vecs[d, 4, :DIM] = np.asarray(p['bproj']).reshape(-1)
        vecs[d, 5, :DIM] = np.asarray(p['b2']).reshape(-1)
        vecs[d, 6, :3 * DIM] = np.asarray(p['bqkv']).reshape(-1)
        vecs[d, 7, :HIDDEN] = np.asarray(p['b1']).reshape(-1)
        wmat[d, :, :3 * DIM] = np.asarray(p['wqkv'])
        wmat[d, :, 3 * DIM:4 * DIM] = np.asarray(p['wproj'])
        wmat[d, :, 4 * DIM:] = np.asarray(p['w1'])
        w2[d] = np.asarray(p['w2'])
    return vecs, wmat, w2


# ----------------------- fused Pallas kernel -----------------------
def _layernorm(x, g, b):
    mean = jnp.mean(x, axis=-1, keepdims=True)
    var = jnp.mean(jnp.square(x - mean), axis=-1, keepdims=True)
    return (x - mean) * lax.rsqrt(var + EPS) * g + b


def _swin_block_core(x, mask_bf16, vec, wm, w2):
    """One swin block, entirely in token order (shift/window layout lives in mask_bf16)."""
    bf16 = jnp.bfloat16
    ln1_g, ln1_b = vec[0:1, :DIM], vec[1:2, :DIM]
    ln2_g, ln2_b = vec[2:3, :DIM], vec[3:4, :DIM]
    bproj, b2 = vec[4:5, :DIM], vec[5:6, :DIM]
    bqkv, b1 = vec[6:7, :3 * DIM], vec[7:8, :HIDDEN]

    # ---- W-MSA / SW-MSA ----
    xn = _layernorm(x, ln1_g, ln1_b)                                          # norm1 (f32)
    qkv = jnp.dot(xn.astype(bf16), wm[:, :3 * DIM].astype(bf16),
                  preferred_element_type=jnp.float32) + bqkv                  # (T, 3*DIM)
    attn = None
    for h in range(NUM_HEADS):                                                # unrolled (4 heads)
        q = (qkv[:, h * HEAD_DIM:(h + 1) * HEAD_DIM] * SCALE).astype(bf16)
        k = qkv[:, DIM + h * HEAD_DIM:DIM + (h + 1) * HEAD_DIM].astype(bf16)
        v = qkv[:, 2 * DIM + h * HEAD_DIM:2 * DIM + (h + 1) * HEAD_DIM].astype(bf16)
        s = lax.dot_general(q, k, (((1,), (1,)), ((), ())),
                            preferred_element_type=jnp.float32)               # (T, T) all windows
        s = s + mask_bf16.astype(jnp.float32)                                 # upcast at use (f32 add)
        s = s - jnp.max(s, axis=-1, keepdims=True)
        p = jnp.exp(s)
        p = p * pl.reciprocal(jnp.sum(p, axis=-1, keepdims=True), approx=True)  # EUP divide
        head = jnp.dot(p.astype(bf16), v, preferred_element_type=jnp.float32)   # (T, HEAD_DIM)
        wproj_h = wm[h * HEAD_DIM:(h + 1) * HEAD_DIM, 3 * DIM:4 * DIM].astype(bf16)
        contrib = jnp.dot(head.astype(bf16), wproj_h, preferred_element_type=jnp.float32)
        attn = contrib if attn is None else attn + contrib                    # heads accumulated thru proj
    x = x + attn + bproj                                                      # residual (drop_path=0)

    # ---- MLP ----
    xn2 = _layernorm(x, ln2_g, ln2_b)                                         # norm2 (f32)
    hid = jnp.dot(xn2.astype(bf16), wm[:, 4 * DIM:].astype(bf16),
                  preferred_element_type=jnp.float32) + b1                    # (T, HIDDEN) lane-dense
    hid = 0.5 * hid * (1.0 + lax.erf(hid * np.float32(1.0 / np.sqrt(2.0))))   # exact GELU (f32)
    y = jnp.dot(hid.astype(bf16), w2.astype(bf16), preferred_element_type=jnp.float32) + b2
    return x + y                                                              # residual


def encoder_block_kernel(x_ref, masks_ref, vecs_ref, wmat_ref, w2_ref, o_ref):
    x = x_ref[...]                                                            # (tb, DIM) f32, token-major
    for d in range(DEPTH):                                                    # unrolled (DEPTH=2)
        x = _swin_block_core(x, masks_ref[d], vecs_ref[d], wmat_ref[d], w2_ref[d])
    o_ref[...] = x.astype(o_ref.dtype)                                        # single (tb, DIM) store


# ----------------------- module forward -----------------------
def _num_parallel_blocks(batch):
    """Split over batch only on multi-TensorCore chips (v7x); one step is cheapest on v5e/v6e."""
    try:
        kind = jax.devices()[0].device_kind.lower()
    except Exception:
        return 1
    if "v7" in kind or "7x" in kind:
        return max(1, batch)
    return 1


def encoder_block_forward(x, H_, W_, params, mask_raw_np):
    Bx, L, C = x.shape
    T = Bx * L
    vecs_np, wmat_np, w2_np = pack_params_np(params)
    masks_np = build_token_order_masks_np(np.asarray(mask_raw_np))            # (DEPTH, T, T) f32

    nblk = _num_parallel_blocks(Bx)
    if T % nblk != 0 or (T // nblk) % 8 != 0:
        nblk = 1
    tb = T // nblk
    if nblk > 1:
        # windows never cross images, so each image's diagonal mask block is identical
        same = all(np.array_equal(masks_np[:, :tb, :tb],
                                  masks_np[:, b * tb:(b + 1) * tb, b * tb:(b + 1) * tb])
                   for b in range(1, nblk))
        if same:
            masks_np = masks_np[:, :tb, :tb]
        else:                                                                 # defensive fallback
            nblk, tb = 1, T

    masks = jnp.asarray(masks_np, dtype=jnp.bfloat16)                         # bf16 mask: half the DMA
    vecs = jnp.asarray(vecs_np)
    wmat = jnp.asarray(wmat_np)
    w2 = jnp.asarray(w2_np)
    xf = x.reshape(T, C)

    out = pl.pallas_call(
        encoder_block_kernel,
        out_shape=jax.ShapeDtypeStruct((T, C), x.dtype),
        grid=(nblk,),
        in_specs=[
            pl.BlockSpec((tb, C), lambda i: (i, 0)),                          # x
            pl.BlockSpec((DEPTH, tb, tb), lambda i: (0, 0, 0)),               # masks (bf16)
            pl.BlockSpec((DEPTH, NVEC, 128), lambda i: (0, 0, 0)),            # packed vectors
            pl.BlockSpec((DEPTH, DIM, WCOLS), lambda i: (0, 0, 0)),           # packed [wqkv|wproj|w1]
            pl.BlockSpec((DEPTH, HIDDEN, DIM), lambda i: (0, 0, 0)),          # w2
        ],
        out_specs=pl.BlockSpec((tb, C), lambda i: (i, 0)),
        compiler_params=pltpu.CompilerParams(dimension_semantics=("parallel",)),
    )(xf, masks, vecs, wmat, w2)
    # downsample is None -> (x, H, W)
    return out.reshape(Bx, L, C), H_, W_


# ----------------------- deterministic params -----------------------
def init_params(key):
    params = []
    for i in range(DEPTH):
        k = jax.random.fold_in(key, i)
        ks = jax.random.split(k, 6)
        params.append(dict(
            ln1_g=jnp.ones((1, DIM), jnp.float32),
            ln1_b=jnp.zeros((1, DIM), jnp.float32),
            wqkv=(jax.random.normal(ks[0], (DIM, 3 * DIM)) * 0.05).astype(jnp.float32),
            bqkv=(jax.random.normal(ks[1], (1, 3 * DIM)) * 0.02).astype(jnp.float32),
            wproj=(jax.random.normal(ks[2], (DIM, DIM)) * 0.05).astype(jnp.float32),
            bproj=(jax.random.normal(ks[3], (1, DIM)) * 0.02).astype(jnp.float32),
            ln2_g=jnp.ones((1, DIM), jnp.float32),
            ln2_b=jnp.zeros((1, DIM), jnp.float32),
            w1=(jax.random.normal(ks[4], (DIM, HIDDEN)) * 0.05).astype(jnp.float32),
            b1=jnp.zeros((1, HIDDEN), jnp.float32),
            w2=(jax.random.normal(ks[5], (HIDDEN, DIM)) * 0.05).astype(jnp.float32),
            b2=jnp.zeros((1, DIM), jnp.float32),
        ))
    return params


# ----------------------- pure-JAX reference (for sanity check) -----------------------
def window_partition(x, ws):
    Bx, Hx, Wx, C = x.shape
    x = x.reshape(Bx, Hx // ws, ws, Wx // ws, ws, C)
    return jnp.transpose(x, (0, 1, 3, 2, 4, 5)).reshape(-1, ws, ws, C)


def window_reverse(windows, ws, Hx, Wx):
    Bx = windows.shape[0] // ((Hx // ws) * (Wx // ws))
    x = windows.reshape(Bx, Hx // ws, Wx // ws, ws, ws, -1)
    return jnp.transpose(x, (0, 1, 3, 2, 4, 5)).reshape(Bx, Hx, Wx, -1)


def reference_forward(x, params, mask_raw):
    hp = jax.lax.Precision.HIGHEST

    def ln(v, g, b):
        m = jnp.mean(v, -1, keepdims=True)
        var = jnp.mean(jnp.square(v - m), -1, keepdims=True)
        return (v - m) / jnp.sqrt(var + EPS) * g + b

    for i, p in enumerate(params):
        shift = 0 if i % 2 == 0 else SHIFT
        shortcut = x
        xn = ln(x, p['ln1_g'][0], p['ln1_b'][0])
        xs = xn.reshape(B, H, W, DIM)
        if shift > 0:
            xs = jnp.roll(xs, (-shift, -shift), axis=(1, 2))
        xw = window_partition(xs, WINDOW).reshape(-1, N_TOK, DIM)
        qkv = jnp.einsum('wnc,cd->wnd', xw, p['wqkv'], precision=hp) + p['bqkv'][0]
        qkv = qkv.reshape(-1, N_TOK, 3, NUM_HEADS, HEAD_DIM).transpose(2, 0, 3, 1, 4)
        q, k, v = qkv[0] * SCALE, qkv[1], qkv[2]
        attn = jnp.einsum('whnd,whmd->whnm', q, k, precision=hp)
        if shift > 0:
            attn = attn + jnp.tile(mask_raw, (B, 1, 1))[:, None]
        attn = jax.nn.softmax(attn, axis=-1)
        out = jnp.einsum('whnm,whmd->whnd', attn, v, precision=hp)
        out = out.transpose(0, 2, 1, 3).reshape(-1, N_TOK, DIM)
        out = jnp.einsum('wnc,cd->wnd', out, p['wproj'], precision=hp) + p['bproj'][0]
        xs = window_reverse(out.reshape(-1, WINDOW, WINDOW, DIM), WINDOW, H, W)
        if shift > 0:
            xs = jnp.roll(xs, (shift, shift), axis=(1, 2))
        x = shortcut + xs.reshape(B, H * W, DIM)
        xn2 = ln(x, p['ln2_g'][0], p['ln2_b'][0])
        hdd = jnp.einsum('blc,ch->blh', xn2, p['w1'], precision=hp) + p['b1'][0]
        hdd = 0.5 * hdd * (1.0 + jax.lax.erf(hdd / np.sqrt(2.0)))
        y = jnp.einsum('blh,hc->blc', hdd, p['w2'], precision=hp) + p['b2'][0]
        x = x + y
    return x


# ----------------------- main -----------------------
if __name__ == "__main__":
    key = jax.random.PRNGKey(0)
    x = jax.random.normal(jax.random.fold_in(key, 100), (B, H * W, DIM), jnp.float32)
    params = init_params(jax.random.fold_in(key, 200))
    mask_raw_np = calculate_attention_mask_np(H, W, WINDOW, SHIFT)   # (NW, N, N), raw diffs

    out, Ho, Wo = encoder_block_forward(x, H, W, params, mask_raw_np)
    out = jax.block_until_ready(out)

    ref = reference_forward(x, params, jnp.asarray(mask_raw_np))
    np.testing.assert_allclose(np.asarray(out), np.asarray(ref), atol=2e-2, rtol=2e-2)
    assert out.shape == (B, H * W, DIM) and (Ho, Wo) == (H, W)
    print("KERNEL_OK")
</pallas_src>

<mosaic_0001>
module attributes {stable_mosaic.version = 11 : i64} {
  func.func @encoder_block_kernel(%arg0: i32, %arg1: memref<128x32xf32, #tpu.memory_space<vmem>>, %arg2: memref<2x128x128xbf16, #tpu.memory_space<vmem>>, %arg3: memref<2x8x128xf32, #tpu.memory_space<vmem>>, %arg4: memref<2x32x256xf32, #tpu.memory_space<vmem>>, %arg5: memref<2x128x32xf32, #tpu.memory_space<vmem>>, %arg6: memref<128x32xf32, #tpu.memory_space<vmem>>) attributes {dimension_semantics = [#tpu.dimension_semantics<parallel>], iteration_bounds = array<i64: 1>, scalar_prefetch = 0 : i64, scratch_operands = 0 : i64, tpu.core_type = #tpu.core_type<tc>, window_params = [{transform_indices = @transform_0, window_bounds = array<i64: 128, 32>}, {pipeline_mode = #tpu.pipeline_mode<synchronous>, transform_indices = @transform_1, window_bounds = array<i64: 2, 128, 128>}, {pipeline_mode = #tpu.pipeline_mode<synchronous>, transform_indices = @transform_2, window_bounds = array<i64: 2, 8, 128>}, {pipeline_mode = #tpu.pipeline_mode<synchronous>, transform_indices = @transform_3, window_bounds = array<i64: 2, 32, 256>}, {pipeline_mode = #tpu.pipeline_mode<synchronous>, transform_indices = @transform_4, window_bounds = array<i64: 2, 128, 32>}, {transform_indices = @transform_5, window_bounds = array<i64: 128, 32>}]} {
    %c0 = arith.constant 0 : index
    %c0_0 = arith.constant 0 : index
    %0 = vector.load %arg1[%c0, %c0_0] : memref<128x32xf32, #tpu.memory_space<vmem>>, vector<128x32xf32>
    %c0_1 = arith.constant 0 : index
    %c0_2 = arith.constant 0 : index
    %c0_3 = arith.constant 0 : index
    %1 = vector.load %arg2[%c0_1, %c0_2, %c0_3] : memref<2x128x128xbf16, #tpu.memory_space<vmem>>, vector<1x128x128xbf16>
    %2 = vector.shape_cast %1 : vector<1x128x128xbf16> to vector<128x128xbf16>
    %c0_4 = arith.constant 0 : index
    %c0_5 = arith.constant 0 : index
    %c0_6 = arith.constant 0 : index
    %3 = vector.load %arg3[%c0_4, %c0_5, %c0_6] : memref<2x8x128xf32, #tpu.memory_space<vmem>>, vector<1x8x128xf32>
    %4 = vector.shape_cast %3 : vector<1x8x128xf32> to vector<8x128xf32>
    %c0_7 = arith.constant 0 : index
    %c0_8 = arith.constant 0 : index
    %c0_9 = arith.constant 0 : index
    %5 = vector.load %arg4[%c0_7, %c0_8, %c0_9] : memref<2x32x256xf32, #tpu.memory_space<vmem>>, vector<1x32x256xf32>
    %6 = vector.shape_cast %5 : vector<1x32x256xf32> to vector<32x256xf32>
    %c0_10 = arith.constant 0 : index
    %c0_11 = arith.constant 0 : index
    %c0_12 = arith.constant 0 : index
    %7 = vector.load %arg5[%c0_10, %c0_11, %c0_12] : memref<2x128x32xf32, #tpu.memory_space<vmem>>, vector<1x128x32xf32>
    %8 = vector.shape_cast %7 : vector<1x128x32xf32> to vector<128x32xf32>
    %9 = vector.extract_strided_slice %4 {offsets = [0, 0], sizes = [1, 32], strides = [1, 1]} : vector<8x128xf32> to vector<1x32xf32>
    %10 = vector.extract_strided_slice %4 {offsets = [1, 0], sizes = [1, 32], strides = [1, 1]} : vector<8x128xf32> to vector<1x32xf32>
    %11 = vector.extract_strided_slice %4 {offsets = [2, 0], sizes = [1, 32], strides = [1, 1]} : vector<8x128xf32> to vector<1x32xf32>
    %12 = vector.extract_strided_slice %4 {offsets = [3, 0], sizes = [1, 32], strides = [1, 1]} : vector<8x128xf32> to vector<1x32xf32>
    %13 = vector.extract_strided_slice %4 {offsets = [4, 0], sizes = [1, 32], strides = [1, 1]} : vector<8x128xf32> to vector<1x32xf32>
    %14 = vector.extract_strided_slice %4 {offsets = [5, 0], sizes = [1, 32], strides = [1, 1]} : vector<8x128xf32> to vector<1x32xf32>
    %15 = vector.extract_strided_slice %4 {offsets = [6, 0], sizes = [1, 96], strides = [1, 1]} : vector<8x128xf32> to vector<1x96xf32>
    %16 = vector.extract_strided_slice %4 {offsets = [7, 0], sizes = [1, 128], strides = [1, 1]} : vector<8x128xf32> to vector<1x128xf32>
    %cst = arith.constant dense<0.000000e+00> : vector<128xf32>
    %17 = vector.multi_reduction <add>, %0, %cst [1] : vector<128x32xf32> to vector<128xf32>
    %18 = vector.shape_cast %17 : vector<128xf32> to vector<128x1xf32>
    %cst_13 = arith.constant 3.200000e+01 : f32
    %19 = vector.broadcast %cst_13 : f32 to vector<128x1xf32>
    %20 = arith.divf %18, %19 : vector<128x1xf32>
    %21 = vector.broadcast %20 : vector<128x1xf32> to vector<128x32xf32>
    %22 = arith.subf %0, %21 : vector<128x32xf32>
    %23 = arith.mulf %22, %22 : vector<128x32xf32>
    %cst_14 = arith.constant dense<0.000000e+00> : vector<128xf32>
    %24 = vector.multi_reduction <add>, %23, %cst_14 [1] : vector<128x32xf32> to vector<128xf32>
    %25 = vector.shape_cast %24 : vector<128xf32> to vector<128x1xf32>
    %cst_15 = arith.constant 3.200000e+01 : f32
    %26 = vector.broadcast %cst_15 : f32 to vector<128x1xf32>
    %27 = arith.divf %25, %26 : vector<128x1xf32>
    %28 = vector.broadcast %20 : vector<128x1xf32> to vector<128x32xf32>
    %29 = arith.subf %0, %28 : vector<128x32xf32>
    %cst_16 = arith.constant 9.99999974E-6 : f32
    %30 = vector.broadcast %cst_16 : f32 to vector<128x1xf32>
    %31 = arith.addf %27, %30 : vector<128x1xf32>
    %32 = math.rsqrt %31 : vector<128x1xf32>
    %33 = vector.broadcast %32 : vector<128x1xf32> to vector<128x32xf32>
    %34 = arith.mulf %29, %33 : vector<128x32xf32>
    %35 = vector.broadcast %9 : vector<1x32xf32> to vector<128x32xf32>
    %36 = arith.mulf %34, %35 : vector<128x32xf32>
    %37 = vector.broadcast %10 : vector<1x32xf32> to vector<128x32xf32>
    %38 = arith.addf %36, %37 : vector<128x32xf32>
    %39 = arith.truncf %38 : vector<128x32xf32> to vector<128x32xbf16>
    %40 = vector.extract_strided_slice %6 {offsets = [0, 0], sizes = [32, 96], strides = [1, 1]} : vector<32x256xf32> to vector<32x96xf32>
    %41 = arith.truncf %40 : vector<32x96xf32> to vector<32x96xbf16>
    %cst_17 = arith.constant dense<0.000000e+00> : vector<128x96xf32>
    %42 = tpu.matmul %39, %41, %cst_17 {dimension_numbers = #tpu.dot_dimension_numbers<[1], [0], [0], [1], [0, 0, 1, 1], [], []>} : vector<128x32xbf16>, vector<32x96xbf16>, vector<128x96xf32> -> vector<128x96xf32>
    %43 = vector.broadcast %15 : vector<1x96xf32> to vector<128x96xf32>
    %44 = arith.addf %42, %43 : vector<128x96xf32>
    %45 = vector.extract_strided_slice %44 {offsets = [0, 0], sizes = [128, 8], strides = [1, 1]} : vector<128x96xf32> to vector<128x8xf32>
    %cst_18 = arith.constant 0.353553385 : f32
    %46 = vector.broadcast %cst_18 : f32 to vector<128x8xf32>
    %47 = arith.mulf %45, %46 : vector<128x8xf32>
    %48 = arith.truncf %47 : vector<128x8xf32> to vector<128x8xbf16>
    %49 = vector.extract_strided_slice %44 {offsets = [0, 32], sizes = [128, 8], strides = [1, 1]} : vector<128x96xf32> to vector<128x8xf32>
    %50 = arith.truncf %49 : vector<128x8xf32> to vector<128x8xbf16>
    %51 = vector.extract_strided_slice %44 {offsets = [0, 64], sizes = [128, 8], strides = [1, 1]} : vector<128x96xf32> to vector<128x8xf32>
    %52 = arith.truncf %51 : vector<128x8xf32> to vector<128x8xbf16>
    %cst_19 = arith.constant dense<0.000000e+00> : vector<128x128xf32>
    %53 = tpu.matmul %48, %50, %cst_19 {dimension_numbers = #tpu.dot_dimension_numbers<[1], [1], [0], [0], [0, 0, 1, 0], [], []>} : vector<128x8xbf16>, vector<128x8xbf16>, vector<128x128xf32> -> vector<128x128xf32>
    %54 = arith.extf %2 : vector<128x128xbf16> to vector<128x128xf32>
    %55 = arith.addf %53, %54 : vector<128x128xf32>
    %cst_20 = arith.constant dense<0xFF800000> : vector<128xf32>
    %56 = vector.multi_reduction <maximumf>, %55, %cst_20 [1] : vector<128x128xf32> to vector<128xf32>
    %57 = vector.shape_cast %56 : vector<128xf32> to vector<128x1xf32>
    %58 = vector.broadcast %57 : vector<128x1xf32> to vector<128x128xf32>
    %59 = arith.subf %55, %58 : vector<128x128xf32>
    %60 = math.exp %59 : vector<128x128xf32>
    %cst_21 = arith.constant dense<0.000000e+00> : vector<128xf32>
    %61 = vector.multi_reduction <add>, %60, %cst_21 [1] : vector<128x128xf32> to vector<128xf32>
    %62 = vector.shape_cast %61 : vector<128xf32> to vector<128x1xf32>
    %63 = tpu.reciprocal %62 {approx = true} : vector<128x1xf32> -> vector<128x1xf32>
    %64 = vector.broadcast %63 : vector<128x1xf32> to vector<128x128xf32>
    %65 = arith.mulf %60, %64 : vector<128x128xf32>
    %66 = arith.truncf %65 : vector<128x128xf32> to vector<128x128xbf16>
    %cst_22 = arith.constant dense<0.000000e+00> : vector<128x8xf32>
    %67 = tpu.matmul %66, %52, %cst_22 {dimension_numbers = #tpu.dot_dimension_numbers<[1], [0], [0], [1], [0, 0, 1, 1], [], []>} : vector<128x128xbf16>, vector<128x8xbf16>, vector<128x8xf32> -> vector<128x8xf32>
    %68 = vector.extract_strided_slice %6 {offsets = [0, 96], sizes = [8, 32], strides = [1, 1]} : vector<32x256xf32> to vector<8x32xf32>
    %69 = arith.truncf %68 : vector<8x32xf32> to vector<8x32xbf16>
    %70 = arith.truncf %67 : vector<128x8xf32> to vector<128x8xbf16>
    %cst_23 = arith.constant dense<0.000000e+00> : vector<128x32xf32>
    %71 = tpu.matmul %70, %69, %cst_23 {dimension_numbers = #tpu.dot_dimension_numbers<[1], [0], [0], [1], [0, 0, 1, 1], [], []>} : vector<128x8xbf16>, vector<8x32xbf16>, vector<128x32xf32> -> vector<128x32xf32>
    %72 = vector.extract_strided_slice %44 {offsets = [0, 8], sizes = [128, 8], strides = [1, 1]} : vector<128x96xf32> to vector<128x8xf32>
    %cst_24 = arith.constant 0.353553385 : f32
    %73 = vector.broadcast %cst_24 : f32 to vector<128x8xf32>
    %74 = arith.mulf %72, %73 : vector<128x8xf32>
    %75 = arith.truncf %74 : vector<128x8xf32> to vector<128x8xbf16>
    %76 = vector.extract_strided_slice %44 {offsets = [0, 40], sizes = [128, 8], strides = [1, 1]} : vector<128x96xf32> to vector<128x8xf32>
    %77 = arith.truncf %76 : vector<128x8xf32> to vector<128x8xbf16>
    %78 = vector.extract_strided_slice %44 {offsets = [0, 72], sizes = [128, 8], strides = [1, 1]} : vector<128x96xf32> to vector<128x8xf32>
    %79 = arith.truncf %78 : vector<128x8xf32> to vector<128x8xbf16>
    %cst_25 = arith.constant dense<0.000000e+00> : vector<128x128xf32>
    %80 = tpu.matmul %75, %77, %cst_25 {dimension_numbers = #tpu.dot_dimension_numbers<[1], [1], [0], [0], [0, 0, 1, 0], [], []>} : vector<128x8xbf16>, vector<128x8xbf16>, vector<128x128xf32> -> vector<128x128xf32>
    %81 = arith.extf %2 : vector<128x128xbf16> to vector<128x128xf32>
    %82 = arith.addf %80, %81 : vector<128x128xf32>
    %cst_26 = arith.constant dense<0xFF800000> : vector<128xf32>
    %83 = vector.multi_reduction <maximumf>, %82, %cst_26 [1] : vector<128x128xf32> to vector<128xf32>
    %84 = vector.shape_cast %83 : vector<128xf32> to vector<128x1xf32>
    %85 = vector.broadcast %84 : vector<128x1xf32> to vector<128x128xf32>
    %86 = arith.subf %82, %85 : vector<128x128xf32>
    %87 = math.exp %86 : vector<128x128xf32>
    %cst_27 = arith.constant dense<0.000000e+00> : vector<128xf32>
    %88 = vector.multi_reduction <add>, %87, %cst_27 [1] : vector<128x128xf32> to vector<128xf32>
    %89 = vector.shape_cast %88 : vector<128xf32> to vector<128x1xf32>
    %90 = tpu.reciprocal %89 {approx = true} : vector<128x1xf32> -> vector<128x1xf32>
    %91 = vector.broadcast %90 : vector<128x1xf32> to vector<128x128xf32>
    %92 = arith.mulf %87, %91 : vector<128x128xf32>
    %93 = arith.truncf %92 : vector<128x128xf32> to vector<128x128xbf16>
    %cst_28 = arith.constant dense<0.000000e+00> : vector<128x8xf32>
    %94 = tpu.matmul %93, %79, %cst_28 {dimension_numbers = #tpu.dot_dimension_numbers<[1], [0], [0], [1], [0, 0, 1, 1], [], []>} : vector<128x128xbf16>, vector<128x8xbf16>, vector<128x8xf32> -> vector<128x8xf32>
    %95 = vector.extract_strided_slice %6 {offsets = [8, 96], sizes = [8, 32], strides = [1, 1]} : vector<32x256xf32> to vector<8x32xf32>
    %96 = arith.truncf %95 : vector<8x32xf32> to vector<8x32xbf16>
    %97 = arith.truncf %94 : vector<128x8xf32> to vector<128x8xbf16>
    %cst_29 = arith.constant dense<0.000000e+00> : vector<128x32xf32>
    %98 = tpu.matmul %97, %96, %cst_29 {dimension_numbers = #tpu.dot_dimension_numbers<[1], [0], [0], [1], [0, 0, 1, 1], [], []>} : vector<128x8xbf16>, vector<8x32xbf16>, vector<128x32xf32> -> vector<128x32xf32>
    %99 = arith.addf %71, %98 : vector<128x32xf32>
    %100 = vector.extract_strided_slice %44 {offsets = [0, 16], sizes = [128, 8], strides = [1, 1]} : vector<128x96xf32> to vector<128x8xf32>
    %cst_30 = arith.constant 0.353553385 : f32
    %101 = vector.broadcast %cst_30 : f32 to vector<128x8xf32>
    %102 = arith.mulf %100, %101 : vector<128x8xf32>
    %103 = arith.truncf %102 : vector<128x8xf32> to vector<128x8xbf16>
    %104 = vector.extract_strided_slice %44 {offsets = [0, 48], sizes = [128, 8], strides = [1, 1]} : vector<128x96xf32> to vector<128x8xf32>
    %105 = arith.truncf %104 : vector<128x8xf32> to vector<128x8xbf16>
    %106 = vector.extract_strided_slice %44 {offsets = [0, 80], sizes = [128, 8], strides = [1, 1]} : vector<128x96xf32> to vector<128x8xf32>
    %107 = arith.truncf %106 : vector<128x8xf32> to vector<128x8xbf16>
    %cst_31 = arith.constant dense<0.000000e+00> : vector<128x128xf32>
    %108 = tpu.matmul %103, %105, %cst_31 {dimension_numbers = #tpu.dot_dimension_numbers<[1], [1], [0], [0], [0, 0, 1, 0], [], []>} : vector<128x8xbf16>, vector<128x8xbf16>, vector<128x128xf32> -> vector<128x128xf32>
    %109 = arith.extf %2 : vector<128x128xbf16> to vector<128x128xf32>
    %110 = arith.addf %108, %109 : vector<128x128xf32>
    %cst_32 = arith.constant dense<0xFF800000> : vector<128xf32>
    %111 = vector.multi_reduction <maximumf>, %110, %cst_32 [1] : vector<128x128xf32> to vector<128xf32>
    %112 = vector.shape_cast %111 : vector<128xf32> to vector<128x1xf32>
    %113 = vector.broadcast %112 : vector<128x1xf32> to vector<128x128xf32>
    %114 = arith.subf %110, %113 : vector<128x128xf32>
    %115 = math.exp %114 : vector<128x128xf32>
    %cst_33 = arith.constant dense<0.000000e+00> : vector<128xf32>
    %116 = vector.multi_reduction <add>, %115, %cst_33 [1] : vector<128x128xf32> to vector<128xf32>
    %117 = vector.shape_cast %116 : vector<128xf32> to vector<128x1xf32>
    %118 = tpu.reciprocal %117 {approx = true} : vector<128x1xf32> -> vector<128x1xf32>
    %119 = vector.broadcast %118 : vector<128x1xf32> to vector<128x128xf32>
    %120 = arith.mulf %115, %119 : vector<128x128xf32>
    %121 = arith.truncf %120 : vector<128x128xf32> to vector<128x128xbf16>
    %cst_34 = arith.constant dense<0.000000e+00> : vector<128x8xf32>
    %122 = tpu.matmul %121, %107, %cst_34 {dimension_numbers = #tpu.dot_dimension_numbers<[1], [0], [0], [1], [0, 0, 1, 1], [], []>} : vector<128x128xbf16>, vector<128x8xbf16>, vector<128x8xf32> -> vector<128x8xf32>
    %123 = vector.extract_strided_slice %6 {offsets = [16, 96], sizes = [8, 32], strides = [1, 1]} : vector<32x256xf32> to vector<8x32xf32>
    %124 = arith.truncf %123 : vector<8x32xf32> to vector<8x32xbf16>
    %125 = arith.truncf %122 : vector<128x8xf32> to vector<128x8xbf16>
    %cst_35 = arith.constant dense<0.000000e+00> : vector<128x32xf32>
    %126 = tpu.matmul %125, %124, %cst_35 {dimension_numbers = #tpu.dot_dimension_numbers<[1], [0], [0], [1], [0, 0, 1, 1], [], []>} : vector<128x8xbf16>, vector<8x32xbf16>, vector<128x32xf32> -> vector<128x32xf32>
    %127 = arith.addf %99, %126 : vector<128x32xf32>
    %128 = vector.extract_strided_slice %44 {offsets = [0, 24], sizes = [128, 8], strides = [1, 1]} : vector<128x96xf32> to vector<128x8xf32>
    %cst_36 = arith.constant 0.353553385 : f32
    %129 = vector.broadcast %cst_36 : f32 to vector<128x8xf32>
    %130 = arith.mulf %128, %129 : vector<128x8xf32>
    %131 = arith.truncf %130 : vector<128x8xf32> to vector<128x8xbf16>
    %132 = vector.extract_strided_slice %44 {offsets = [0, 56], sizes = [128, 8], strides = [1, 1]} : vector<128x96xf32> to vector<128x8xf32>
    %133 = arith.truncf %132 : vector<128x8xf32> to vector<128x8xbf16>
    %134 = vector.extract_strided_slice %44 {offsets = [0, 88], sizes = [128, 8], strides = [1, 1]} : vector<128x96xf32> to vector<128x8xf32>
    %135 = arith.truncf %134 : vector<128x8xf32> to vector<128x8xbf16>
    %cst_37 = arith.constant dense<0.000000e+00> : vector<128x128xf32>
    %136 = tpu.matmul %131, %133, %cst_37 {dimension_numbers = #tpu.dot_dimension_numbers<[1], [1], [0], [0], [0, 0, 1, 0], [], []>} : vector<128x8xbf16>, vector<128x8xbf16>, vector<128x128xf32> -> vector<128x128xf32>
    %137 = arith.extf %2 : vector<128x128xbf16> to vector<128x128xf32>
    %138 = arith.addf %136, %137 : vector<128x128xf32>
    %cst_38 = arith.constant dense<0xFF800000> : vector<128xf32>
    %139 = vector.multi_reduction <maximumf>, %138, %cst_38 [1] : vector<128x128xf32> to vector<128xf32>
    %140 = vector.shape_cast %139 : vector<128xf32> to vector<128x1xf32>
    %141 = vector.broadcast %140 : vector<128x1xf32> to vector<128x128xf32>
    %142 = arith.subf %138, %141 : vector<128x128xf32>
    %143 = math.exp %142 : vector<128x128xf32>
    %cst_39 = arith.constant dense<0.000000e+00> : vector<128xf32>
    %144 = vector.multi_reduction <add>, %143, %cst_39 [1] : vector<128x128xf32> to vector<128xf32>
    %145 = vector.shape_cast %144 : vector<128xf32> to vector<128x1xf32>
    %146 = tpu.reciprocal %145 {approx = true} : vector<128x1xf32> -> vector<128x1xf32>
    %147 = vector.broadcast %146 : vector<128x1xf32> to vector<128x128xf32>
    %148 = arith.mulf %143, %147 : vector<128x128xf32>
    %149 = arith.truncf %148 : vector<128x128xf32> to vector<128x128xbf16>
    %cst_40 = arith.constant dense<0.000000e+00> : vector<128x8xf32>
    %150 = tpu.matmul %149, %135, %cst_40 {dimension_numbers = #tpu.dot_dimension_numbers<[1], [0], [0], [1], [0, 0, 1, 1], [], []>} : vector<128x128xbf16>, vector<128x8xbf16>, vector<128x8xf32> -> vector<128x8xf32>
    %151 = vector.extract_strided_slice %6 {offsets = [24, 96], sizes = [8, 32], strides = [1, 1]} : vector<32x256xf32> to vector<8x32xf32>
    %152 = arith.truncf %151 : vector<8x32xf32> to vector<8x32xbf16>
    %153 = arith.truncf %150 : vector<128x8xf32> to vector<128x8xbf16>
    %cst_41 = arith.constant dense<0.000000e+00> : vector<128x32xf32>
    %154 = tpu.matmul %153, %152, %cst_41 {dimension_numbers = #tpu.dot_dimension_numbers<[1], [0], [0], [1], [0, 0, 1, 1], [], []>} : vector<128x8xbf16>, vector<8x32xbf16>, vector<128x32xf32> -> vector<128x32xf32>
    %155 = arith.addf %127, %154 : vector<128x32xf32>
    %156 = arith.addf %0, %155 : vector<128x32xf32>
    %157 = vector.broadcast %13 : vector<1x32xf32> to vector<128x32xf32>
    %158 = arith.addf %156, %157 : vector<128x32xf32>
    %cst_42 = arith.constant dense<0.000000e+00> : vector<128xf32>
    %159 = vector.multi_reduction <add>, %158, %cst_42 [1] : vector<128x32xf32> to vector<128xf32>
    %160 = vector.shape_cast %159 : vector<128xf32> to vector<128x1xf32>
    %cst_43 = arith.constant 3.200000e+01 : f32
    %161 = vector.broadcast %cst_43 : f32 to vector<128x1xf32>
    %162 = arith.divf %160, %161 : vector<128x1xf32>
    %163 = vector.broadcast %162 : vector<128x1xf32> to vector<128x32xf32>
    %164 = arith.subf %158, %163 : vector<128x32xf32>
    %165 = arith.mulf %164, %164 : vector<128x32xf32>
    %cst_44 = arith.constant dense<0.000000e+00> : vector<128xf32>
    %166 = vector.multi_reduction <add>, %165, %cst_44 [1] : vector<128x32xf32> to vector<128xf32>
    %167 = vector.shape_cast %166 : vector<128xf32> to vector<128x1xf32>
    %cst_45 = arith.constant 3.200000e+01 : f32
    %168 = vector.broadcast %cst_45 : f32 to vector<128x1xf32>
    %169 = arith.divf %167, %168 : vector<128x1xf32>
    %170 = vector.broadcast %162 : vector<128x1xf32> to vector<128x32xf32>
    %171 = arith.subf %158, %170 : vector<128x32xf32>
    %cst_46 = arith.constant 9.99999974E-6 : f32
    %172 = vector.broadcast %cst_46 : f32 to vector<128x1xf32>
    %173 = arith.addf %169, %172 : vector<128x1xf32>
    %174 = math.rsqrt %173 : vector<128x1xf32>
    %175 = vector.broadcast %174 : vector<128x1xf32> to vector<128x32xf32>
    %176 = arith.mulf %171, %175 : vector<128x32xf32>
    %177 = vector.broadcast %11 : vector<1x32xf32> to vector<128x32xf32>
    %178 = arith.mulf %176, %177 : vector<128x32xf32>
    %179 = vector.broadcast %12 : vector<1x32xf32> to vector<128x32xf32>
    %180 = arith.addf %178, %179 : vector<128x32xf32>
    %181 = arith.truncf %180 : vector<128x32xf32> to vector<128x32xbf16>
    %182 = vector.extract_strided_slice %6 {offsets = [0, 128], sizes = [32, 128], strides = [1, 1]} : vector<32x256xf32> to vector<32x128xf32>
    %183 = arith.truncf %182 : vector<32x128xf32> to vector<32x128xbf16>
    %cst_47 = arith.constant dense<0.000000e+00> : vector<128x128xf32>
    %184 = tpu.matmul %181, %183, %cst_47 {dimension_numbers = #tpu.dot_dimension_numbers<[1], [0], [0], [1], [0, 0, 1, 1], [], []>} : vector<128x32xbf16>, vector<32x128xbf16>, vector<128x128xf32> -> vector<128x128xf32>
    %185 = vector.broadcast %16 : vector<1x128xf32> to vector<128x128xf32>
    %186 = arith.addf %184, %185 : vector<128x128xf32>
    %cst_48 = arith.constant 5.000000e-01 : f32
    %187 = vector.broadcast %cst_48 : f32 to vector<128x128xf32>
    %188 = arith.mulf %187, %186 : vector<128x128xf32>
    %cst_49 = arith.constant 0.707106769 : f32
    %189 = vector.broadcast %cst_49 : f32 to vector<128x128xf32>
    %190 = arith.mulf %186, %189 : vector<128x128xf32>
    %191 = math.erf %190 : vector<128x128xf32>
    %cst_50 = arith.constant 1.000000e+00 : f32
    %192 = vector.broadcast %cst_50 : f32 to vector<128x128xf32>
    %193 = arith.addf %192, %191 : vector<128x128xf32>
    %194 = arith.mulf %188, %193 : vector<128x128xf32>
    %195 = arith.truncf %194 : vector<128x128xf32> to vector<128x128xbf16>
    %196 = arith.truncf %8 : vector<128x32xf32> to vector<128x32xbf16>
    %cst_51 = arith.constant dense<0.000000e+00> : vector<128x32xf32>
    %197 = tpu.matmul %195, %196, %cst_51 {dimension_numbers = #tpu.dot_dimension_numbers<[1], [0], [0], [1], [0, 0, 1, 1], [], []>} : vector<128x128xbf16>, vector<128x32xbf16>, vector<128x32xf32> -> vector<128x32xf32>
    %198 = vector.broadcast %14 : vector<1x32xf32> to vector<128x32xf32>
    %199 = arith.addf %197, %198 : vector<128x32xf32>
    %200 = arith.addf %158, %199 : vector<128x32xf32>
    %c1 = arith.constant 1 : index
    %c0_52 = arith.constant 0 : index
    %c0_53 = arith.constant 0 : index
    %201 = vector.load %arg2[%c1, %c0_52, %c0_53] : memref<2x128x128xbf16, #tpu.memory_space<vmem>>, vector<1x128x128xbf16>
    %202 = vector.shape_cast %201 : vector<1x128x128xbf16> to vector<128x128xbf16>
    %c1_54 = arith.constant 1 : index
    %c0_55 = arith.constant 0 : index
    %c0_56 = arith.constant 0 : index
    %203 = vector.load %arg3[%c1_54, %c0_55, %c0_56] : memref<2x8x128xf32, #tpu.memory_space<vmem>>, vector<1x8x128xf32>
    %204 = vector.shape_cast %203 : vector<1x8x128xf32> to vector<8x128xf32>
    %c1_57 = arith.constant 1 : index
    %c0_58 = arith.constant 0 : index
    %c0_59 = arith.constant 0 : index
    %205 = vector.load %arg4[%c1_57, %c0_58, %c0_59] : memref<2x32x256xf32, #tpu.memory_space<vmem>>, vector<1x32x256xf32>
    %206 = vector.shape_cast %205 : vector<1x32x256xf32> to vector<32x256xf32>
    %c1_60 = arith.constant 1 : index
    %c0_61 = arith.constant 0 : index
    %c0_62 = arith.constant 0 : index
    %207 = vector.load %arg5[%c1_60, %c0_61, %c0_62] : memref<2x128x32xf32, #tpu.memory_space<vmem>>, vector<1x128x32xf32>
    %208 = vector.shape_cast %207 : vector<1x128x32xf32> to vector<128x32xf32>
    %209 = vector.extract_strided_slice %204 {offsets = [0, 0], sizes = [1, 32], strides = [1, 1]} : vector<8x128xf32> to vector<1x32xf32>
    %210 = vector.extract_strided_slice %204 {offsets = [1, 0], sizes = [1, 32], strides = [1, 1]} : vector<8x128xf32> to vector<1x32xf32>
    %211 = vector.extract_strided_slice %204 {offsets = [2, 0], sizes = [1, 32], strides = [1, 1]} : vector<8x128xf32> to vector<1x32xf32>
    %212 = vector.extract_strided_slice %204 {offsets = [3, 0], sizes = [1, 32], strides = [1, 1]} : vector<8x128xf32> to vector<1x32xf32>
    %213 = vector.extract_strided_slice %204 {offsets = [4, 0], sizes = [1, 32], strides = [1, 1]} : vector<8x128xf32> to vector<1x32xf32>
    %214 = vector.extract_strided_slice %204 {offsets = [5, 0], sizes = [1, 32], strides = [1, 1]} : vector<8x128xf32> to vector<1x32xf32>
    %215 = vector.extract_strided_slice %204 {offsets = [6, 0], sizes = [1, 96], strides = [1, 1]} : vector<8x128xf32> to vector<1x96xf32>
    %216 = vector.extract_strided_slice %204 {offsets = [7, 0], sizes = [1, 128], strides = [1, 1]} : vector<8x128xf32> to vector<1x128xf32>
    %cst_63 = arith.constant dense<0.000000e+00> : vector<128xf32>
    %217 = vector.multi_reduction <add>, %200, %cst_63 [1] : vector<128x32xf32> to vector<128xf32>
    %218 = vector.shape_cast %217 : vector<128xf32> to vector<128x1xf32>
    %cst_64 = arith.constant 3.200000e+01 : f32
    %219 = vector.broadcast %cst_64 : f32 to vector<128x1xf32>
    %220 = arith.divf %218, %219 : vector<128x1xf32>
    %221 = vector.broadcast %220 : vector<128x1xf32> to vector<128x32xf32>
    %222 = arith.subf %200, %221 : vector<128x32xf32>
    %223 = arith.mulf %222, %222 : vector<128x32xf32>
    %cst_65 = arith.constant dense<0.000000e+00> : vector<128xf32>
    %224 = vector.multi_reduction <add>, %223, %cst_65 [1] : vector<128x32xf32> to vector<128xf32>
    %225 = vector.shape_cast %224 : vector<128xf32> to vector<128x1xf32>
    %cst_66 = arith.constant 3.200000e+01 : f32
    %226 = vector.broadcast %cst_66 : f32 to vector<128x1xf32>
    %227 = arith.divf %225, %226 : vector<128x1xf32>
    %228 = vector.broadcast %220 : vector<128x1xf32> to vector<128x32xf32>
    %229 = arith.subf %200, %228 : vector<128x32xf32>
    %cst_67 = arith.constant 9.99999974E-6 : f32
    %230 = vector.broadcast %cst_67 : f32 to vector<128x1xf32>
    %231 = arith.addf %227, %230 : vector<128x1xf32>
    %232 = math.rsqrt %231 : vector<128x1xf32>
    %233 = vector.broadcast %232 : vector<128x1xf32> to vector<128x32xf32>
    %234 = arith.mulf %229, %233 : vector<128x32xf32>
    %235 = vector.broadcast %209 : vector<1x32xf32> to vector<128x32xf32>
    %236 = arith.mulf %234, %235 : vector<128x32xf32>
    %237 = vector.broadcast %210 : vector<1x32xf32> to vector<128x32xf32>
    %238 = arith.addf %236, %237 : vector<128x32xf32>
    %239 = arith.truncf %238 : vector<128x32xf32> to vector<128x32xbf16>
    %240 = vector.extract_strided_slice %206 {offsets = [0, 0], sizes = [32, 96], strides = [1, 1]} : vector<32x256xf32> to vector<32x96xf32>
    %241 = arith.truncf %240 : vector<32x96xf32> to vector<32x96xbf16>
    %cst_68 = arith.constant dense<0.000000e+00> : vector<128x96xf32>
    %242 = tpu.matmul %239, %241, %cst_68 {dimension_numbers = #tpu.dot_dimension_numbers<[1], [0], [0], [1], [0, 0, 1, 1], [], []>} : vector<128x32xbf16>, vector<32x96xbf16>, vector<128x96xf32> -> vector<128x96xf32>
    %243 = vector.broadcast %215 : vector<1x96xf32> to vector<128x96xf32>
    %244 = arith.addf %242, %243 : vector<128x96xf32>
    %245 = vector.extract_strided_slice %244 {offsets = [0, 0], sizes = [128, 8], strides = [1, 1]} : vector<128x96xf32> to vector<128x8xf32>
    %cst_69 = arith.constant 0.353553385 : f32
    %246 = vector.broadcast %cst_69 : f32 to vector<128x8xf32>
    %247 = arith.mulf %245, %246 : vector<128x8xf32>
    %248 = arith.truncf %247 : vector<128x8xf32> to vector<128x8xbf16>
    %249 = vector.extract_strided_slice %244 {offsets = [0, 32], sizes = [128, 8], strides = [1, 1]} : vector<128x96xf32> to vector<128x8xf32>
    %250 = arith.truncf %249 : vector<128x8xf32> to vector<128x8xbf16>
    %251 = vector.extract_strided_slice %244 {offsets = [0, 64], sizes = [128, 8], strides = [1, 1]} : vector<128x96xf32> to vector<128x8xf32>
    %252 = arith.truncf %251 : vector<128x8xf32> to vector<128x8xbf16>
    %cst_70 = arith.constant dense<0.000000e+00> : vector<128x128xf32>
    %253 = tpu.matmul %248, %250, %cst_70 {dimension_numbers = #tpu.dot_dimension_numbers<[1], [1], [0], [0], [0, 0, 1, 0], [], []>} : vector<128x8xbf16>, vector<128x8xbf16>, vector<128x128xf32> -> vector<128x128xf32>
    %254 = arith.extf %202 : vector<128x128xbf16> to vector<128x128xf32>
    %255 = arith.addf %253, %254 : vector<128x128xf32>
    %cst_71 = arith.constant dense<0xFF800000> : vector<128xf32>
    %256 = vector.multi_reduction <maximumf>, %255, %cst_71 [1] : vector<128x128xf32> to vector<128xf32>
    %257 = vector.shape_cast %256 : vector<128xf32> to vector<128x1xf32>
    %258 = vector.broadcast %257 : vector<128x1xf32> to vector<128x128xf32>
    %259 = arith.subf %255, %258 : vector<128x128xf32>
    %260 = math.exp %259 : vector<128x128xf32>
    %cst_72 = arith.constant dense<0.000000e+00> : vector<128xf32>
    %261 = vector.multi_reduction <add>, %260, %cst_72 [1] : vector<128x128xf32> to vector<128xf32>
    %262 = vector.shape_cast %261 : vector<128xf32> to vector<128x1xf32>
    %263 = tpu.reciprocal %262 {approx = true} : vector<128x1xf32> -> vector<128x1xf32>
    %264 = vector.broadcast %263 : vector<128x1xf32> to vector<128x128xf32>
    %265 = arith.mulf %260, %264 : vector<128x128xf32>
    %266 = arith.truncf %265 : vector<128x128xf32> to vector<128x128xbf16>
    %cst_73 = arith.constant dense<0.000000e+00> : vector<128x8xf32>
    %267 = tpu.matmul %266, %252, %cst_73 {dimension_numbers = #tpu.dot_dimension_numbers<[1], [0], [0], [1], [0, 0, 1, 1], [], []>} : vector<128x128xbf16>, vector<128x8xbf16>, vector<128x8xf32> -> vector<128x8xf32>
    %268 = vector.extract_strided_slice %206 {offsets = [0, 96], sizes = [8, 32], strides = [1, 1]} : vector<32x256xf32> to vector<8x32xf32>
    %269 = arith.truncf %268 : vector<8x32xf32> to vector<8x32xbf16>
    %270 = arith.truncf %267 : vector<128x8xf32> to vector<128x8xbf16>
    %cst_74 = arith.constant dense<0.000000e+00> : vector<128x32xf32>
    %271 = tpu.matmul %270, %269, %cst_74 {dimension_numbers = #tpu.dot_dimension_numbers<[1], [0], [0], [1], [0, 0, 1, 1], [], []>} : vector<128x8xbf16>, vector<8x32xbf16>, vector<128x32xf32> -> vector<128x32xf32>
    %272 = vector.extract_strided_slice %244 {offsets = [0, 8], sizes = [128, 8], strides = [1, 1]} : vector<128x96xf32> to vector<128x8xf32>
    %cst_75 = arith.constant 0.353553385 : f32
    %273 = vector.broadcast %cst_75 : f32 to vector<128x8xf32>
    %274 = arith.mulf %272, %273 : vector<128x8xf32>
    %275 = arith.truncf %274 : vector<128x8xf32> to vector<128x8xbf16>
    %276 = vector.extract_strided_slice %244 {offsets = [0, 40], sizes = [128, 8], strides = [1, 1]} : vector<128x96xf32> to vector<128x8xf32>
    %277 = arith.truncf %276 : vector<128x8xf32> to vector<128x8xbf16>
    %278 = vector.extract_strided_slice %244 {offsets = [0, 72], sizes = [128, 8], strides = [1, 1]} : vector<128x96xf32> to vector<128x8xf32>
    %279 = arith.truncf %278 : vector<128x8xf32> to vector<128x8xbf16>
    %cst_76 = arith.constant dense<0.000000e+00> : vector<128x128xf32>
    %280 = tpu.matmul %275, %277, %cst_76 {dimension_numbers = #tpu.dot_dimension_numbers<[1], [1], [0], [0], [0, 0, 1, 0], [], []>} : vector<128x8xbf16>, vector<128x8xbf16>, vector<128x128xf32> -> vector<128x128xf32>
    %281 = arith.extf %202 : vector<128x128xbf16> to vector<128x128xf32>
    %282 = arith.addf %280, %281 : vector<128x128xf32>
    %cst_77 = arith.constant dense<0xFF800000> : vector<128xf32>
    %283 = vector.multi_reduction <maximumf>, %282, %cst_77 [1] : vector<128x128xf32> to vector<128xf32>
    %284 = vector.shape_cast %283 : vector<128xf32> to vector<128x1xf32>
    %285 = vector.broadcast %284 : vector<128x1xf32> to vector<128x128xf32>
    %286 = arith.subf %282, %285 : vector<128x128xf32>
    %287 = math.exp %286 : vector<128x128xf32>
    %cst_78 = arith.constant dense<0.000000e+00> : vector<128xf32>
    %288 = vector.multi_reduction <add>, %287, %cst_78 [1] : vector<128x128xf32> to vector<128xf32>
    %289 = vector.shape_cast %288 : vector<128xf32> to vector<128x1xf32>
    %290 = tpu.reciprocal %289 {approx = true} : vector<128x1xf32> -> vector<128x1xf32>
    %291 = vector.broadcast %290 : vector<128x1xf32> to vector<128x128xf32>
    %292 = arith.mulf %287, %291 : vector<128x128xf32>
    %293 = arith.truncf %292 : vector<128x128xf32> to vector<128x128xbf16>
    %cst_79 = arith.constant dense<0.000000e+00> : vector<128x8xf32>
    %294 = tpu.matmul %293, %279, %cst_79 {dimension_numbers = #tpu.dot_dimension_numbers<[1], [0], [0], [1], [0, 0, 1, 1], [], []>} : vector<128x128xbf16>, vector<128x8xbf16>, vector<128x8xf32> -> vector<128x8xf32>
    %295 = vector.extract_strided_slice %206 {offsets = [8, 96], sizes = [8, 32], strides = [1, 1]} : vector<32x256xf32> to vector<8x32xf32>
    %296 = arith.truncf %295 : vector<8x32xf32> to vector<8x32xbf16>
    %297 = arith.truncf %294 : vector<128x8xf32> to vector<128x8xbf16>
    %cst_80 = arith.constant dense<0.000000e+00> : vector<128x32xf32>
    %298 = tpu.matmul %297, %296, %cst_80 {dimension_numbers = #tpu.dot_dimension_numbers<[1], [0], [0], [1], [0, 0, 1, 1], [], []>} : vector<128x8xbf16>, vector<8x32xbf16>, vector<128x32xf32> -> vector<128x32xf32>
    %299 = arith.addf %271, %298 : vector<128x32xf32>
    %300 = vector.extract_strided_slice %244 {offsets = [0, 16], sizes = [128, 8], strides = [1, 1]} : vector<128x96xf32> to vector<128x8xf32>
    %cst_81 = arith.constant 0.353553385 : f32
    %301 = vector.broadcast %cst_81 : f32 to vector<128x8xf32>
    %302 = arith.mulf %300, %301 : vector<128x8xf32>
    %303 = arith.truncf %302 : vector<128x8xf32> to vector<128x8xbf16>
    %304 = vector.extract_strided_slice %244 {offsets = [0, 48], sizes = [128, 8], strides = [1, 1]} : vector<128x96xf32> to vector<128x8xf32>
    %305 = arith.truncf %304 : vector<128x8xf32> to vector<128x8xbf16>
    %306 = vector.extract_strided_slice %244 {offsets = [0, 80], sizes = [128, 8], strides = [1, 1]} : vector<128x96xf32> to vector<128x8xf32>
    %307 = arith.truncf %306 : vector<128x8xf32> to vector<128x8xbf16>
    %cst_82 = arith.constant dense<0.000000e+00> : vector<128x128xf32>
    %308 = tpu.matmul %303, %305, %cst_82 {dimension_numbers = #tpu.dot_dimension_numbers<[1], [1], [0], [0], [0, 0, 1, 0], [], []>} : vector<128x8xbf16>, vector<128x8xbf16>, vector<128x128xf32> -> vector<128x128xf32>
    %309 = arith.extf %202 : vector<128x128xbf16> to vector<128x128xf32>
    %310 = arith.addf %308, %309 : vector<128x128xf32>
    %cst_83 = arith.constant dense<0xFF800000> : vector<128xf32>
    %311 = vector.multi_reduction <maximumf>, %310, %cst_83 [1] : vector<128x128xf32> to vector<128xf32>
    %312 = vector.shape_cast %311 : vector<128xf32> to vector<128x1xf32>
    %313 = vector.broadcast %312 : vector<128x1xf32> to vector<128x128xf32>
    %314 = arith.subf %310, %313 : vector<128x128xf32>
    %315 = math.exp %314 : vector<128x128xf32>
    %cst_84 = arith.constant dense<0.000000e+00> : vector<128xf32>
    %316 = vector.multi_reduction <add>, %315, %cst_84 [1] : vector<128x128xf32> to vector<128xf32>
    %317 = vector.shape_cast %316 : vector<128xf32> to vector<128x1xf32>
    %318 = tpu.reciprocal %317 {approx = true} : vector<128x1xf32> -> vector<128x1xf32>
    %319 = vector.broadcast %318 : vector<128x1xf32> to vector<128x128xf32>
    %320 = arith.mulf %315, %319 : vector<128x128xf32>
    %321 = arith.truncf %320 : vector<128x128xf32> to vector<128x128xbf16>
    %cst_85 = arith.constant dense<0.000000e+00> : vector<128x8xf32>
    %322 = tpu.matmul %321, %307, %cst_85 {dimension_numbers = #tpu.dot_dimension_numbers<[1], [0], [0], [1], [0, 0, 1, 1], [], []>} : vector<128x128xbf16>, vector<128x8xbf16>, vector<128x8xf32> -> vector<128x8xf32>
    %323 = vector.extract_strided_slice %206 {offsets = [16, 96], sizes = [8, 32], strides = [1, 1]} : vector<32x256xf32> to vector<8x32xf32>
    %324 = arith.truncf %323 : vector<8x32xf32> to vector<8x32xbf16>
    %325 = arith.truncf %322 : vector<128x8xf32> to vector<128x8xbf16>
    %cst_86 = arith.constant dense<0.000000e+00> : vector<128x32xf32>
    %326 = tpu.matmul %325, %324, %cst_86 {dimension_numbers = #tpu.dot_dimension_numbers<[1], [0], [0], [1], [0, 0, 1, 1], [], []>} : vector<128x8xbf16>, vector<8x32xbf16>, vector<128x32xf32> -> vector<128x32xf32>
    %327 = arith.addf %299, %326 : vector<128x32xf32>
    %328 = vector.extract_strided_slice %244 {offsets = [0, 24], sizes = [128, 8], strides = [1, 1]} : vector<128x96xf32> to vector<128x8xf32>
    %cst_87 = arith.constant 0.353553385 : f32
    %329 = vector.broadcast %cst_87 : f32 to vector<128x8xf32>
    %330 = arith.mulf %328, %329 : vector<128x8xf32>
    %331 = arith.truncf %330 : vector<128x8xf32> to vector<128x8xbf16>
    %332 = vector.extract_strided_slice %244 {offsets = [0, 56], sizes = [128, 8], strides = [1, 1]} : vector<128x96xf32> to vector<128x8xf32>
    %333 = arith.truncf %332 : vector<128x8xf32> to vector<128x8xbf16>
    %334 = vector.extract_strided_slice %244 {offsets = [0, 88], sizes = [128, 8], strides = [1, 1]} : vector<128x96xf32> to vector<128x8xf32>
    %335 = arith.truncf %334 : vector<128x8xf32> to vector<128x8xbf16>
    %cst_88 = arith.constant dense<0.000000e+00> : vector<128x128xf32>
    %336 = tpu.matmul %331, %333, %cst_88 {dimension_numbers = #tpu.dot_dimension_numbers<[1], [1], [0], [0], [0, 0, 1, 0], [], []>} : vector<128x8xbf16>, vector<128x8xbf16>, vector<128x128xf32> -> vector<128x128xf32>
    %337 = arith.extf %202 : vector<128x128xbf16> to vector<128x128xf32>
    %338 = arith.addf %336, %337 : vector<128x128xf32>
    %cst_89 = arith.constant dense<0xFF800000> : vector<128xf32>
    %339 = vector.multi_reduction <maximumf>, %338, %cst_89 [1] : vector<128x128xf32> to vector<128xf32>
    %340 = vector.shape_cast %339 : vector<128xf32> to vector<128x1xf32>
    %341 = vector.broadcast %340 : vector<128x1xf32> to vector<128x128xf32>
    %342 = arith.subf %338, %341 : vector<128x128xf32>
    %343 = math.exp %342 : vector<128x128xf32>
    %cst_90 = arith.constant dense<0.000000e+00> : vector<128xf32>
    %344 = vector.multi_reduction <add>, %343, %cst_90 [1] : vector<128x128xf32> to vector<128xf32>
    %345 = vector.shape_cast %344 : vector<128xf32> to vector<128x1xf32>
    %346 = tpu.reciprocal %345 {approx = true} : vector<128x1xf32> -> vector<128x1xf32>
    %347 = vector.broadcast %346 : vector<128x1xf32> to vector<128x128xf32>
    %348 = arith.mulf %343, %347 : vector<128x128xf32>
    %349 = arith.truncf %348 : vector<128x128xf32> to vector<128x128xbf16>
    %cst_91 = arith.constant dense<0.000000e+00> : vector<128x8xf32>
    %350 = tpu.matmul %349, %335, %cst_91 {dimension_numbers = #tpu.dot_dimension_numbers<[1], [0], [0], [1], [0, 0, 1, 1], [], []>} : vector<128x128xbf16>, vector<128x8xbf16>, vector<128x8xf32> -> vector<128x8xf32>
    %351 = vector.extract_strided_slice %206 {offsets = [24, 96], sizes = [8, 32], strides = [1, 1]} : vector<32x256xf32> to vector<8x32xf32>
    %352 = arith.truncf %351 : vector<8x32xf32> to vector<8x32xbf16>
    %353 = arith.truncf %350 : vector<128x8xf32> to vector<128x8xbf16>
    %cst_92 = arith.constant dense<0.000000e+00> : vector<128x32xf32>
    %354 = tpu.matmul %353, %352, %cst_92 {dimension_numbers = #tpu.dot_dimension_numbers<[1], [0], [0], [1], [0, 0, 1, 1], [], []>} : vector<128x8xbf16>, vector<8x32xbf16>, vector<128x32xf32> -> vector<128x32xf32>
    %355 = arith.addf %327, %354 : vector<128x32xf32>
    %356 = arith.addf %200, %355 : vector<128x32xf32>
    %357 = vector.broadcast %213 : vector<1x32xf32> to vector<128x32xf32>
    %358 = arith.addf %356, %357 : vector<128x32xf32>
    %cst_93 = arith.constant dense<0.000000e+00> : vector<128xf32>
    %359 = vector.multi_reduction <add>, %358, %cst_93 [1] : vector<128x32xf32> to vector<128xf32>
    %360 = vector.shape_cast %359 : vector<128xf32> to vector<128x1xf32>
    %cst_94 = arith.constant 3.200000e+01 : f32
    %361 = vector.broadcast %cst_94 : f32 to vector<128x1xf32>
    %362 = arith.divf %360, %361 : vector<128x1xf32>
    %363 = vector.broadcast %362 : vector<128x1xf32> to vector<128x32xf32>
    %364 = arith.subf %358, %363 : vector<128x32xf32>
    %365 = arith.mulf %364, %364 : vector<128x32xf32>
    %cst_95 = arith.constant dense<0.000000e+00> : vector<128xf32>
    %366 = vector.multi_reduction <add>, %365, %cst_95 [1] : vector<128x32xf32> to vector<128xf32>
    %367 = vector.shape_cast %366 : vector<128xf32> to vector<128x1xf32>
    %cst_96 = arith.constant 3.200000e+01 : f32
    %368 = vector.broadcast %cst_96 : f32 to vector<128x1xf32>
    %369 = arith.divf %367, %368 : vector<128x1xf32>
    %370 = vector.broadcast %362 : vector<128x1xf32> to vector<128x32xf32>
    %371 = arith.subf %358, %370 : vector<128x32xf32>
    %cst_97 = arith.constant 9.99999974E-6 : f32
    %372 = vector.broadcast %cst_97 : f32 to vector<128x1xf32>
    %373 = arith.addf %369, %372 : vector<128x1xf32>
    %374 = math.rsqrt %373 : vector<128x1xf32>
    %375 = vector.broadcast %374 : vector<128x1xf32> to vector<128x32xf32>
    %376 = arith.mulf %371, %375 : vector<128x32xf32>
    %377 = vector.broadcast %211 : vector<1x32xf32> to vector<128x32xf32>
    %378 = arith.mulf %376, %377 : vector<128x32xf32>
    %379 = vector.broadcast %212 : vector<1x32xf32> to vector<128x32xf32>
    %380 = arith.addf %378, %379 : vector<128x32xf32>
    %381 = arith.truncf %380 : vector<128x32xf32> to vector<128x32xbf16>
    %382 = vector.extract_strided_slice %206 {offsets = [0, 128], sizes = [32, 128], strides = [1, 1]} : vector<32x256xf32> to vector<32x128xf32>
    %383 = arith.truncf %382 : vector<32x128xf32> to vector<32x128xbf16>
    %cst_98 = arith.constant dense<0.000000e+00> : vector<128x128xf32>
    %384 = tpu.matmul %381, %383, %cst_98 {dimension_numbers = #tpu.dot_dimension_numbers<[1], [0], [0], [1], [0, 0, 1, 1], [], []>} : vector<128x32xbf16>, vector<32x128xbf16>, vector<128x128xf32> -> vector<128x128xf32>
    %385 = vector.broadcast %216 : vector<1x128xf32> to vector<128x128xf32>
    %386 = arith.addf %384, %385 : vector<128x128xf32>
    %cst_99 = arith.constant 5.000000e-01 : f32
    %387 = vector.broadcast %cst_99 : f32 to vector<128x128xf32>
    %388 = arith.mulf %387, %386 : vector<128x128xf32>
    %cst_100 = arith.constant 0.707106769 : f32
    %389 = vector.broadcast %cst_100 : f32 to vector<128x128xf32>
    %390 = arith.mulf %386, %389 : vector<128x128xf32>
    %391 = math.erf %390 : vector<128x128xf32>
    %cst_101 = arith.constant 1.000000e+00 : f32
    %392 = vector.broadcast %cst_101 : f32 to vector<128x128xf32>
    %393 = arith.addf %392, %391 : vector<128x128xf32>
    %394 = arith.mulf %388, %393 : vector<128x128xf32>
    %395 = arith.truncf %394 : vector<128x128xf32> to vector<128x128xbf16>
    %396 = arith.truncf %208 : vector<128x32xf32> to vector<128x32xbf16>
    %cst_102 = arith.constant dense<0.000000e+00> : vector<128x32xf32>
    %397 = tpu.matmul %395, %396, %cst_102 {dimension_numbers = #tpu.dot_dimension_numbers<[1], [0], [0], [1], [0, 0, 1, 1], [], []>} : vector<128x128xbf16>, vector<128x32xbf16>, vector<128x32xf32> -> vector<128x32xf32>
    %398 = vector.broadcast %214 : vector<1x32xf32> to vector<128x32xf32>
    %399 = arith.addf %397, %398 : vector<128x32xf32>
    %400 = arith.addf %358, %399 : vector<128x32xf32>
    %c0_103 = arith.constant 0 : index
    %c0_104 = arith.constant 0 : index
    %401 = vector.load %arg6[%c0_103, %c0_104] : memref<128x32xf32, #tpu.memory_space<vmem>>, vector<128x32xf32>
    tpu.vector_store %arg6[%c0_103, %c0_104], %400 {strides = array<i32>} : memref<128x32xf32, #tpu.memory_space<vmem>>, vector<128x32xf32>,
    return
  }
  func.func @transform_0(%arg0: i32) -> (i32, i32) {
    %c0_i32 = arith.constant 0 : i32
    %c0_i32_0 = arith.constant 0 : i32
    return %arg0, %c0_i32 : i32, i32
  }
  func.func @transform_1(%arg0: i32) -> (i32, i32, i32) {
    %c0_i32 = arith.constant 0 : i32
    %c0_i32_0 = arith.constant 0 : i32
    %c0_i32_1 = arith.constant 0 : i32
    %c0_i32_2 = arith.constant 0 : i32
    return %c0_i32, %c0_i32_0, %c0_i32_1 : i32, i32, i32
  }
  func.func @transform_2(%arg0: i32) -> (i32, i32, i32) {
    %c0_i32 = arith.constant 0 : i32
    %c0_i32_0 = arith.constant 0 : i32
    %c0_i32_1 = arith.constant 0 : i32
    %c0_i32_2 = arith.constant 0 : i32
    return %c0_i32, %c0_i32_0, %c0_i32_1 : i32, i32, i32
  }
  func.func @transform_3(%arg0: i32) -> (i32, i32, i32) {
    %c0_i32 = arith.constant 0 : i32
    %c0_i32_0 = arith.constant 0 : i32
    %c0_i32_1 = arith.constant 0 : i32
    %c0_i32_2 = arith.constant 0 : i32
    return %c0_i32, %c0_i32_0, %c0_i32_1 : i32, i32, i32
  }
  func.func @transform_4(%arg0: i32) -> (i32, i32, i32) {
    %c0_i32 = arith.constant 0 : i32
    %c0_i32_0 = arith.constant 0 : i32
    %c0_i32_1 = arith.constant 0 : i32
    %c0_i32_2 = arith.constant 0 : i32
    return %c0_i32, %c0_i32_0, %c0_i32_1 : i32, i32, i32
  }
  func.func @transform_5(%arg0: i32) -> (i32, i32) {
    %c0_i32 = arith.constant 0 : i32
    %c0_i32_0 = arith.constant 0 : i32
    return %arg0, %c0_i32 : i32, i32
  }
}

</mosaic_0001>

<llo_original>
// kernel: tpu_custom_call.1
$region0: #{tpu_custom_call.1}
  #allocation0 [shape = 'u32[]', space=smem, size = 0x4, offset = 0x4, fixed_abs, tag = 'smem constant byte address 0x4 - core index']
  #allocation1 [shape = 'u32[72,128]{1,0:T(1,128)}', space=vmem, size = 0x9000, scoped, tag = 'internal scratch']
  %s0 = inlined_call_operand.vmem [shape: f32[128,32], index: 0, kind: input, shape index: {}]
  %s1 = inlined_call_operand.vmem [shape: bf16[2,128,128], index: 1, kind: input, shape index: {}]
  %s2 = inlined_call_operand.vmem [shape: f32[2,8,128], index: 2, kind: input, shape index: {}]
  %s3 = inlined_call_operand.vmem [shape: f32[2,32,256], index: 3, kind: input, shape index: {}]
  %s4 = inlined_call_operand.vmem [shape: f32[2,128,32], index: 4, kind: input, shape index: {}]
  %s5 = inlined_call_operand.vmem [shape: f32[128,32], index: 5, kind: output, shape index: {}]
  %s6 = sld [smem:[#allocation0]]
  $region30: #{tpu_custom_call.1} parent=0
    _
  %s8 = ssub.s32 1, %s6
  %s9 = scalar_select 0, %s8, %s6
  // Predicated region
  $region2: #{tpu_custom_call.1} parent=0 // pred_check
    _
  $region3: #{tpu_custom_call.1} parent=0 // pred_check_branch
    %11 = sbr.rel (0) target = $region5
  $region4: #{tpu_custom_call.1} parent=0 // pred_region
    _
  $region5: #{tpu_custom_call.1} parent=0 // pred_fallthru
    _
  // Predicated region
  $region6: #{tpu_custom_call.1} parent=0 // pred_check
    _
  $region7: #{tpu_custom_call.1} parent=0 // pred_check_branch
    %13 = sbr.rel (0) target = $region9
  $region8: #{tpu_custom_call.1} parent=0 // pred_region
    _
  $region9: #{tpu_custom_call.1} parent=0 // pred_fallthru
    _
  // Predicated region
  $region10: #{tpu_custom_call.1} parent=0 // pred_check
    _
  $region11: #{tpu_custom_call.1} parent=0 // pred_check_branch
    %15 = sbr.rel (0) target = $region13
  $region12: #{tpu_custom_call.1} parent=0 // pred_region
    _
  $region13: #{tpu_custom_call.1} parent=0 // pred_fallthru
    _
  // Predicated region
  $region14: #{tpu_custom_call.1} parent=0 // pred_check
    _
  $region15: #{tpu_custom_call.1} parent=0 // pred_check_branch
    %17 = sbr.rel (0) target = $region17
  $region16: #{tpu_custom_call.1} parent=0 // pred_region
    _
  $region17: #{tpu_custom_call.1} parent=0 // pred_fallthru
    _
  // Predicated region
  $region18: #{tpu_custom_call.1} parent=0 // pred_check
    _
  $region19: #{tpu_custom_call.1} parent=0 // pred_check_branch
    %19 = sbr.rel (0) target = $region21
  $region20: #{tpu_custom_call.1} parent=0 // pred_region
    _
  $region21: #{tpu_custom_call.1} parent=0 // pred_fallthru
    _
  %v21 = vld [vmem:[%s0] sm:$0xff]
  %v22 = vld [vmem:[%s0 + $0x8] sm:$0xff]
  %v23 = vld [vmem:[%s0 + $0x10] sm:$0xff]
  %v24 = vld [vmem:[%s0 + $0x18] sm:$0xff]
  %v25 = vld [vmem:[%s0 + $0x20] sm:$0xff]
  %v26 = vld [vmem:[%s0 + $0x28] sm:$0xff]
  %v27 = vld [vmem:[%s0 + $0x30] sm:$0xff]
  %v28 = vld [vmem:[%s0 + $0x38] sm:$0xff]
  %v29 = vld [vmem:[%s0 + $0x40] sm:$0xff]
  %v30 = vld [vmem:[%s0 + $0x48] sm:$0xff]
  %v31 = vld [vmem:[%s0 + $0x50] sm:$0xff]
  %v32 = vld [vmem:[%s0 + $0x58] sm:$0xff]
  %v33 = vld [vmem:[%s0 + $0x60] sm:$0xff]
  %v34 = vld [vmem:[%s0 + $0x68] sm:$0xff]
  %v35 = vld [vmem:[%s0 + $0x70] sm:$0xff]
  %v36 = vld [vmem:[%s0 + $0x78] sm:$0xff]
  %v37 = vld [vmem:[%s1] sm:$0xf]
  %v38 = vld [vmem:[%s1 + $0x4] sm:$0xf]
  %v39 = vld [vmem:[%s1 + $0x8] sm:$0xf]
  %v40 = vld [vmem:[%s1 + $0xc] sm:$0xf]
  %v41 = vld [vmem:[%s1 + $0x10] sm:$0xf]
  %v42 = vld [vmem:[%s1 + $0x14] sm:$0xf]
  %v43 = vld [vmem:[%s1 + $0x18] sm:$0xf]
  %v44 = vld [vmem:[%s1 + $0x1c] sm:$0xf]
  %v45 = vld [vmem:[%s1 + $0x20] sm:$0xf]
  %v46 = vld [vmem:[%s1 + $0x24] sm:$0xf]
  %v47 = vld [vmem:[%s1 + $0x28] sm:$0xf]
  %v48 = vld [vmem:[%s1 + $0x2c] sm:$0xf]
  %v49 = vld [vmem:[%s1 + $0x30] sm:$0xf]
  %v50 = vld [vmem:[%s1 + $0x34] sm:$0xf]
  %v51 = vld [vmem:[%s1 + $0x38] sm:$0xf]
  %v52 = vld [vmem:[%s1 + $0x3c] sm:$0xf]
  %v53 = vld [vmem:[%s2] sm:$0xff]
  %v54 = vld [vmem:[%s3] sm:$0xff]
  %v55 = vld [vmem:[%s3 + $0x8] sm:$0xff]
  %v56 = vld [vmem:[%s3 + $0x10] sm:$0xff]
  %v57 = vld [vmem:[%s3 + $0x18] sm:$0xff]
  %v58 = vld [vmem:[%s3 + $0x20] sm:$0xff]
  %v59 = vld [vmem:[%s3 + $0x28] sm:$0xff]
  %v60 = vld [vmem:[%s3 + $0x30] sm:$0xff]
  %v61 = vld [vmem:[%s3 + $0x38] sm:$0xff]
  %v62 = vld [vmem:[%s4] sm:$0xff]
  %v63 = vld [vmem:[%s4 + $0x8] sm:$0xff]
  %v64 = vld [vmem:[%s4 + $0x10] sm:$0xff]
  %v65 = vld [vmem:[%s4 + $0x18] sm:$0xff]
  %v66 = vld [vmem:[%s4 + $0x20] sm:$0xff]
  %v67 = vld [vmem:[%s4 + $0x28] sm:$0xff]
  %v68 = vld [vmem:[%s4 + $0x30] sm:$0xff]
  %v69 = vld [vmem:[%s4 + $0x38] sm:$0xff]
  %v70 = vld [vmem:[%s4 + $0x40] sm:$0xff]
  %v71 = vld [vmem:[%s4 + $0x48] sm:$0xff]
  %v72 = vld [vmem:[%s4 + $0x50] sm:$0xff]
  %v73 = vld [vmem:[%s4 + $0x58] sm:$0xff]
  %v74 = vld [vmem:[%s4 + $0x60] sm:$0xff]
  %v75 = vld [vmem:[%s4 + $0x68] sm:$0xff]
  %v76 = vld [vmem:[%s4 + $0x70] sm:$0xff]
  %v77 = vld [vmem:[%s4 + $0x78] sm:$0xff]
  %vm78 = vcmask 261120
  %v79 = vsel %vm78, %v21, 0.0
  %80 = vadd.xlane.f32.xlu0 %v79
  %v81 = vpop.xlane.xlu0 %80
  %v82 = vsel %vm78, %v22, 0.0
  %83 = vadd.xlane.f32.xlu0 %v82
  %v84 = vpop.xlane.xlu0 %83
  %v85 = vsel %vm78, %v23, 0.0
  %86 = vadd.xlane.f32.xlu0 %v85
  %v87 = vpop.xlane.xlu0 %86
  %v88 = vsel %vm78, %v24, 0.0
  %89 = vadd.xlane.f32.xlu0 %v88
  %v90 = vpop.xlane.xlu0 %89
  %v91 = vsel %vm78, %v25, 0.0
  %92 = vadd.xlane.f32.xlu0 %v91
  %v93 = vpop.xlane.xlu0 %92
  %v94 = vsel %vm78, %v26, 0.0
  %95 = vadd.xlane.f32.xlu0 %v94
  %v96 = vpop.xlane.xlu0 %95
  %v97 = vsel %vm78, %v27, 0.0
  %98 = vadd.xlane.f32.xlu0 %v97
  %v99 = vpop.xlane.xlu0 %98
  %v100 = vsel %vm78, %v28, 0.0
  %101 = vadd.xlane.f32.xlu0 %v100
  %v102 = vpop.xlane.xlu0 %101
  %v103 = vsel %vm78, %v29, 0.0
  %104 = vadd.xlane.f32.xlu0 %v103
  %v105 = vpop.xlane.xlu0 %104
  %v106 = vsel %vm78, %v30, 0.0
  %107 = vadd.xlane.f32.xlu0 %v106
  %v108 = vpop.xlane.xlu0 %107
  %v109 = vsel %vm78, %v31, 0.0
  %110 = vadd.xlane.f32.xlu0 %v109
  %v111 = vpop.xlane.xlu0 %110
  %v112 = vsel %vm78, %v32, 0.0
  %113 = vadd.xlane.f32.xlu0 %v112
  %v114 = vpop.xlane.xlu0 %113
  %v115 = vsel %vm78, %v33, 0.0
  %116 = vadd.xlane.f32.xlu0 %v115
  %v117 = vpop.xlane.xlu0 %116
  %v118 = vsel %vm78, %v34, 0.0
  %119 = vadd.xlane.f32.xlu0 %v118
  %v120 = vpop.xlane.xlu0 %119
  %v121 = vsel %vm78, %v35, 0.0
  %122 = vadd.xlane.f32.xlu0 %v121
  %v123 = vpop.xlane.xlu0 %122
  %v124 = vsel %vm78, %v36, 0.0
  %125 = vadd.xlane.f32.xlu0 %v124
  %v126 = vpop.xlane.xlu0 %125
  %v127 = vrcp.pop 32.0
  %v128 = vmul.f32 32.0, %v127
  %v129 = vsub.f32 1.0, %v128
  %v130 = vmul.f32 %v127, %v129
  %v131 = vadd.f32 %v127, %v130
  %vm132 = vweird.f32 %v127
  %v133 = vsel %vm132, %v127, %v131
  %v134 = vmul.f32 %v81, %v133
  %v135 = vmul.f32 %v84, %v133
  %v136 = vmul.f32 %v87, %v133
  %v137 = vmul.f32 %v90, %v133
  %v138 = vmul.f32 %v93, %v133
  %v139 = vmul.f32 %v96, %v133
  %v140 = vmul.f32 %v99, %v133
  %v141 = vmul.f32 %v102, %v133
  %v142 = vmul.f32 %v105, %v133
  %v143 = vmul.f32 %v108, %v133
  %v144 = vmul.f32 %v111, %v133
  %v145 = vmul.f32 %v114, %v133
  %v146 = vmul.f32 %v117, %v133
  %v147 = vmul.f32 %v120, %v133
  %v148 = vmul.f32 %v123, %v133
  %v149 = vmul.f32 %v126, %v133
  %v150 = vsub.f32 %v21, %v134
  %v151 = vsub.f32 %v22, %v135
  %v152 = vsub.f32 %v23, %v136
  %v153 = vsub.f32 %v24, %v137
  %v154 = vsub.f32 %v25, %v138
  %v155 = vsub.f32 %v26, %v139
  %v156 = vsub.f32 %v27, %v140
  %v157 = vsub.f32 %v28, %v141
  %v158 = vsub.f32 %v29, %v142
  %v159 = vsub.f32 %v30, %v143
  %v160 = vsub.f32 %v31, %v144
  %v161 = vsub.f32 %v32, %v145
  %v162 = vsub.f32 %v33, %v146
  %v163 = vsub.f32 %v34, %v147
  %v164 = vsub.f32 %v35, %v148
  %v165 = vsub.f32 %v36, %v149
  %v166 = vmul.f32 %v150, %v150
  %v167 = vmul.f32 %v151, %v151
  %v168 = vmul.f32 %v152, %v152
  %v169 = vmul.f32 %v153, %v153
  %v170 = vmul.f32 %v154, %v154
  %v171 = vmul.f32 %v155, %v155
  %v172 = vmul.f32 %v156, %v156
  %v173 = vmul.f32 %v157, %v157
  %v174 = vmul.f32 %v158, %v158
  %v175 = vmul.f32 %v159, %v159
  %v176 = vmul.f32 %v160, %v160
  %v177 = vmul.f32 %v161, %v161
  %v178 = vmul.f32 %v162, %v162
  %v179 = vmul.f32 %v163, %v163
  %v180 = vmul.f32 %v164, %v164
  %v181 = vmul.f32 %v165, %v165
  %v182 = vsel %vm78, %v166, 0.0
  %183 = vadd.xlane.f32.xlu0 %v182
  %v184 = vpop.xlane.xlu0 %183
  %v185 = vsel %vm78, %v167, 0.0
  %186 = vadd.xlane.f32.xlu0 %v185
  %v187 = vpop.xlane.xlu0 %186
  %v188 = vsel %vm78, %v168, 0.0
  %189 = vadd.xlane.f32.xlu0 %v188
  %v190 = vpop.xlane.xlu0 %189
  %v191 = vsel %vm78, %v169, 0.0
  %192 = vadd.xlane.f32.xlu0 %v191
  %v193 = vpop.xlane.xlu0 %192
  %v194 = vsel %vm78, %v170, 0.0
  %195 = vadd.xlane.f32.xlu0 %v194
  %v196 = vpop.xlane.xlu0 %195
  %v197 = vsel %vm78, %v171, 0.0
  %198 = vadd.xlane.f32.xlu0 %v197
  %v199 = vpop.xlane.xlu0 %198
  %v200 = vsel %vm78, %v172, 0.0
  %201 = vadd.xlane.f32.xlu0 %v200
  %v202 = vpop.xlane.xlu0 %201
  %v203 = vsel %vm78, %v173, 0.0
  %204 = vadd.xlane.f32.xlu0 %v203
  %v205 = vpop.xlane.xlu0 %204
  %v206 = vsel %vm78, %v174, 0.0
  %207 = vadd.xlane.f32.xlu0 %v206
  %v208 = vpop.xlane.xlu0 %207
  %v209 = vsel %vm78, %v175, 0.0
  %210 = vadd.xlane.f32.xlu0 %v209
  %v211 = vpop.xlane.xlu0 %210
  %v212 = vsel %vm78, %v176, 0.0
  %213 = vadd.xlane.f32.xlu0 %v212
  %v214 = vpop.xlane.xlu0 %213
  %v215 = vsel %vm78, %v177, 0.0
  %216 = vadd.xlane.f32.xlu0 %v215
  %v217 = vpop.xlane.xlu0 %216
  %v218 = vsel %vm78, %v178, 0.0
  %219 = vadd.xlane.f32.xlu0 %v218
  %v220 = vpop.xlane.xlu0 %219
  %v221 = vsel %vm78, %v179, 0.0
  %222 = vadd.xlane.f32.xlu0 %v221
  %v223 = vpop.xlane.xlu0 %222
  %v224 = vsel %vm78, %v180, 0.0
  %225 = vadd.xlane.f32.xlu0 %v224
  %v226 = vpop.xlane.xlu0 %225
  %v227 = vsel %vm78, %v181, 0.0
  %228 = vadd.xlane.f32.xlu0 %v227
  %v229 = vpop.xlane.xlu0 %228
  %v230 = vmul.f32 %v184, %v133
  %v231 = vmul.f32 %v187, %v133
  %v232 = vmul.f32 %v190, %v133
  %v233 = vmul.f32 %v193, %v133
  %v234 = vmul.f32 %v196, %v133
  %v235 = vmul.f32 %v199, %v133
  %v236 = vmul.f32 %v202, %v133
  %v237 = vmul.f32 %v205, %v133
  %v238 = vmul.f32 %v208, %v133
  %v239 = vmul.f32 %v211, %v133
  %v240 = vmul.f32 %v214, %v133
  %v241 = vmul.f32 %v217, %v133
  %v242 = vmul.f32 %v220, %v133
  %v243 = vmul.f32 %v223, %v133
  %v244 = vmul.f32 %v226, %v133
  %v245 = vmul.f32 %v229, %v133
  %v246 = vadd.f32 %v230, 1e-05
  %v247 = vadd.f32 %v231, 1e-05
  %v248 = vadd.f32 %v232, 1e-05
  %v249 = vadd.f32 %v233, 1e-05
  %v250 = vadd.f32 %v234, 1e-05
  %v251 = vadd.f32 %v235, 1e-05
  %v252 = vadd.f32 %v236, 1e-05
  %v253 = vadd.f32 %v237, 1e-05
  %v254 = vadd.f32 %v238, 1e-05
  %v255 = vadd.f32 %v239, 1e-05
  %v256 = vadd.f32 %v240, 1e-05
  %v257 = vadd.f32 %v241, 1e-05
  %v258 = vadd.f32 %v242, 1e-05
  %v259 = vadd.f32 %v243, 1e-05
  %v260 = vadd.f32 %v244, 1e-05
  %v261 = vadd.f32 %v245, 1e-05
  %v262 = vrsqrt.pop %v246
  %v263 = vmul.f32 %v262, %v246
  %v264 = vmul.f32 %v263, %v262
  %v265 = vmul.f32 0.5, %v264
  %v266 = vsub.f32 1.5, %v265
  %v267 = vmul.f32 %v262, %v266
  %vm268 = vweird.f32 %v246
  %vm269 = vweird.f32 %v262
  %vm270 = vmor %vm268, %vm269
  %v271 = vsel %vm270, %v262, %v267
  %v272 = vrsqrt.pop %v247
  %v273 = vmul.f32 %v272, %v247
  %v274 = vmul.f32 %v273, %v272
  %v275 = vmul.f32 0.5, %v274
  %v276 = vsub.f32 1.5, %v275
  %v277 = vmul.f32 %v272, %v276
  %vm278 = vweird.f32 %v247
  %vm279 = vweird.f32 %v272
  %vm280 = vmor %vm278, %vm279
  %v281 = vsel %vm280, %v272, %v277
  %v282 = vrsqrt.pop %v248
  %v283 = vmul.f32 %v282, %v248
  %v284 = vmul.f32 %v283, %v282
  %v285 = vmul.f32 0.5, %v284
  %v286 = vsub.f32 1.5, %v285
  %v287 = vmul.f32 %v282, %v286
  %vm288 = vweird.f32 %v248
  %vm289 = vweird.f32 %v282
  %vm290 = vmor %vm288, %vm289
  %v291 = vsel %vm290, %v282, %v287
  %v292 = vrsqrt.pop %v249
  %v293 = vmul.f32 %v292, %v249
  %v294 = vmul.f32 %v293, %v292
  %v295 = vmul.f32 0.5, %v294
  %v296 = vsub.f32 1.5, %v295
  %v297 = vmul.f32 %v292, %v296
  %vm298 = vweird.f32 %v249
  %vm299 = vweird.f32 %v292
  %vm300 = vmor %vm298, %vm299
  %v301 = vsel %vm300, %v292, %v297
  %v302 = vrsqrt.pop %v250
  %v303 = vmul.f32 %v302, %v250
  %v304 = vmul.f32 %v303, %v302
  %v305 = vmul.f32 0.5, %v304
  %v306 = vsub.f32 1.5, %v305
  %v307 = vmul.f32 %v302, %v306
  %vm308 = vweird.f32 %v250
  %vm309 = vweird.f32 %v302
  %vm310 = vmor %vm308, %vm309
  %v311 = vsel %vm310, %v302, %v307
  %v312 = vrsqrt.pop %v251
  %v313 = vmul.f32 %v312, %v251
  %v314 = vmul.f32 %v313, %v312
  %v315 = vmul.f32 0.5, %v314
  %v316 = vsub.f32 1.5, %v315
  %v317 = vmul.f32 %v312, %v316
  %vm318 = vweird.f32 %v251
  %vm319 = vweird.f32 %v312
  %vm320 = vmor %vm318, %vm319
  %v321 = vsel %vm320, %v312, %v317
  %v322 = vrsqrt.pop %v252
  %v323 = vmul.f32 %v322, %v252
  %v324 = vmul.f32 %v323, %v322
  %v325 = vmul.f32 0.5, %v324
  %v326 = vsub.f32 1.5, %v325
  %v327 = vmul.f32 %v322, %v326
  %vm328 = vweird.f32 %v252
  %vm329 = vweird.f32 %v322
  %vm330 = vmor %vm328, %vm329
  %v331 = vsel %vm330, %v322, %v327
  %v332 = vrsqrt.pop %v253
  %v333 = vmul.f32 %v332, %v253
  %v334 = vmul.f32 %v333, %v332
  %v335 = vmul.f32 0.5, %v334
  %v336 = vsub.f32 1.5, %v335
  %v337 = vmul.f32 %v332, %v336
  %vm338 = vweird.f32 %v253
  %vm339 = vweird.f32 %v332
  %vm340 = vmor %vm338, %vm339
  %v341 = vsel %vm340, %v332, %v337
  %v342 = vrsqrt.pop %v254
  %v343 = vmul.f32 %v342, %v254
  %v344 = vmul.f32 %v343, %v342
  %v345 = vmul.f32 0.5, %v344
  %v346 = vsub.f32 1.5, %v345
  %v347 = vmul.f32 %v342, %v346
  %vm348 = vweird.f32 %v254
  %vm349 = vweird.f32 %v342
  %vm350 = vmor %vm348, %vm349
  %v351 = vsel %vm350, %v342, %v347
  %v352 = vrsqrt.pop %v255
  %v353 = vmul.f32 %v352, %v255
  %v354 = vmul.f32 %v353, %v352
  %v355 = vmul.f32 0.5, %v354
  %v356 = vsub.f32 1.5, %v355
  %v357 = vmul.f32 %v352, %v356
  %vm358 = vweird.f32 %v255
  %vm359 = vweird.f32 %v352
  %vm360 = vmor %vm358, %vm359
  %v361 = vsel %vm360, %v352, %v357
  %v362 = vrsqrt.pop %v256
  %v363 = vmul.f32 %v362, %v256
  %v364 = vmul.f32 %v363, %v362
  %v365 = vmul.f32 0.5, %v364
  %v366 = vsub.f32 1.5, %v365
  %v367 = vmul.f32 %v362, %v366
  %vm368 = vweird.f32 %v256
  %vm369 = vweird.f32 %v362
  %vm370 = vmor %vm368, %vm369
  %v371 = vsel %vm370, %v362, %v367
  %v372 = vrsqrt.pop %v257
  %v373 = vmul.f32 %v372, %v257
  %v374 = vmul.f32 %v373, %v372
  %v375 = vmul.f32 0.5, %v374
  %v376 = vsub.f32 1.5, %v375
  %v377 = vmul.f32 %v372, %v376
  %vm378 = vweird.f32 %v257
  %vm379 = vweird.f32 %v372
  %vm380 = vmor %vm378, %vm379
  %v381 = vsel %vm380, %v372, %v377
  %v382 = vrsqrt.pop %v258
  %v383 = vmul.f32 %v382, %v258
  %v384 = vmul.f32 %v383, %v382
  %v385 = vmul.f32 0.5, %v384
  %v386 = vsub.f32 1.5, %v385
  %v387 = vmul.f32 %v382, %v386
  %vm388 = vweird.f32 %v258
  %vm389 = vweird.f32 %v382
  %vm390 = vmor %vm388, %vm389
  %v391 = vsel %vm390, %v382, %v387
  %v392 = vrsqrt.pop %v259
  %v393 = vmul.f32 %v392, %v259
  %v394 = vmul.f32 %v393, %v392
  %v395 = vmul.f32 0.5, %v394
  %v396 = vsub.f32 1.5, %v395
  %v397 = vmul.f32 %v392, %v396
  %vm398 = vweird.f32 %v259
  %vm399 = vweird.f32 %v392
  %vm400 = vmor %vm398, %vm399
  %v401 = vsel %vm400, %v392, %v397
  %v402 = vrsqrt.pop %v260
  %v403 = vmul.f32 %v402, %v260
  %v404 = vmul.f32 %v403, %v402
  %v405 = vmul.f32 0.5, %v404
  %v406 = vsub.f32 1.5, %v405
  %v407 = vmul.f32 %v402, %v406
  %vm408 = vweird.f32 %v260
  %vm409 = vweird.f32 %v402
  %vm410 = vmor %vm408, %vm409
  %v411 = vsel %vm410, %v402, %v407
  %v412 = vrsqrt.pop %v261
  %v413 = vmul.f32 %v412, %v261
  %v414 = vmul.f32 %v413, %v412
  %v415 = vmul.f32 0.5, %v414
  %v416 = vsub.f32 1.5, %v415
  %v417 = vmul.f32 %v412, %v416
  %vm418 = vweird.f32 %v261
  %vm419 = vweird.f32 %v412
  %vm420 = vmor %vm418, %vm419
  %v421 = vsel %vm420, %v412, %v417
  %v422 = vmul.f32 %v150, %v271
  %v423 = vmul.f32 %v151, %v281
  %v424 = vmul.f32 %v152, %v291
  %v425 = vmul.f32 %v153, %v301
  %v426 = vmul.f32 %v154, %v311
  %v427 = vmul.f32 %v155, %v321
  %v428 = vmul.f32 %v156, %v331
  %v429 = vmul.f32 %v157, %v341
  %v430 = vmul.f32 %v158, %v351
  %v431 = vmul.f32 %v159, %v361
  %v432 = vmul.f32 %v160, %v371
  %v433 = vmul.f32 %v161, %v381
  %v434 = vmul.f32 %v162, %v391
  %v435 = vmul.f32 %v163, %v401
  %v436 = vmul.f32 %v164, %v411
  %v437 = vmul.f32 %v165, %v421
  %v438 = vperm.slane %v53, 0
  %v439 = vmul.f32 %v422, %v438
  %v440 = vmul.f32 %v423, %v438
  %v441 = vmul.f32 %v424, %v438
  %v442 = vmul.f32 %v425, %v438
  %v443 = vmul.f32 %v426, %v438
  %v444 = vmul.f32 %v427, %v438
  %v445 = vmul.f32 %v428, %v438
  %v446 = vmul.f32 %v429, %v438
  %v447 = vmul.f32 %v430, %v438
  %v448 = vmul.f32 %v431, %v438
  %v449 = vmul.f32 %v432, %v438
  %v450 = vmul.f32 %v433, %v438
  %v451 = vmul.f32 %v434, %v438
  %v452 = vmul.f32 %v435, %v438
  %v453 = vmul.f32 %v436, %v438
  %v454 = vmul.f32 %v437, %v438
  %v455 = vperm.slane %v53, 1
  %v456 = vadd.f32 %v439, %v455
  %v457 = vadd.f32 %v440, %v455
  %v458 = vadd.f32 %v441, %v455
  %v459 = vadd.f32 %v442, %v455
  %v460 = vadd.f32 %v443, %v455
  %v461 = vadd.f32 %v444, %v455
  %v462 = vadd.f32 %v445, %v455
  %v463 = vadd.f32 %v446, %v455
  %v464 = vadd.f32 %v447, %v455
  %v465 = vadd.f32 %v448, %v455
  %v466 = vadd.f32 %v449, %v455
  %v467 = vadd.f32 %v450, %v455
  %v468 = vadd.f32 %v451, %v455
  %v469 = vadd.f32 %v452, %v455
  %v470 = vadd.f32 %v453, %v455
  %v471 = vadd.f32 %v454, %v455
  %v472 = vpack.c.bf16 %v457, %v456
  %v473 = vpack.c.bf16 %v459, %v458
  %v474 = vpack.c.bf16 %v461, %v460
  %v475 = vpack.c.bf16 %v463, %v462
  %v476 = vpack.c.bf16 %v465, %v464
  %v477 = vpack.c.bf16 %v467, %v466
  %v478 = vpack.c.bf16 %v469, %v468
  %v479 = vpack.c.bf16 %v471, %v470
  %v480 = vpack.c.bf16 %v56, %v54
  %v481 = vpack.c.bf16 %v60, %v58
  %v482 = vperm.slane %v53, 6
  %v484 = vsel %vm78, %v472, 0
  %v487 = vsel %vm78, %v473, 0
  %v490 = vsel %vm78, %v474, 0
  %v493 = vsel %vm78, %v475, 0
  %v496 = vsel %vm78, %v476, 0
  %v499 = vsel %vm78, %v477, 0
  %v502 = vsel %vm78, %v478, 0
  %v505 = vsel %vm78, %v479, 0
  %507 = vmatpush.bf16.msra.mxu0 0
  %508 = vmatpush.bf16.msra.mxu0 0
  %509 = vmatpush.bf16.msra.mxu0 0
  %510 = vmatpush.bf16.msra.mxu0 0
  %511 = vmatpush.bf16.msra.mxu0 0
  %512 = vmatpush.bf16.msra.mxu0 0
  %513 = vmatpush.bf16.msra.mxu0 %v481
  %514 = vmatpush.bf16.msra.mxu0 %v480
  %515 = vmatmul.bf16.gmra.mxu0 %v484
  %v516 = vpop.f32.mrf.mxu0
  %v517 = vadd.f32 %v482, %v516
  %v518 = vpop.f32.mrf.mxu0
  %v519 = vadd.f32 %v482, %v518
  %520 = vmatmul.bf16.gmra.mxu0 %v487
  %v521 = vpop.f32.mrf.mxu0
  %v522 = vadd.f32 %v482, %v521
  %v523 = vpop.f32.mrf.mxu0
  %v524 = vadd.f32 %v482, %v523
  %525 = vmatmul.bf16.gmra.mxu0 %v490
  %v526 = vpop.f32.mrf.mxu0
  %v527 = vadd.f32 %v482, %v526
  %v528 = vpop.f32.mrf.mxu0
  %v529 = vadd.f32 %v482, %v528
  %530 = vmatmul.bf16.gmra.mxu0 %v493
  %v531 = vpop.f32.mrf.mxu0
  %v532 = vadd.f32 %v482, %v531
  %v533 = vpop.f32.mrf.mxu0
  %v534 = vadd.f32 %v482, %v533
  %535 = vmatmul.bf16.gmra.mxu0 %v496
  %v536 = vpop.f32.mrf.mxu0
  %v537 = vadd.f32 %v482, %v536
  %v538 = vpop.f32.mrf.mxu0
  %v539 = vadd.f32 %v482, %v538
  %540 = vmatmul.bf16.gmra.mxu0 %v499
  %v541 = vpop.f32.mrf.mxu0
  %v542 = vadd.f32 %v482, %v541
  %v543 = vpop.f32.mrf.mxu0
  %v544 = vadd.f32 %v482, %v543
  %545 = vmatmul.bf16.gmra.mxu0 %v502
  %v546 = vpop.f32.mrf.mxu0
  %v547 = vadd.f32 %v482, %v546
  %v548 = vpop.f32.mrf.mxu0
  %v549 = vadd.f32 %v482, %v548
  %550 = vmatmul.bf16.gmra.mxu0 %v505
  %v551 = vpop.f32.mrf.mxu0
  %v552 = vadd.f32 %v482, %v551
  %v553 = vpop.f32.mrf.mxu0
  %v554 = vadd.f32 %v482, %v553
  %555 = vdwg.mxu0
  %v556 = vmul.f32 %v517, 0.35355338
  %v557 = vmul.f32 %v519, 0.35355338
  %v558 = vmul.f32 %v522, 0.35355338
  %v559 = vmul.f32 %v524, 0.35355338
  %v560 = vmul.f32 %v527, 0.35355338
  %v561 = vmul.f32 %v529, 0.35355338
  %v562 = vmul.f32 %v532, 0.35355338
  %v563 = vmul.f32 %v534, 0.35355338
  %v564 = vmul.f32 %v537, 0.35355338
  %v565 = vmul.f32 %v539, 0.35355338
  %v566 = vmul.f32 %v542, 0.35355338
  %v567 = vmul.f32 %v544, 0.35355338
  %v568 = vmul.f32 %v547, 0.35355338
  %v569 = vmul.f32 %v549, 0.35355338
  %v570 = vmul.f32 %v552, 0.35355338
  %v571 = vmul.f32 %v554, 0.35355338
  %v572 = vpack.c.bf16 %v557, %v556
  %v573 = vpack.c.bf16 %v559, %v558
  %v574 = vpack.c.bf16 %v561, %v560
  %v575 = vpack.c.bf16 %v563, %v562
  %v576 = vpack.c.bf16 %v565, %v564
  %v577 = vpack.c.bf16 %v567, %v566
  %v578 = vpack.c.bf16 %v569, %v568
  %v579 = vpack.c.bf16 %v571, %v570
  %v580 = vpack.c.bf16 %v519, %v517
  %v581 = vpack.c.bf16 %v524, %v522
  %v582 = vpack.c.bf16 %v529, %v527
  %v583 = vpack.c.bf16 %v534, %v532
  %v584 = vpack.c.bf16 %v539, %v537
  %v585 = vpack.c.bf16 %v544, %v542
  %v586 = vpack.c.bf16 %v549, %v547
  %v587 = vpack.c.bf16 %v554, %v552
  %v588 = vunpack.c.l.bf16 %v37
  %v589 = vunpack.c.l.bf16 %v38
  %v590 = vunpack.c.l.bf16 %v39
  %v591 = vunpack.c.l.bf16 %v40
  %v592 = vunpack.c.l.bf16 %v41
  %v593 = vunpack.c.l.bf16 %v42
  %v594 = vunpack.c.l.bf16 %v43
  %v595 = vunpack.c.l.bf16 %v44
  %v596 = vunpack.c.l.bf16 %v45
  %v597 = vunpack.c.l.bf16 %v46
  %v598 = vunpack.c.l.bf16 %v47
  %v599 = vunpack.c.l.bf16 %v48
  %v600 = vunpack.c.l.bf16 %v49
  %v601 = vunpack.c.l.bf16 %v50
  %v602 = vunpack.c.l.bf16 %v51
  %v603 = vunpack.c.l.bf16 %v52
  %612 = vrot.lane.b32.xlu0 %v580, 96
  %v613 = vpop.permute.xlu0 %612
  %614 = vrot.lane.b32.xlu0 %v581, 96
  %v615 = vpop.permute.xlu0 %614
  %616 = vrot.lane.b32.xlu0 %v582, 96
  %v617 = vpop.permute.xlu0 %616
  %618 = vrot.lane.b32.xlu0 %v583, 96
  %v619 = vpop.permute.xlu0 %618
  %620 = vrot.lane.b32.xlu0 %v584, 96
  %v621 = vpop.permute.xlu0 %620
  %622 = vrot.lane.b32.xlu0 %v585, 96
  %v623 = vpop.permute.xlu0 %622
  %624 = vrot.lane.b32.xlu0 %v586, 96
  %v625 = vpop.permute.xlu0 %624
  %626 = vrot.lane.b32.xlu0 %v587, 96
  %v627 = vpop.permute.xlu0 %626
  %vm628 = vcmask 64512
  %v630 = vsel %vm628, %v572, 0
  %v633 = vsel %vm628, %v573, 0
  %v636 = vsel %vm628, %v574, 0
  %v639 = vsel %vm628, %v575, 0
  %v642 = vsel %vm628, %v576, 0
  %v645 = vsel %vm628, %v577, 0
  %v648 = vsel %vm628, %v578, 0
  %v651 = vsel %vm628, %v579, 0
  %v654 = vsel %vm628, %v613, 0
  %v657 = vsel %vm628, %v615, 0
  %v660 = vsel %vm628, %v617, 0
  %v663 = vsel %vm628, %v619, 0
  %v666 = vsel %vm628, %v621, 0
  %v669 = vsel %vm628, %v623, 0
  %v672 = vsel %vm628, %v625, 0
  %v675 = vsel %vm628, %v627, 0
  %677 = vmatpush.bf16.xpose.msra.mxu0 %v675
  %678 = vmatpush.bf16.xpose.msra.mxu0 %v672
  %679 = vmatpush.bf16.xpose.msra.mxu0 %v669
  %680 = vmatpush.bf16.xpose.msra.mxu0 %v666
  %681 = vmatpush.bf16.xpose.msra.mxu0 %v663
  %682 = vmatpush.bf16.xpose.msra.mxu0 %v660
  %683 = vmatpush.bf16.xpose.msra.mxu0 %v657
  %684 = vmatpush.bf16.xpose.msra.mxu0 %v654
  %685 = vmatmul.bf16.gmra.mxu0 %v630
  %v686 = vpop.f32.mrf.mxu0
  %v687 = vadd.f32 %v588, %v686
  %v688 = vpop.f32.mrf.mxu0
  %v689 = vadd.f32 %v589, %v688
  %690 = vmatmul.bf16.gmra.mxu0 %v633
  %v691 = vpop.f32.mrf.mxu0
  %v692 = vadd.f32 %v590, %v691
  %v693 = vpop.f32.mrf.mxu0
  %v694 = vadd.f32 %v591, %v693
  %695 = vmatmul.bf16.gmra.mxu0 %v636
  %v696 = vpop.f32.mrf.mxu0
  %v697 = vadd.f32 %v592, %v696
  %v698 = vpop.f32.mrf.mxu0
  %v699 = vadd.f32 %v593, %v698
  %700 = vmatmul.bf16.gmra.mxu0 %v639
  %v701 = vpop.f32.mrf.mxu0
  %v702 = vadd.f32 %v594, %v701
  %v703 = vpop.f32.mrf.mxu0
  %v704 = vadd.f32 %v595, %v703
  %705 = vmatmul.bf16.gmra.mxu0 %v642
  %v706 = vpop.f32.mrf.mxu0
  %v707 = vadd.f32 %v596, %v706
  %v708 = vpop.f32.mrf.mxu0
  %v709 = vadd.f32 %v597, %v708
  %710 = vmatmul.bf16.gmra.mxu0 %v645
  %v711 = vpop.f32.mrf.mxu0
  %v712 = vadd.f32 %v598, %v711
  %v713 = vpop.f32.mrf.mxu0
  %v714 = vadd.f32 %v599, %v713
  %715 = vmatmul.bf16.gmra.mxu0 %v648
  %v716 = vpop.f32.mrf.mxu0
  %v717 = vadd.f32 %v600, %v716
  %v718 = vpop.f32.mrf.mxu0
  %v719 = vadd.f32 %v601, %v718
  %720 = vmatmul.bf16.gmra.mxu0 %v651
  %v721 = vpop.f32.mrf.mxu0
  %v722 = vadd.f32 %v602, %v721
  %v723 = vpop.f32.mrf.mxu0
  %v724 = vadd.f32 %v603, %v723
  %725 = vdwg.mxu0
  %726 = vmax.xlane.f32.xlu0 %v687
  %v727 = vpop.xlane.xlu0 %726
  %728 = vmax.xlane.f32.xlu0 %v689
  %v729 = vpop.xlane.xlu0 %728
  %730 = vmax.xlane.f32.xlu0 %v692
  %v731 = vpop.xlane.xlu0 %730
  %732 = vmax.xlane.f32.xlu0 %v694
  %v733 = vpop.xlane.xlu0 %732
  %734 = vmax.xlane.f32.xlu0 %v697
  %v735 = vpop.xlane.xlu0 %734
  %736 = vmax.xlane.f32.xlu0 %v699
  %v737 = vpop.xlane.xlu0 %736
  %738 = vmax.xlane.f32.xlu0 %v702
  %v739 = vpop.xlane.xlu0 %738
  %740 = vmax.xlane.f32.xlu0 %v704
  %v741 = vpop.xlane.xlu0 %740
  %742 = vmax.xlane.f32.xlu0 %v707
  %v743 = vpop.xlane.xlu0 %742
  %744 = vmax.xlane.f32.xlu0 %v709
  %v745 = vpop.xlane.xlu0 %744
  %746 = vmax.xlane.f32.xlu0 %v712
  %v747 = vpop.xlane.xlu0 %746
  %748 = vmax.xlane.f32.xlu0 %v714
  %v749 = vpop.xlane.xlu0 %748
  %750 = vmax.xlane.f32.xlu0 %v717
  %v751 = vpop.xlane.xlu0 %750
  %752 = vmax.xlane.f32.xlu0 %v719
  %v753 = vpop.xlane.xlu0 %752
  %754 = vmax.xlane.f32.xlu0 %v722
  %v755 = vpop.xlane.xlu0 %754
  %756 = vmax.xlane.f32.xlu0 %v724
  %v757 = vpop.xlane.xlu0 %756
  %v758 = vsub.f32 %v687, %v727
  %v759 = vsub.f32 %v689, %v729
  %v760 = vsub.f32 %v692, %v731
  %v761 = vsub.f32 %v694, %v733
  %v762 = vsub.f32 %v697, %v735
  %v763 = vsub.f32 %v699, %v737
  %v764 = vsub.f32 %v702, %v739
  %v765 = vsub.f32 %v704, %v741
  %v766 = vsub.f32 %v707, %v743
  %v767 = vsub.f32 %v709, %v745
  %v768 = vsub.f32 %v712, %v747
  %v769 = vsub.f32 %v714, %v749
  %v770 = vsub.f32 %v717, %v751
  %v771 = vsub.f32 %v719, %v753
  %v772 = vsub.f32 %v722, %v755
  %v773 = vsub.f32 %v724, %v757
  %v774 = vmul.f32 %v758, 1.442695
  %v775 = vpow.pop %v774
  %v776 = vmul.f32 %v759, 1.442695
  %v777 = vpow.pop %v776
  %v778 = vmul.f32 %v760, 1.442695
  %v779 = vpow.pop %v778
  %v780 = vmul.f32 %v761, 1.442695
  %v781 = vpow.pop %v780
  %v782 = vmul.f32 %v762, 1.442695
  %v783 = vpow.pop %v782
  %v784 = vmul.f32 %v763, 1.442695
  %v785 = vpow.pop %v784
  %v786 = vmul.f32 %v764, 1.442695
  %v787 = vpow.pop %v786
  %v788 = vmul.f32 %v765, 1.442695
  %v789 = vpow.pop %v788
  %v790 = vmul.f32 %v766, 1.442695
  %v791 = vpow.pop %v790
  %v792 = vmul.f32 %v767, 1.442695
  %v793 = vpow.pop %v792
  %v794 = vmul.f32 %v768, 1.442695
  %v795 = vpow.pop %v794
  %v796 = vmul.f32 %v769, 1.442695
  %v797 = vpow.pop %v796
  %v798 = vmul.f32 %v770, 1.442695
  %v799 = vpow.pop %v798
  %v800 = vmul.f32 %v771, 1.442695
  %v801 = vpow.pop %v800
  %v802 = vmul.f32 %v772, 1.442695
  %v803 = vpow.pop %v802
  %v804 = vmul.f32 %v773, 1.442695
  %v805 = vpow.pop %v804
  %806 = vadd.xlane.f32.xlu0 %v775
  %v807 = vpop.xlane.xlu0 %806
  %808 = vadd.xlane.f32.xlu0 %v777
  %v809 = vpop.xlane.xlu0 %808
  %810 = vadd.xlane.f32.xlu0 %v779
  %v811 = vpop.xlane.xlu0 %810
  %812 = vadd.xlane.f32.xlu0 %v781
  %v813 = vpop.xlane.xlu0 %812
  %814 = vadd.xlane.f32.xlu0 %v783
  %v815 = vpop.xlane.xlu0 %814
  %816 = vadd.xlane.f32.xlu0 %v785
  %v817 = vpop.xlane.xlu0 %816
  %818 = vadd.xlane.f32.xlu0 %v787
  %v819 = vpop.xlane.xlu0 %818
  %820 = vadd.xlane.f32.xlu0 %v789
  %v821 = vpop.xlane.xlu0 %820
  %822 = vadd.xlane.f32.xlu0 %v791
  %v823 = vpop.xlane.xlu0 %822
  %824 = vadd.xlane.f32.xlu0 %v793
  %v825 = vpop.xlane.xlu0 %824
  %826 = vadd.xlane.f32.xlu0 %v795
  %v827 = vpop.xlane.xlu0 %826
  %828 = vadd.xlane.f32.xlu0 %v797
  %v829 = vpop.xlane.xlu0 %828
  %830 = vadd.xlane.f32.xlu0 %v799
  %v831 = vpop.xlane.xlu0 %830
  %832 = vadd.xlane.f32.xlu0 %v801
  %v833 = vpop.xlane.xlu0 %832
  %834 = vadd.xlane.f32.xlu0 %v803
  %v835 = vpop.xlane.xlu0 %834
  %836 = vadd.xlane.f32.xlu0 %v805
  %v837 = vpop.xlane.xlu0 %836
  %v838 = vrcp.pop %v807
  %v839 = vrcp.pop %v809
  %v840 = vrcp.pop %v811
  %v841 = vrcp.pop %v813
  %v842 = vrcp.pop %v815
  %v843 = vrcp.pop %v817
  %v844 = vrcp.pop %v819
  %v845 = vrcp.pop %v821
  %v846 = vrcp.pop %v823
  %v847 = vrcp.pop %v825
  %v848 = vrcp.pop %v827
  %v849 = vrcp.pop %v829
  %v850 = vrcp.pop %v831
  %v851 = vrcp.pop %v833
  %v852 = vrcp.pop %v835
  %v853 = vrcp.pop %v837
  %v854 = vmul.f32 %v775, %v838
  %v855 = vmul.f32 %v777, %v839
  %v856 = vmul.f32 %v779, %v840
  %v857 = vmul.f32 %v781, %v841
  %v858 = vmul.f32 %v783, %v842
  %v859 = vmul.f32 %v785, %v843
  %v860 = vmul.f32 %v787, %v844
  %v861 = vmul.f32 %v789, %v845
  %v862 = vmul.f32 %v791, %v846
  %v863 = vmul.f32 %v793, %v847
  %v864 = vmul.f32 %v795, %v848
  %v865 = vmul.f32 %v797, %v849
  %v866 = vmul.f32 %v799, %v850
  %v867 = vmul.f32 %v801, %v851
  %v868 = vmul.f32 %v803, %v852
  %v869 = vmul.f32 %v805, %v853
  %v870 = vpack.c.bf16 %v855, %v854
  %v871 = vpack.c.bf16 %v857, %v856
  %v872 = vpack.c.bf16 %v859, %v858
  %v873 = vpack.c.bf16 %v861, %v860
  %v874 = vpack.c.bf16 %v863, %v862
  %v875 = vpack.c.bf16 %v865, %v864
  %v876 = vpack.c.bf16 %v867, %v866
  %v877 = vpack.c.bf16 %v869, %v868
  %878 = vrot.lane.b32.xlu0 %v580, 64
  %v879 = vpop.permute.xlu0 %878
  %880 = vrot.lane.b32.xlu0 %v581, 64
  %v881 = vpop.permute.xlu0 %880
  %882 = vrot.lane.b32.xlu0 %v582, 64
  %v883 = vpop.permute.xlu0 %882
  %884 = vrot.lane.b32.xlu0 %v583, 64
  %v885 = vpop.permute.xlu0 %884
  %886 = vrot.lane.b32.xlu0 %v584, 64
  %v887 = vpop.permute.xlu0 %886
  %888 = vrot.lane.b32.xlu0 %v585, 64
  %v889 = vpop.permute.xlu0 %888
  %890 = vrot.lane.b32.xlu0 %v586, 64
  %v891 = vpop.permute.xlu0 %890
  %892 = vrot.lane.b32.xlu0 %v587, 64
  %v893 = vpop.permute.xlu0 %892
  %902 = vmatpush.bf16.msra.mxu0 %v893
  %903 = vmatpush.bf16.msra.mxu0 %v891
  %904 = vmatpush.bf16.msra.mxu0 %v889
  %905 = vmatpush.bf16.msra.mxu0 %v887
  %906 = vmatpush.bf16.msra.mxu0 %v885
  %907 = vmatpush.bf16.msra.mxu0 %v883
  %908 = vmatpush.bf16.msra.mxu0 %v881
  %909 = vmatpush.bf16.msra.mxu0 %v879
  %910 = vmatmul.bf16.gmra.mxu0 %v870
  %v911 = vpop.f32.mrf.mxu0
  %v912 = vadd.f32 0.0, %v911
  %v913 = vpop.f32.mrf.mxu0
  %v914 = vadd.f32 0.0, %v913
  %915 = vmatmul.bf16.gmra.mxu0 %v871
  %v916 = vpop.f32.mrf.mxu0
  %v917 = vadd.f32 0.0, %v916
  %v918 = vpop.f32.mrf.mxu0
  %v919 = vadd.f32 0.0, %v918
  %920 = vmatmul.bf16.gmra.mxu0 %v872
  %v921 = vpop.f32.mrf.mxu0
  %v922 = vadd.f32 0.0, %v921
  %v923 = vpop.f32.mrf.mxu0
  %v924 = vadd.f32 0.0, %v923
  %925 = vmatmul.bf16.gmra.mxu0 %v873
  %v926 = vpop.f32.mrf.mxu0
  %v927 = vadd.f32 0.0, %v926
  %v928 = vpop.f32.mrf.mxu0
  %v929 = vadd.f32 0.0, %v928
  %930 = vmatmul.bf16.gmra.mxu0 %v874
  %v931 = vpop.f32.mrf.mxu0
  %v932 = vadd.f32 0.0, %v931
  %v933 = vpop.f32.mrf.mxu0
  %v934 = vadd.f32 0.0, %v933
  %935 = vmatmul.bf16.gmra.mxu0 %v875
  %v936 = vpop.f32.mrf.mxu0
  %v937 = vadd.f32 0.0, %v936
  %v938 = vpop.f32.mrf.mxu0
  %v939 = vadd.f32 0.0, %v938
  %940 = vmatmul.bf16.gmra.mxu0 %v876
  %v941 = vpop.f32.mrf.mxu0
  %v942 = vadd.f32 0.0, %v941
  %v943 = vpop.f32.mrf.mxu0
  %v944 = vadd.f32 0.0, %v943
  %945 = vmatmul.bf16.gmra.mxu0 %v877
  %v946 = vpop.f32.mrf.mxu0
  %v947 = vadd.f32 0.0, %v946
  %v948 = vpop.f32.mrf.mxu0
  %v949 = vadd.f32 0.0, %v948
  %950 = vdwg.mxu0
  %v951 = vpack.c.bf16 %v54, %v54
  %v952 = vpack.c.bf16 %v914, %v912
  %v953 = vpack.c.bf16 %v919, %v917
  %v954 = vpack.c.bf16 %v924, %v922
  %v955 = vpack.c.bf16 %v929, %v927
  %v956 = vpack.c.bf16 %v934, %v932
  %v957 = vpack.c.bf16 %v939, %v937
  %v958 = vpack.c.bf16 %v944, %v942
  %v959 = vpack.c.bf16 %v949, %v947
  %968 = vrot.lane.b32.xlu0 %v572, 120
  %v969 = vpop.permute.xlu0 %968
  %970 = vrot.lane.b32.xlu0 %v573, 120
  %v971 = vpop.permute.xlu0 %970
  %972 = vrot.lane.b32.xlu0 %v574, 120
  %v973 = vpop.permute.xlu0 %972
  %974 = vrot.lane.b32.xlu0 %v575, 120
  %v975 = vpop.permute.xlu0 %974
  %976 = vrot.lane.b32.xlu0 %v576, 120
  %v977 = vpop.permute.xlu0 %976
  %978 = vrot.lane.b32.xlu0 %v577, 120
  %v979 = vpop.permute.xlu0 %978
  %980 = vrot.lane.b32.xlu0 %v578, 120
  %v981 = vpop.permute.xlu0 %980
  %982 = vrot.lane.b32.xlu0 %v579, 120
  %v983 = vpop.permute.xlu0 %982
  %984 = vrot.lane.b32.xlu0 %v580, 88
  %v985 = vpop.permute.xlu0 %984
  %986 = vrot.lane.b32.xlu0 %v581, 88
  %v987 = vpop.permute.xlu0 %986
  %988 = vrot.lane.b32.xlu0 %v582, 88
  %v989 = vpop.permute.xlu0 %988
  %990 = vrot.lane.b32.xlu0 %v583, 88
  %v991 = vpop.permute.xlu0 %990
  %992 = vrot.lane.b32.xlu0 %v584, 88
  %v993 = vpop.permute.xlu0 %992
  %994 = vrot.lane.b32.xlu0 %v585, 88
  %v995 = vpop.permute.xlu0 %994
  %996 = vrot.lane.b32.xlu0 %v586, 88
  %v997 = vpop.permute.xlu0 %996
  %998 = vrot.lane.b32.xlu0 %v587, 88
  %v999 = vpop.permute.xlu0 %998
  %v1001 = vsel %vm628, %v969, 0
  %v1004 = vsel %vm628, %v971, 0
  %v1007 = vsel %vm628, %v973, 0
  %v1010 = vsel %vm628, %v975, 0
  %v1013 = vsel %vm628, %v977, 0
  %v1016 = vsel %vm628, %v979, 0
  %v1019 = vsel %vm628, %v981, 0
  %v1022 = vsel %vm628, %v983, 0
  %v1025 = vsel %vm628, %v985, 0
  %v1028 = vsel %vm628, %v987, 0
  %v1031 = vsel %vm628, %v989, 0
  %v1034 = vsel %vm628, %v991, 0
  %v1037 = vsel %vm628, %v993, 0
  %v1040 = vsel %vm628, %v995, 0
  %v1043 = vsel %vm628, %v997, 0
  %v1046 = vsel %vm628, %v999, 0
  %1048 = vmatpush.bf16.xpose.msra.mxu0 %v1046
  %1049 = vmatpush.bf16.xpose.msra.mxu0 %v1043
  %1050 = vmatpush.bf16.xpose.msra.mxu0 %v1040
  %1051 = vmatpush.bf16.xpose.msra.mxu0 %v1037
  %1052 = vmatpush.bf16.xpose.msra.mxu0 %v1034
  %1053 = vmatpush.bf16.xpose.msra.mxu0 %v1031
  %1054 = vmatpush.bf16.xpose.msra.mxu0 %v1028
  %1055 = vmatpush.bf16.xpose.msra.mxu0 %v1025
  %1056 = vmatmul.bf16.gmra.mxu0 %v1001
  %v1057 = vpop.f32.mrf.mxu0
  %v1058 = vadd.f32 %v588, %v1057
  %v1059 = vpop.f32.mrf.mxu0
  %v1060 = vadd.f32 %v589, %v1059
  %1061 = vmatmul.bf16.gmra.mxu0 %v1004
  %v1062 = vpop.f32.mrf.mxu0
  %v1063 = vadd.f32 %v590, %v1062
  %v1064 = vpop.f32.mrf.mxu0
  %v1065 = vadd.f32 %v591, %v1064
  %1066 = vmatmul.bf16.gmra.mxu0 %v1007
  %v1067 = vpop.f32.mrf.mxu0
  %v1068 = vadd.f32 %v592, %v1067
  %v1069 = vpop.f32.mrf.mxu0
  %v1070 = vadd.f32 %v593, %v1069
  %1071 = vmatmul.bf16.gmra.mxu0 %v1010
  %v1072 = vpop.f32.mrf.mxu0
  %v1073 = vadd.f32 %v594, %v1072
  %v1074 = vpop.f32.mrf.mxu0
  %v1075 = vadd.f32 %v595, %v1074
  %1076 = vmatmul.bf16.gmra.mxu0 %v1013
  %v1077 = vpop.f32.mrf.mxu0
  %v1078 = vadd.f32 %v596, %v1077
  %v1079 = vpop.f32.mrf.mxu0
  %v1080 = vadd.f32 %v597, %v1079
  %1081 = vmatmul.bf16.gmra.mxu0 %v1016
  %v1082 = vpop.f32.mrf.mxu0
  %v1083 = vadd.f32 %v598, %v1082
  %v1084 = vpop.f32.mrf.mxu0
  %v1085 = vadd.f32 %v599, %v1084
  %1086 = vmatmul.bf16.gmra.mxu0 %v1019
  %v1087 = vpop.f32.mrf.mxu0
  %v1088 = vadd.f32 %v600, %v1087
  %v1089 = vpop.f32.mrf.mxu0
  %v1090 = vadd.f32 %v601, %v1089
  %1091 = vmatmul.bf16.gmra.mxu0 %v1022
  %v1092 = vpop.f32.mrf.mxu0
  %v1093 = vadd.f32 %v602, %v1092
  %v1094 = vpop.f32.mrf.mxu0
  %v1095 = vadd.f32 %v603, %v1094
  %1096 = vdwg.mxu0
  %1097 = vmax.xlane.f32.xlu0 %v1058
  %v1098 = vpop.xlane.xlu0 %1097
  %1099 = vmax.xlane.f32.xlu0 %v1060
  %v1100 = vpop.xlane.xlu0 %1099
  %1101 = vmax.xlane.f32.xlu0 %v1063
  %v1102 = vpop.xlane.xlu0 %1101
  %1103 = vmax.xlane.f32.xlu0 %v1065
  %v1104 = vpop.xlane.xlu0 %1103
  %1105 = vmax.xlane.f32.xlu0 %v1068
  %v1106 = vpop.xlane.xlu0 %1105
  %1107 = vmax.xlane.f32.xlu0 %v1070
  %v1108 = vpop.xlane.xlu0 %1107
  %1109 = vmax.xlane.f32.xlu0 %v1073
  %v1110 = vpop.xlane.xlu0 %1109
  %1111 = vmax.xlane.f32.xlu0 %v1075
  %v1112 = vpop.xlane.xlu0 %1111
  %1113 = vmax.xlane.f32.xlu0 %v1078
  %v1114 = vpop.xlane.xlu0 %1113
  %1115 = vmax.xlane.f32.xlu0 %v1080
  %v1116 = vpop.xlane.xlu0 %1115
  %1117 = vmax.xlane.f32.xlu0 %v1083
  %v1118 = vpop.xlane.xlu0 %1117
  %1119 = vmax.xlane.f32.xlu0 %v1085
  %v1120 = vpop.xlane.xlu0 %1119
  %1121 = vmax.xlane.f32.xlu0 %v1088
  %v1122 = vpop.xlane.xlu0 %1121
  %1123 = vmax.xlane.f32.xlu0 %v1090
  %v1124 = vpop.xlane.xlu0 %1123
  %1125 = vmax.xlane.f32.xlu0 %v1093
  %v1126 = vpop.xlane.xlu0 %1125
  %1127 = vmax.xlane.f32.xlu0 %v1095
  %v1128 = vpop.xlane.xlu0 %1127
  %v1129 = vsub.f32 %v1058, %v1098
  %v1130 = vsub.f32 %v1060, %v1100
  %v1131 = vsub.f32 %v1063, %v1102
  %v1132 = vsub.f32 %v1065, %v1104
  %v1133 = vsub.f32 %v1068, %v1106
  %v1134 = vsub.f32 %v1070, %v1108
  %v1135 = vsub.f32 %v1073, %v1110
  %v1136 = vsub.f32 %v1075, %v1112
  %v1137 = vsub.f32 %v1078, %v1114
  %v1138 = vsub.f32 %v1080, %v1116
  %v1139 = vsub.f32 %v1083, %v1118
  %v1140 = vsub.f32 %v1085, %v1120
  %v1141 = vsub.f32 %v1088, %v1122
  %v1142 = vsub.f32 %v1090, %v1124
  %v1143 = vsub.f32 %v1093, %v1126
  %v1144 = vsub.f32 %v1095, %v1128
  %v1145 = vmul.f32 %v1129, 1.442695
  %v1146 = vpow.pop %v1145
  %v1147 = vmul.f32 %v1130, 1.442695
  %v1148 = vpow.pop %v1147
  %v1149 = vmul.f32 %v1131, 1.442695
  %v1150 = vpow.pop %v1149
  %v1151 = vmul.f32 %v1132, 1.442695
  %v1152 = vpow.pop %v1151
  %v1153 = vmul.f32 %v1133, 1.442695
  %v1154 = vpow.pop %v1153
  %v1155 = vmul.f32 %v1134, 1.442695
  %v1156 = vpow.pop %v1155
  %v1157 = vmul.f32 %v1135, 1.442695
  %v1158 = vpow.pop %v1157
  %v1159 = vmul.f32 %v1136, 1.442695
  %v1160 = vpow.pop %v1159
  %v1161 = vmul.f32 %v1137, 1.442695
  %v1162 = vpow.pop %v1161
  %v1163 = vmul.f32 %v1138, 1.442695
  %v1164 = vpow.pop %v1163
  %v1165 = vmul.f32 %v1139, 1.442695
  %v1166 = vpow.pop %v1165
  %v1167 = vmul.f32 %v1140, 1.442695
  %v1168 = vpow.pop %v1167
  %v1169 = vmul.f32 %v1141, 1.442695
  %v1170 = vpow.pop %v1169
  %v1171 = vmul.f32 %v1142, 1.442695
  %v1172 = vpow.pop %v1171
  %v1173 = vmul.f32 %v1143, 1.442695
  %v1174 = vpow.pop %v1173
  %v1175 = vmul.f32 %v1144, 1.442695
  %v1176 = vpow.pop %v1175
  %1177 = vadd.xlane.f32.xlu0 %v1146
  %v1178 = vpop.xlane.xlu0 %1177
  %1179 = vadd.xlane.f32.xlu0 %v1148
  %v1180 = vpop.xlane.xlu0 %1179
  %1181 = vadd.xlane.f32.xlu0 %v1150
  %v1182 = vpop.xlane.xlu0 %1181
  %1183 = vadd.xlane.f32.xlu0 %v1152
  %v1184 = vpop.xlane.xlu0 %1183
  %1185 = vadd.xlane.f32.xlu0 %v1154
  %v1186 = vpop.xlane.xlu0 %1185
  %1187 = vadd.xlane.f32.xlu0 %v1156
  %v1188 = vpop.xlane.xlu0 %1187
  %1189 = vadd.xlane.f32.xlu0 %v1158
  %v1190 = vpop.xlane.xlu0 %1189
  %1191 = vadd.xlane.f32.xlu0 %v1160
  %v1192 = vpop.xlane.xlu0 %1191
  %1193 = vadd.xlane.f32.xlu0 %v1162
  %v1194 = vpop.xlane.xlu0 %1193
  %1195 = vadd.xlane.f32.xlu0 %v1164
  %v1196 = vpop.xlane.xlu0 %1195
  %1197 = vadd.xlane.f32.xlu0 %v1166
  %v1198 = vpop.xlane.xlu0 %1197
  %1199 = vadd.xlane.f32.xlu0 %v1168
  %v1200 = vpop.xlane.xlu0 %1199
  %1201 = vadd.xlane.f32.xlu0 %v1170
  %v1202 = vpop.xlane.xlu0 %1201
  %1203 = vadd.xlane.f32.xlu0 %v1172
  %v1204 = vpop.xlane.xlu0 %1203
  %1205 = vadd.xlane.f32.xlu0 %v1174
  %v1206 = vpop.xlane.xlu0 %1205
  %1207 = vadd.xlane.f32.xlu0 %v1176
  %v1208 = vpop.xlane.xlu0 %1207
  %v1209 = vrcp.pop %v1178
  %v1210 = vrcp.pop %v1180
  %v1211 = vrcp.pop %v1182
  %v1212 = vrcp.pop %v1184
  %v1213 = vrcp.pop %v1186
  %v1214 = vrcp.pop %v1188
  %v1215 = vrcp.pop %v1190
  %v1216 = vrcp.pop %v1192
  %v1217 = vrcp.pop %v1194
  %v1218 = vrcp.pop %v1196
  %v1219 = vrcp.pop %v1198
  %v1220 = vrcp.pop %v1200
  %v1221 = vrcp.pop %v1202
  %v1222 = vrcp.pop %v1204
  %v1223 = vrcp.pop %v1206
  %v1224 = vrcp.pop %v1208
  %v1225 = vmul.f32 %v1146, %v1209
  %v1226 = vmul.f32 %v1148, %v1210
  %v1227 = vmul.f32 %v1150, %v1211
  %v1228 = vmul.f32 %v1152, %v1212
  %v1229 = vmul.f32 %v1154, %v1213
  %v1230 = vmul.f32 %v1156, %v1214
  %v1231 = vmul.f32 %v1158, %v1215
  %v1232 = vmul.f32 %v1160, %v1216
  %v1233 = vmul.f32 %v1162, %v1217
  %v1234 = vmul.f32 %v1164, %v1218
  %v1235 = vmul.f32 %v1166, %v1219
  %v1236 = vmul.f32 %v1168, %v1220
  %v1237 = vmul.f32 %v1170, %v1221
  %v1238 = vmul.f32 %v1172, %v1222
  %v1239 = vmul.f32 %v1174, %v1223
  %v1240 = vmul.f32 %v1176, %v1224
  %v1241 = vpack.c.bf16 %v1226, %v1225
  %v1242 = vpack.c.bf16 %v1228, %v1227
  %v1243 = vpack.c.bf16 %v1230, %v1229
  %v1244 = vpack.c.bf16 %v1232, %v1231
  %v1245 = vpack.c.bf16 %v1234, %v1233
  %v1246 = vpack.c.bf16 %v1236, %v1235
  %v1247 = vpack.c.bf16 %v1238, %v1237
  %v1248 = vpack.c.bf16 %v1240, %v1239
  %1249 = vrot.lane.b32.xlu0 %v580, 56
  %v1250 = vpop.permute.xlu0 %1249
  %1251 = vrot.lane.b32.xlu0 %v581, 56
  %v1252 = vpop.permute.xlu0 %1251
  %1253 = vrot.lane.b32.xlu0 %v582, 56
  %v1254 = vpop.permute.xlu0 %1253
  %1255 = vrot.lane.b32.xlu0 %v583, 56
  %v1256 = vpop.permute.xlu0 %1255
  %1257 = vrot.lane.b32.xlu0 %v584, 56
  %v1258 = vpop.permute.xlu0 %1257
  %1259 = vrot.lane.b32.xlu0 %v585, 56
  %v1260 = vpop.permute.xlu0 %1259
  %1261 = vrot.lane.b32.xlu0 %v586, 56
  %v1262 = vpop.permute.xlu0 %1261
  %1263 = vrot.lane.b32.xlu0 %v587, 56
  %v1264 = vpop.permute.xlu0 %1263
  %1273 = vmatpush.bf16.msra.mxu0 %v1264
  %1274 = vmatpush.bf16.msra.mxu0 %v1262
  %1275 = vmatpush.bf16.msra.mxu0 %v1260
  %1276 = vmatpush.bf16.msra.mxu0 %v1258
  %1277 = vmatpush.bf16.msra.mxu0 %v1256
  %1278 = vmatpush.bf16.msra.mxu0 %v1254
  %1279 = vmatpush.bf16.msra.mxu0 %v1252
  %1280 = vmatpush.bf16.msra.mxu0 %v1250
  %1281 = vmatmul.bf16.gmra.mxu0 %v1241
  %v1282 = vpop.f32.mrf.mxu0
  %v1283 = vadd.f32 0.0, %v1282
  %v1284 = vpop.f32.mrf.mxu0
  %v1285 = vadd.f32 0.0, %v1284
  %1286 = vmatmul.bf16.gmra.mxu0 %v1242
  %v1287 = vpop.f32.mrf.mxu0
  %v1288 = vadd.f32 0.0, %v1287
  %v1289 = vpop.f32.mrf.mxu0
  %v1290 = vadd.f32 0.0, %v1289
  %1291 = vmatmul.bf16.gmra.mxu0 %v1243
  %v1292 = vpop.f32.mrf.mxu0
  %v1293 = vadd.f32 0.0, %v1292
  %v1294 = vpop.f32.mrf.mxu0
  %v1295 = vadd.f32 0.0, %v1294
  %1296 = vmatmul.bf16.gmra.mxu0 %v1244
  %v1297 = vpop.f32.mrf.mxu0
  %v1298 = vadd.f32 0.0, %v1297
  %v1299 = vpop.f32.mrf.mxu0
  %v1300 = vadd.f32 0.0, %v1299
  %1301 = vmatmul.bf16.gmra.mxu0 %v1245
  %v1302 = vpop.f32.mrf.mxu0
  %v1303 = vadd.f32 0.0, %v1302
  %v1304 = vpop.f32.mrf.mxu0
  %v1305 = vadd.f32 0.0, %v1304
  %1306 = vmatmul.bf16.gmra.mxu0 %v1246
  %v1307 = vpop.f32.mrf.mxu0
  %v1308 = vadd.f32 0.0, %v1307
  %v1309 = vpop.f32.mrf.mxu0
  %v1310 = vadd.f32 0.0, %v1309
  %1311 = vmatmul.bf16.gmra.mxu0 %v1247
  %v1312 = vpop.f32.mrf.mxu0
  %v1313 = vadd.f32 0.0, %v1312
  %v1314 = vpop.f32.mrf.mxu0
  %v1315 = vadd.f32 0.0, %v1314
  %1316 = vmatmul.bf16.gmra.mxu0 %v1248
  %v1317 = vpop.f32.mrf.mxu0
  %v1318 = vadd.f32 0.0, %v1317
  %v1319 = vpop.f32.mrf.mxu0
  %v1320 = vadd.f32 0.0, %v1319
  %1321 = vdwg.mxu0
  %v1322 = vpack.c.bf16 %v56, %v56
  %v1323 = vpack.c.bf16 %v1285, %v1283
  %v1324 = vpack.c.bf16 %v1290, %v1288
  %v1325 = vpack.c.bf16 %v1295, %v1293
  %v1326 = vpack.c.bf16 %v1300, %v1298
  %v1327 = vpack.c.bf16 %v1305, %v1303
  %v1328 = vpack.c.bf16 %v1310, %v1308
  %v1329 = vpack.c.bf16 %v1315, %v1313
  %v1330 = vpack.c.bf16 %v1320, %v1318
  %1332 = vrot.lane.b32.xlu0 %v1322, 32
  %v1333 = vpop.permute.xlu0 %1332
  %v1335 = vsel %vm628, %v1323, 0
  %v1338 = vsel %vm628, %v1324, 0
  %v1341 = vsel %vm628, %v1325, 0
  %v1344 = vsel %vm628, %v1326, 0
  %v1347 = vsel %vm628, %v1327, 0
  %v1350 = vsel %vm628, %v1328, 0
  %v1353 = vsel %vm628, %v1329, 0
  %v1356 = vsel %vm628, %v1330, 0
  %vm1358 = vcmask 1043456
  %v1360 = vsel %vm1358, %v1333, 0
  %1362 = vmatpush.bf16.msra.mxu0 0
  %1363 = vmatpush.bf16.msra.mxu0 0
  %1364 = vmatpush.bf16.msra.mxu0 0
  %1365 = vmatpush.bf16.msra.mxu0 0
  %1366 = vmatpush.bf16.msra.mxu0 0
  %1367 = vmatpush.bf16.msra.mxu0 0
  %1368 = vmatpush.bf16.msra.mxu0 0
  %1369 = vmatpush.bf16.msra.mxu0 %v1360
  %1370 = vmatmul.bf16.gmra.mxu0 %v1335
  %v1371 = vpop.f32.mrf.mxu0
  %v1372 = vadd.f32 0.0, %v1371
  %v1373 = vpop.f32.mrf.mxu0
  %v1374 = vadd.f32 0.0, %v1373
  %1375 = vmatmul.bf16.gmra.mxu0 %v1338
  %v1376 = vpop.f32.mrf.mxu0
  %v1377 = vadd.f32 0.0, %v1376
  %v1378 = vpop.f32.mrf.mxu0
  %v1379 = vadd.f32 0.0, %v1378
  %1380 = vmatmul.bf16.gmra.mxu0 %v1341
  %v1381 = vpop.f32.mrf.mxu0
  %v1382 = vadd.f32 0.0, %v1381
  %v1383 = vpop.f32.mrf.mxu0
  %v1384 = vadd.f32 0.0, %v1383
  %1385 = vmatmul.bf16.gmra.mxu0 %v1344
  %v1386 = vpop.f32.mrf.mxu0
  %v1387 = vadd.f32 0.0, %v1386
  %v1388 = vpop.f32.mrf.mxu0
  %v1389 = vadd.f32 0.0, %v1388
  %1390 = vmatmul.bf16.gmra.mxu0 %v1347
  %v1391 = vpop.f32.mrf.mxu0
  %v1392 = vadd.f32 0.0, %v1391
  %v1393 = vpop.f32.mrf.mxu0
  %v1394 = vadd.f32 0.0, %v1393
  %1395 = vmatmul.bf16.gmra.mxu0 %v1350
  %v1396 = vpop.f32.mrf.mxu0
  %v1397 = vadd.f32 0.0, %v1396
  %v1398 = vpop.f32.mrf.mxu0
  %v1399 = vadd.f32 0.0, %v1398
  %1400 = vmatmul.bf16.gmra.mxu0 %v1353
  %v1401 = vpop.f32.mrf.mxu0
  %v1402 = vadd.f32 0.0, %v1401
  %v1403 = vpop.f32.mrf.mxu0
  %v1404 = vadd.f32 0.0, %v1403
  %1405 = vmatmul.bf16.gmra.mxu0 %v1356
  %v1406 = vpop.f32.mrf.mxu0
  %v1407 = vadd.f32 0.0, %v1406
  %v1408 = vpop.f32.mrf.mxu0
  %v1409 = vadd.f32 0.0, %v1408
  %1410 = vdwg.mxu0
  %1412 = vrot.lane.b32.xlu0 %v951, 32
  %v1413 = vpop.permute.xlu0 %1412
  %v1415 = vsel %vm628, %v952, 0
  %v1418 = vsel %vm628, %v953, 0
  %v1421 = vsel %vm628, %v954, 0
  %v1424 = vsel %vm628, %v955, 0
  %v1427 = vsel %vm628, %v956, 0
  %v1430 = vsel %vm628, %v957, 0
  %v1433 = vsel %vm628, %v958, 0
  %v1436 = vsel %vm628, %v959, 0
  %v1439 = vsel %vm1358, %v1413, 0
  %1441 = vmatpush.bf16.msra.mxu0 0
  %1442 = vmatpush.bf16.msra.mxu0 0
  %1443 = vmatpush.bf16.msra.mxu0 0
  %1444 = vmatpush.bf16.msra.mxu0 0
  %1445 = vmatpush.bf16.msra.mxu0 0
  %1446 = vmatpush.bf16.msra.mxu0 0
  %1447 = vmatpush.bf16.msra.mxu0 0
  %1448 = vmatpush.bf16.msra.mxu0 %v1439
  %1449 = vmatmul.bf16.gmra.mxu0 %v1415
  %v1450 = vpop.f32.mrf.mxu0
  %v1451 = vadd.f32 %v1372, %v1450
  %v1452 = vpop.f32.mrf.mxu0
  %v1453 = vadd.f32 %v1374, %v1452
  %1454 = vmatmul.bf16.gmra.mxu0 %v1418
  %v1455 = vpop.f32.mrf.mxu0
  %v1456 = vadd.f32 %v1377, %v1455
  %v1457 = vpop.f32.mrf.mxu0
  %v1458 = vadd.f32 %v1379, %v1457
  %1459 = vmatmul.bf16.gmra.mxu0 %v1421
  %v1460 = vpop.f32.mrf.mxu0
  %v1461 = vadd.f32 %v1382, %v1460
  %v1462 = vpop.f32.mrf.mxu0
  %v1463 = vadd.f32 %v1384, %v1462
  %1464 = vmatmul.bf16.gmra.mxu0 %v1424
  %v1465 = vpop.f32.mrf.mxu0
  %v1466 = vadd.f32 %v1387, %v1465
  %v1467 = vpop.f32.mrf.mxu0
  %v1468 = vadd.f32 %v1389, %v1467
  %1469 = vmatmul.bf16.gmra.mxu0 %v1427
  %v1470 = vpop.f32.mrf.mxu0
  %v1471 = vadd.f32 %v1392, %v1470
  %v1472 = vpop.f32.mrf.mxu0
  %v1473 = vadd.f32 %v1394, %v1472
  %1474 = vmatmul.bf16.gmra.mxu0 %v1430
  %v1475 = vpop.f32.mrf.mxu0
  %v1476 = vadd.f32 %v1397, %v1475
  %v1477 = vpop.f32.mrf.mxu0
  %v1478 = vadd.f32 %v1399, %v1477
  %1479 = vmatmul.bf16.gmra.mxu0 %v1433
  %v1480 = vpop.f32.mrf.mxu0
  %v1481 = vadd.f32 %v1402, %v1480
  %v1482 = vpop.f32.mrf.mxu0
  %v1483 = vadd.f32 %v1404, %v1482
  %1484 = vmatmul.bf16.gmra.mxu0 %v1436
  %v1485 = vpop.f32.mrf.mxu0
  %v1486 = vadd.f32 %v1407, %v1485
  %v1487 = vpop.f32.mrf.mxu0
  %v1488 = vadd.f32 %v1409, %v1487
  %1489 = vdwg.mxu0
  %1490 = vrot.lane.b32.xlu0 %v572, 112
  %v1491 = vpop.permute.xlu0 %1490
  %1492 = vrot.lane.b32.xlu0 %v573, 112
  %v1493 = vpop.permute.xlu0 %1492
  %1494 = vrot.lane.b32.xlu0 %v574, 112
  %v1495 = vpop.permute.xlu0 %1494
  %1496 = vrot.lane.b32.xlu0 %v575, 112
  %v1497 = vpop.permute.xlu0 %1496
  %1498 = vrot.lane.b32.xlu0 %v576, 112
  %v1499 = vpop.permute.xlu0 %1498
  %1500 = vrot.lane.b32.xlu0 %v577, 112
  %v1501 = vpop.permute.xlu0 %1500
  %1502 = vrot.lane.b32.xlu0 %v578, 112
  %v1503 = vpop.permute.xlu0 %1502
  %1504 = vrot.lane.b32.xlu0 %v579, 112
  %v1505 = vpop.permute.xlu0 %1504
  %1506 = vrot.lane.b32.xlu0 %v580, 80
  %v1507 = vpop.permute.xlu0 %1506
  %1508 = vrot.lane.b32.xlu0 %v581, 80
  %v1509 = vpop.permute.xlu0 %1508
  %1510 = vrot.lane.b32.xlu0 %v582, 80
  %v1511 = vpop.permute.xlu0 %1510
  %1512 = vrot.lane.b32.xlu0 %v583, 80
  %v1513 = vpop.permute.xlu0 %1512
  %1514 = vrot.lane.b32.xlu0 %v584, 80
  %v1515 = vpop.permute.xlu0 %1514
  %1516 = vrot.lane.b32.xlu0 %v585, 80
  %v1517 = vpop.permute.xlu0 %1516
  %1518 = vrot.lane.b32.xlu0 %v586, 80
  %v1519 = vpop.permute.xlu0 %1518
  %1520 = vrot.lane.b32.xlu0 %v587, 80
  %v1521 = vpop.permute.xlu0 %1520
  %v1523 = vsel %vm628, %v1491, 0
  %v1526 = vsel %vm628, %v1493, 0
  %v1529 = vsel %vm628, %v1495, 0
  %v1532 = vsel %vm628, %v1497, 0
  %v1535 = vsel %vm628, %v1499, 0
  %v1538 = vsel %vm628, %v1501, 0
  %v1541 = vsel %vm628, %v1503, 0
  %v1544 = vsel %vm628, %v1505, 0
  %v1547 = vsel %vm628, %v1507, 0
  %v1550 = vsel %vm628, %v1509, 0
  %v1553 = vsel %vm628, %v1511, 0
  %v1556 = vsel %vm628, %v1513, 0
  %v1559 = vsel %vm628, %v1515, 0
  %v1562 = vsel %vm628, %v1517, 0
  %v1565 = vsel %vm628, %v1519, 0
  %v1568 = vsel %vm628, %v1521, 0
  %1570 = vmatpush.bf16.xpose.msra.mxu0 %v1568
  %1571 = vmatpush.bf16.xpose.msra.mxu0 %v1565
  %1572 = vmatpush.bf16.xpose.msra.mxu0 %v1562
  %1573 = vmatpush.bf16.xpose.msra.mxu0 %v1559
  %1574 = vmatpush.bf16.xpose.msra.mxu0 %v1556
  %1575 = vmatpush.bf16.xpose.msra.mxu0 %v1553
  %1576 = vmatpush.bf16.xpose.msra.mxu0 %v1550
  %1577 = vmatpush.bf16.xpose.msra.mxu0 %v1547
  %1578 = vmatmul.bf16.gmra.mxu0 %v1523
  %v1579 = vpop.f32.mrf.mxu0
  %v1580 = vadd.f32 %v588, %v1579
  %v1581 = vpop.f32.mrf.mxu0
  %v1582 = vadd.f32 %v589, %v1581
  %1583 = vmatmul.bf16.gmra.mxu0 %v1526
  %v1584 = vpop.f32.mrf.mxu0
  %v1585 = vadd.f32 %v590, %v1584
  %v1586 = vpop.f32.mrf.mxu0
  %v1587 = vadd.f32 %v591, %v1586
  %1588 = vmatmul.bf16.gmra.mxu0 %v1529
  %v1589 = vpop.f32.mrf.mxu0
  %v1590 = vadd.f32 %v592, %v1589
  %v1591 = vpop.f32.mrf.mxu0
  %v1592 = vadd.f32 %v593, %v1591
  %1593 = vmatmul.bf16.gmra.mxu0 %v1532
  %v1594 = vpop.f32.mrf.mxu0
  %v1595 = vadd.f32 %v594, %v1594
  %v1596 = vpop.f32.mrf.mxu0
  %v1597 = vadd.f32 %v595, %v1596
  %1598 = vmatmul.bf16.gmra.mxu0 %v1535
  %v1599 = vpop.f32.mrf.mxu0
  %v1600 = vadd.f32 %v596, %v1599
  %v1601 = vpop.f32.mrf.mxu0
  %v1602 = vadd.f32 %v597, %v1601
  %1603 = vmatmul.bf16.gmra.mxu0 %v1538
  %v1604 = vpop.f32.mrf.mxu0
  %v1605 = vadd.f32 %v598, %v1604
  %v1606 = vpop.f32.mrf.mxu0
  %v1607 = vadd.f32 %v599, %v1606
  %1608 = vmatmul.bf16.gmra.mxu0 %v1541
  %v1609 = vpop.f32.mrf.mxu0
  %v1610 = vadd.f32 %v600, %v1609
  %v1611 = vpop.f32.mrf.mxu0
  %v1612 = vadd.f32 %v601, %v1611
  %1613 = vmatmul.bf16.gmra.mxu0 %v1544
  %v1614 = vpop.f32.mrf.mxu0
  %v1615 = vadd.f32 %v602, %v1614
  %v1616 = vpop.f32.mrf.mxu0
  %v1617 = vadd.f32 %v603, %v1616
  %1618 = vdwg.mxu0
  %1619 = vmax.xlane.f32.xlu0 %v1580
  %v1620 = vpop.xlane.xlu0 %1619
  %1621 = vmax.xlane.f32.xlu0 %v1582
  %v1622 = vpop.xlane.xlu0 %1621
  %1623 = vmax.xlane.f32.xlu0 %v1585
  %v1624 = vpop.xlane.xlu0 %1623
  %1625 = vmax.xlane.f32.xlu0 %v1587
  %v1626 = vpop.xlane.xlu0 %1625
  %1627 = vmax.xlane.f32.xlu0 %v1590
  %v1628 = vpop.xlane.xlu0 %1627
  %1629 = vmax.xlane.f32.xlu0 %v1592
  %v1630 = vpop.xlane.xlu0 %1629
  %1631 = vmax.xlane.f32.xlu0 %v1595
  %v1632 = vpop.xlane.xlu0 %1631
  %1633 = vmax.xlane.f32.xlu0 %v1597
  %v1634 = vpop.xlane.xlu0 %1633
  %1635 = vmax.xlane.f32.xlu0 %v1600
  %v1636 = vpop.xlane.xlu0 %1635
  %1637 = vmax.xlane.f32.xlu0 %v1602
  %v1638 = vpop.xlane.xlu0 %1637
  %1639 = vmax.xlane.f32.xlu0 %v1605
  %v1640 = vpop.xlane.xlu0 %1639
  %1641 = vmax.xlane.f32.xlu0 %v1607
  %v1642 = vpop.xlane.xlu0 %1641
  %1643 = vmax.xlane.f32.xlu0 %v1610
  %v1644 = vpop.xlane.xlu0 %1643
  %1645 = vmax.xlane.f32.xlu0 %v1612
  %v1646 = vpop.xlane.xlu0 %1645
  %1647 = vmax.xlane.f32.xlu0 %v1615
  %v1648 = vpop.xlane.xlu0 %1647
  %1649 = vmax.xlane.f32.xlu0 %v1617
  %v1650 = vpop.xlane.xlu0 %1649
  %v1651 = vsub.f32 %v1580, %v1620
  %v1652 = vsub.f32 %v1582, %v1622
  %v1653 = vsub.f32 %v1585, %v1624
  %v1654 = vsub.f32 %v1587, %v1626
  %v1655 = vsub.f32 %v1590, %v1628
  %v1656 = vsub.f32 %v1592, %v1630
  %v1657 = vsub.f32 %v1595, %v1632
  %v1658 = vsub.f32 %v1597, %v1634
  %v1659 = vsub.f32 %v1600, %v1636
  %v1660 = vsub.f32 %v1602, %v1638
  %v1661 = vsub.f32 %v1605, %v1640
  %v1662 = vsub.f32 %v1607, %v1642
  %v1663 = vsub.f32 %v1610, %v1644
  %v1664 = vsub.f32 %v1612, %v1646
  %v1665 = vsub.f32 %v1615, %v1648
  %v1666 = vsub.f32 %v1617, %v1650
  %v1667 = vmul.f32 %v1651, 1.442695
  %v1668 = vpow.pop %v1667
  %v1669 = vmul.f32 %v1652, 1.442695
  %v1670 = vpow.pop %v1669
  %v1671 = vmul.f32 %v1653, 1.442695
  %v1672 = vpow.pop %v1671
  %v1673 = vmul.f32 %v1654, 1.442695
  %v1674 = vpow.pop %v1673
  %v1675 = vmul.f32 %v1655, 1.442695
  %v1676 = vpow.pop %v1675
  %v1677 = vmul.f32 %v1656, 1.442695
  %v1678 = vpow.pop %v1677
  %v1679 = vmul.f32 %v1657, 1.442695
  %v1680 = vpow.pop %v1679
  %v1681 = vmul.f32 %v1658, 1.442695
  %v1682 = vpow.pop %v1681
  %v1683 = vmul.f32 %v1659, 1.442695
  %v1684 = vpow.pop %v1683
  %v1685 = vmul.f32 %v1660, 1.442695
  %v1686 = vpow.pop %v1685
  %v1687 = vmul.f32 %v1661, 1.442695
  %v1688 = vpow.pop %v1687
  %v1689 = vmul.f32 %v1662, 1.442695
  %v1690 = vpow.pop %v1689
  %v1691 = vmul.f32 %v1663, 1.442695
  %v1692 = vpow.pop %v1691
  %v1693 = vmul.f32 %v1664, 1.442695
  %v1694 = vpow.pop %v1693
  %v1695 = vmul.f32 %v1665, 1.442695
  %v1696 = vpow.pop %v1695
  %v1697 = vmul.f32 %v1666, 1.442695
  %v1698 = vpow.pop %v1697
  %1699 = vadd.xlane.f32.xlu0 %v1668
  %v1700 = vpop.xlane.xlu0 %1699
  %1701 = vadd.xlane.f32.xlu0 %v1670
  %v1702 = vpop.xlane.xlu0 %1701
  %1703 = vadd.xlane.f32.xlu0 %v1672
  %v1704 = vpop.xlane.xlu0 %1703
  %1705 = vadd.xlane.f32.xlu0 %v1674
  %v1706 = vpop.xlane.xlu0 %1705
  %1707 = vadd.xlane.f32.xlu0 %v1676
  %v1708 = vpop.xlane.xlu0 %1707
  %1709 = vadd.xlane.f32.xlu0 %v1678
  %v1710 = vpop.xlane.xlu0 %1709
  %1711 = vadd.xlane.f32.xlu0 %v1680
  %v1712 = vpop.xlane.xlu0 %1711
  %1713 = vadd.xlane.f32.xlu0 %v1682
  %v1714 = vpop.xlane.xlu0 %1713
  %1715 = vadd.xlane.f32.xlu0 %v1684
  %v1716 = vpop.xlane.xlu0 %1715
  %1717 = vadd.xlane.f32.xlu0 %v1686
  %v1718 = vpop.xlane.xlu0 %1717
  %1719 = vadd.xlane.f32.xlu0 %v1688
  %v1720 = vpop.xlane.xlu0 %1719
  %1721 = vadd.xlane.f32.xlu0 %v1690
  %v1722 = vpop.xlane.xlu0 %1721
  %1723 = vadd.xlane.f32.xlu0 %v1692
  %v1724 = vpop.xlane.xlu0 %1723
  %1725 = vadd.xlane.f32.xlu0 %v1694
  %v1726 = vpop.xlane.xlu0 %1725
  %1727 = vadd.xlane.f32.xlu0 %v1696
  %v1728 = vpop.xlane.xlu0 %1727
  %1729 = vadd.xlane.f32.xlu0 %v1698
  %v1730 = vpop.xlane.xlu0 %1729
  %v1731 = vrcp.pop %v1700
  %v1732 = vrcp.pop %v1702
  %v1733 = vrcp.pop %v1704
  %v1734 = vrcp.pop %v1706
  %v1735 = vrcp.pop %v1708
  %v1736 = vrcp.pop %v1710
  %v1737 = vrcp.pop %v1712
  %v1738 = vrcp.pop %v1714
  %v1739 = vrcp.pop %v1716
  %v1740 = vrcp.pop %v1718
  %v1741 = vrcp.pop %v1720
  %v1742 = vrcp.pop %v1722
  %v1743 = vrcp.pop %v1724
  %v1744 = vrcp.pop %v1726
  %v1745 = vrcp.pop %v1728
  %v1746 = vrcp.pop %v1730
  %v1747 = vmul.f32 %v1668, %v1731
  %v1748 = vmul.f32 %v1670, %v1732
  %v1749 = vmul.f32 %v1672, %v1733
  %v1750 = vmul.f32 %v1674, %v1734
  %v1751 = vmul.f32 %v1676, %v1735
  %v1752 = vmul.f32 %v1678, %v1736
  %v1753 = vmul.f32 %v1680, %v1737
  %v1754 = vmul.f32 %v1682, %v1738
  %v1755 = vmul.f32 %v1684, %v1739
  %v1756 = vmul.f32 %v1686, %v1740
  %v1757 = vmul.f32 %v1688, %v1741
  %v1758 = vmul.f32 %v1690, %v1742
  %v1759 = vmul.f32 %v1692, %v1743
  %v1760 = vmul.f32 %v1694, %v1744
  %v1761 = vmul.f32 %v1696, %v1745
  %v1762 = vmul.f32 %v1698, %v1746
  %v1763 = vpack.c.bf16 %v1748, %v1747
  %v1764 = vpack.c.bf16 %v1750, %v1749
  %v1765 = vpack.c.bf16 %v1752, %v1751
  %v1766 = vpack.c.bf16 %v1754, %v1753
  %v1767 = vpack.c.bf16 %v1756, %v1755
  %v1768 = vpack.c.bf16 %v1758, %v1757
  %v1769 = vpack.c.bf16 %v1760, %v1759
  %v1770 = vpack.c.bf16 %v1762, %v1761
  %1771 = vrot.lane.b32.xlu0 %v580, 48
  %v1772 = vpop.permute.xlu0 %1771
  %1773 = vrot.lane.b32.xlu0 %v581, 48
  %v1774 = vpop.permute.xlu0 %1773
  %1775 = vrot.lane.b32.xlu0 %v582, 48
  %v1776 = vpop.permute.xlu0 %1775
  %1777 = vrot.lane.b32.xlu0 %v583, 48
  %v1778 = vpop.permute.xlu0 %1777
  %1779 = vrot.lane.b32.xlu0 %v584, 48
  %v1780 = vpop.permute.xlu0 %1779
  %1781 = vrot.lane.b32.xlu0 %v585, 48
  %v1782 = vpop.permute.xlu0 %1781
  %1783 = vrot.lane.b32.xlu0 %v586, 48
  %v1784 = vpop.permute.xlu0 %1783
  %1785 = vrot.lane.b32.xlu0 %v587, 48
  %v1786 = vpop.permute.xlu0 %1785
  %1795 = vmatpush.bf16.msra.mxu0 %v1786
  %1796 = vmatpush.bf16.msra.mxu0 %v1784
  %1797 = vmatpush.bf16.msra.mxu0 %v1782
  %1798 = vmatpush.bf16.msra.mxu0 %v1780
  %1799 = vmatpush.bf16.msra.mxu0 %v1778
  %1800 = vmatpush.bf16.msra.mxu0 %v1776
  %1801 = vmatpush.bf16.msra.mxu0 %v1774
  %1802 = vmatpush.bf16.msra.mxu0 %v1772
  %1803 = vmatmul.bf16.gmra.mxu0 %v1763
  %v1804 = vpop.f32.mrf.mxu0
  %v1805 = vadd.f32 0.0, %v1804
  %v1806 = vpop.f32.mrf.mxu0
  %v1807 = vadd.f32 0.0, %v1806
  %1808 = vmatmul.bf16.gmra.mxu0 %v1764
  %v1809 = vpop.f32.mrf.mxu0
  %v1810 = vadd.f32 0.0, %v1809
  %v1811 = vpop.f32.mrf.mxu0
  %v1812 = vadd.f32 0.0, %v1811
  %1813 = vmatmul.bf16.gmra.mxu0 %v1765
  %v1814 = vpop.f32.mrf.mxu0
  %v1815 = vadd.f32 0.0, %v1814
  %v1816 = vpop.f32.mrf.mxu0
  %v1817 = vadd.f32 0.0, %v1816
  %1818 = vmatmul.bf16.gmra.mxu0 %v1766
  %v1819 = vpop.f32.mrf.mxu0
  %v1820 = vadd.f32 0.0, %v1819
  %v1821 = vpop.f32.mrf.mxu0
  %v1822 = vadd.f32 0.0, %v1821
  %1823 = vmatmul.bf16.gmra.mxu0 %v1767
  %v1824 = vpop.f32.mrf.mxu0
  %v1825 = vadd.f32 0.0, %v1824
  %v1826 = vpop.f32.mrf.mxu0
  %v1827 = vadd.f32 0.0, %v1826
  %1828 = vmatmul.bf16.gmra.mxu0 %v1768
  %v1829 = vpop.f32.mrf.mxu0
  %v1830 = vadd.f32 0.0, %v1829
  %v1831 = vpop.f32.mrf.mxu0
  %v1832 = vadd.f32 0.0, %v1831
  %1833 = vmatmul.bf16.gmra.mxu0 %v1769
  %v1834 = vpop.f32.mrf.mxu0
  %v1835 = vadd.f32 0.0, %v1834
  %v1836 = vpop.f32.mrf.mxu0
  %v1837 = vadd.f32 0.0, %v1836
  %1838 = vmatmul.bf16.gmra.mxu0 %v1770
  %v1839 = vpop.f32.mrf.mxu0
  %v1840 = vadd.f32 0.0, %v1839
  %v1841 = vpop.f32.mrf.mxu0
  %v1842 = vadd.f32 0.0, %v1841
  %1843 = vdwg.mxu0
  %v1844 = vpack.c.bf16 %v58, %v58
  %v1845 = vpack.c.bf16 %v1807, %v1805
  %v1846 = vpack.c.bf16 %v1812, %v1810
  %v1847 = vpack.c.bf16 %v1817, %v1815
  %v1848 = vpack.c.bf16 %v1822, %v1820
  %v1849 = vpack.c.bf16 %v1827, %v1825
  %v1850 = vpack.c.bf16 %v1832, %v1830
  %v1851 = vpack.c.bf16 %v1837, %v1835
  %v1852 = vpack.c.bf16 %v1842, %v1840
  %1854 = vrot.lane.b32.xlu0 %v1844, 32
  %v1855 = vpop.permute.xlu0 %1854
  %v1857 = vsel %vm628, %v1845, 0
  %v1860 = vsel %vm628, %v1846, 0
  %v1863 = vsel %vm628, %v1847, 0
  %v1866 = vsel %vm628, %v1848, 0
  %v1869 = vsel %vm628, %v1849, 0
  %v1872 = vsel %vm628, %v1850, 0
  %v1875 = vsel %vm628, %v1851, 0
  %v1878 = vsel %vm628, %v1852, 0
  %v1881 = vsel %vm1358, %v1855, 0
  %1883 = vmatpush.bf16.msra.mxu0 0
  %1884 = vmatpush.bf16.msra.mxu0 0
  %1885 = vmatpush.bf16.msra.mxu0 0
  %1886 = vmatpush.bf16.msra.mxu0 0
  %1887 = vmatpush.bf16.msra.mxu0 0
  %1888 = vmatpush.bf16.msra.mxu0 0
  %1889 = vmatpush.bf16.msra.mxu0 0
  %1890 = vmatpush.bf16.msra.mxu0 %v1881
  %1891 = vmatmul.bf16.gmra.mxu0 %v1857
  %v1892 = vpop.f32.mrf.mxu0
  %v1893 = vadd.f32 0.0, %v1892
  %v1894 = vpop.f32.mrf.mxu0
  %v1895 = vadd.f32 0.0, %v1894
  %1896 = vmatmul.bf16.gmra.mxu0 %v1860
  %v1897 = vpop.f32.mrf.mxu0
  %v1898 = vadd.f32 0.0, %v1897
  %v1899 = vpop.f32.mrf.mxu0
  %v1900 = vadd.f32 0.0, %v1899
  %1901 = vmatmul.bf16.gmra.mxu0 %v1863
  %v1902 = vpop.f32.mrf.mxu0
  %v1903 = vadd.f32 0.0, %v1902
  %v1904 = vpop.f32.mrf.mxu0
  %v1905 = vadd.f32 0.0, %v1904
  %1906 = vmatmul.bf16.gmra.mxu0 %v1866
  %v1907 = vpop.f32.mrf.mxu0
  %v1908 = vadd.f32 0.0, %v1907
  %v1909 = vpop.f32.mrf.mxu0
  %v1910 = vadd.f32 0.0, %v1909
  %1911 = vmatmul.bf16.gmra.mxu0 %v1869
  %v1912 = vpop.f32.mrf.mxu0
  %v1913 = vadd.f32 0.0, %v1912
  %v1914 = vpop.f32.mrf.mxu0
  %v1915 = vadd.f32 0.0, %v1914
  %1916 = vmatmul.bf16.gmra.mxu0 %v1872
  %v1917 = vpop.f32.mrf.mxu0
  %v1918 = vadd.f32 0.0, %v1917
  %v1919 = vpop.f32.mrf.mxu0
  %v1920 = vadd.f32 0.0, %v1919
  %1921 = vmatmul.bf16.gmra.mxu0 %v1875
  %v1922 = vpop.f32.mrf.mxu0
  %v1923 = vadd.f32 0.0, %v1922
  %v1924 = vpop.f32.mrf.mxu0
  %v1925 = vadd.f32 0.0, %v1924
  %1926 = vmatmul.bf16.gmra.mxu0 %v1878
  %v1927 = vpop.f32.mrf.mxu0
  %v1928 = vadd.f32 0.0, %v1927
  %v1929 = vpop.f32.mrf.mxu0
  %v1930 = vadd.f32 0.0, %v1929
  %1931 = vdwg.mxu0
  %v1932 = vadd.f32 %v1451, %v1893
  %v1933 = vadd.f32 %v1453, %v1895
  %v1934 = vadd.f32 %v1456, %v1898
  %v1935 = vadd.f32 %v1458, %v1900
  %v1936 = vadd.f32 %v1461, %v1903
  %v1937 = vadd.f32 %v1463, %v1905
  %v1938 = vadd.f32 %v1466, %v1908
  %v1939 = vadd.f32 %v1468, %v1910
  %v1940 = vadd.f32 %v1471, %v1913
  %v1941 = vadd.f32 %v1473, %v1915
  %v1942 = vadd.f32 %v1476, %v1918
  %v1943 = vadd.f32 %v1478, %v1920
  %v1944 = vadd.f32 %v1481, %v1923
  %v1945 = vadd.f32 %v1483, %v1925
  %v1946 = vadd.f32 %v1486, %v1928
  %v1947 = vadd.f32 %v1488, %v1930
  %1948 = vrot.lane.b32.xlu0 %v572, 104
  %v1949 = vpop.permute.xlu0 %1948
  %1950 = vrot.lane.b32.xlu0 %v573, 104
  %v1951 = vpop.permute.xlu0 %1950
  %1952 = vrot.lane.b32.xlu0 %v574, 104
  %v1953 = vpop.permute.xlu0 %1952
  %1954 = vrot.lane.b32.xlu0 %v575, 104
  %v1955 = vpop.permute.xlu0 %1954
  %1956 = vrot.lane.b32.xlu0 %v576, 104
  %v1957 = vpop.permute.xlu0 %1956
  %1958 = vrot.lane.b32.xlu0 %v577, 104
  %v1959 = vpop.permute.xlu0 %1958
  %1960 = vrot.lane.b32.xlu0 %v578, 104
  %v1961 = vpop.permute.xlu0 %1960
  %1962 = vrot.lane.b32.xlu0 %v579, 104
  %v1963 = vpop.permute.xlu0 %1962
  %1964 = vrot.lane.b32.xlu0 %v580, 72
  %v1965 = vpop.permute.xlu0 %1964
  %1966 = vrot.lane.b32.xlu0 %v581, 72
  %v1967 = vpop.permute.xlu0 %1966
  %1968 = vrot.lane.b32.xlu0 %v582, 72
  %v1969 = vpop.permute.xlu0 %1968
  %1970 = vrot.lane.b32.xlu0 %v583, 72
  %v1971 = vpop.permute.xlu0 %1970
  %1972 = vrot.lane.b32.xlu0 %v584, 72
  %v1973 = vpop.permute.xlu0 %1972
  %1974 = vrot.lane.b32.xlu0 %v585, 72
  %v1975 = vpop.permute.xlu0 %1974
  %1976 = vrot.lane.b32.xlu0 %v586, 72
  %v1977 = vpop.permute.xlu0 %1976
  %1978 = vrot.lane.b32.xlu0 %v587, 72
  %v1979 = vpop.permute.xlu0 %1978
  %v1981 = vsel %vm628, %v1949, 0
  %v1984 = vsel %vm628, %v1951, 0
  %v1987 = vsel %vm628, %v1953, 0
  %v1990 = vsel %vm628, %v1955, 0
  %v1993 = vsel %vm628, %v1957, 0
  %v1996 = vsel %vm628, %v1959, 0
  %v1999 = vsel %vm628, %v1961, 0
  %v2002 = vsel %vm628, %v1963, 0
  %v2005 = vsel %vm628, %v1965, 0
  %v2008 = vsel %vm628, %v1967, 0
  %v2011 = vsel %vm628, %v1969, 0
  %v2014 = vsel %vm628, %v1971, 0
  %v2017 = vsel %vm628, %v1973, 0
  %v2020 = vsel %vm628, %v1975, 0
  %v2023 = vsel %vm628, %v1977, 0
  %v2026 = vsel %vm628, %v1979, 0
  %2028 = vmatpush.bf16.xpose.msra.mxu0 %v2026
  %2029 = vmatpush.bf16.xpose.msra.mxu0 %v2023
  %2030 = vmatpush.bf16.xpose.msra.mxu0 %v2020
  %2031 = vmatpush.bf16.xpose.msra.mxu0 %v2017
  %2032 = vmatpush.bf16.xpose.msra.mxu0 %v2014
  %2033 = vmatpush.bf16.xpose.msra.mxu0 %v2011
  %2034 = vmatpush.bf16.xpose.msra.mxu0 %v2008
  %2035 = vmatpush.bf16.xpose.msra.mxu0 %v2005
  %2036 = vmatmul.bf16.gmra.mxu0 %v1981
  %v2037 = vpop.f32.mrf.mxu0
  %v2038 = vadd.f32 %v588, %v2037
  %v2039 = vpop.f32.mrf.mxu0
  %v2040 = vadd.f32 %v589, %v2039
  %2041 = vmatmul.bf16.gmra.mxu0 %v1984
  %v2042 = vpop.f32.mrf.mxu0
  %v2043 = vadd.f32 %v590, %v2042
  %v2044 = vpop.f32.mrf.mxu0
  %v2045 = vadd.f32 %v591, %v2044
  %2046 = vmatmul.bf16.gmra.mxu0 %v1987
  %v2047 = vpop.f32.mrf.mxu0
  %v2048 = vadd.f32 %v592, %v2047
  %v2049 = vpop.f32.mrf.mxu0
  %v2050 = vadd.f32 %v593, %v2049
  %2051 = vmatmul.bf16.gmra.mxu0 %v1990
  %v2052 = vpop.f32.mrf.mxu0
  %v2053 = vadd.f32 %v594, %v2052
  %v2054 = vpop.f32.mrf.mxu0
  %v2055 = vadd.f32 %v595, %v2054
  %2056 = vmatmul.bf16.gmra.mxu0 %v1993
  %v2057 = vpop.f32.mrf.mxu0
  %v2058 = vadd.f32 %v596, %v2057
  %v2059 = vpop.f32.mrf.mxu0
  %v2060 = vadd.f32 %v597, %v2059
  %2061 = vmatmul.bf16.gmra.mxu0 %v1996
  %v2062 = vpop.f32.mrf.mxu0
  %v2063 = vadd.f32 %v598, %v2062
  %v2064 = vpop.f32.mrf.mxu0
  %v2065 = vadd.f32 %v599, %v2064
  %2066 = vmatmul.bf16.gmra.mxu0 %v1999
  %v2067 = vpop.f32.mrf.mxu0
  %v2068 = vadd.f32 %v600, %v2067
  %v2069 = vpop.f32.mrf.mxu0
  %v2070 = vadd.f32 %v601, %v2069
  %2071 = vmatmul.bf16.gmra.mxu0 %v2002
  %v2072 = vpop.f32.mrf.mxu0
  %v2073 = vadd.f32 %v602, %v2072
  %v2074 = vpop.f32.mrf.mxu0
  %v2075 = vadd.f32 %v603, %v2074
  %2076 = vdwg.mxu0
  %2077 = vmax.xlane.f32.xlu0 %v2038
  %v2078 = vpop.xlane.xlu0 %2077
  %2079 = vmax.xlane.f32.xlu0 %v2040
  %v2080 = vpop.xlane.xlu0 %2079
  %2081 = vmax.xlane.f32.xlu0 %v2043
  %v2082 = vpop.xlane.xlu0 %2081
  %2083 = vmax.xlane.f32.xlu0 %v2045
  %v2084 = vpop.xlane.xlu0 %2083
  %2085 = vmax.xlane.f32.xlu0 %v2048
  %v2086 = vpop.xlane.xlu0 %2085
  %2087 = vmax.xlane.f32.xlu0 %v2050
  %v2088 = vpop.xlane.xlu0 %2087
  %2089 = vmax.xlane.f32.xlu0 %v2053
  %v2090 = vpop.xlane.xlu0 %2089
  %2091 = vmax.xlane.f32.xlu0 %v2055
  %v2092 = vpop.xlane.xlu0 %2091
  %2093 = vmax.xlane.f32.xlu0 %v2058
  %v2094 = vpop.xlane.xlu0 %2093
  %2095 = vmax.xlane.f32.xlu0 %v2060
  %v2096 = vpop.xlane.xlu0 %2095
  %2097 = vmax.xlane.f32.xlu0 %v2063
  %v2098 = vpop.xlane.xlu0 %2097
  %2099 = vmax.xlane.f32.xlu0 %v2065
  %v2100 = vpop.xlane.xlu0 %2099
  %2101 = vmax.xlane.f32.xlu0 %v2068
  %v2102 = vpop.xlane.xlu0 %2101
  %2103 = vmax.xlane.f32.xlu0 %v2070
  %v2104 = vpop.xlane.xlu0 %2103
  %2105 = vmax.xlane.f32.xlu0 %v2073
  %v2106 = vpop.xlane.xlu0 %2105
  %2107 = vmax.xlane.f32.xlu0 %v2075
  %v2108 = vpop.xlane.xlu0 %2107
  %v2109 = vsub.f32 %v2038, %v2078
  %v2110 = vsub.f32 %v2040, %v2080
  %v2111 = vsub.f32 %v2043, %v2082
  %v2112 = vsub.f32 %v2045, %v2084
  %v2113 = vsub.f32 %v2048, %v2086
  %v2114 = vsub.f32 %v2050, %v2088
  %v2115 = vsub.f32 %v2053, %v2090
  %v2116 = vsub.f32 %v2055, %v2092
  %v2117 = vsub.f32 %v2058, %v2094
  %v2118 = vsub.f32 %v2060, %v2096
  %v2119 = vsub.f32 %v2063, %v2098
  %v2120 = vsub.f32 %v2065, %v2100
  %v2121 = vsub.f32 %v2068, %v2102
  %v2122 = vsub.f32 %v2070, %v2104
  %v2123 = vsub.f32 %v2073, %v2106
  %v2124 = vsub.f32 %v2075, %v2108
  %v2125 = vmul.f32 %v2109, 1.442695
  %v2126 = vpow.pop %v2125
  %v2127 = vmul.f32 %v2110, 1.442695
  %v2128 = vpow.pop %v2127
  %v2129 = vmul.f32 %v2111, 1.442695
  %v2130 = vpow.pop %v2129
  %v2131 = vmul.f32 %v2112, 1.442695
  %v2132 = vpow.pop %v2131
  %v2133 = vmul.f32 %v2113, 1.442695
  %v2134 = vpow.pop %v2133
  %v2135 = vmul.f32 %v2114, 1.442695
  %v2136 = vpow.pop %v2135
  %v2137 = vmul.f32 %v2115, 1.442695
  %v2138 = vpow.pop %v2137
  %v2139 = vmul.f32 %v2116, 1.442695
  %v2140 = vpow.pop %v2139
  %v2141 = vmul.f32 %v2117, 1.442695
  %v2142 = vpow.pop %v2141
  %v2143 = vmul.f32 %v2118, 1.442695
  %v2144 = vpow.pop %v2143
  %v2145 = vmul.f32 %v2119, 1.442695
  %v2146 = vpow.pop %v2145
  %v2147 = vmul.f32 %v2120, 1.442695
  %v2148 = vpow.pop %v2147
  %v2149 = vmul.f32 %v2121, 1.442695
  %v2150 = vpow.pop %v2149
  %v2151 = vmul.f32 %v2122, 1.442695
  %v2152 = vpow.pop %v2151
  %v2153 = vmul.f32 %v2123, 1.442695
  %v2154 = vpow.pop %v2153
  %v2155 = vmul.f32 %v2124, 1.442695
  %v2156 = vpow.pop %v2155
  %2157 = vadd.xlane.f32.xlu0 %v2126
  %v2158 = vpop.xlane.xlu0 %2157
  %2159 = vadd.xlane.f32.xlu0 %v2128
  %v2160 = vpop.xlane.xlu0 %2159
  %2161 = vadd.xlane.f32.xlu0 %v2130
  %v2162 = vpop.xlane.xlu0 %2161
  %2163 = vadd.xlane.f32.xlu0 %v2132
  %v2164 = vpop.xlane.xlu0 %2163
  %2165 = vadd.xlane.f32.xlu0 %v2134
  %v2166 = vpop.xlane.xlu0 %2165
  %2167 = vadd.xlane.f32.xlu0 %v2136
  %v2168 = vpop.xlane.xlu0 %2167
  %2169 = vadd.xlane.f32.xlu0 %v2138
  %v2170 = vpop.xlane.xlu0 %2169
  %2171 = vadd.xlane.f32.xlu0 %v2140
  %v2172 = vpop.xlane.xlu0 %2171
  %2173 = vadd.xlane.f32.xlu0 %v2142
  %v2174 = vpop.xlane.xlu0 %2173
  %2175 = vadd.xlane.f32.xlu0 %v2144
  %v2176 = vpop.xlane.xlu0 %2175
  %2177 = vadd.xlane.f32.xlu0 %v2146
  %v2178 = vpop.xlane.xlu0 %2177
  %2179 = vadd.xlane.f32.xlu0 %v2148
  %v2180 = vpop.xlane.xlu0 %2179
  %2181 = vadd.xlane.f32.xlu0 %v2150
  %v2182 = vpop.xlane.xlu0 %2181
  %2183 = vadd.xlane.f32.xlu0 %v2152
  %v2184 = vpop.xlane.xlu0 %2183
  %2185 = vadd.xlane.f32.xlu0 %v2154
  %v2186 = vpop.xlane.xlu0 %2185
  %2187 = vadd.xlane.f32.xlu0 %v2156
  %v2188 = vpop.xlane.xlu0 %2187
  %v2189 = vrcp.pop %v2158
  %v2190 = vrcp.pop %v2160
  %v2191 = vrcp.pop %v2162
  %v2192 = vrcp.pop %v2164
  %v2193 = vrcp.pop %v2166
  %v2194 = vrcp.pop %v2168
  %v2195 = vrcp.pop %v2170
  %v2196 = vrcp.pop %v2172
  %v2197 = vrcp.pop %v2174
  %v2198 = vrcp.pop %v2176
  %v2199 = vrcp.pop %v2178
  %v2200 = vrcp.pop %v2180
  %v2201 = vrcp.pop %v2182
  %v2202 = vrcp.pop %v2184
  %v2203 = vrcp.pop %v2186
  %v2204 = vrcp.pop %v2188
  %v2205 = vmul.f32 %v2126, %v2189
  %v2206 = vmul.f32 %v2128, %v2190
  %v2207 = vmul.f32 %v2130, %v2191
  %v2208 = vmul.f32 %v2132, %v2192
  %v2209 = vmul.f32 %v2134, %v2193
  %v2210 = vmul.f32 %v2136, %v2194
  %v2211 = vmul.f32 %v2138, %v2195
  %v2212 = vmul.f32 %v2140, %v2196
  %v2213 = vmul.f32 %v2142, %v2197
  %v2214 = vmul.f32 %v2144, %v2198
  %v2215 = vmul.f32 %v2146, %v2199
  %v2216 = vmul.f32 %v2148, %v2200
  %v2217 = vmul.f32 %v2150, %v2201
  %v2218 = vmul.f32 %v2152, %v2202
  %v2219 = vmul.f32 %v2154, %v2203
  %v2220 = vmul.f32 %v2156, %v2204
  %v2221 = vpack.c.bf16 %v2206, %v2205
  %v2222 = vpack.c.bf16 %v2208, %v2207
  %v2223 = vpack.c.bf16 %v2210, %v2209
  %v2224 = vpack.c.bf16 %v2212, %v2211
  %v2225 = vpack.c.bf16 %v2214, %v2213
  %v2226 = vpack.c.bf16 %v2216, %v2215
  %v2227 = vpack.c.bf16 %v2218, %v2217
  %v2228 = vpack.c.bf16 %v2220, %v2219
  %2229 = vrot.lane.b32.xlu0 %v580, 40
  %v2230 = vpop.permute.xlu0 %2229
  %2231 = vrot.lane.b32.xlu0 %v581, 40
  %v2232 = vpop.permute.xlu0 %2231
  %2233 = vrot.lane.b32.xlu0 %v582, 40
  %v2234 = vpop.permute.xlu0 %2233
  %2235 = vrot.lane.b32.xlu0 %v583, 40
  %v2236 = vpop.permute.xlu0 %2235
  %2237 = vrot.lane.b32.xlu0 %v584, 40
  %v2238 = vpop.permute.xlu0 %2237
  %2239 = vrot.lane.b32.xlu0 %v585, 40
  %v2240 = vpop.permute.xlu0 %2239
  %2241 = vrot.lane.b32.xlu0 %v586, 40
  %v2242 = vpop.permute.xlu0 %2241
  %2243 = vrot.lane.b32.xlu0 %v587, 40
  %v2244 = vpop.permute.xlu0 %2243
  %2253 = vmatpush.bf16.msra.mxu0 %v2244
  %2254 = vmatpush.bf16.msra.mxu0 %v2242
  %2255 = vmatpush.bf16.msra.mxu0 %v2240
  %2256 = vmatpush.bf16.msra.mxu0 %v2238
  %2257 = vmatpush.bf16.msra.mxu0 %v2236
  %2258 = vmatpush.bf16.msra.mxu0 %v2234
  %2259 = vmatpush.bf16.msra.mxu0 %v2232
  %2260 = vmatpush.bf16.msra.mxu0 %v2230
  %2261 = vmatmul.bf16.gmra.mxu0 %v2221
  %v2262 = vpop.f32.mrf.mxu0
  %v2263 = vadd.f32 0.0, %v2262
  %v2264 = vpop.f32.mrf.mxu0
  %v2265 = vadd.f32 0.0, %v2264
  %2266 = vmatmul.bf16.gmra.mxu0 %v2222
  %v2267 = vpop.f32.mrf.mxu0
  %v2268 = vadd.f32 0.0, %v2267
  %v2269 = vpop.f32.mrf.mxu0
  %v2270 = vadd.f32 0.0, %v2269
  %2271 = vmatmul.bf16.gmra.mxu0 %v2223
  %v2272 = vpop.f32.mrf.mxu0
  %v2273 = vadd.f32 0.0, %v2272
  %v2274 = vpop.f32.mrf.mxu0
  %v2275 = vadd.f32 0.0, %v2274
  %2276 = vmatmul.bf16.gmra.mxu0 %v2224
  %v2277 = vpop.f32.mrf.mxu0
  %v2278 = vadd.f32 0.0, %v2277
  %v2279 = vpop.f32.mrf.mxu0
  %v2280 = vadd.f32 0.0, %v2279
  %2281 = vmatmul.bf16.gmra.mxu0 %v2225
  %v2282 = vpop.f32.mrf.mxu0
  %v2283 = vadd.f32 0.0, %v2282
  %v2284 = vpop.f32.mrf.mxu0
  %v2285 = vadd.f32 0.0, %v2284
  %2286 = vmatmul.bf16.gmra.mxu0 %v2226
  %v2287 = vpop.f32.mrf.mxu0
  %v2288 = vadd.f32 0.0, %v2287
  %v2289 = vpop.f32.mrf.mxu0
  %v2290 = vadd.f32 0.0, %v2289
  %2291 = vmatmul.bf16.gmra.mxu0 %v2227
  %v2292 = vpop.f32.mrf.mxu0
  %v2293 = vadd.f32 0.0, %v2292
  %v2294 = vpop.f32.mrf.mxu0
  %v2295 = vadd.f32 0.0, %v2294
  %2296 = vmatmul.bf16.gmra.mxu0 %v2228
  %v2297 = vpop.f32.mrf.mxu0
  %v2298 = vadd.f32 0.0, %v2297
  %v2299 = vpop.f32.mrf.mxu0
  %v2300 = vadd.f32 0.0, %v2299
  %2301 = vdwg.mxu0
  %v2302 = vpack.c.bf16 %v60, %v60
  %v2303 = vpack.c.bf16 %v2265, %v2263
  %v2304 = vpack.c.bf16 %v2270, %v2268
  %v2305 = vpack.c.bf16 %v2275, %v2273
  %v2306 = vpack.c.bf16 %v2280, %v2278
  %v2307 = vpack.c.bf16 %v2285, %v2283
  %v2308 = vpack.c.bf16 %v2290, %v2288
  %v2309 = vpack.c.bf16 %v2295, %v2293
  %v2310 = vpack.c.bf16 %v2300, %v2298
  %2312 = vrot.lane.b32.xlu0 %v2302, 32
  %v2313 = vpop.permute.xlu0 %2312
  %v2315 = vsel %vm628, %v2303, 0
  %v2318 = vsel %vm628, %v2304, 0
  %v2321 = vsel %vm628, %v2305, 0
  %v2324 = vsel %vm628, %v2306, 0
  %v2327 = vsel %vm628, %v2307, 0
  %v2330 = vsel %vm628, %v2308, 0
  %v2333 = vsel %vm628, %v2309, 0
  %v2336 = vsel %vm628, %v2310, 0
  %v2339 = vsel %vm1358, %v2313, 0
  %2341 = vmatpush.bf16.msra.mxu0 0
  %2342 = vmatpush.bf16.msra.mxu0 0
  %2343 = vmatpush.bf16.msra.mxu0 0
  %2344 = vmatpush.bf16.msra.mxu0 0
  %2345 = vmatpush.bf16.msra.mxu0 0
  %2346 = vmatpush.bf16.msra.mxu0 0
  %2347 = vmatpush.bf16.msra.mxu0 0
  %2348 = vmatpush.bf16.msra.mxu0 %v2339
  %2349 = vmatmul.bf16.gmra.mxu0 %v2315
  %v2350 = vpop.f32.mrf.mxu0
  %v2351 = vadd.f32 0.0, %v2350
  %v2352 = vpop.f32.mrf.mxu0
  %v2353 = vadd.f32 0.0, %v2352
  %2354 = vmatmul.bf16.gmra.mxu0 %v2318
  %v2355 = vpop.f32.mrf.mxu0
  %v2356 = vadd.f32 0.0, %v2355
  %v2357 = vpop.f32.mrf.mxu0
  %v2358 = vadd.f32 0.0, %v2357
  %2359 = vmatmul.bf16.gmra.mxu0 %v2321
  %v2360 = vpop.f32.mrf.mxu0
  %v2361 = vadd.f32 0.0, %v2360
  %v2362 = vpop.f32.mrf.mxu0
  %v2363 = vadd.f32 0.0, %v2362
  %2364 = vmatmul.bf16.gmra.mxu0 %v2324
  %v2365 = vpop.f32.mrf.mxu0
  %v2366 = vadd.f32 0.0, %v2365
  %v2367 = vpop.f32.mrf.mxu0
  %v2368 = vadd.f32 0.0, %v2367
  %2369 = vmatmul.bf16.gmra.mxu0 %v2327
  %v2370 = vpop.f32.mrf.mxu0
  %v2371 = vadd.f32 0.0, %v2370
  %v2372 = vpop.f32.mrf.mxu0
  %v2373 = vadd.f32 0.0, %v2372
  %2374 = vmatmul.bf16.gmra.mxu0 %v2330
  %v2375 = vpop.f32.mrf.mxu0
  %v2376 = vadd.f32 0.0, %v2375
  %v2377 = vpop.f32.mrf.mxu0
  %v2378 = vadd.f32 0.0, %v2377
  %2379 = vmatmul.bf16.gmra.mxu0 %v2333
  %v2380 = vpop.f32.mrf.mxu0
  %v2381 = vadd.f32 0.0, %v2380
  %v2382 = vpop.f32.mrf.mxu0
  %v2383 = vadd.f32 0.0, %v2382
  %2384 = vmatmul.bf16.gmra.mxu0 %v2336
  %v2385 = vpop.f32.mrf.mxu0
  %v2386 = vadd.f32 0.0, %v2385
  %v2387 = vpop.f32.mrf.mxu0
  %v2388 = vadd.f32 0.0, %v2387
  %2389 = vdwg.mxu0
  %v2390 = vadd.f32 %v1932, %v2351
  %v2391 = vadd.f32 %v1933, %v2353
  %v2392 = vadd.f32 %v1934, %v2356
  %v2393 = vadd.f32 %v1935, %v2358
  %v2394 = vadd.f32 %v1936, %v2361
  %v2395 = vadd.f32 %v1937, %v2363
  %v2396 = vadd.f32 %v1938, %v2366
  %v2397 = vadd.f32 %v1939, %v2368
  %v2398 = vadd.f32 %v1940, %v2371
  %v2399 = vadd.f32 %v1941, %v2373
  %v2400 = vadd.f32 %v1942, %v2376
  %v2401 = vadd.f32 %v1943, %v2378
  %v2402 = vadd.f32 %v1944, %v2381
  %v2403 = vadd.f32 %v1945, %v2383
  %v2404 = vadd.f32 %v1946, %v2386
  %v2405 = vadd.f32 %v1947, %v2388
  %v2406 = vadd.f32 %v21, %v2390
  %v2407 = vadd.f32 %v22, %v2391
  %v2408 = vadd.f32 %v23, %v2392
  %v2409 = vadd.f32 %v24, %v2393
  %v2410 = vadd.f32 %v25, %v2394
  %v2411 = vadd.f32 %v26, %v2395
  %v2412 = vadd.f32 %v27, %v2396
  %v2413 = vadd.f32 %v28, %v2397
  %v2414 = vadd.f32 %v29, %v2398
  %v2415 = vadd.f32 %v30, %v2399
  %v2416 = vadd.f32 %v31, %v2400
  %v2417 = vadd.f32 %v32, %v2401
  %v2418 = vadd.f32 %v33, %v2402
  %v2419 = vadd.f32 %v34, %v2403
  %v2420 = vadd.f32 %v35, %v2404
  %v2421 = vadd.f32 %v36, %v2405
  %v2422 = vperm.slane %v53, 4
  %v2423 = vadd.f32 %v2406, %v2422
  %v2424 = vadd.f32 %v2407, %v2422
  %v2425 = vadd.f32 %v2408, %v2422
  %v2426 = vadd.f32 %v2409, %v2422
  %v2427 = vadd.f32 %v2410, %v2422
  %v2428 = vadd.f32 %v2411, %v2422
  %v2429 = vadd.f32 %v2412, %v2422
  %v2430 = vadd.f32 %v2413, %v2422
  %v2431 = vadd.f32 %v2414, %v2422
  %v2432 = vadd.f32 %v2415, %v2422
  %v2433 = vadd.f32 %v2416, %v2422
  %v2434 = vadd.f32 %v2417, %v2422
  %v2435 = vadd.f32 %v2418, %v2422
  %v2436 = vadd.f32 %v2419, %v2422
  %v2437 = vadd.f32 %v2420, %v2422
  %v2438 = vadd.f32 %v2421, %v2422
  %v2439 = vsel %vm78, %v2423, 0.0
  %2440 = vadd.xlane.f32.xlu0 %v2439
  %v2441 = vpop.xlane.xlu0 %2440
  %v2442 = vsel %vm78, %v2424, 0.0
  %2443 = vadd.xlane.f32.xlu0 %v2442
  %v2444 = vpop.xlane.xlu0 %2443
  %v2445 = vsel %vm78, %v2425, 0.0
  %2446 = vadd.xlane.f32.xlu0 %v2445
  %v2447 = vpop.xlane.xlu0 %2446
  %v2448 = vsel %vm78, %v2426, 0.0
  %2449 = vadd.xlane.f32.xlu0 %v2448
  %v2450 = vpop.xlane.xlu0 %2449
  %v2451 = vsel %vm78, %v2427, 0.0
  %2452 = vadd.xlane.f32.xlu0 %v2451
  %v2453 = vpop.xlane.xlu0 %2452
  %v2454 = vsel %vm78, %v2428, 0.0
  %2455 = vadd.xlane.f32.xlu0 %v2454
  %v2456 = vpop.xlane.xlu0 %2455
  %v2457 = vsel %vm78, %v2429, 0.0
  %2458 = vadd.xlane.f32.xlu0 %v2457
  %v2459 = vpop.xlane.xlu0 %2458
  %v2460 = vsel %vm78, %v2430, 0.0
  %2461 = vadd.xlane.f32.xlu0 %v2460
  %v2462 = vpop.xlane.xlu0 %2461
  %v2463 = vsel %vm78, %v2431, 0.0
  %2464 = vadd.xlane.f32.xlu0 %v2463
  %v2465 = vpop.xlane.xlu0 %2464
  %v2466 = vsel %vm78, %v2432, 0.0
  %2467 = vadd.xlane.f32.xlu0 %v2466
  %v2468 = vpop.xlane.xlu0 %2467
  %v2469 = vsel %vm78, %v2433, 0.0
  %2470 = vadd.xlane.f32.xlu0 %v2469
  %v2471 = vpop.xlane.xlu0 %2470
  %v2472 = vsel %vm78, %v2434, 0.0
  %2473 = vadd.xlane.f32.xlu0 %v2472
  %v2474 = vpop.xlane.xlu0 %2473
  %v2475 = vsel %vm78, %v2435, 0.0
  %2476 = vadd.xlane.f32.xlu0 %v2475
  %v2477 = vpop.xlane.xlu0 %2476
  %v2478 = vsel %vm78, %v2436, 0.0
  %2479 = vadd.xlane.f32.xlu0 %v2478
  %v2480 = vpop.xlane.xlu0 %2479
  %v2481 = vsel %vm78, %v2437, 0.0
  %2482 = vadd.xlane.f32.xlu0 %v2481
  %v2483 = vpop.xlane.xlu0 %2482
  %v2484 = vsel %vm78, %v2438, 0.0
  %2485 = vadd.xlane.f32.xlu0 %v2484
  %v2486 = vpop.xlane.xlu0 %2485
  %v2487 = vmul.f32 %v2441, %v133
  %v2488 = vmul.f32 %v2444, %v133
  %v2489 = vmul.f32 %v2447, %v133
  %v2490 = vmul.f32 %v2450, %v133
  %v2491 = vmul.f32 %v2453, %v133
  %v2492 = vmul.f32 %v2456, %v133
  %v2493 = vmul.f32 %v2459, %v133
  %v2494 = vmul.f32 %v2462, %v133
  %v2495 = vmul.f32 %v2465, %v133
  %v2496 = vmul.f32 %v2468, %v133
  %v2497 = vmul.f32 %v2471, %v133
  %v2498 = vmul.f32 %v2474, %v133
  %v2499 = vmul.f32 %v2477, %v133
  %v2500 = vmul.f32 %v2480, %v133
  %v2501 = vmul.f32 %v2483, %v133
  %v2502 = vmul.f32 %v2486, %v133
  %v2503 = vsub.f32 %v2423, %v2487
  %v2504 = vsub.f32 %v2424, %v2488
  %v2505 = vsub.f32 %v2425, %v2489
  %v2506 = vsub.f32 %v2426, %v2490
  %v2507 = vsub.f32 %v2427, %v2491
  %v2508 = vsub.f32 %v2428, %v2492
  %v2509 = vsub.f32 %v2429, %v2493
  %v2510 = vsub.f32 %v2430, %v2494
  %v2511 = vsub.f32 %v2431, %v2495
  %v2512 = vsub.f32 %v2432, %v2496
  %v2513 = vsub.f32 %v2433, %v2497
  %v2514 = vsub.f32 %v2434, %v2498
  %v2515 = vsub.f32 %v2435, %v2499
  %v2516 = vsub.f32 %v2436, %v2500
  %v2517 = vsub.f32 %v2437, %v2501
  %v2518 = vsub.f32 %v2438, %v2502
  %v2519 = vmul.f32 %v2503, %v2503
  %v2520 = vmul.f32 %v2504, %v2504
  %v2521 = vmul.f32 %v2505, %v2505
  %v2522 = vmul.f32 %v2506, %v2506
  %v2523 = vmul.f32 %v2507, %v2507
  %v2524 = vmul.f32 %v2508, %v2508
  %v2525 = vmul.f32 %v2509, %v2509
  %v2526 = vmul.f32 %v2510, %v2510
  %v2527 = vmul.f32 %v2511, %v2511
  %v2528 = vmul.f32 %v2512, %v2512
  %v2529 = vmul.f32 %v2513, %v2513
  %v2530 = vmul.f32 %v2514, %v2514
  %v2531 = vmul.f32 %v2515, %v2515
  %v2532 = vmul.f32 %v2516, %v2516
  %v2533 = vmul.f32 %v2517, %v2517
  %v2534 = vmul.f32 %v2518, %v2518
  %v2535 = vsel %vm78, %v2519, 0.0
  %2536 = vadd.xlane.f32.xlu0 %v2535
  %v2537 = vpop.xlane.xlu0 %2536
  %v2538 = vsel %vm78, %v2520, 0.0
  %2539 = vadd.xlane.f32.xlu0 %v2538
  %v2540 = vpop.xlane.xlu0 %2539
  %v2541 = vsel %vm78, %v2521, 0.0
  %2542 = vadd.xlane.f32.xlu0 %v2541
  %v2543 = vpop.xlane.xlu0 %2542
  %v2544 = vsel %vm78, %v2522, 0.0
  %2545 = vadd.xlane.f32.xlu0 %v2544
  %v2546 = vpop.xlane.xlu0 %2545
  %v2547 = vsel %vm78, %v2523, 0.0
  %2548 = vadd.xlane.f32.xlu0 %v2547
  %v2549 = vpop.xlane.xlu0 %2548
  %v2550 = vsel %vm78, %v2524, 0.0
  %2551 = vadd.xlane.f32.xlu0 %v2550
  %v2552 = vpop.xlane.xlu0 %2551
  %v2553 = vsel %vm78, %v2525, 0.0
  %2554 = vadd.xlane.f32.xlu0 %v2553
  %v2555 = vpop.xlane.xlu0 %2554
  %v2556 = vsel %vm78, %v2526, 0.0
  %2557 = vadd.xlane.f32.xlu0 %v2556
  %v2558 = vpop.xlane.xlu0 %2557
  %v2559 = vsel %vm78, %v2527, 0.0
  %2560 = vadd.xlane.f32.xlu0 %v2559
  %v2561 = vpop.xlane.xlu0 %2560
  %v2562 = vsel %vm78, %v2528, 0.0
  %2563 = vadd.xlane.f32.xlu0 %v2562
  %v2564 = vpop.xlane.xlu0 %2563
  %v2565 = vsel %vm78, %v2529, 0.0
  %2566 = vadd.xlane.f32.xlu0 %v2565
  %v2567 = vpop.xlane.xlu0 %2566
  %v2568 = vsel %vm78, %v2530, 0.0
  %2569 = vadd.xlane.f32.xlu0 %v2568
  %v2570 = vpop.xlane.xlu0 %2569
  %v2571 = vsel %vm78, %v2531, 0.0
  %2572 = vadd.xlane.f32.xlu0 %v2571
  %v2573 = vpop.xlane.xlu0 %2572
  %v2574 = vsel %vm78, %v2532, 0.0
  %2575 = vadd.xlane.f32.xlu0 %v2574
  %v2576 = vpop.xlane.xlu0 %2575
  %v2577 = vsel %vm78, %v2533, 0.0
  %2578 = vadd.xlane.f32.xlu0 %v2577
  %v2579 = vpop.xlane.xlu0 %2578
  %v2580 = vsel %vm78, %v2534, 0.0
  %2581 = vadd.xlane.f32.xlu0 %v2580
  %v2582 = vpop.xlane.xlu0 %2581
  %v2583 = vmul.f32 %v2537, %v133
  %v2584 = vmul.f32 %v2540, %v133
  %v2585 = vmul.f32 %v2543, %v133
  %v2586 = vmul.f32 %v2546, %v133
  %v2587 = vmul.f32 %v2549, %v133
  %v2588 = vmul.f32 %v2552, %v133
  %v2589 = vmul.f32 %v2555, %v133
  %v2590 = vmul.f32 %v2558, %v133
  %v2591 = vmul.f32 %v2561, %v133
  %v2592 = vmul.f32 %v2564, %v133
  %v2593 = vmul.f32 %v2567, %v133
  %v2594 = vmul.f32 %v2570, %v133
  %v2595 = vmul.f32 %v2573, %v133
  %v2596 = vmul.f32 %v2576, %v133
  %v2597 = vmul.f32 %v2579, %v133
  %v2598 = vmul.f32 %v2582, %v133
  %v2599 = vadd.f32 %v2583, 1e-05
  %v2600 = vadd.f32 %v2584, 1e-05
  %v2601 = vadd.f32 %v2585, 1e-05
  %v2602 = vadd.f32 %v2586, 1e-05
  %v2603 = vadd.f32 %v2587, 1e-05
  %v2604 = vadd.f32 %v2588, 1e-05
  %v2605 = vadd.f32 %v2589, 1e-05
  %v2606 = vadd.f32 %v2590, 1e-05
  %v2607 = vadd.f32 %v2591, 1e-05
  %v2608 = vadd.f32 %v2592, 1e-05
  %v2609 = vadd.f32 %v2593, 1e-05
  %v2610 = vadd.f32 %v2594, 1e-05
  %v2611 = vadd.f32 %v2595, 1e-05
  %v2612 = vadd.f32 %v2596, 1e-05
  %v2613 = vadd.f32 %v2597, 1e-05
  %v2614 = vadd.f32 %v2598, 1e-05
  %v2615 = vrsqrt.pop %v2599
  %v2616 = vmul.f32 %v2615, %v2599
  %v2617 = vmul.f32 %v2616, %v2615
  %v2618 = vmul.f32 0.5, %v2617
  %v2619 = vsub.f32 1.5, %v2618
  %v2620 = vmul.f32 %v2615, %v2619
  %vm2621 = vweird.f32 %v2599
  %vm2622 = vweird.f32 %v2615
  %vm2623 = vmor %vm2621, %vm2622
  %v2624 = vsel %vm2623, %v2615, %v2620
  %v2625 = vrsqrt.pop %v2600
  %v2626 = vmul.f32 %v2625, %v2600
  %v2627 = vmul.f32 %v2626, %v2625
  %v2628 = vmul.f32 0.5, %v2627
  %v2629 = vsub.f32 1.5, %v2628
  %v2630 = vmul.f32 %v2625, %v2629
  %vm2631 = vweird.f32 %v2600
  %vm2632 = vweird.f32 %v2625
  %vm2633 = vmor %vm2631, %vm2632
  %v2634 = vsel %vm2633, %v2625, %v2630
  %v2635 = vrsqrt.pop %v2601
  %v2636 = vmul.f32 %v2635, %v2601
  %v2637 = vmul.f32 %v2636, %v2635
  %v2638 = vmul.f32 0.5, %v2637
  %v2639 = vsub.f32 1.5, %v2638
  %v2640 = vmul.f32 %v2635, %v2639
  %vm2641 = vweird.f32 %v2601
  %vm2642 = vweird.f32 %v2635
  %vm2643 = vmor %vm2641, %vm2642
  %v2644 = vsel %vm2643, %v2635, %v2640
  %v2645 = vrsqrt.pop %v2602
  %v2646 = vmul.f32 %v2645, %v2602
  %v2647 = vmul.f32 %v2646, %v2645
  %v2648 = vmul.f32 0.5, %v2647
  %v2649 = vsub.f32 1.5, %v2648
  %v2650 = vmul.f32 %v2645, %v2649
  %vm2651 = vweird.f32 %v2602
  %vm2652 = vweird.f32 %v2645
  %vm2653 = vmor %vm2651, %vm2652
  %v2654 = vsel %vm2653, %v2645, %v2650
  %v2655 = vrsqrt.pop %v2603
  %v2656 = vmul.f32 %v2655, %v2603
  %v2657 = vmul.f32 %v2656, %v2655
  %v2658 = vmul.f32 0.5, %v2657
  %v2659 = vsub.f32 1.5, %v2658
  %v2660 = vmul.f32 %v2655, %v2659
  %vm2661 = vweird.f32 %v2603
  %vm2662 = vweird.f32 %v2655
  %vm2663 = vmor %vm2661, %vm2662
  %v2664 = vsel %vm2663, %v2655, %v2660
  %v2665 = vrsqrt.pop %v2604
  %v2666 = vmul.f32 %v2665, %v2604
  %v2667 = vmul.f32 %v2666, %v2665
  %v2668 = vmul.f32 0.5, %v2667
  %v2669 = vsub.f32 1.5, %v2668
  %v2670 = vmul.f32 %v2665, %v2669
  %vm2671 = vweird.f32 %v2604
  %vm2672 = vweird.f32 %v2665
  %vm2673 = vmor %vm2671, %vm2672
  %v2674 = vsel %vm2673, %v2665, %v2670
  %v2675 = vrsqrt.pop %v2605
  %v2676 = vmul.f32 %v2675, %v2605
  %v2677 = vmul.f32 %v2676, %v2675
  %v2678 = vmul.f32 0.5, %v2677
  %v2679 = vsub.f32 1.5, %v2678
  %v2680 = vmul.f32 %v2675, %v2679
  %vm2681 = vweird.f32 %v2605
  %vm2682 = vweird.f32 %v2675
  %vm2683 = vmor %vm2681, %vm2682
  %v2684 = vsel %vm2683, %v2675, %v2680
  %v2685 = vrsqrt.pop %v2606
  %v2686 = vmul.f32 %v2685, %v2606
  %v2687 = vmul.f32 %v2686, %v2685
  %v2688 = vmul.f32 0.5, %v2687
  %v2689 = vsub.f32 1.5, %v2688
  %v2690 = vmul.f32 %v2685, %v2689
  %vm2691 = vweird.f32 %v2606
  %vm2692 = vweird.f32 %v2685
  %vm2693 = vmor %vm2691, %vm2692
  %v2694 = vsel %vm2693, %v2685, %v2690
  %v2695 = vrsqrt.pop %v2607
  %v2696 = vmul.f32 %v2695, %v2607
  %v2697 = vmul.f32 %v2696, %v2695
  %v2698 = vmul.f32 0.5, %v2697
  %v2699 = vsub.f32 1.5, %v2698
  %v2700 = vmul.f32 %v2695, %v2699
  %vm2701 = vweird.f32 %v2607
  %vm2702 = vweird.f32 %v2695
  %vm2703 = vmor %vm2701, %vm2702
  %v2704 = vsel %vm2703, %v2695, %v2700
  %v2705 = vrsqrt.pop %v2608
  %v2706 = vmul.f32 %v2705, %v2608
  %v2707 = vmul.f32 %v2706, %v2705
  %v2708 = vmul.f32 0.5, %v2707
  %v2709 = vsub.f32 1.5, %v2708
  %v2710 = vmul.f32 %v2705, %v2709
  %vm2711 = vweird.f32 %v2608
  %vm2712 = vweird.f32 %v2705
  %vm2713 = vmor %vm2711, %vm2712
  %v2714 = vsel %vm2713, %v2705, %v2710
  %v2715 = vrsqrt.pop %v2609
  %v2716 = vmul.f32 %v2715, %v2609
  %v2717 = vmul.f32 %v2716, %v2715
  %v2718 = vmul.f32 0.5, %v2717
  %v2719 = vsub.f32 1.5, %v2718
  %v2720 = vmul.f32 %v2715, %v2719
  %vm2721 = vweird.f32 %v2609
  %vm2722 = vweird.f32 %v2715
  %vm2723 = vmor %vm2721, %vm2722
  %v2724 = vsel %vm2723, %v2715, %v2720
  %v2725 = vrsqrt.pop %v2610
  %v2726 = vmul.f32 %v2725, %v2610
  %v2727 = vmul.f32 %v2726, %v2725
  %v2728 = vmul.f32 0.5, %v2727
  %v2729 = vsub.f32 1.5, %v2728
  %v2730 = vmul.f32 %v2725, %v2729
  %vm2731 = vweird.f32 %v2610
  %vm2732 = vweird.f32 %v2725
  %vm2733 = vmor %vm2731, %vm2732
  %v2734 = vsel %vm2733, %v2725, %v2730
  %v2735 = vrsqrt.pop %v2611
  %v2736 = vmul.f32 %v2735, %v2611
  %v2737 = vmul.f32 %v2736, %v2735
  %v2738 = vmul.f32 0.5, %v2737
  %v2739 = vsub.f32 1.5, %v2738
  %v2740 = vmul.f32 %v2735, %v2739
  %vm2741 = vweird.f32 %v2611
  %vm2742 = vweird.f32 %v2735
  %vm2743 = vmor %vm2741, %vm2742
  %v2744 = vsel %vm2743, %v2735, %v2740
  %v2745 = vrsqrt.pop %v2612
  %v2746 = vmul.f32 %v2745, %v2612
  %v2747 = vmul.f32 %v2746, %v2745
  %v2748 = vmul.f32 0.5, %v2747
  %v2749 = vsub.f32 1.5, %v2748
  %v2750 = vmul.f32 %v2745, %v2749
  %vm2751 = vweird.f32 %v2612
  %vm2752 = vweird.f32 %v2745
  %vm2753 = vmor %vm2751, %vm2752
  %v2754 = vsel %vm2753, %v2745, %v2750
  %v2755 = vrsqrt.pop %v2613
  %v2756 = vmul.f32 %v2755, %v2613
  %v2757 = vmul.f32 %v2756, %v2755
  %v2758 = vmul.f32 0.5, %v2757
  %v2759 = vsub.f32 1.5, %v2758
  %v2760 = vmul.f32 %v2755, %v2759
  %vm2761 = vweird.f32 %v2613
  %vm2762 = vweird.f32 %v2755
  %vm2763 = vmor %vm2761, %vm2762
  %v2764 = vsel %vm2763, %v2755, %v2760
  %v2765 = vrsqrt.pop %v2614
  %v2766 = vmul.f32 %v2765, %v2614
  %v2767 = vmul.f32 %v2766, %v2765
  %v2768 = vmul.f32 0.5, %v2767
  %v2769 = vsub.f32 1.5, %v2768
  %v2770 = vmul.f32 %v2765, %v2769
  %vm2771 = vweird.f32 %v2614
  %vm2772 = vweird.f32 %v2765
  %vm2773 = vmor %vm2771, %vm2772
  %v2774 = vsel %vm2773, %v2765, %v2770
  %v2775 = vmul.f32 %v2503, %v2624
  %v2776 = vmul.f32 %v2504, %v2634
  %v2777 = vmul.f32 %v2505, %v2644
  %v2778 = vmul.f32 %v2506, %v2654
  %v2779 = vmul.f32 %v2507, %v2664
  %v2780 = vmul.f32 %v2508, %v2674
  %v2781 = vmul.f32 %v2509, %v2684
  %v2782 = vmul.f32 %v2510, %v2694
  %v2783 = vmul.f32 %v2511, %v2704
  %v2784 = vmul.f32 %v2512, %v2714
  %v2785 = vmul.f32 %v2513, %v2724
  %v2786 = vmul.f32 %v2514, %v2734
  %v2787 = vmul.f32 %v2515, %v2744
  %v2788 = vmul.f32 %v2516, %v2754
  %v2789 = vmul.f32 %v2517, %v2764
  %v2790 = vmul.f32 %v2518, %v2774
  %v2791 = vperm.slane %v53, 2
  %v2792 = vmul.f32 %v2775, %v2791
  %v2793 = vmul.f32 %v2776, %v2791
  %v2794 = vmul.f32 %v2777, %v2791
  %v2795 = vmul.f32 %v2778, %v2791
  %v2796 = vmul.f32 %v2779, %v2791
  %v2797 = vmul.f32 %v2780, %v2791
  %v2798 = vmul.f32 %v2781, %v2791
  %v2799 = vmul.f32 %v2782, %v2791
  %v2800 = vmul.f32 %v2783, %v2791
  %v2801 = vmul.f32 %v2784, %v2791
  %v2802 = vmul.f32 %v2785, %v2791
  %v2803 = vmul.f32 %v2786, %v2791
  %v2804 = vmul.f32 %v2787, %v2791
  %v2805 = vmul.f32 %v2788, %v2791
  %v2806 = vmul.f32 %v2789, %v2791
  %v2807 = vmul.f32 %v2790, %v2791
  %v2808 = vperm.slane %v53, 3
  %v2809 = vadd.f32 %v2792, %v2808
  %v2810 = vadd.f32 %v2793, %v2808
  %v2811 = vadd.f32 %v2794, %v2808
  %v2812 = vadd.f32 %v2795, %v2808
  %v2813 = vadd.f32 %v2796, %v2808
  %v2814 = vadd.f32 %v2797, %v2808
  %v2815 = vadd.f32 %v2798, %v2808
  %v2816 = vadd.f32 %v2799, %v2808
  %v2817 = vadd.f32 %v2800, %v2808
  %v2818 = vadd.f32 %v2801, %v2808
  %v2819 = vadd.f32 %v2802, %v2808
  %v2820 = vadd.f32 %v2803, %v2808
  %v2821 = vadd.f32 %v2804, %v2808
  %v2822 = vadd.f32 %v2805, %v2808
  %v2823 = vadd.f32 %v2806, %v2808
  %v2824 = vadd.f32 %v2807, %v2808
  %v2825 = vpack.c.bf16 %v2810, %v2809
  %v2826 = vpack.c.bf16 %v2812, %v2811
  %v2827 = vpack.c.bf16 %v2814, %v2813
  %v2828 = vpack.c.bf16 %v2816, %v2815
  %v2829 = vpack.c.bf16 %v2818, %v2817
  %v2830 = vpack.c.bf16 %v2820, %v2819
  %v2831 = vpack.c.bf16 %v2822, %v2821
  %v2832 = vpack.c.bf16 %v2824, %v2823
  %v2833 = vpack.c.bf16 %v57, %v55
  %v2834 = vpack.c.bf16 %v61, %v59
  %v2835 = vperm.slane %v53, 7
  %v2837 = vsel %vm78, %v2825, 0
  %v2840 = vsel %vm78, %v2826, 0
  %v2843 = vsel %vm78, %v2827, 0
  %v2846 = vsel %vm78, %v2828, 0
  %v2849 = vsel %vm78, %v2829, 0
  %v2852 = vsel %vm78, %v2830, 0
  %v2855 = vsel %vm78, %v2831, 0
  %v2858 = vsel %vm78, %v2832, 0
  %2860 = vmatpush.bf16.msra.mxu0 0
  %2861 = vmatpush.bf16.msra.mxu0 0
  %2862 = vmatpush.bf16.msra.mxu0 0
  %2863 = vmatpush.bf16.msra.mxu0 0
  %2864 = vmatpush.bf16.msra.mxu0 0
  %2865 = vmatpush.bf16.msra.mxu0 0
  %2866 = vmatpush.bf16.msra.mxu0 %v2834
  %2867 = vmatpush.bf16.msra.mxu0 %v2833
  %2868 = vmatmul.bf16.gmra.mxu0 %v2837
  %v2869 = vpop.f32.mrf.mxu0
  %v2870 = vadd.f32 %v2835, %v2869
  %v2871 = vpop.f32.mrf.mxu0
  %v2872 = vadd.f32 %v2835, %v2871
  %2873 = vmatmul.bf16.gmra.mxu0 %v2840
  %v2874 = vpop.f32.mrf.mxu0
  %v2875 = vadd.f32 %v2835, %v2874
  %v2876 = vpop.f32.mrf.mxu0
  %v2877 = vadd.f32 %v2835, %v2876
  %2878 = vmatmul.bf16.gmra.mxu0 %v2843
  %v2879 = vpop.f32.mrf.mxu0
  %v2880 = vadd.f32 %v2835, %v2879
  %v2881 = vpop.f32.mrf.mxu0
  %v2882 = vadd.f32 %v2835, %v2881
  %2883 = vmatmul.bf16.gmra.mxu0 %v2846
  %v2884 = vpop.f32.mrf.mxu0
  %v2885 = vadd.f32 %v2835, %v2884
  %v2886 = vpop.f32.mrf.mxu0
  %v2887 = vadd.f32 %v2835, %v2886
  %2888 = vmatmul.bf16.gmra.mxu0 %v2849
  %v2889 = vpop.f32.mrf.mxu0
  %v2890 = vadd.f32 %v2835, %v2889
  %v2891 = vpop.f32.mrf.mxu0
  %v2892 = vadd.f32 %v2835, %v2891
  %2893 = vmatmul.bf16.gmra.mxu0 %v2852
  %v2894 = vpop.f32.mrf.mxu0
  %v2895 = vadd.f32 %v2835, %v2894
  %v2896 = vpop.f32.mrf.mxu0
  %v2897 = vadd.f32 %v2835, %v2896
  %2898 = vmatmul.bf16.gmra.mxu0 %v2855
  %v2899 = vpop.f32.mrf.mxu0
  %v2900 = vadd.f32 %v2835, %v2899
  %v2901 = vpop.f32.mrf.mxu0
  %v2902 = vadd.f32 %v2835, %v2901
  %2903 = vmatmul.bf16.gmra.mxu0 %v2858
  %v2904 = vpop.f32.mrf.mxu0
  %v2905 = vadd.f32 %v2835, %v2904
  %v2906 = vpop.f32.mrf.mxu0
  %v2907 = vadd.f32 %v2835, %v2906
  %2908 = vdwg.mxu0
  %v2909 = vmul.f32 %v2870, 0.5
  %v2910 = vmul.f32 %v2872, 0.5
  %v2911 = vmul.f32 %v2875, 0.5
  %v2912 = vmul.f32 %v2877, 0.5
  %v2913 = vmul.f32 %v2880, 0.5
  %v2914 = vmul.f32 %v2882, 0.5
  %v2915 = vmul.f32 %v2885, 0.5
  %v2916 = vmul.f32 %v2887, 0.5
  %v2917 = vmul.f32 %v2890, 0.5
  %v2918 = vmul.f32 %v2892, 0.5
  %v2919 = vmul.f32 %v2895, 0.5
  %v2920 = vmul.f32 %v2897, 0.5
  %v2921 = vmul.f32 %v2900, 0.5
  %v2922 = vmul.f32 %v2902, 0.5
  %v2923 = vmul.f32 %v2905, 0.5
  %v2924 = vmul.f32 %v2907, 0.5
  %v2925 = vmul.f32 %v2870, 0.70710677
  %v2926 = vmul.f32 %v2872, 0.70710677
  %v2927 = vmul.f32 %v2875, 0.70710677
  %v2928 = vmul.f32 %v2877, 0.70710677
  %v2929 = vmul.f32 %v2880, 0.70710677
  %v2930 = vmul.f32 %v2882, 0.70710677
  %v2931 = vmul.f32 %v2885, 0.70710677
  %v2932 = vmul.f32 %v2887, 0.70710677
  %v2933 = vmul.f32 %v2890, 0.70710677
  %v2934 = vmul.f32 %v2892, 0.70710677
  %v2935 = vmul.f32 %v2895, 0.70710677
  %v2936 = vmul.f32 %v2897, 0.70710677
  %v2937 = vmul.f32 %v2900, 0.70710677
  %v2938 = vmul.f32 %v2902, 0.70710677
  %v2939 = vmul.f32 %v2905, 0.70710677
  %v2940 = vmul.f32 %v2907, 0.70710677
  %v2941 = vmul.f32 %v2925, %v2925
  %v2942 = vmin.f32 16.0, %v2941
  %v2943 = vmul.f32 %v2942, 2.1237322e-06
  %v2944 = vadd.f32 %v2943, 0.00028619796
  %v2945 = vmul.f32 %v2942, %v2944
  %v2946 = vadd.f32 %v2945, 0.0036580483
  %v2947 = vmul.f32 %v2942, %v2946
  %v2948 = vadd.f32 %v2947, 0.05243302
  %v2949 = vmul.f32 %v2942, %v2948
  %v2950 = vadd.f32 %v2949, 0.18741608
  %v2951 = vmul.f32 %v2942, %v2950
  %v2952 = vadd.f32 %v2951, 1.1283791
  %v2953 = vmul.f32 %v2925, %v2952
  %v2954 = vmul.f32 %v2942, 3.8918573e-05
  %v2955 = vadd.f32 %v2954, 0.001143296
  %v2956 = vmul.f32 %v2942, %v2955
  %v2957 = vadd.f32 %v2956, 0.014752088
  %v2958 = vmul.f32 %v2942, %v2957
  %v2959 = vadd.f32 %v2958, 0.112945676
  %v2960 = vmul.f32 %v2942, %v2959
  %v2961 = vadd.f32 %v2960, 0.4994258
  %v2962 = vmul.f32 %v2942, %v2961
  %v2963 = vadd.f32 %v2962, 1.0
  %v2964 = vrcp.pop %v2963
  %v2965 = vmul.f32 %v2963, %v2964
  %v2966 = vsub.f32 1.0, %v2965
  %v2967 = vmul.f32 %v2964, %v2966
  %v2968 = vadd.f32 %v2964, %v2967
  %vm2969 = vweird.f32 %v2963
  %vm2970 = vweird.f32 %v2964
  %vm2971 = vmor %vm2969, %vm2970
  %v2972 = vsel %vm2971, %v2964, %v2968
  %v2973 = vand.u32 2147483647, %v2963
  %vm2974 = vcmp.eq.f32.partialorder %v2973, 8.507059e+37
  %v2975 = vand.u32 %v2963, 2147483648
  %v2976 = vor.u32 1.1754944e-38, %v2975
  %v2977 = vsel %vm2974, %v2976, %v2972
  %v2978 = vmul.f32 %v2953, %v2977
  %v2979 = vmin.f32 %v2978, 1.0
  %v2980 = vmax.f32 %v2979, -1.0
  %v2981 = vmul.f32 %v2926, %v2926
  %v2982 = vmin.f32 16.0, %v2981
  %v2983 = vmul.f32 %v2982, 2.1237322e-06
  %v2984 = vadd.f32 %v2983, 0.00028619796
  %v2985 = vmul.f32 %v2982, %v2984
  %v2986 = vadd.f32 %v2985, 0.0036580483
  %v2987 = vmul.f32 %v2982, %v2986
  %v2988 = vadd.f32 %v2987, 0.05243302
  %v2989 = vmul.f32 %v2982, %v2988
  %v2990 = vadd.f32 %v2989, 0.18741608
  %v2991 = vmul.f32 %v2982, %v2990
  %v2992 = vadd.f32 %v2991, 1.1283791
  %v2993 = vmul.f32 %v2926, %v2992
  %v2994 = vmul.f32 %v2982, 3.8918573e-05
  %v2995 = vadd.f32 %v2994, 0.001143296
  %v2996 = vmul.f32 %v2982, %v2995
  %v2997 = vadd.f32 %v2996, 0.014752088
  %v2998 = vmul.f32 %v2982, %v2997
  %v2999 = vadd.f32 %v2998, 0.112945676
  %v3000 = vmul.f32 %v2982, %v2999
  %v3001 = vadd.f32 %v3000, 0.4994258
  %v3002 = vmul.f32 %v2982, %v3001
  %v3003 = vadd.f32 %v3002, 1.0
  %v3004 = vrcp.pop %v3003
  %v3005 = vmul.f32 %v3003, %v3004
  %v3006 = vsub.f32 1.0, %v3005
  %v3007 = vmul.f32 %v3004, %v3006
  %v3008 = vadd.f32 %v3004, %v3007
  %vm3009 = vweird.f32 %v3003
  %vm3010 = vweird.f32 %v3004
  %vm3011 = vmor %vm3009, %vm3010
  %v3012 = vsel %vm3011, %v3004, %v3008
  %v3013 = vand.u32 2147483647, %v3003
  %vm3014 = vcmp.eq.f32.partialorder %v3013, 8.507059e+37
  %v3015 = vand.u32 %v3003, 2147483648
  %v3016 = vor.u32 1.1754944e-38, %v3015
  %v3017 = vsel %vm3014, %v3016, %v3012
  %v3018 = vmul.f32 %v2993, %v3017
  %v3019 = vmin.f32 %v3018, 1.0
  %v3020 = vmax.f32 %v3019, -1.0
  %v3021 = vmul.f32 %v2927, %v2927
  %v3022 = vmin.f32 16.0, %v3021
  %v3023 = vmul.f32 %v3022, 2.1237322e-06
  %v3024 = vadd.f32 %v3023, 0.00028619796
  %v3025 = vmul.f32 %v3022, %v3024
  %v3026 = vadd.f32 %v3025, 0.0036580483
  %v3027 = vmul.f32 %v3022, %v3026
  %v3028 = vadd.f32 %v3027, 0.05243302
  %v3029 = vmul.f32 %v3022, %v3028
  %v3030 = vadd.f32 %v3029, 0.18741608
  %v3031 = vmul.f32 %v3022, %v3030
  %v3032 = vadd.f32 %v3031, 1.1283791
  %v3033 = vmul.f32 %v2927, %v3032
  %v3034 = vmul.f32 %v3022, 3.8918573e-05
  %v3035 = vadd.f32 %v3034, 0.001143296
  %v3036 = vmul.f32 %v3022, %v3035
  %v3037 = vadd.f32 %v3036, 0.014752088
  %v3038 = vmul.f32 %v3022, %v3037
  %v3039 = vadd.f32 %v3038, 0.112945676
  %v3040 = vmul.f32 %v3022, %v3039
  %v3041 = vadd.f32 %v3040, 0.4994258
  %v3042 = vmul.f32 %v3022, %v3041
  %v3043 = vadd.f32 %v3042, 1.0
  %v3044 = vrcp.pop %v3043
  %v3045 = vmul.f32 %v3043, %v3044
  %v3046 = vsub.f32 1.0, %v3045
  %v3047 = vmul.f32 %v3044, %v3046
  %v3048 = vadd.f32 %v3044, %v3047
  %vm3049 = vweird.f32 %v3043
  %vm3050 = vweird.f32 %v3044
  %vm3051 = vmor %vm3049, %vm3050
  %v3052 = vsel %vm3051, %v3044, %v3048
  %v3053 = vand.u32 2147483647, %v3043
  %vm3054 = vcmp.eq.f32.partialorder %v3053, 8.507059e+37
  %v3055 = vand.u32 %v3043, 2147483648
  %v3056 = vor.u32 1.1754944e-38, %v3055
  %v3057 = vsel %vm3054, %v3056, %v3052
  %v3058 = vmul.f32 %v3033, %v3057
  %v3059 = vmin.f32 %v3058, 1.0
  %v3060 = vmax.f32 %v3059, -1.0
  %v3061 = vmul.f32 %v2928, %v2928
  %v3062 = vmin.f32 16.0, %v3061
  %v3063 = vmul.f32 %v3062, 2.1237322e-06
  %v3064 = vadd.f32 %v3063, 0.00028619796
  %v3065 = vmul.f32 %v3062, %v3064
  %v3066 = vadd.f32 %v3065, 0.0036580483
  %v3067 = vmul.f32 %v3062, %v3066
  %v3068 = vadd.f32 %v3067, 0.05243302
  %v3069 = vmul.f32 %v3062, %v3068
  %v3070 = vadd.f32 %v3069, 0.18741608
  %v3071 = vmul.f32 %v3062, %v3070
  %v3072 = vadd.f32 %v3071, 1.1283791
  %v3073 = vmul.f32 %v2928, %v3072
  %v3074 = vmul.f32 %v3062, 3.8918573e-05
  %v3075 = vadd.f32 %v3074, 0.001143296
  %v3076 = vmul.f32 %v3062, %v3075
  %v3077 = vadd.f32 %v3076, 0.014752088
  %v3078 = vmul.f32 %v3062, %v3077
  %v3079 = vadd.f32 %v3078, 0.112945676
  %v3080 = vmul.f32 %v3062, %v3079
  %v3081 = vadd.f32 %v3080, 0.4994258
  %v3082 = vmul.f32 %v3062, %v3081
  %v3083 = vadd.f32 %v3082, 1.0
  %v3084 = vrcp.pop %v3083
  %v3085 = vmul.f32 %v3083, %v3084
  %v3086 = vsub.f32 1.0, %v3085
  %v3087 = vmul.f32 %v3084, %v3086
  %v3088 = vadd.f32 %v3084, %v3087
  %vm3089 = vweird.f32 %v3083
  %vm3090 = vweird.f32 %v3084
  %vm3091 = vmor %vm3089, %vm3090
  %v3092 = vsel %vm3091, %v3084, %v3088
  %v3093 = vand.u32 2147483647, %v3083
  %vm3094 = vcmp.eq.f32.partialorder %v3093, 8.507059e+37
  %v3095 = vand.u32 %v3083, 2147483648
  %v3096 = vor.u32 1.1754944e-38, %v3095
  %v3097 = vsel %vm3094, %v3096, %v3092
  %v3098 = vmul.f32 %v3073, %v3097
  %v3099 = vmin.f32 %v3098, 1.0
  %v3100 = vmax.f32 %v3099, -1.0
  %v3101 = vmul.f32 %v2929, %v2929
  %v3102 = vmin.f32 16.0, %v3101
  %v3103 = vmul.f32 %v3102, 2.1237322e-06
  %v3104 = vadd.f32 %v3103, 0.00028619796
  %v3105 = vmul.f32 %v3102, %v3104
  %v3106 = vadd.f32 %v3105, 0.0036580483
  %v3107 = vmul.f32 %v3102, %v3106
  %v3108 = vadd.f32 %v3107, 0.05243302
  %v3109 = vmul.f32 %v3102, %v3108
  %v3110 = vadd.f32 %v3109, 0.18741608
  %v3111 = vmul.f32 %v3102, %v3110
  %v3112 = vadd.f32 %v3111, 1.1283791
  %v3113 = vmul.f32 %v2929, %v3112
  %v3114 = vmul.f32 %v3102, 3.8918573e-05
  %v3115 = vadd.f32 %v3114, 0.001143296
  %v3116 = vmul.f32 %v3102, %v3115
  %v3117 = vadd.f32 %v3116, 0.014752088
  %v3118 = vmul.f32 %v3102, %v3117
  %v3119 = vadd.f32 %v3118, 0.112945676
  %v3120 = vmul.f32 %v3102, %v3119
  %v3121 = vadd.f32 %v3120, 0.4994258
  %v3122 = vmul.f32 %v3102, %v3121
  %v3123 = vadd.f32 %v3122, 1.0
  %v3124 = vrcp.pop %v3123
  %v3125 = vmul.f32 %v3123, %v3124
  %v3126 = vsub.f32 1.0, %v3125
  %v3127 = vmul.f32 %v3124, %v3126
  %v3128 = vadd.f32 %v3124, %v3127
  %vm3129 = vweird.f32 %v3123
  %vm3130 = vweird.f32 %v3124
  %vm3131 = vmor %vm3129, %vm3130
  %v3132 = vsel %vm3131, %v3124, %v3128
  %v3133 = vand.u32 2147483647, %v3123
  %vm3134 = vcmp.eq.f32.partialorder %v3133, 8.507059e+37
  %v3135 = vand.u32 %v3123, 2147483648
  %v3136 = vor.u32 1.1754944e-38, %v3135
  %v3137 = vsel %vm3134, %v3136, %v3132
  %v3138 = vmul.f32 %v3113, %v3137
  %v3139 = vmin.f32 %v3138, 1.0
  %v3140 = vmax.f32 %v3139, -1.0
  %v3141 = vmul.f32 %v2930, %v2930
  %v3142 = vmin.f32 16.0, %v3141
  %v3143 = vmul.f32 %v3142, 2.1237322e-06
  %v3144 = vadd.f32 %v3143, 0.00028619796
  %v3145 = vmul.f32 %v3142, %v3144
  %v3146 = vadd.f32 %v3145, 0.0036580483
  %v3147 = vmul.f32 %v3142, %v3146
  %v3148 = vadd.f32 %v3147, 0.05243302
  %v3149 = vmul.f32 %v3142, %v3148
  %v3150 = vadd.f32 %v3149, 0.18741608
  %v3151 = vmul.f32 %v3142, %v3150
  %v3152 = vadd.f32 %v3151, 1.1283791
  %v3153 = vmul.f32 %v2930, %v3152
  %v3154 = vmul.f32 %v3142, 3.8918573e-05
  %v3155 = vadd.f32 %v3154, 0.001143296
  %v3156 = vmul.f32 %v3142, %v3155
  %v3157 = vadd.f32 %v3156, 0.014752088
  %v3158 = vmul.f32 %v3142, %v3157
  %v3159 = vadd.f32 %v3158, 0.112945676
  %v3160 = vmul.f32 %v3142, %v3159
  %v3161 = vadd.f32 %v3160, 0.4994258
  %v3162 = vmul.f32 %v3142, %v3161
  %v3163 = vadd.f32 %v3162, 1.0
  %v3164 = vrcp.pop %v3163
  %v3165 = vmul.f32 %v3163, %v3164
  %v3166 = vsub.f32 1.0, %v3165
  %v3167 = vmul.f32 %v3164, %v3166
  %v3168 = vadd.f32 %v3164, %v3167
  %vm3169 = vweird.f32 %v3163
  %vm3170 = vweird.f32 %v3164
  %vm3171 = vmor %vm3169, %vm3170
  %v3172 = vsel %vm3171, %v3164, %v3168
  %v3173 = vand.u32 2147483647, %v3163
  %vm3174 = vcmp.eq.f32.partialorder %v3173, 8.507059e+37
  %v3175 = vand.u32 %v3163, 2147483648
  %v3176 = vor.u32 1.1754944e-38, %v3175
  %v3177 = vsel %vm3174, %v3176, %v3172
  %v3178 = vmul.f32 %v3153, %v3177
  %v3179 = vmin.f32 %v3178, 1.0
  %v3180 = vmax.f32 %v3179, -1.0
  %v3181 = vmul.f32 %v2931, %v2931
  %v3182 = vmin.f32 16.0, %v3181
  %v3183 = vmul.f32 %v3182, 2.1237322e-06
  %v3184 = vadd.f32 %v3183, 0.00028619796
  %v3185 = vmul.f32 %v3182, %v3184
  %v3186 = vadd.f32 %v3185, 0.0036580483
  %v3187 = vmul.f32 %v3182, %v3186
  %v3188 = vadd.f32 %v3187, 0.05243302
  %v3189 = vmul.f32 %v3182, %v3188
  %v3190 = vadd.f32 %v3189, 0.18741608
  %v3191 = vmul.f32 %v3182, %v3190
  %v3192 = vadd.f32 %v3191, 1.1283791
  %v3193 = vmul.f32 %v2931, %v3192
  %v3194 = vmul.f32 %v3182, 3.8918573e-05
  %v3195 = vadd.f32 %v3194, 0.001143296
  %v3196 = vmul.f32 %v3182, %v3195
  %v3197 = vadd.f32 %v3196, 0.014752088
  %v3198 = vmul.f32 %v3182, %v3197
  %v3199 = vadd.f32 %v3198, 0.112945676
  %v3200 = vmul.f32 %v3182, %v3199
  %v3201 = vadd.f32 %v3200, 0.4994258
  %v3202 = vmul.f32 %v3182, %v3201
  %v3203 = vadd.f32 %v3202, 1.0
  %v3204 = vrcp.pop %v3203
  %v3205 = vmul.f32 %v3203, %v3204
  %v3206 = vsub.f32 1.0, %v3205
  %v3207 = vmul.f32 %v3204, %v3206
  %v3208 = vadd.f32 %v3204, %v3207
  %vm3209 = vweird.f32 %v3203
  %vm3210 = vweird.f32 %v3204
  %vm3211 = vmor %vm3209, %vm3210
  %v3212 = vsel %vm3211, %v3204, %v3208
  %v3213 = vand.u32 2147483647, %v3203
  %vm3214 = vcmp.eq.f32.partialorder %v3213, 8.507059e+37
  %v3215 = vand.u32 %v3203, 2147483648
  %v3216 = vor.u32 1.1754944e-38, %v3215
  %v3217 = vsel %vm3214, %v3216, %v3212
  %v3218 = vmul.f32 %v3193, %v3217
  %v3219 = vmin.f32 %v3218, 1.0
  %v3220 = vmax.f32 %v3219, -1.0
  %v3221 = vmul.f32 %v2932, %v2932
  %v3222 = vmin.f32 16.0, %v3221
  %v3223 = vmul.f32 %v3222, 2.1237322e-06
  %v3224 = vadd.f32 %v3223, 0.00028619796
  %v3225 = vmul.f32 %v3222, %v3224
  %v3226 = vadd.f32 %v3225, 0.0036580483
  %v3227 = vmul.f32 %v3222, %v3226
  %v3228 = vadd.f32 %v3227, 0.05243302
  %v3229 = vmul.f32 %v3222, %v3228
  %v3230 = vadd.f32 %v3229, 0.18741608
  %v3231 = vmul.f32 %v3222, %v3230
  %v3232 = vadd.f32 %v3231, 1.1283791
  %v3233 = vmul.f32 %v2932, %v3232
  %v3234 = vmul.f32 %v3222, 3.8918573e-05
  %v3235 = vadd.f32 %v3234, 0.001143296
  %v3236 = vmul.f32 %v3222, %v3235
  %v3237 = vadd.f32 %v3236, 0.014752088
  %v3238 = vmul.f32 %v3222, %v3237
  %v3239 = vadd.f32 %v3238, 0.112945676
  %v3240 = vmul.f32 %v3222, %v3239
  %v3241 = vadd.f32 %v3240, 0.4994258
  %v3242 = vmul.f32 %v3222, %v3241
  %v3243 = vadd.f32 %v3242, 1.0
  %v3244 = vrcp.pop %v3243
  %v3245 = vmul.f32 %v3243, %v3244
  %v3246 = vsub.f32 1.0, %v3245
  %v3247 = vmul.f32 %v3244, %v3246
  %v3248 = vadd.f32 %v3244, %v3247
  %vm3249 = vweird.f32 %v3243
  %vm3250 = vweird.f32 %v3244
  %vm3251 = vmor %vm3249, %vm3250
  %v3252 = vsel %vm3251, %v3244, %v3248
  %v3253 = vand.u32 2147483647, %v3243
  %vm3254 = vcmp.eq.f32.partialorder %v3253, 8.507059e+37
  %v3255 = vand.u32 %v3243, 2147483648
  %v3256 = vor.u32 1.1754944e-38, %v3255
  %v3257 = vsel %vm3254, %v3256, %v3252
  %v3258 = vmul.f32 %v3233, %v3257
  %v3259 = vmin.f32 %v3258, 1.0
  %v3260 = vmax.f32 %v3259, -1.0
  %v3261 = vmul.f32 %v2933, %v2933
  %v3262 = vmin.f32 16.0, %v3261
  %v3263 = vmul.f32 %v3262, 2.1237322e-06
  %v3264 = vadd.f32 %v3263, 0.00028619796
  %v3265 = vmul.f32 %v3262, %v3264
  %v3266 = vadd.f32 %v3265, 0.0036580483
  %v3267 = vmul.f32 %v3262, %v3266
  %v3268 = vadd.f32 %v3267, 0.05243302
  %v3269 = vmul.f32 %v3262, %v3268
  %v3270 = vadd.f32 %v3269, 0.18741608
  %v3271 = vmul.f32 %v3262, %v3270
  %v3272 = vadd.f32 %v3271, 1.1283791
  %v3273 = vmul.f32 %v2933, %v3272
  %v3274 = vmul.f32 %v3262, 3.8918573e-05
  %v3275 = vadd.f32 %v3274, 0.001143296
  %v3276 = vmul.f32 %v3262, %v3275
  %v3277 = vadd.f32 %v3276, 0.014752088
  %v3278 = vmul.f32 %v3262, %v3277
  %v3279 = vadd.f32 %v3278, 0.112945676
  %v3280 = vmul.f32 %v3262, %v3279
  %v3281 = vadd.f32 %v3280, 0.4994258
  %v3282 = vmul.f32 %v3262, %v3281
  %v3283 = vadd.f32 %v3282, 1.0
  %v3284 = vrcp.pop %v3283
  %v3285 = vmul.f32 %v3283, %v3284
  %v3286 = vsub.f32 1.0, %v3285
  %v3287 = vmul.f32 %v3284, %v3286
  %v3288 = vadd.f32 %v3284, %v3287
  %vm3289 = vweird.f32 %v3283
  %vm3290 = vweird.f32 %v3284
  %vm3291 = vmor %vm3289, %vm3290
  %v3292 = vsel %vm3291, %v3284, %v3288
  %v3293 = vand.u32 2147483647, %v3283
  %vm3294 = vcmp.eq.f32.partialorder %v3293, 8.507059e+37
  %v3295 = vand.u32 %v3283, 2147483648
  %v3296 = vor.u32 1.1754944e-38, %v3295
  %v3297 = vsel %vm3294, %v3296, %v3292
  %v3298 = vmul.f32 %v3273, %v3297
  %v3299 = vmin.f32 %v3298, 1.0
  %v3300 = vmax.f32 %v3299, -1.0
  %v3301 = vmul.f32 %v2934, %v2934
  %v3302 = vmin.f32 16.0, %v3301
  %v3303 = vmul.f32 %v3302, 2.1237322e-06
  %v3304 = vadd.f32 %v3303, 0.00028619796
  %v3305 = vmul.f32 %v3302, %v3304
  %v3306 = vadd.f32 %v3305, 0.0036580483
  %v3307 = vmul.f32 %v3302, %v3306
  %v3308 = vadd.f32 %v3307, 0.05243302
  %v3309 = vmul.f32 %v3302, %v3308
  %v3310 = vadd.f32 %v3309, 0.18741608
  %v3311 = vmul.f32 %v3302, %v3310
  %v3312 = vadd.f32 %v3311, 1.1283791
  %v3313 = vmul.f32 %v2934, %v3312
  %v3314 = vmul.f32 %v3302, 3.8918573e-05
  %v3315 = vadd.f32 %v3314, 0.001143296
  %v3316 = vmul.f32 %v3302, %v3315
  %v3317 = vadd.f32 %v3316, 0.014752088
  %v3318 = vmul.f32 %v3302, %v3317
  %v3319 = vadd.f32 %v3318, 0.112945676
  %v3320 = vmul.f32 %v3302, %v3319
  %v3321 = vadd.f32 %v3320, 0.4994258
  %v3322 = vmul.f32 %v3302, %v3321
  %v3323 = vadd.f32 %v3322, 1.0
  %v3324 = vrcp.pop %v3323
  %v3325 = vmul.f32 %v3323, %v3324
  %v3326 = vsub.f32 1.0, %v3325
  %v3327 = vmul.f32 %v3324, %v3326
  %v3328 = vadd.f32 %v3324, %v3327
  %vm3329 = vweird.f32 %v3323
  %vm3330 = vweird.f32 %v3324
  %vm3331 = vmor %vm3329, %vm3330
  %v3332 = vsel %vm3331, %v3324, %v3328
  %v3333 = vand.u32 2147483647, %v3323
  %vm3334 = vcmp.eq.f32.partialorder %v3333, 8.507059e+37
  %v3335 = vand.u32 %v3323, 2147483648
  %v3336 = vor.u32 1.1754944e-38, %v3335
  %v3337 = vsel %vm3334, %v3336, %v3332
  %v3338 = vmul.f32 %v3313, %v3337
  %v3339 = vmin.f32 %v3338, 1.0
  %v3340 = vmax.f32 %v3339, -1.0
  %v3341 = vmul.f32 %v2935, %v2935
  %v3342 = vmin.f32 16.0, %v3341
  %v3343 = vmul.f32 %v3342, 2.1237322e-06
  %v3344 = vadd.f32 %v3343, 0.00028619796
  %v3345 = vmul.f32 %v3342, %v3344
  %v3346 = vadd.f32 %v3345, 0.0036580483
  %v3347 = vmul.f32 %v3342, %v3346
  %v3348 = vadd.f32 %v3347, 0.05243302
  %v3349 = vmul.f32 %v3342, %v3348
  %v3350 = vadd.f32 %v3349, 0.18741608
  %v3351 = vmul.f32 %v3342, %v3350
  %v3352 = vadd.f32 %v3351, 1.1283791
  %v3353 = vmul.f32 %v2935, %v3352
  %v3354 = vmul.f32 %v3342, 3.8918573e-05
  %v3355 = vadd.f32 %v3354, 0.001143296
  %v3356 = vmul.f32 %v3342, %v3355
  %v3357 = vadd.f32 %v3356, 0.014752088
  %v3358 = vmul.f32 %v3342, %v3357
  %v3359 = vadd.f32 %v3358, 0.112945676
  %v3360 = vmul.f32 %v3342, %v3359
  %v3361 = vadd.f32 %v3360, 0.4994258
  %v3362 = vmul.f32 %v3342, %v3361
  %v3363 = vadd.f32 %v3362, 1.0
  %v3364 = vrcp.pop %v3363
  %v3365 = vmul.f32 %v3363, %v3364
  %v3366 = vsub.f32 1.0, %v3365
  %v3367 = vmul.f32 %v3364, %v3366
  %v3368 = vadd.f32 %v3364, %v3367
  %vm3369 = vweird.f32 %v3363
  %vm3370 = vweird.f32 %v3364
  %vm3371 = vmor %vm3369, %vm3370
  %v3372 = vsel %vm3371, %v3364, %v3368
  %v3373 = vand.u32 2147483647, %v3363
  %vm3374 = vcmp.eq.f32.partialorder %v3373, 8.507059e+37
  %v3375 = vand.u32 %v3363, 2147483648
  %v3376 = vor.u32 1.1754944e-38, %v3375
  %v3377 = vsel %vm3374, %v3376, %v3372
  %v3378 = vmul.f32 %v3353, %v3377
  %v3379 = vmin.f32 %v3378, 1.0
  %v3380 = vmax.f32 %v3379, -1.0
  %v3381 = vmul.f32 %v2936, %v2936
  %v3382 = vmin.f32 16.0, %v3381
  %v3383 = vmul.f32 %v3382, 2.1237322e-06
  %v3384 = vadd.f32 %v3383, 0.00028619796
  %v3385 = vmul.f32 %v3382, %v3384
  %v3386 = vadd.f32 %v3385, 0.0036580483
  %v3387 = vmul.f32 %v3382, %v3386
  %v3388 = vadd.f32 %v3387, 0.05243302
  %v3389 = vmul.f32 %v3382, %v3388
  %v3390 = vadd.f32 %v3389, 0.18741608
  %v3391 = vmul.f32 %v3382, %v3390
  %v3392 = vadd.f32 %v3391, 1.1283791
  %v3393 = vmul.f32 %v2936, %v3392
  %v3394 = vmul.f32 %v3382, 3.8918573e-05
  %v3395 = vadd.f32 %v3394, 0.001143296
  %v3396 = vmul.f32 %v3382, %v3395
  %v3397 = vadd.f32 %v3396, 0.014752088
  %v3398 = vmul.f32 %v3382, %v3397
  %v3399 = vadd.f32 %v3398, 0.112945676
  %v3400 = vmul.f32 %v3382, %v3399
  %v3401 = vadd.f32 %v3400, 0.4994258
  %v3402 = vmul.f32 %v3382, %v3401
  %v3403 = vadd.f32 %v3402, 1.0
  %v3404 = vrcp.pop %v3403
  %v3405 = vmul.f32 %v3403, %v3404
  %v3406 = vsub.f32 1.0, %v3405
  %v3407 = vmul.f32 %v3404, %v3406
  %v3408 = vadd.f32 %v3404, %v3407
  %vm3409 = vweird.f32 %v3403
  %vm3410 = vweird.f32 %v3404
  %vm3411 = vmor %vm3409, %vm3410
  %v3412 = vsel %vm3411, %v3404, %v3408
  %v3413 = vand.u32 2147483647, %v3403
  %vm3414 = vcmp.eq.f32.partialorder %v3413, 8.507059e+37
  %v3415 = vand.u32 %v3403, 2147483648
  %v3416 = vor.u32 1.1754944e-38, %v3415
  %v3417 = vsel %vm3414, %v3416, %v3412
  %v3418 = vmul.f32 %v3393, %v3417
  %v3419 = vmin.f32 %v3418, 1.0
  %v3420 = vmax.f32 %v3419, -1.0
  %v3421 = vmul.f32 %v2937, %v2937
  %v3422 = vmin.f32 16.0, %v3421
  %v3423 = vmul.f32 %v3422, 2.1237322e-06
  %v3424 = vadd.f32 %v3423, 0.00028619796
  %v3425 = vmul.f32 %v3422, %v3424
  %v3426 = vadd.f32 %v3425, 0.0036580483
  %v3427 = vmul.f32 %v3422, %v3426
  %v3428 = vadd.f32 %v3427, 0.05243302
  %v3429 = vmul.f32 %v3422, %v3428
  %v3430 = vadd.f32 %v3429, 0.18741608
  %v3431 = vmul.f32 %v3422, %v3430
  %v3432 = vadd.f32 %v3431, 1.1283791
  %v3433 = vmul.f32 %v2937, %v3432
  %v3434 = vmul.f32 %v3422, 3.8918573e-05
  %v3435 = vadd.f32 %v3434, 0.001143296
  %v3436 = vmul.f32 %v3422, %v3435
  %v3437 = vadd.f32 %v3436, 0.014752088
  %v3438 = vmul.f32 %v3422, %v3437
  %v3439 = vadd.f32 %v3438, 0.112945676
  %v3440 = vmul.f32 %v3422, %v3439
  %v3441 = vadd.f32 %v3440, 0.4994258
  %v3442 = vmul.f32 %v3422, %v3441
  %v3443 = vadd.f32 %v3442, 1.0
  %v3444 = vrcp.pop %v3443
  %v3445 = vmul.f32 %v3443, %v3444
  %v3446 = vsub.f32 1.0, %v3445
  %v3447 = vmul.f32 %v3444, %v3446
  %v3448 = vadd.f32 %v3444, %v3447
  %vm3449 = vweird.f32 %v3443
  %vm3450 = vweird.f32 %v3444
  %vm3451 = vmor %vm3449, %vm3450
  %v3452 = vsel %vm3451, %v3444, %v3448
  %v3453 = vand.u32 2147483647, %v3443
  %vm3454 = vcmp.eq.f32.partialorder %v3453, 8.507059e+37
  %v3455 = vand.u32 %v3443, 2147483648
  %v3456 = vor.u32 1.1754944e-38, %v3455
  %v3457 = vsel %vm3454, %v3456, %v3452
  %v3458 = vmul.f32 %v3433, %v3457
  %v3459 = vmin.f32 %v3458, 1.0
  %v3460 = vmax.f32 %v3459, -1.0
  %v3461 = vmul.f32 %v2938, %v2938
  %v3462 = vmin.f32 16.0, %v3461
  %v3463 = vmul.f32 %v3462, 2.1237322e-06
  %v3464 = vadd.f32 %v3463, 0.00028619796
  %v3465 = vmul.f32 %v3462, %v3464
  %v3466 = vadd.f32 %v3465, 0.0036580483
  %v3467 = vmul.f32 %v3462, %v3466
  %v3468 = vadd.f32 %v3467, 0.05243302
  %v3469 = vmul.f32 %v3462, %v3468
  %v3470 = vadd.f32 %v3469, 0.18741608
  %v3471 = vmul.f32 %v3462, %v3470
  %v3472 = vadd.f32 %v3471, 1.1283791
  %v3473 = vmul.f32 %v2938, %v3472
  %v3474 = vmul.f32 %v3462, 3.8918573e-05
  %v3475 = vadd.f32 %v3474, 0.001143296
  %v3476 = vmul.f32 %v3462, %v3475
  %v3477 = vadd.f32 %v3476, 0.014752088
  %v3478 = vmul.f32 %v3462, %v3477
  %v3479 = vadd.f32 %v3478, 0.112945676
  %v3480 = vmul.f32 %v3462, %v3479
  %v3481 = vadd.f32 %v3480, 0.4994258
  %v3482 = vmul.f32 %v3462, %v3481
  %v3483 = vadd.f32 %v3482, 1.0
  %v3484 = vrcp.pop %v3483
  %v3485 = vmul.f32 %v3483, %v3484
  %v3486 = vsub.f32 1.0, %v3485
  %v3487 = vmul.f32 %v3484, %v3486
  %v3488 = vadd.f32 %v3484, %v3487
  %vm3489 = vweird.f32 %v3483
  %vm3490 = vweird.f32 %v3484
  %vm3491 = vmor %vm3489, %vm3490
  %v3492 = vsel %vm3491, %v3484, %v3488
  %v3493 = vand.u32 2147483647, %v3483
  %vm3494 = vcmp.eq.f32.partialorder %v3493, 8.507059e+37
  %v3495 = vand.u32 %v3483, 2147483648
  %v3496 = vor.u32 1.1754944e-38, %v3495
  %v3497 = vsel %vm3494, %v3496, %v3492
  %v3498 = vmul.f32 %v3473, %v3497
  %v3499 = vmin.f32 %v3498, 1.0
  %v3500 = vmax.f32 %v3499, -1.0
  %v3501 = vmul.f32 %v2939, %v2939
  %v3502 = vmin.f32 16.0, %v3501
  %v3503 = vmul.f32 %v3502, 2.1237322e-06
  %v3504 = vadd.f32 %v3503, 0.00028619796
  %v3505 = vmul.f32 %v3502, %v3504
  %v3506 = vadd.f32 %v3505, 0.0036580483
  %v3507 = vmul.f32 %v3502, %v3506
  %v3508 = vadd.f32 %v3507, 0.05243302
  %v3509 = vmul.f32 %v3502, %v3508
  %v3510 = vadd.f32 %v3509, 0.18741608
  %v3511 = vmul.f32 %v3502, %v3510
  %v3512 = vadd.f32 %v3511, 1.1283791
  %v3513 = vmul.f32 %v2939, %v3512
  %v3514 = vmul.f32 %v3502, 3.8918573e-05
  %v3515 = vadd.f32 %v3514, 0.001143296
  %v3516 = vmul.f32 %v3502, %v3515
  %v3517 = vadd.f32 %v3516, 0.014752088
  %v3518 = vmul.f32 %v3502, %v3517
  %v3519 = vadd.f32 %v3518, 0.112945676
  %v3520 = vmul.f32 %v3502, %v3519
  %v3521 = vadd.f32 %v3520, 0.4994258
  %v3522 = vmul.f32 %v3502, %v3521
  %v3523 = vadd.f32 %v3522, 1.0
  %v3524 = vrcp.pop %v3523
  %v3525 = vmul.f32 %v3523, %v3524
  %v3526 = vsub.f32 1.0, %v3525
  %v3527 = vmul.f32 %v3524, %v3526
  %v3528 = vadd.f32 %v3524, %v3527
  %vm3529 = vweird.f32 %v3523
  %vm3530 = vweird.f32 %v3524
  %vm3531 = vmor %vm3529, %vm3530
  %v3532 = vsel %vm3531, %v3524, %v3528
  %v3533 = vand.u32 2147483647, %v3523
  %vm3534 = vcmp.eq.f32.partialorder %v3533, 8.507059e+37
  %v3535 = vand.u32 %v3523, 2147483648
  %v3536 = vor.u32 1.1754944e-38, %v3535
  %v3537 = vsel %vm3534, %v3536, %v3532
  %v3538 = vmul.f32 %v3513, %v3537
  %v3539 = vmin.f32 %v3538, 1.0
  %v3540 = vmax.f32 %v3539, -1.0
  %v3541 = vmul.f32 %v2940, %v2940
  %v3542 = vmin.f32 16.0, %v3541
  %v3543 = vmul.f32 %v3542, 2.1237322e-06
  %v3544 = vadd.f32 %v3543, 0.00028619796
  %v3545 = vmul.f32 %v3542, %v3544
  %v3546 = vadd.f32 %v3545, 0.0036580483
  %v3547 = vmul.f32 %v3542, %v3546
  %v3548 = vadd.f32 %v3547, 0.05243302
  %v3549 = vmul.f32 %v3542, %v3548
  %v3550 = vadd.f32 %v3549, 0.18741608
  %v3551 = vmul.f32 %v3542, %v3550
  %v3552 = vadd.f32 %v3551, 1.1283791
  %v3553 = vmul.f32 %v2940, %v3552
  %v3554 = vmul.f32 %v3542, 3.8918573e-05
  %v3555 = vadd.f32 %v3554, 0.001143296
  %v3556 = vmul.f32 %v3542, %v3555
  %v3557 = vadd.f32 %v3556, 0.014752088
  %v3558 = vmul.f32 %v3542, %v3557
  %v3559 = vadd.f32 %v3558, 0.112945676
  %v3560 = vmul.f32 %v3542, %v3559
  %v3561 = vadd.f32 %v3560, 0.4994258
  %v3562 = vmul.f32 %v3542, %v3561
  %v3563 = vadd.f32 %v3562, 1.0
  %v3564 = vrcp.pop %v3563
  %v3565 = vmul.f32 %v3563, %v3564
  %v3566 = vsub.f32 1.0, %v3565
  %v3567 = vmul.f32 %v3564, %v3566
  %v3568 = vadd.f32 %v3564, %v3567
  %vm3569 = vweird.f32 %v3563
  %vm3570 = vweird.f32 %v3564
  %vm3571 = vmor %vm3569, %vm3570
  %v3572 = vsel %vm3571, %v3564, %v3568
  %v3573 = vand.u32 2147483647, %v3563
  %vm3574 = vcmp.eq.f32.partialorder %v3573, 8.507059e+37
  %v3575 = vand.u32 %v3563, 2147483648
  %v3576 = vor.u32 1.1754944e-38, %v3575
  %v3577 = vsel %vm3574, %v3576, %v3572
  %v3578 = vmul.f32 %v3553, %v3577
  %v3579 = vmin.f32 %v3578, 1.0
  %v3580 = vmax.f32 %v3579, -1.0
  %v3581 = vadd.f32 %v2980, 1.0
  %v3582 = vadd.f32 %v3020, 1.0
  %v3583 = vadd.f32 %v3060, 1.0
  %v3584 = vadd.f32 %v3100, 1.0
  %v3585 = vadd.f32 %v3140, 1.0
  %v3586 = vadd.f32 %v3180, 1.0
  %v3587 = vadd.f32 %v3220, 1.0
  %v3588 = vadd.f32 %v3260, 1.0
  %v3589 = vadd.f32 %v3300, 1.0
  %v3590 = vadd.f32 %v3340, 1.0
  %v3591 = vadd.f32 %v3380, 1.0
  %v3592 = vadd.f32 %v3420, 1.0
  %v3593 = vadd.f32 %v3460, 1.0
  %v3594 = vadd.f32 %v3500, 1.0
  %v3595 = vadd.f32 %v3540, 1.0
  %v3596 = vadd.f32 %v3580, 1.0
  %v3597 = vmul.f32 %v2909, %v3581
  %v3598 = vmul.f32 %v2910, %v3582
  %v3599 = vmul.f32 %v2911, %v3583
  %v3600 = vmul.f32 %v2912, %v3584
  %v3601 = vmul.f32 %v2913, %v3585
  %v3602 = vmul.f32 %v2914, %v3586
  %v3603 = vmul.f32 %v2915, %v3587
  %v3604 = vmul.f32 %v2916, %v3588
  %v3605 = vmul.f32 %v2917, %v3589
  %v3606 = vmul.f32 %v2918, %v3590
  %v3607 = vmul.f32 %v2919, %v3591
  %v3608 = vmul.f32 %v2920, %v3592
  %v3609 = vmul.f32 %v2921, %v3593
  %v3610 = vmul.f32 %v2922, %v3594
  %v3611 = vmul.f32 %v2923, %v3595
  %v3612 = vmul.f32 %v2924, %v3596
  %v3613 = vpack.c.bf16 %v3598, %v3597
  %v3614 = vpack.c.bf16 %v3600, %v3599
  %v3615 = vpack.c.bf16 %v3602, %v3601
  %v3616 = vpack.c.bf16 %v3604, %v3603
  %v3617 = vpack.c.bf16 %v3606, %v3605
  %v3618 = vpack.c.bf16 %v3608, %v3607
  %v3619 = vpack.c.bf16 %v3610, %v3609
  %v3620 = vpack.c.bf16 %v3612, %v3611
  %v3621 = vpack.c.bf16 %v63, %v62
  %v3622 = vpack.c.bf16 %v65, %v64
  %v3623 = vpack.c.bf16 %v67, %v66
  %v3624 = vpack.c.bf16 %v69, %v68
  %v3625 = vpack.c.bf16 %v71, %v70
  %v3626 = vpack.c.bf16 %v73, %v72
  %v3627 = vpack.c.bf16 %v75, %v74
  %v3628 = vpack.c.bf16 %v77, %v76
  %v3629 = vperm.slane %v53, 5
  %3630 = vmatpush.bf16.msra.mxu0 %v3628
  %3631 = vmatpush.bf16.msra.mxu0 %v3627
  %3632 = vmatpush.bf16.msra.mxu0 %v3626
  %3633 = vmatpush.bf16.msra.mxu0 %v3625
  %3634 = vmatpush.bf16.msra.mxu0 %v3624
  %3635 = vmatpush.bf16.msra.mxu0 %v3623
  %3636 = vmatpush.bf16.msra.mxu0 %v3622
  %3637 = vmatpush.bf16.msra.mxu0 %v3621
  %3638 = vmatmul.bf16.gmra.mxu0 %v3613
  %v3639 = vpop.f32.mrf.mxu0
  %v3640 = vadd.f32 %v3629, %v3639
  %v3641 = vpop.f32.mrf.mxu0
  %v3642 = vadd.f32 %v3629, %v3641
  %3643 = vmatmul.bf16.gmra.mxu0 %v3614
  %v3644 = vpop.f32.mrf.mxu0
  %v3645 = vadd.f32 %v3629, %v3644
  %v3646 = vpop.f32.mrf.mxu0
  %v3647 = vadd.f32 %v3629, %v3646
  %3648 = vmatmul.bf16.gmra.mxu0 %v3615
  %v3649 = vpop.f32.mrf.mxu0
  %v3650 = vadd.f32 %v3629, %v3649
  %v3651 = vpop.f32.mrf.mxu0
  %v3652 = vadd.f32 %v3629, %v3651
  %3653 = vmatmul.bf16.gmra.mxu0 %v3616
  %v3654 = vpop.f32.mrf.mxu0
  %v3655 = vadd.f32 %v3629, %v3654
  %v3656 = vpop.f32.mrf.mxu0
  %v3657 = vadd.f32 %v3629, %v3656
  %3658 = vmatmul.bf16.gmra.mxu0 %v3617
  %v3659 = vpop.f32.mrf.mxu0
  %v3660 = vadd.f32 %v3629, %v3659
  %v3661 = vpop.f32.mrf.mxu0
  %v3662 = vadd.f32 %v3629, %v3661
  %3663 = vmatmul.bf16.gmra.mxu0 %v3618
  %v3664 = vpop.f32.mrf.mxu0
  %v3665 = vadd.f32 %v3629, %v3664
  %v3666 = vpop.f32.mrf.mxu0
  %v3667 = vadd.f32 %v3629, %v3666
  %3668 = vmatmul.bf16.gmra.mxu0 %v3619
  %v3669 = vpop.f32.mrf.mxu0
  %v3670 = vadd.f32 %v3629, %v3669
  %v3671 = vpop.f32.mrf.mxu0
  %v3672 = vadd.f32 %v3629, %v3671
  %3673 = vmatmul.bf16.gmra.mxu0 %v3620
  %v3674 = vpop.f32.mrf.mxu0
  %v3675 = vadd.f32 %v3629, %v3674
  %v3676 = vpop.f32.mrf.mxu0
  %v3677 = vadd.f32 %v3629, %v3676
  %3678 = vdwg.mxu0
  %v3679 = vadd.f32 %v2423, %v3640
  %v3680 = vadd.f32 %v2424, %v3642
  %v3681 = vadd.f32 %v2425, %v3645
  %v3682 = vadd.f32 %v2426, %v3647
  %v3683 = vadd.f32 %v2427, %v3650
  %v3684 = vadd.f32 %v2428, %v3652
  %v3685 = vadd.f32 %v2429, %v3655
  %v3686 = vadd.f32 %v2430, %v3657
  %v3687 = vadd.f32 %v2431, %v3660
  %v3688 = vadd.f32 %v2432, %v3662
  %v3689 = vadd.f32 %v2433, %v3665
  %v3690 = vadd.f32 %v2434, %v3667
  %v3691 = vadd.f32 %v2435, %v3670
  %v3692 = vadd.f32 %v2436, %v3672
  %v3693 = vadd.f32 %v2437, %v3675
  %v3694 = vadd.f32 %v2438, %v3677
  %s3695 = scalar_lea.vmem %s1, 64
  %v3696 = vld [vmem:[%s3695] sm:$0xf]
  %v3697 = vld [vmem:[%s3695 + $0x4] sm:$0xf]
  %v3698 = vld [vmem:[%s3695 + $0x8] sm:$0xf]
  %v3699 = vld [vmem:[%s3695 + $0xc] sm:$0xf]
  %v3700 = vld [vmem:[%s3695 + $0x10] sm:$0xf]
  %v3701 = vld [vmem:[%s3695 + $0x14] sm:$0xf]
  %v3702 = vld [vmem:[%s3695 + $0x18] sm:$0xf]
  %v3703 = vld [vmem:[%s3695 + $0x1c] sm:$0xf]
  %v3704 = vld [vmem:[%s3695 + $0x20] sm:$0xf]
  %v3705 = vld [vmem:[%s3695 + $0x24] sm:$0xf]
  %v3706 = vld [vmem:[%s3695 + $0x28] sm:$0xf]
  %v3707 = vld [vmem:[%s3695 + $0x2c] sm:$0xf]
  %v3708 = vld [vmem:[%s3695 + $0x30] sm:$0xf]
  %v3709 = vld [vmem:[%s3695 + $0x34] sm:$0xf]
  %v3710 = vld [vmem:[%s3695 + $0x38] sm:$0xf]
  %v3711 = vld [vmem:[%s3695 + $0x3c] sm:$0xf]
  %s3712 = scalar_lea.vmem %s2, 8
  %v3713 = vld [vmem:[%s3712] sm:$0xff]
  %s3714 = scalar_lea.vmem %s3, 64
  %v3715 = vld [vmem:[%s3714] sm:$0xff]
  %v3716 = vld [vmem:[%s3714 + $0x8] sm:$0xff]
  %v3717 = vld [vmem:[%s3714 + $0x10] sm:$0xff]
  %v3718 = vld [vmem:[%s3714 + $0x18] sm:$0xff]
  %v3719 = vld [vmem:[%s3714 + $0x20] sm:$0xff]
  %v3720 = vld [vmem:[%s3714 + $0x28] sm:$0xff]
  %v3721 = vld [vmem:[%s3714 + $0x30] sm:$0xff]
  %v3722 = vld [vmem:[%s3714 + $0x38] sm:$0xff]
  %s3723 = scalar_lea.vmem %s4, 128
  %v3724 = vld [vmem:[%s3723] sm:$0xff]
  %v3725 = vld [vmem:[%s3723 + $0x8] sm:$0xff]
  %v3726 = vld [vmem:[%s3723 + $0x10] sm:$0xff]
  %v3727 = vld [vmem:[%s3723 + $0x18] sm:$0xff]
  %v3728 = vld [vmem:[%s3723 + $0x20] sm:$0xff]
  %v3729 = vld [vmem:[%s3723 + $0x28] sm:$0xff]
  %v3730 = vld [vmem:[%s3723 + $0x30] sm:$0xff]
  %v3731 = vld [vmem:[%s3723 + $0x38] sm:$0xff]
  %v3732 = vld [vmem:[%s3723 + $0x40] sm:$0xff]
  %v3733 = vld [vmem:[%s3723 + $0x48] sm:$0xff]
  %v3734 = vld [vmem:[%s3723 + $0x50] sm:$0xff]
  %v3735 = vld [vmem:[%s3723 + $0x58] sm:$0xff]
  %v3736 = vld [vmem:[%s3723 + $0x60] sm:$0xff]
  %v3737 = vld [vmem:[%s3723 + $0x68] sm:$0xff]
  %v3738 = vld [vmem:[%s3723 + $0x70] sm:$0xff]
  %v3739 = vld [vmem:[%s3723 + $0x78] sm:$0xff]
  %v3740 = vsel %vm78, %v3679, 0.0
  %3741 = vadd.xlane.f32.xlu0 %v3740
  %v3742 = vpop.xlane.xlu0 %3741
  %v3743 = vsel %vm78, %v3680, 0.0
  %3744 = vadd.xlane.f32.xlu0 %v3743
  %v3745 = vpop.xlane.xlu0 %3744
  %v3746 = vsel %vm78, %v3681, 0.0
  %3747 = vadd.xlane.f32.xlu0 %v3746
  %v3748 = vpop.xlane.xlu0 %3747
  %v3749 = vsel %vm78, %v3682, 0.0
  %3750 = vadd.xlane.f32.xlu0 %v3749
  %v3751 = vpop.xlane.xlu0 %3750
  %v3752 = vsel %vm78, %v3683, 0.0
  %3753 = vadd.xlane.f32.xlu0 %v3752
  %v3754 = vpop.xlane.xlu0 %3753
  %v3755 = vsel %vm78, %v3684, 0.0
  %3756 = vadd.xlane.f32.xlu0 %v3755
  %v3757 = vpop.xlane.xlu0 %3756
  %v3758 = vsel %vm78, %v3685, 0.0
  %3759 = vadd.xlane.f32.xlu0 %v3758
  %v3760 = vpop.xlane.xlu0 %3759
  %v3761 = vsel %vm78, %v3686, 0.0
  %3762 = vadd.xlane.f32.xlu0 %v3761
  %v3763 = vpop.xlane.xlu0 %3762
  %v3764 = vsel %vm78, %v3687, 0.0
  %3765 = vadd.xlane.f32.xlu0 %v3764
  %v3766 = vpop.xlane.xlu0 %3765
  %v3767 = vsel %vm78, %v3688, 0.0
  %3768 = vadd.xlane.f32.xlu0 %v3767
  %v3769 = vpop.xlane.xlu0 %3768
  %v3770 = vsel %vm78, %v3689, 0.0
  %3771 = vadd.xlane.f32.xlu0 %v3770
  %v3772 = vpop.xlane.xlu0 %3771
  %v3773 = vsel %vm78, %v3690, 0.0
  %3774 = vadd.xlane.f32.xlu0 %v3773
  %v3775 = vpop.xlane.xlu0 %3774
  %v3776 = vsel %vm78, %v3691, 0.0
  %3777 = vadd.xlane.f32.xlu0 %v3776
  %v3778 = vpop.xlane.xlu0 %3777
  %v3779 = vsel %vm78, %v3692, 0.0
  %3780 = vadd.xlane.f32.xlu0 %v3779
  %v3781 = vpop.xlane.xlu0 %3780
  %v3782 = vsel %vm78, %v3693, 0.0
  %3783 = vadd.xlane.f32.xlu0 %v3782
  %v3784 = vpop.xlane.xlu0 %3783
  %v3785 = vsel %vm78, %v3694, 0.0
  %3786 = vadd.xlane.f32.xlu0 %v3785
  %v3787 = vpop.xlane.xlu0 %3786
  %v3788 = vmul.f32 %v3742, %v133
  %v3789 = vmul.f32 %v3745, %v133
  %v3790 = vmul.f32 %v3748, %v133
  %v3791 = vmul.f32 %v3751, %v133
  %v3792 = vmul.f32 %v3754, %v133
  %v3793 = vmul.f32 %v3757, %v133
  %v3794 = vmul.f32 %v3760, %v133
  %v3795 = vmul.f32 %v3763, %v133
  %v3796 = vmul.f32 %v3766, %v133
  %v3797 = vmul.f32 %v3769, %v133
  %v3798 = vmul.f32 %v3772, %v133
  %v3799 = vmul.f32 %v3775, %v133
  %v3800 = vmul.f32 %v3778, %v133
  %v3801 = vmul.f32 %v3781, %v133
  %v3802 = vmul.f32 %v3784, %v133
  %v3803 = vmul.f32 %v3787, %v133
  %v3804 = vsub.f32 %v3679, %v3788
  %v3805 = vsub.f32 %v3680, %v3789
  %v3806 = vsub.f32 %v3681, %v3790
  %v3807 = vsub.f32 %v3682, %v3791
  %v3808 = vsub.f32 %v3683, %v3792
  %v3809 = vsub.f32 %v3684, %v3793
  %v3810 = vsub.f32 %v3685, %v3794
  %v3811 = vsub.f32 %v3686, %v3795
  %v3812 = vsub.f32 %v3687, %v3796
  %v3813 = vsub.f32 %v3688, %v3797
  %v3814 = vsub.f32 %v3689, %v3798
  %v3815 = vsub.f32 %v3690, %v3799
  %v3816 = vsub.f32 %v3691, %v3800
  %v3817 = vsub.f32 %v3692, %v3801
  %v3818 = vsub.f32 %v3693, %v3802
  %v3819 = vsub.f32 %v3694, %v3803
  %v3820 = vmul.f32 %v3804, %v3804
  %v3821 = vmul.f32 %v3805, %v3805
  %v3822 = vmul.f32 %v3806, %v3806
  %v3823 = vmul.f32 %v3807, %v3807
  %v3824 = vmul.f32 %v3808, %v3808
  %v3825 = vmul.f32 %v3809, %v3809
  %v3826 = vmul.f32 %v3810, %v3810
  %v3827 = vmul.f32 %v3811, %v3811
  %v3828 = vmul.f32 %v3812, %v3812
  %v3829 = vmul.f32 %v3813, %v3813
  %v3830 = vmul.f32 %v3814, %v3814
  %v3831 = vmul.f32 %v3815, %v3815
  %v3832 = vmul.f32 %v3816, %v3816
  %v3833 = vmul.f32 %v3817, %v3817
  %v3834 = vmul.f32 %v3818, %v3818
  %v3835 = vmul.f32 %v3819, %v3819
  %v3836 = vsel %vm78, %v3820, 0.0
  %3837 = vadd.xlane.f32.xlu0 %v3836
  %v3838 = vpop.xlane.xlu0 %3837
  %v3839 = vsel %vm78, %v3821, 0.0
  %3840 = vadd.xlane.f32.xlu0 %v3839
  %v3841 = vpop.xlane.xlu0 %3840
  %v3842 = vsel %vm78, %v3822, 0.0
  %3843 = vadd.xlane.f32.xlu0 %v3842
  %v3844 = vpop.xlane.xlu0 %3843
  %v3845 = vsel %vm78, %v3823, 0.0
  %3846 = vadd.xlane.f32.xlu0 %v3845
  %v3847 = vpop.xlane.xlu0 %3846
  %v3848 = vsel %vm78, %v3824, 0.0
  %3849 = vadd.xlane.f32.xlu0 %v3848
  %v3850 = vpop.xlane.xlu0 %3849
  %v3851 = vsel %vm78, %v3825, 0.0
  %3852 = vadd.xlane.f32.xlu0 %v3851
  %v3853 = vpop.xlane.xlu0 %3852
  %v3854 = vsel %vm78, %v3826, 0.0
  %3855 = vadd.xlane.f32.xlu0 %v3854
  %v3856 = vpop.xlane.xlu0 %3855
  %v3857 = vsel %vm78, %v3827, 0.0
  %3858 = vadd.xlane.f32.xlu0 %v3857
  %v3859 = vpop.xlane.xlu0 %3858
  %v3860 = vsel %vm78, %v3828, 0.0
  %3861 = vadd.xlane.f32.xlu0 %v3860
  %v3862 = vpop.xlane.xlu0 %3861
  %v3863 = vsel %vm78, %v3829, 0.0
  %3864 = vadd.xlane.f32.xlu0 %v3863
  %v3865 = vpop.xlane.xlu0 %3864
  %v3866 = vsel %vm78, %v3830, 0.0
  %3867 = vadd.xlane.f32.xlu0 %v3866
  %v3868 = vpop.xlane.xlu0 %3867
  %v3869 = vsel %vm78, %v3831, 0.0
  %3870 = vadd.xlane.f32.xlu0 %v3869
  %v3871 = vpop.xlane.xlu0 %3870
  %v3872 = vsel %vm78, %v3832, 0.0
  %3873 = vadd.xlane.f32.xlu0 %v3872
  %v3874 = vpop.xlane.xlu0 %3873
  %v3875 = vsel %vm78, %v3833, 0.0
  %3876 = vadd.xlane.f32.xlu0 %v3875
  %v3877 = vpop.xlane.xlu0 %3876
  %v3878 = vsel %vm78, %v3834, 0.0
  %3879 = vadd.xlane.f32.xlu0 %v3878
  %v3880 = vpop.xlane.xlu0 %3879
  %v3881 = vsel %vm78, %v3835, 0.0
  %3882 = vadd.xlane.f32.xlu0 %v3881
  %v3883 = vpop.xlane.xlu0 %3882
  %v3884 = vmul.f32 %v3838, %v133
  %v3885 = vmul.f32 %v3841, %v133
  %v3886 = vmul.f32 %v3844, %v133
  %v3887 = vmul.f32 %v3847, %v133
  %v3888 = vmul.f32 %v3850, %v133
  %v3889 = vmul.f32 %v3853, %v133
  %v3890 = vmul.f32 %v3856, %v133
  %v3891 = vmul.f32 %v3859, %v133
  %v3892 = vmul.f32 %v3862, %v133
  %v3893 = vmul.f32 %v3865, %v133
  %v3894 = vmul.f32 %v3868, %v133
  %v3895 = vmul.f32 %v3871, %v133
  %v3896 = vmul.f32 %v3874, %v133
  %v3897 = vmul.f32 %v3877, %v133
  %v3898 = vmul.f32 %v3880, %v133
  %v3899 = vmul.f32 %v3883, %v133
  %v3900 = vadd.f32 %v3884, 1e-05
  %v3901 = vadd.f32 %v3885, 1e-05
  %v3902 = vadd.f32 %v3886, 1e-05
  %v3903 = vadd.f32 %v3887, 1e-05
  %v3904 = vadd.f32 %v3888, 1e-05
  %v3905 = vadd.f32 %v3889, 1e-05
  %v3906 = vadd.f32 %v3890, 1e-05
  %v3907 = vadd.f32 %v3891, 1e-05
  %v3908 = vadd.f32 %v3892, 1e-05
  %v3909 = vadd.f32 %v3893, 1e-05
  %v3910 = vadd.f32 %v3894, 1e-05
  %v3911 = vadd.f32 %v3895, 1e-05
  %v3912 = vadd.f32 %v3896, 1e-05
  %v3913 = vadd.f32 %v3897, 1e-05
  %v3914 = vadd.f32 %v3898, 1e-05
  %v3915 = vadd.f32 %v3899, 1e-05
  %v3916 = vrsqrt.pop %v3900
  %v3917 = vmul.f32 %v3916, %v3900
  %v3918 = vmul.f32 %v3917, %v3916
  %v3919 = vmul.f32 0.5, %v3918
  %v3920 = vsub.f32 1.5, %v3919
  %v3921 = vmul.f32 %v3916, %v3920
  %vm3922 = vweird.f32 %v3900
  %vm3923 = vweird.f32 %v3916
  %vm3924 = vmor %vm3922, %vm3923
  %v3925 = vsel %vm3924, %v3916, %v3921
  %v3926 = vrsqrt.pop %v3901
  %v3927 = vmul.f32 %v3926, %v3901
  %v3928 = vmul.f32 %v3927, %v3926
  %v3929 = vmul.f32 0.5, %v3928
  %v3930 = vsub.f32 1.5, %v3929
  %v3931 = vmul.f32 %v3926, %v3930
  %vm3932 = vweird.f32 %v3901
  %vm3933 = vweird.f32 %v3926
  %vm3934 = vmor %vm3932, %vm3933
  %v3935 = vsel %vm3934, %v3926, %v3931
  %v3936 = vrsqrt.pop %v3902
  %v3937 = vmul.f32 %v3936, %v3902
  %v3938 = vmul.f32 %v3937, %v3936
  %v3939 = vmul.f32 0.5, %v3938
  %v3940 = vsub.f32 1.5, %v3939
  %v3941 = vmul.f32 %v3936, %v3940
  %vm3942 = vweird.f32 %v3902
  %vm3943 = vweird.f32 %v3936
  %vm3944 = vmor %vm3942, %vm3943
  %v3945 = vsel %vm3944, %v3936, %v3941
  %v3946 = vrsqrt.pop %v3903
  %v3947 = vmul.f32 %v3946, %v3903
  %v3948 = vmul.f32 %v3947, %v3946
  %v3949 = vmul.f32 0.5, %v3948
  %v3950 = vsub.f32 1.5, %v3949
  %v3951 = vmul.f32 %v3946, %v3950
  %vm3952 = vweird.f32 %v3903
  %vm3953 = vweird.f32 %v3946
  %vm3954 = vmor %vm3952, %vm3953
  %v3955 = vsel %vm3954, %v3946, %v3951
  %v3956 = vrsqrt.pop %v3904
  %v3957 = vmul.f32 %v3956, %v3904
  %v3958 = vmul.f32 %v3957, %v3956
  %v3959 = vmul.f32 0.5, %v3958
  %v3960 = vsub.f32 1.5, %v3959
  %v3961 = vmul.f32 %v3956, %v3960
  %vm3962 = vweird.f32 %v3904
  %vm3963 = vweird.f32 %v3956
  %vm3964 = vmor %vm3962, %vm3963
  %v3965 = vsel %vm3964, %v3956, %v3961
  %v3966 = vrsqrt.pop %v3905
  %v3967 = vmul.f32 %v3966, %v3905
  %v3968 = vmul.f32 %v3967, %v3966
  %v3969 = vmul.f32 0.5, %v3968
  %v3970 = vsub.f32 1.5, %v3969
  %v3971 = vmul.f32 %v3966, %v3970
  %vm3972 = vweird.f32 %v3905
  %vm3973 = vweird.f32 %v3966
  %vm3974 = vmor %vm3972, %vm3973
  %v3975 = vsel %vm3974, %v3966, %v3971
  %v3976 = vrsqrt.pop %v3906
  %v3977 = vmul.f32 %v3976, %v3906
  %v3978 = vmul.f32 %v3977, %v3976
  %v3979 = vmul.f32 0.5, %v3978
  %v3980 = vsub.f32 1.5, %v3979
  %v3981 = vmul.f32 %v3976, %v3980
  %vm3982 = vweird.f32 %v3906
  %vm3983 = vweird.f32 %v3976
  %vm3984 = vmor %vm3982, %vm3983
  %v3985 = vsel %vm3984, %v3976, %v3981
  %v3986 = vrsqrt.pop %v3907
  %v3987 = vmul.f32 %v3986, %v3907
  %v3988 = vmul.f32 %v3987, %v3986
  %v3989 = vmul.f32 0.5, %v3988
  %v3990 = vsub.f32 1.5, %v3989
  %v3991 = vmul.f32 %v3986, %v3990
  %vm3992 = vweird.f32 %v3907
  %vm3993 = vweird.f32 %v3986
  %vm3994 = vmor %vm3992, %vm3993
  %v3995 = vsel %vm3994, %v3986, %v3991
  %v3996 = vrsqrt.pop %v3908
  %v3997 = vmul.f32 %v3996, %v3908
  %v3998 = vmul.f32 %v3997, %v3996
  %v3999 = vmul.f32 0.5, %v3998
  %v4000 = vsub.f32 1.5, %v3999
  %v4001 = vmul.f32 %v3996, %v4000
  %vm4002 = vweird.f32 %v3908
  %vm4003 = vweird.f32 %v3996
  %vm4004 = vmor %vm4002, %vm4003
  %v4005 = vsel %vm4004, %v3996, %v4001
  %v4006 = vrsqrt.pop %v3909
  %v4007 = vmul.f32 %v4006, %v3909
  %v4008 = vmul.f32 %v4007, %v4006
  %v4009 = vmul.f32 0.5, %v4008
  %v4010 = vsub.f32 1.5, %v4009
  %v4011 = vmul.f32 %v4006, %v4010
  %vm4012 = vweird.f32 %v3909
  %vm4013 = vweird.f32 %v4006
  %vm4014 = vmor %vm4012, %vm4013
  %v4015 = vsel %vm4014, %v4006, %v4011
  %v4016 = vrsqrt.pop %v3910
  %v4017 = vmul.f32 %v4016, %v3910
  %v4018 = vmul.f32 %v4017, %v4016
  %v4019 = vmul.f32 0.5, %v4018
  %v4020 = vsub.f32 1.5, %v4019
  %v4021 = vmul.f32 %v4016, %v4020
  %vm4022 = vweird.f32 %v3910
  %vm4023 = vweird.f32 %v4016
  %vm4024 = vmor %vm4022, %vm4023
  %v4025 = vsel %vm4024, %v4016, %v4021
  %v4026 = vrsqrt.pop %v3911
  %v4027 = vmul.f32 %v4026, %v3911
  %v4028 = vmul.f32 %v4027, %v4026
  %v4029 = vmul.f32 0.5, %v4028
  %v4030 = vsub.f32 1.5, %v4029
  %v4031 = vmul.f32 %v4026, %v4030
  %vm4032 = vweird.f32 %v3911
  %vm4033 = vweird.f32 %v4026
  %vm4034 = vmor %vm4032, %vm4033
  %v4035 = vsel %vm4034, %v4026, %v4031
  %v4036 = vrsqrt.pop %v3912
  %v4037 = vmul.f32 %v4036, %v3912
  %v4038 = vmul.f32 %v4037, %v4036
  %v4039 = vmul.f32 0.5, %v4038
  %v4040 = vsub.f32 1.5, %v4039
  %v4041 = vmul.f32 %v4036, %v4040
  %vm4042 = vweird.f32 %v3912
  %vm4043 = vweird.f32 %v4036
  %vm4044 = vmor %vm4042, %vm4043
  %v4045 = vsel %vm4044, %v4036, %v4041
  %v4046 = vrsqrt.pop %v3913
  %v4047 = vmul.f32 %v4046, %v3913
  %v4048 = vmul.f32 %v4047, %v4046
  %v4049 = vmul.f32 0.5, %v4048
  %v4050 = vsub.f32 1.5, %v4049
  %v4051 = vmul.f32 %v4046, %v4050
  %vm4052 = vweird.f32 %v3913
  %vm4053 = vweird.f32 %v4046
  %vm4054 = vmor %vm4052, %vm4053
  %v4055 = vsel %vm4054, %v4046, %v4051
  %v4056 = vrsqrt.pop %v3914
  %v4057 = vmul.f32 %v4056, %v3914
  %v4058 = vmul.f32 %v4057, %v4056
  %v4059 = vmul.f32 0.5, %v4058
  %v4060 = vsub.f32 1.5, %v4059
  %v4061 = vmul.f32 %v4056, %v4060
  %vm4062 = vweird.f32 %v3914
  %vm4063 = vweird.f32 %v4056
  %vm4064 = vmor %vm4062, %vm4063
  %v4065 = vsel %vm4064, %v4056, %v4061
  %v4066 = vrsqrt.pop %v3915
  %v4067 = vmul.f32 %v4066, %v3915
  %v4068 = vmul.f32 %v4067, %v4066
  %v4069 = vmul.f32 0.5, %v4068
  %v4070 = vsub.f32 1.5, %v4069
  %v4071 = vmul.f32 %v4066, %v4070
  %vm4072 = vweird.f32 %v3915
  %vm4073 = vweird.f32 %v4066
  %vm4074 = vmor %vm4072, %vm4073
  %v4075 = vsel %vm4074, %v4066, %v4071
  %v4076 = vmul.f32 %v3804, %v3925
  %v4077 = vmul.f32 %v3805, %v3935
  %v4078 = vmul.f32 %v3806, %v3945
  %v4079 = vmul.f32 %v3807, %v3955
  %v4080 = vmul.f32 %v3808, %v3965
  %v4081 = vmul.f32 %v3809, %v3975
  %v4082 = vmul.f32 %v3810, %v3985
  %v4083 = vmul.f32 %v3811, %v3995
  %v4084 = vmul.f32 %v3812, %v4005
  %v4085 = vmul.f32 %v3813, %v4015
  %v4086 = vmul.f32 %v3814, %v4025
  %v4087 = vmul.f32 %v3815, %v4035
  %v4088 = vmul.f32 %v3816, %v4045
  %v4089 = vmul.f32 %v3817, %v4055
  %v4090 = vmul.f32 %v3818, %v4065
  %v4091 = vmul.f32 %v3819, %v4075
  %v4092 = vperm.slane %v3713, 0
  %v4093 = vmul.f32 %v4076, %v4092
  %v4094 = vmul.f32 %v4077, %v4092
  %v4095 = vmul.f32 %v4078, %v4092
  %v4096 = vmul.f32 %v4079, %v4092
  %v4097 = vmul.f32 %v4080, %v4092
  %v4098 = vmul.f32 %v4081, %v4092
  %v4099 = vmul.f32 %v4082, %v4092
  %v4100 = vmul.f32 %v4083, %v4092
  %v4101 = vmul.f32 %v4084, %v4092
  %v4102 = vmul.f32 %v4085, %v4092
  %v4103 = vmul.f32 %v4086, %v4092
  %v4104 = vmul.f32 %v4087, %v4092
  %v4105 = vmul.f32 %v4088, %v4092
  %v4106 = vmul.f32 %v4089, %v4092
  %v4107 = vmul.f32 %v4090, %v4092
  %v4108 = vmul.f32 %v4091, %v4092
  %v4109 = vperm.slane %v3713, 1
  %v4110 = vadd.f32 %v4093, %v4109
  %v4111 = vadd.f32 %v4094, %v4109
  %v4112 = vadd.f32 %v4095, %v4109
  %v4113 = vadd.f32 %v4096, %v4109
  %v4114 = vadd.f32 %v4097, %v4109
  %v4115 = vadd.f32 %v4098, %v4109
  %v4116 = vadd.f32 %v4099, %v4109
  %v4117 = vadd.f32 %v4100, %v4109
  %v4118 = vadd.f32 %v4101, %v4109
  %v4119 = vadd.f32 %v4102, %v4109
  %v4120 = vadd.f32 %v4103, %v4109
  %v4121 = vadd.f32 %v4104, %v4109
  %v4122 = vadd.f32 %v4105, %v4109
  %v4123 = vadd.f32 %v4106, %v4109
  %v4124 = vadd.f32 %v4107, %v4109
  %v4125 = vadd.f32 %v4108, %v4109
  %v4126 = vpack.c.bf16 %v4111, %v4110
  %v4127 = vpack.c.bf16 %v4113, %v4112
  %v4128 = vpack.c.bf16 %v4115, %v4114
  %v4129 = vpack.c.bf16 %v4117, %v4116
  %v4130 = vpack.c.bf16 %v4119, %v4118
  %v4131 = vpack.c.bf16 %v4121, %v4120
  %v4132 = vpack.c.bf16 %v4123, %v4122
  %v4133 = vpack.c.bf16 %v4125, %v4124
  %v4134 = vpack.c.bf16 %v3717, %v3715
  %v4135 = vpack.c.bf16 %v3721, %v3719
  %v4136 = vperm.slane %v3713, 6
  %v4138 = vsel %vm78, %v4126, 0
  %v4141 = vsel %vm78, %v4127, 0
  %v4144 = vsel %vm78, %v4128, 0
  %v4147 = vsel %vm78, %v4129, 0
  %v4150 = vsel %vm78, %v4130, 0
  %v4153 = vsel %vm78, %v4131, 0
  %v4156 = vsel %vm78, %v4132, 0
  %v4159 = vsel %vm78, %v4133, 0
  %4161 = vmatpush.bf16.msra.mxu0 0
  %4162 = vmatpush.bf16.msra.mxu0 0
  %4163 = vmatpush.bf16.msra.mxu0 0
  %4164 = vmatpush.bf16.msra.mxu0 0
  %4165 = vmatpush.bf16.msra.mxu0 0
  %4166 = vmatpush.bf16.msra.mxu0 0
  %4167 = vmatpush.bf16.msra.mxu0 %v4135
  %4168 = vmatpush.bf16.msra.mxu0 %v4134
  %4169 = vmatmul.bf16.gmra.mxu0 %v4138
  %v4170 = vpop.f32.mrf.mxu0
  %v4171 = vadd.f32 %v4136, %v4170
  %v4172 = vpop.f32.mrf.mxu0
  %v4173 = vadd.f32 %v4136, %v4172
  %4174 = vmatmul.bf16.gmra.mxu0 %v4141
  %v4175 = vpop.f32.mrf.mxu0
  %v4176 = vadd.f32 %v4136, %v4175
  %v4177 = vpop.f32.mrf.mxu0
  %v4178 = vadd.f32 %v4136, %v4177
  %4179 = vmatmul.bf16.gmra.mxu0 %v4144
  %v4180 = vpop.f32.mrf.mxu0
  %v4181 = vadd.f32 %v4136, %v4180
  %v4182 = vpop.f32.mrf.mxu0
  %v4183 = vadd.f32 %v4136, %v4182
  %4184 = vmatmul.bf16.gmra.mxu0 %v4147
  %v4185 = vpop.f32.mrf.mxu0
  %v4186 = vadd.f32 %v4136, %v4185
  %v4187 = vpop.f32.mrf.mxu0
  %v4188 = vadd.f32 %v4136, %v4187
  %4189 = vmatmul.bf16.gmra.mxu0 %v4150
  %v4190 = vpop.f32.mrf.mxu0
  %v4191 = vadd.f32 %v4136, %v4190
  %v4192 = vpop.f32.mrf.mxu0
  %v4193 = vadd.f32 %v4136, %v4192
  %4194 = vmatmul.bf16.gmra.mxu0 %v4153
  %v4195 = vpop.f32.mrf.mxu0
  %v4196 = vadd.f32 %v4136, %v4195
  %v4197 = vpop.f32.mrf.mxu0
  %v4198 = vadd.f32 %v4136, %v4197
  %4199 = vmatmul.bf16.gmra.mxu0 %v4156
  %v4200 = vpop.f32.mrf.mxu0
  %v4201 = vadd.f32 %v4136, %v4200
  %v4202 = vpop.f32.mrf.mxu0
  %v4203 = vadd.f32 %v4136, %v4202
  %4204 = vmatmul.bf16.gmra.mxu0 %v4159
  %v4205 = vpop.f32.mrf.mxu0
  %v4206 = vadd.f32 %v4136, %v4205
  %v4207 = vpop.f32.mrf.mxu0
  %v4208 = vadd.f32 %v4136, %v4207
  %4209 = vdwg.mxu0
  %v4210 = vmul.f32 %v4171, 0.35355338
  %v4211 = vmul.f32 %v4173, 0.35355338
  %v4212 = vmul.f32 %v4176, 0.35355338
  %v4213 = vmul.f32 %v4178, 0.35355338
  %v4214 = vmul.f32 %v4181, 0.35355338
  %v4215 = vmul.f32 %v4183, 0.35355338
  %v4216 = vmul.f32 %v4186, 0.35355338
  %v4217 = vmul.f32 %v4188, 0.35355338
  %v4218 = vmul.f32 %v4191, 0.35355338
  %v4219 = vmul.f32 %v4193, 0.35355338
  %v4220 = vmul.f32 %v4196, 0.35355338
  %v4221 = vmul.f32 %v4198, 0.35355338
  %v4222 = vmul.f32 %v4201, 0.35355338
  %v4223 = vmul.f32 %v4203, 0.35355338
  %v4224 = vmul.f32 %v4206, 0.35355338
  %v4225 = vmul.f32 %v4208, 0.35355338
  %v4226 = vpack.c.bf16 %v4211, %v4210
  %v4227 = vpack.c.bf16 %v4213, %v4212
  %v4228 = vpack.c.bf16 %v4215, %v4214
  %v4229 = vpack.c.bf16 %v4217, %v4216
  %v4230 = vpack.c.bf16 %v4219, %v4218
  %v4231 = vpack.c.bf16 %v4221, %v4220
  %v4232 = vpack.c.bf16 %v4223, %v4222
  %v4233 = vpack.c.bf16 %v4225, %v4224
  %v4234 = vpack.c.bf16 %v4173, %v4171
  %v4235 = vpack.c.bf16 %v4178, %v4176
  %v4236 = vpack.c.bf16 %v4183, %v4181
  %v4237 = vpack.c.bf16 %v4188, %v4186
  %v4238 = vpack.c.bf16 %v4193, %v4191
  %v4239 = vpack.c.bf16 %v4198, %v4196
  %v4240 = vpack.c.bf16 %v4203, %v4201
  %v4241 = vpack.c.bf16 %v4208, %v4206
  %v4242 = vunpack.c.l.bf16 %v3696
  %v4243 = vunpack.c.l.bf16 %v3697
  %v4244 = vunpack.c.l.bf16 %v3698
  %v4245 = vunpack.c.l.bf16 %v3699
  %v4246 = vunpack.c.l.bf16 %v3700
  %v4247 = vunpack.c.l.bf16 %v3701
  %v4248 = vunpack.c.l.bf16 %v3702
  %v4249 = vunpack.c.l.bf16 %v3703
  %v4250 = vunpack.c.l.bf16 %v3704
  %v4251 = vunpack.c.l.bf16 %v3705
  %v4252 = vunpack.c.l.bf16 %v3706
  %v4253 = vunpack.c.l.bf16 %v3707
  %v4254 = vunpack.c.l.bf16 %v3708
  %v4255 = vunpack.c.l.bf16 %v3709
  %v4256 = vunpack.c.l.bf16 %v3710
  %v4257 = vunpack.c.l.bf16 %v3711
  %4266 = vrot.lane.b32.xlu0 %v4234, 96
  %v4267 = vpop.permute.xlu0 %4266
  %4268 = vrot.lane.b32.xlu0 %v4235, 96
  %v4269 = vpop.permute.xlu0 %4268
  %4270 = vrot.lane.b32.xlu0 %v4236, 96
  %v4271 = vpop.permute.xlu0 %4270
  %4272 = vrot.lane.b32.xlu0 %v4237, 96
  %v4273 = vpop.permute.xlu0 %4272
  %4274 = vrot.lane.b32.xlu0 %v4238, 96
  %v4275 = vpop.permute.xlu0 %4274
  %4276 = vrot.lane.b32.xlu0 %v4239, 96
  %v4277 = vpop.permute.xlu0 %4276
  %4278 = vrot.lane.b32.xlu0 %v4240, 96
  %v4279 = vpop.permute.xlu0 %4278
  %4280 = vrot.lane.b32.xlu0 %v4241, 96
  %v4281 = vpop.permute.xlu0 %4280
  %v4283 = vsel %vm628, %v4226, 0
  %v4286 = vsel %vm628, %v4227, 0
  %v4289 = vsel %vm628, %v4228, 0
  %v4292 = vsel %vm628, %v4229, 0
  %v4295 = vsel %vm628, %v4230, 0
  %v4298 = vsel %vm628, %v4231, 0
  %v4301 = vsel %vm628, %v4232, 0
  %v4304 = vsel %vm628, %v4233, 0
  %v4307 = vsel %vm628, %v4267, 0
  %v4310 = vsel %vm628, %v4269, 0
  %v4313 = vsel %vm628, %v4271, 0
  %v4316 = vsel %vm628, %v4273, 0
  %v4319 = vsel %vm628, %v4275, 0
  %v4322 = vsel %vm628, %v4277, 0
  %v4325 = vsel %vm628, %v4279, 0
  %v4328 = vsel %vm628, %v4281, 0
  %4330 = vmatpush.bf16.xpose.msra.mxu0 %v4328
  %4331 = vmatpush.bf16.xpose.msra.mxu0 %v4325
  %4332 = vmatpush.bf16.xpose.msra.mxu0 %v4322
  %4333 = vmatpush.bf16.xpose.msra.mxu0 %v4319
  %4334 = vmatpush.bf16.xpose.msra.mxu0 %v4316
  %4335 = vmatpush.bf16.xpose.msra.mxu0 %v4313
  %4336 = vmatpush.bf16.xpose.msra.mxu0 %v4310
  %4337 = vmatpush.bf16.xpose.msra.mxu0 %v4307
  %4338 = vmatmul.bf16.gmra.mxu0 %v4283
  %v4339 = vpop.f32.mrf.mxu0
  %v4340 = vadd.f32 %v4242, %v4339
  %v4341 = vpop.f32.mrf.mxu0
  %v4342 = vadd.f32 %v4243, %v4341
  %4343 = vmatmul.bf16.gmra.mxu0 %v4286
  %v4344 = vpop.f32.mrf.mxu0
  %v4345 = vadd.f32 %v4244, %v4344
  %v4346 = vpop.f32.mrf.mxu0
  %v4347 = vadd.f32 %v4245, %v4346
  %4348 = vmatmul.bf16.gmra.mxu0 %v4289
  %v4349 = vpop.f32.mrf.mxu0
  %v4350 = vadd.f32 %v4246, %v4349
  %v4351 = vpop.f32.mrf.mxu0
  %v4352 = vadd.f32 %v4247, %v4351
  %4353 = vmatmul.bf16.gmra.mxu0 %v4292
  %v4354 = vpop.f32.mrf.mxu0
  %v4355 = vadd.f32 %v4248, %v4354
  %v4356 = vpop.f32.mrf.mxu0
  %v4357 = vadd.f32 %v4249, %v4356
  %4358 = vmatmul.bf16.gmra.mxu0 %v4295
  %v4359 = vpop.f32.mrf.mxu0
  %v4360 = vadd.f32 %v4250, %v4359
  %v4361 = vpop.f32.mrf.mxu0
  %v4362 = vadd.f32 %v4251, %v4361
  %4363 = vmatmul.bf16.gmra.mxu0 %v4298
  %v4364 = vpop.f32.mrf.mxu0
  %v4365 = vadd.f32 %v4252, %v4364
  %v4366 = vpop.f32.mrf.mxu0
  %v4367 = vadd.f32 %v4253, %v4366
  %4368 = vmatmul.bf16.gmra.mxu0 %v4301
  %v4369 = vpop.f32.mrf.mxu0
  %v4370 = vadd.f32 %v4254, %v4369
  %v4371 = vpop.f32.mrf.mxu0
  %v4372 = vadd.f32 %v4255, %v4371
  %4373 = vmatmul.bf16.gmra.mxu0 %v4304
  %v4374 = vpop.f32.mrf.mxu0
  %v4375 = vadd.f32 %v4256, %v4374
  %v4376 = vpop.f32.mrf.mxu0
  %v4377 = vadd.f32 %v4257, %v4376
  %4378 = vdwg.mxu0
  %4379 = vmax.xlane.f32.xlu0 %v4340
  %v4380 = vpop.xlane.xlu0 %4379
  %4381 = vmax.xlane.f32.xlu0 %v4342
  %v4382 = vpop.xlane.xlu0 %4381
  %4383 = vmax.xlane.f32.xlu0 %v4345
  %v4384 = vpop.xlane.xlu0 %4383
  %4385 = vmax.xlane.f32.xlu0 %v4347
  %v4386 = vpop.xlane.xlu0 %4385
  %4387 = vmax.xlane.f32.xlu0 %v4350
  %v4388 = vpop.xlane.xlu0 %4387
  %4389 = vmax.xlane.f32.xlu0 %v4352
  %v4390 = vpop.xlane.xlu0 %4389
  %4391 = vmax.xlane.f32.xlu0 %v4355
  %v4392 = vpop.xlane.xlu0 %4391
  %4393 = vmax.xlane.f32.xlu0 %v4357
  %v4394 = vpop.xlane.xlu0 %4393
  %4395 = vmax.xlane.f32.xlu0 %v4360
  %v4396 = vpop.xlane.xlu0 %4395
  %4397 = vmax.xlane.f32.xlu0 %v4362
  %v4398 = vpop.xlane.xlu0 %4397
  %4399 = vmax.xlane.f32.xlu0 %v4365
  %v4400 = vpop.xlane.xlu0 %4399
  %4401 = vmax.xlane.f32.xlu0 %v4367
  %v4402 = vpop.xlane.xlu0 %4401
  %4403 = vmax.xlane.f32.xlu0 %v4370
  %v4404 = vpop.xlane.xlu0 %4403
  %4405 = vmax.xlane.f32.xlu0 %v4372
  %v4406 = vpop.xlane.xlu0 %4405
  %4407 = vmax.xlane.f32.xlu0 %v4375
  %v4408 = vpop.xlane.xlu0 %4407
  %4409 = vmax.xlane.f32.xlu0 %v4377
  %v4410 = vpop.xlane.xlu0 %4409
  %v4411 = vsub.f32 %v4340, %v4380
  %v4412 = vsub.f32 %v4342, %v4382
  %v4413 = vsub.f32 %v4345, %v4384
  %v4414 = vsub.f32 %v4347, %v4386
  %v4415 = vsub.f32 %v4350, %v4388
  %v4416 = vsub.f32 %v4352, %v4390
  %v4417 = vsub.f32 %v4355, %v4392
  %v4418 = vsub.f32 %v4357, %v4394
  %v4419 = vsub.f32 %v4360, %v4396
  %v4420 = vsub.f32 %v4362, %v4398
  %v4421 = vsub.f32 %v4365, %v4400
  %v4422 = vsub.f32 %v4367, %v4402
  %v4423 = vsub.f32 %v4370, %v4404
  %v4424 = vsub.f32 %v4372, %v4406
  %v4425 = vsub.f32 %v4375, %v4408
  %v4426 = vsub.f32 %v4377, %v4410
  %v4427 = vmul.f32 %v4411, 1.442695
  %v4428 = vpow.pop %v4427
  %v4429 = vmul.f32 %v4412, 1.442695
  %v4430 = vpow.pop %v4429
  %v4431 = vmul.f32 %v4413, 1.442695
  %v4432 = vpow.pop %v4431
  %v4433 = vmul.f32 %v4414, 1.442695
  %v4434 = vpow.pop %v4433
  %v4435 = vmul.f32 %v4415, 1.442695
  %v4436 = vpow.pop %v4435
  %v4437 = vmul.f32 %v4416, 1.442695
  %v4438 = vpow.pop %v4437
  %v4439 = vmul.f32 %v4417, 1.442695
  %v4440 = vpow.pop %v4439
  %v4441 = vmul.f32 %v4418, 1.442695
  %v4442 = vpow.pop %v4441
  %v4443 = vmul.f32 %v4419, 1.442695
  %v4444 = vpow.pop %v4443
  %v4445 = vmul.f32 %v4420, 1.442695
  %v4446 = vpow.pop %v4445
  %v4447 = vmul.f32 %v4421, 1.442695
  %v4448 = vpow.pop %v4447
  %v4449 = vmul.f32 %v4422, 1.442695
  %v4450 = vpow.pop %v4449
  %v4451 = vmul.f32 %v4423, 1.442695
  %v4452 = vpow.pop %v4451
  %v4453 = vmul.f32 %v4424, 1.442695
  %v4454 = vpow.pop %v4453
  %v4455 = vmul.f32 %v4425, 1.442695
  %v4456 = vpow.pop %v4455
  %v4457 = vmul.f32 %v4426, 1.442695
  %v4458 = vpow.pop %v4457
  %4459 = vadd.xlane.f32.xlu0 %v4428
  %v4460 = vpop.xlane.xlu0 %4459
  %4461 = vadd.xlane.f32.xlu0 %v4430
  %v4462 = vpop.xlane.xlu0 %4461
  %4463 = vadd.xlane.f32.xlu0 %v4432
  %v4464 = vpop.xlane.xlu0 %4463
  %4465 = vadd.xlane.f32.xlu0 %v4434
  %v4466 = vpop.xlane.xlu0 %4465
  %4467 = vadd.xlane.f32.xlu0 %v4436
  %v4468 = vpop.xlane.xlu0 %4467
  %4469 = vadd.xlane.f32.xlu0 %v4438
  %v4470 = vpop.xlane.xlu0 %4469
  %4471 = vadd.xlane.f32.xlu0 %v4440
  %v4472 = vpop.xlane.xlu0 %4471
  %4473 = vadd.xlane.f32.xlu0 %v4442
  %v4474 = vpop.xlane.xlu0 %4473
  %4475 = vadd.xlane.f32.xlu0 %v4444
  %v4476 = vpop.xlane.xlu0 %4475
  %4477 = vadd.xlane.f32.xlu0 %v4446
  %v4478 = vpop.xlane.xlu0 %4477
  %4479 = vadd.xlane.f32.xlu0 %v4448
  %v4480 = vpop.xlane.xlu0 %4479
  %4481 = vadd.xlane.f32.xlu0 %v4450
  %v4482 = vpop.xlane.xlu0 %4481
  %4483 = vadd.xlane.f32.xlu0 %v4452
  %v4484 = vpop.xlane.xlu0 %4483
  %4485 = vadd.xlane.f32.xlu0 %v4454
  %v4486 = vpop.xlane.xlu0 %4485
  %4487 = vadd.xlane.f32.xlu0 %v4456
  %v4488 = vpop.xlane.xlu0 %4487
  %4489 = vadd.xlane.f32.xlu0 %v4458
  %v4490 = vpop.xlane.xlu0 %4489
  %v4491 = vrcp.pop %v4460
  %v4492 = vrcp.pop %v4462
  %v4493 = vrcp.pop %v4464
  %v4494 = vrcp.pop %v4466
  %v4495 = vrcp.pop %v4468
  %v4496 = vrcp.pop %v4470
  %v4497 = vrcp.pop %v4472
  %v4498 = vrcp.pop %v4474
  %v4499 = vrcp.pop %v4476
  %v4500 = vrcp.pop %v4478
  %v4501 = vrcp.pop %v4480
  %v4502 = vrcp.pop %v4482
  %v4503 = vrcp.pop %v4484
  %v4504 = vrcp.pop %v4486
  %v4505 = vrcp.pop %v4488
  %v4506 = vrcp.pop %v4490
  %v4507 = vmul.f32 %v4428, %v4491
  %v4508 = vmul.f32 %v4430, %v4492
  %v4509 = vmul.f32 %v4432, %v4493
  %v4510 = vmul.f32 %v4434, %v4494
  %v4511 = vmul.f32 %v4436, %v4495
  %v4512 = vmul.f32 %v4438, %v4496
  %v4513 = vmul.f32 %v4440, %v4497
  %v4514 = vmul.f32 %v4442, %v4498
  %v4515 = vmul.f32 %v4444, %v4499
  %v4516 = vmul.f32 %v4446, %v4500
  %v4517 = vmul.f32 %v4448, %v4501
  %v4518 = vmul.f32 %v4450, %v4502
  %v4519 = vmul.f32 %v4452, %v4503
  %v4520 = vmul.f32 %v4454, %v4504
  %v4521 = vmul.f32 %v4456, %v4505
  %v4522 = vmul.f32 %v4458, %v4506
  %v4523 = vpack.c.bf16 %v4508, %v4507
  %v4524 = vpack.c.bf16 %v4510, %v4509
  %v4525 = vpack.c.bf16 %v4512, %v4511
  %v4526 = vpack.c.bf16 %v4514, %v4513
  %v4527 = vpack.c.bf16 %v4516, %v4515
  %v4528 = vpack.c.bf16 %v4518, %v4517
  %v4529 = vpack.c.bf16 %v4520, %v4519
  %v4530 = vpack.c.bf16 %v4522, %v4521
  %4531 = vrot.lane.b32.xlu0 %v4234, 64
  %v4532 = vpop.permute.xlu0 %4531
  %4533 = vrot.lane.b32.xlu0 %v4235, 64
  %v4534 = vpop.permute.xlu0 %4533
  %4535 = vrot.lane.b32.xlu0 %v4236, 64
  %v4536 = vpop.permute.xlu0 %4535
  %4537 = vrot.lane.b32.xlu0 %v4237, 64
  %v4538 = vpop.permute.xlu0 %4537
  %4539 = vrot.lane.b32.xlu0 %v4238, 64
  %v4540 = vpop.permute.xlu0 %4539
  %4541 = vrot.lane.b32.xlu0 %v4239, 64
  %v4542 = vpop.permute.xlu0 %4541
  %4543 = vrot.lane.b32.xlu0 %v4240, 64
  %v4544 = vpop.permute.xlu0 %4543
  %4545 = vrot.lane.b32.xlu0 %v4241, 64
  %v4546 = vpop.permute.xlu0 %4545
  %4555 = vmatpush.bf16.msra.mxu0 %v4546
  %4556 = vmatpush.bf16.msra.mxu0 %v4544
  %4557 = vmatpush.bf16.msra.mxu0 %v4542
  %4558 = vmatpush.bf16.msra.mxu0 %v4540
  %4559 = vmatpush.bf16.msra.mxu0 %v4538
  %4560 = vmatpush.bf16.msra.mxu0 %v4536
  %4561 = vmatpush.bf16.msra.mxu0 %v4534
  %4562 = vmatpush.bf16.msra.mxu0 %v4532
  %4563 = vmatmul.bf16.gmra.mxu0 %v4523
  %v4564 = vpop.f32.mrf.mxu0
  %v4565 = vadd.f32 0.0, %v4564
  %v4566 = vpop.f32.mrf.mxu0
  %v4567 = vadd.f32 0.0, %v4566
  %4568 = vmatmul.bf16.gmra.mxu0 %v4524
  %v4569 = vpop.f32.mrf.mxu0
  %v4570 = vadd.f32 0.0, %v4569
  %v4571 = vpop.f32.mrf.mxu0
  %v4572 = vadd.f32 0.0, %v4571
  %4573 = vmatmul.bf16.gmra.mxu0 %v4525
  %v4574 = vpop.f32.mrf.mxu0
  %v4575 = vadd.f32 0.0, %v4574
  %v4576 = vpop.f32.mrf.mxu0
  %v4577 = vadd.f32 0.0, %v4576
  %4578 = vmatmul.bf16.gmra.mxu0 %v4526
  %v4579 = vpop.f32.mrf.mxu0
  %v4580 = vadd.f32 0.0, %v4579
  %v4581 = vpop.f32.mrf.mxu0
  %v4582 = vadd.f32 0.0, %v4581
  %4583 = vmatmul.bf16.gmra.mxu0 %v4527
  %v4584 = vpop.f32.mrf.mxu0
  %v4585 = vadd.f32 0.0, %v4584
  %v4586 = vpop.f32.mrf.mxu0
  %v4587 = vadd.f32 0.0, %v4586
  %4588 = vmatmul.bf16.gmra.mxu0 %v4528
  %v4589 = vpop.f32.mrf.mxu0
  %v4590 = vadd.f32 0.0, %v4589
  %v4591 = vpop.f32.mrf.mxu0
  %v4592 = vadd.f32 0.0, %v4591
  %4593 = vmatmul.bf16.gmra.mxu0 %v4529
  %v4594 = vpop.f32.mrf.mxu0
  %v4595 = vadd.f32 0.0, %v4594
  %v4596 = vpop.f32.mrf.mxu0
  %v4597 = vadd.f32 0.0, %v4596
  %4598 = vmatmul.bf16.gmra.mxu0 %v4530
  %v4599 = vpop.f32.mrf.mxu0
  %v4600 = vadd.f32 0.0, %v4599
  %v4601 = vpop.f32.mrf.mxu0
  %v4602 = vadd.f32 0.0, %v4601
  %4603 = vdwg.mxu0
  %v4604 = vpack.c.bf16 %v3715, %v3715
  %v4605 = vpack.c.bf16 %v4567, %v4565
  %v4606 = vpack.c.bf16 %v4572, %v4570
  %v4607 = vpack.c.bf16 %v4577, %v4575
  %v4608 = vpack.c.bf16 %v4582, %v4580
  %v4609 = vpack.c.bf16 %v4587, %v4585
  %v4610 = vpack.c.bf16 %v4592, %v4590
  %v4611 = vpack.c.bf16 %v4597, %v4595
  %v4612 = vpack.c.bf16 %v4602, %v4600
  %4621 = vrot.lane.b32.xlu0 %v4226, 120
  %v4622 = vpop.permute.xlu0 %4621
  %4623 = vrot.lane.b32.xlu0 %v4227, 120
  %v4624 = vpop.permute.xlu0 %4623
  %4625 = vrot.lane.b32.xlu0 %v4228, 120
  %v4626 = vpop.permute.xlu0 %4625
  %4627 = vrot.lane.b32.xlu0 %v4229, 120
  %v4628 = vpop.permute.xlu0 %4627
  %4629 = vrot.lane.b32.xlu0 %v4230, 120
  %v4630 = vpop.permute.xlu0 %4629
  %4631 = vrot.lane.b32.xlu0 %v4231, 120
  %v4632 = vpop.permute.xlu0 %4631
  %4633 = vrot.lane.b32.xlu0 %v4232, 120
  %v4634 = vpop.permute.xlu0 %4633
  %4635 = vrot.lane.b32.xlu0 %v4233, 120
  %v4636 = vpop.permute.xlu0 %4635
  %4637 = vrot.lane.b32.xlu0 %v4234, 88
  %v4638 = vpop.permute.xlu0 %4637
  %4639 = vrot.lane.b32.xlu0 %v4235, 88
  %v4640 = vpop.permute.xlu0 %4639
  %4641 = vrot.lane.b32.xlu0 %v4236, 88
  %v4642 = vpop.permute.xlu0 %4641
  %4643 = vrot.lane.b32.xlu0 %v4237, 88
  %v4644 = vpop.permute.xlu0 %4643
  %4645 = vrot.lane.b32.xlu0 %v4238, 88
  %v4646 = vpop.permute.xlu0 %4645
  %4647 = vrot.lane.b32.xlu0 %v4239, 88
  %v4648 = vpop.permute.xlu0 %4647
  %4649 = vrot.lane.b32.xlu0 %v4240, 88
  %v4650 = vpop.permute.xlu0 %4649
  %4651 = vrot.lane.b32.xlu0 %v4241, 88
  %v4652 = vpop.permute.xlu0 %4651
  %v4654 = vsel %vm628, %v4622, 0
  %v4657 = vsel %vm628, %v4624, 0
  %v4660 = vsel %vm628, %v4626, 0
  %v4663 = vsel %vm628, %v4628, 0
  %v4666 = vsel %vm628, %v4630, 0
  %v4669 = vsel %vm628, %v4632, 0
  %v4672 = vsel %vm628, %v4634, 0
  %v4675 = vsel %vm628, %v4636, 0
  %v4678 = vsel %vm628, %v4638, 0
  %v4681 = vsel %vm628, %v4640, 0
  %v4684 = vsel %vm628, %v4642, 0
  %v4687 = vsel %vm628, %v4644, 0
  %v4690 = vsel %vm628, %v4646, 0
  %v4693 = vsel %vm628, %v4648, 0
  %v4696 = vsel %vm628, %v4650, 0
  %v4699 = vsel %vm628, %v4652, 0
  %4701 = vmatpush.bf16.xpose.msra.mxu0 %v4699
  %4702 = vmatpush.bf16.xpose.msra.mxu0 %v4696
  %4703 = vmatpush.bf16.xpose.msra.mxu0 %v4693
  %4704 = vmatpush.bf16.xpose.msra.mxu0 %v4690
  %4705 = vmatpush.bf16.xpose.msra.mxu0 %v4687
  %4706 = vmatpush.bf16.xpose.msra.mxu0 %v4684
  %4707 = vmatpush.bf16.xpose.msra.mxu0 %v4681
  %4708 = vmatpush.bf16.xpose.msra.mxu0 %v4678
  %4709 = vmatmul.bf16.gmra.mxu0 %v4654
  %v4710 = vpop.f32.mrf.mxu0
  %v4711 = vadd.f32 %v4242, %v4710
  %v4712 = vpop.f32.mrf.mxu0
  %v4713 = vadd.f32 %v4243, %v4712
  %4714 = vmatmul.bf16.gmra.mxu0 %v4657
  %v4715 = vpop.f32.mrf.mxu0
  %v4716 = vadd.f32 %v4244, %v4715
  %v4717 = vpop.f32.mrf.mxu0
  %v4718 = vadd.f32 %v4245, %v4717
  %4719 = vmatmul.bf16.gmra.mxu0 %v4660
  %v4720 = vpop.f32.mrf.mxu0
  %v4721 = vadd.f32 %v4246, %v4720
  %v4722 = vpop.f32.mrf.mxu0
  %v4723 = vadd.f32 %v4247, %v4722
  %4724 = vmatmul.bf16.gmra.mxu0 %v4663
  %v4725 = vpop.f32.mrf.mxu0
  %v4726 = vadd.f32 %v4248, %v4725
  %v4727 = vpop.f32.mrf.mxu0
  %v4728 = vadd.f32 %v4249, %v4727
  %4729 = vmatmul.bf16.gmra.mxu0 %v4666
  %v4730 = vpop.f32.mrf.mxu0
  %v4731 = vadd.f32 %v4250, %v4730
  %v4732 = vpop.f32.mrf.mxu0
  %v4733 = vadd.f32 %v4251, %v4732
  %4734 = vmatmul.bf16.gmra.mxu0 %v4669
  %v4735 = vpop.f32.mrf.mxu0
  %v4736 = vadd.f32 %v4252, %v4735
  %v4737 = vpop.f32.mrf.mxu0
  %v4738 = vadd.f32 %v4253, %v4737
  %4739 = vmatmul.bf16.gmra.mxu0 %v4672
  %v4740 = vpop.f32.mrf.mxu0
  %v4741 = vadd.f32 %v4254, %v4740
  %v4742 = vpop.f32.mrf.mxu0
  %v4743 = vadd.f32 %v4255, %v4742
  %4744 = vmatmul.bf16.gmra.mxu0 %v4675
  %v4745 = vpop.f32.mrf.mxu0
  %v4746 = vadd.f32 %v4256, %v4745
  %v4747 = vpop.f32.mrf.mxu0
  %v4748 = vadd.f32 %v4257, %v4747
  %4749 = vdwg.mxu0
  %4750 = vmax.xlane.f32.xlu0 %v4711
  %v4751 = vpop.xlane.xlu0 %4750
  %4752 = vmax.xlane.f32.xlu0 %v4713
  %v4753 = vpop.xlane.xlu0 %4752
  %4754 = vmax.xlane.f32.xlu0 %v4716
  %v4755 = vpop.xlane.xlu0 %4754
  %4756 = vmax.xlane.f32.xlu0 %v4718
  %v4757 = vpop.xlane.xlu0 %4756
  %4758 = vmax.xlane.f32.xlu0 %v4721
  %v4759 = vpop.xlane.xlu0 %4758
  %4760 = vmax.xlane.f32.xlu0 %v4723
  %v4761 = vpop.xlane.xlu0 %4760
  %4762 = vmax.xlane.f32.xlu0 %v4726
  %v4763 = vpop.xlane.xlu0 %4762
  %4764 = vmax.xlane.f32.xlu0 %v4728
  %v4765 = vpop.xlane.xlu0 %4764
  %4766 = vmax.xlane.f32.xlu0 %v4731
  %v4767 = vpop.xlane.xlu0 %4766
  %4768 = vmax.xlane.f32.xlu0 %v4733
  %v4769 = vpop.xlane.xlu0 %4768
  %4770 = vmax.xlane.f32.xlu0 %v4736
  %v4771 = vpop.xlane.xlu0 %4770
  %4772 = vmax.xlane.f32.xlu0 %v4738
  %v4773 = vpop.xlane.xlu0 %4772
  %4774 = vmax.xlane.f32.xlu0 %v4741
  %v4775 = vpop.xlane.xlu0 %4774
  %4776 = vmax.xlane.f32.xlu0 %v4743
  %v4777 = vpop.xlane.xlu0 %4776
  %4778 = vmax.xlane.f32.xlu0 %v4746
  %v4779 = vpop.xlane.xlu0 %4778
  %4780 = vmax.xlane.f32.xlu0 %v4748
  %v4781 = vpop.xlane.xlu0 %4780
  %v4782 = vsub.f32 %v4711, %v4751
  %v4783 = vsub.f32 %v4713, %v4753
  %v4784 = vsub.f32 %v4716, %v4755
  %v4785 = vsub.f32 %v4718, %v4757
  %v4786 = vsub.f32 %v4721, %v4759
  %v4787 = vsub.f32 %v4723, %v4761
  %v4788 = vsub.f32 %v4726, %v4763
  %v4789 = vsub.f32 %v4728, %v4765
  %v4790 = vsub.f32 %v4731, %v4767
  %v4791 = vsub.f32 %v4733, %v4769
  %v4792 = vsub.f32 %v4736, %v4771
  %v4793 = vsub.f32 %v4738, %v4773
  %v4794 = vsub.f32 %v4741, %v4775
  %v4795 = vsub.f32 %v4743, %v4777
  %v4796 = vsub.f32 %v4746, %v4779
  %v4797 = vsub.f32 %v4748, %v4781
  %v4798 = vmul.f32 %v4782, 1.442695
  %v4799 = vpow.pop %v4798
  %v4800 = vmul.f32 %v4783, 1.442695
  %v4801 = vpow.pop %v4800
  %v4802 = vmul.f32 %v4784, 1.442695
  %v4803 = vpow.pop %v4802
  %v4804 = vmul.f32 %v4785, 1.442695
  %v4805 = vpow.pop %v4804
  %v4806 = vmul.f32 %v4786, 1.442695
  %v4807 = vpow.pop %v4806
  %v4808 = vmul.f32 %v4787, 1.442695
  %v4809 = vpow.pop %v4808
  %v4810 = vmul.f32 %v4788, 1.442695
  %v4811 = vpow.pop %v4810
  %v4812 = vmul.f32 %v4789, 1.442695
  %v4813 = vpow.pop %v4812
  %v4814 = vmul.f32 %v4790, 1.442695
  %v4815 = vpow.pop %v4814
  %v4816 = vmul.f32 %v4791, 1.442695
  %v4817 = vpow.pop %v4816
  %v4818 = vmul.f32 %v4792, 1.442695
  %v4819 = vpow.pop %v4818
  %v4820 = vmul.f32 %v4793, 1.442695
  %v4821 = vpow.pop %v4820
  %v4822 = vmul.f32 %v4794, 1.442695
  %v4823 = vpow.pop %v4822
  %v4824 = vmul.f32 %v4795, 1.442695
  %v4825 = vpow.pop %v4824
  %v4826 = vmul.f32 %v4796, 1.442695
  %v4827 = vpow.pop %v4826
  %v4828 = vmul.f32 %v4797, 1.442695
  %v4829 = vpow.pop %v4828
  %4830 = vadd.xlane.f32.xlu0 %v4799
  %v4831 = vpop.xlane.xlu0 %4830
  %4832 = vadd.xlane.f32.xlu0 %v4801
  %v4833 = vpop.xlane.xlu0 %4832
  %4834 = vadd.xlane.f32.xlu0 %v4803
  %v4835 = vpop.xlane.xlu0 %4834
  %4836 = vadd.xlane.f32.xlu0 %v4805
  %v4837 = vpop.xlane.xlu0 %4836
  %4838 = vadd.xlane.f32.xlu0 %v4807
  %v4839 = vpop.xlane.xlu0 %4838
  %4840 = vadd.xlane.f32.xlu0 %v4809
  %v4841 = vpop.xlane.xlu0 %4840
  %4842 = vadd.xlane.f32.xlu0 %v4811
  %v4843 = vpop.xlane.xlu0 %4842
  %4844 = vadd.xlane.f32.xlu0 %v4813
  %v4845 = vpop.xlane.xlu0 %4844
  %4846 = vadd.xlane.f32.xlu0 %v4815
  %v4847 = vpop.xlane.xlu0 %4846
  %4848 = vadd.xlane.f32.xlu0 %v4817
  %v4849 = vpop.xlane.xlu0 %4848
  %4850 = vadd.xlane.f32.xlu0 %v4819
  %v4851 = vpop.xlane.xlu0 %4850
  %4852 = vadd.xlane.f32.xlu0 %v4821
  %v4853 = vpop.xlane.xlu0 %4852
  %4854 = vadd.xlane.f32.xlu0 %v4823
  %v4855 = vpop.xlane.xlu0 %4854
  %4856 = vadd.xlane.f32.xlu0 %v4825
  %v4857 = vpop.xlane.xlu0 %4856
  %4858 = vadd.xlane.f32.xlu0 %v4827
  %v4859 = vpop.xlane.xlu0 %4858
  %4860 = vadd.xlane.f32.xlu0 %v4829
  %v4861 = vpop.xlane.xlu0 %4860
  %v4862 = vrcp.pop %v4831
  %v4863 = vrcp.pop %v4833
  %v4864 = vrcp.pop %v4835
  %v4865 = vrcp.pop %v4837
  %v4866 = vrcp.pop %v4839
  %v4867 = vrcp.pop %v4841
  %v4868 = vrcp.pop %v4843
  %v4869 = vrcp.pop %v4845
  %v4870 = vrcp.pop %v4847
  %v4871 = vrcp.pop %v4849
  %v4872 = vrcp.pop %v4851
  %v4873 = vrcp.pop %v4853
  %v4874 = vrcp.pop %v4855
  %v4875 = vrcp.pop %v4857
  %v4876 = vrcp.pop %v4859
  %v4877 = vrcp.pop %v4861
  %v4878 = vmul.f32 %v4799, %v4862
  %v4879 = vmul.f32 %v4801, %v4863
  %v4880 = vmul.f32 %v4803, %v4864
  %v4881 = vmul.f32 %v4805, %v4865
  %v4882 = vmul.f32 %v4807, %v4866
  %v4883 = vmul.f32 %v4809, %v4867
  %v4884 = vmul.f32 %v4811, %v4868
  %v4885 = vmul.f32 %v4813, %v4869
  %v4886 = vmul.f32 %v4815, %v4870
  %v4887 = vmul.f32 %v4817, %v4871
  %v4888 = vmul.f32 %v4819, %v4872
  %v4889 = vmul.f32 %v4821, %v4873
  %v4890 = vmul.f32 %v4823, %v4874
  %v4891 = vmul.f32 %v4825, %v4875
  %v4892 = vmul.f32 %v4827, %v4876
  %v4893 = vmul.f32 %v4829, %v4877
  %v4894 = vpack.c.bf16 %v4879, %v4878
  %v4895 = vpack.c.bf16 %v4881, %v4880
  %v4896 = vpack.c.bf16 %v4883, %v4882
  %v4897 = vpack.c.bf16 %v4885, %v4884
  %v4898 = vpack.c.bf16 %v4887, %v4886
  %v4899 = vpack.c.bf16 %v4889, %v4888
  %v4900 = vpack.c.bf16 %v4891, %v4890
  %v4901 = vpack.c.bf16 %v4893, %v4892
  %4902 = vrot.lane.b32.xlu0 %v4234, 56
  %v4903 = vpop.permute.xlu0 %4902
  %4904 = vrot.lane.b32.xlu0 %v4235, 56
  %v4905 = vpop.permute.xlu0 %4904
  %4906 = vrot.lane.b32.xlu0 %v4236, 56
  %v4907 = vpop.permute.xlu0 %4906
  %4908 = vrot.lane.b32.xlu0 %v4237, 56
  %v4909 = vpop.permute.xlu0 %4908
  %4910 = vrot.lane.b32.xlu0 %v4238, 56
  %v4911 = vpop.permute.xlu0 %4910
  %4912 = vrot.lane.b32.xlu0 %v4239, 56
  %v4913 = vpop.permute.xlu0 %4912
  %4914 = vrot.lane.b32.xlu0 %v4240, 56
  %v4915 = vpop.permute.xlu0 %4914
  %4916 = vrot.lane.b32.xlu0 %v4241, 56
  %v4917 = vpop.permute.xlu0 %4916
  %4926 = vmatpush.bf16.msra.mxu0 %v4917
  %4927 = vmatpush.bf16.msra.mxu0 %v4915
  %4928 = vmatpush.bf16.msra.mxu0 %v4913
  %4929 = vmatpush.bf16.msra.mxu0 %v4911
  %4930 = vmatpush.bf16.msra.mxu0 %v4909
  %4931 = vmatpush.bf16.msra.mxu0 %v4907
  %4932 = vmatpush.bf16.msra.mxu0 %v4905
  %4933 = vmatpush.bf16.msra.mxu0 %v4903
  %4934 = vmatmul.bf16.gmra.mxu0 %v4894
  %v4935 = vpop.f32.mrf.mxu0
  %v4936 = vadd.f32 0.0, %v4935
  %v4937 = vpop.f32.mrf.mxu0
  %v4938 = vadd.f32 0.0, %v4937
  %4939 = vmatmul.bf16.gmra.mxu0 %v4895
  %v4940 = vpop.f32.mrf.mxu0
  %v4941 = vadd.f32 0.0, %v4940
  %v4942 = vpop.f32.mrf.mxu0
  %v4943 = vadd.f32 0.0, %v4942
  %4944 = vmatmul.bf16.gmra.mxu0 %v4896
  %v4945 = vpop.f32.mrf.mxu0
  %v4946 = vadd.f32 0.0, %v4945
  %v4947 = vpop.f32.mrf.mxu0
  %v4948 = vadd.f32 0.0, %v4947
  %4949 = vmatmul.bf16.gmra.mxu0 %v4897
  %v4950 = vpop.f32.mrf.mxu0
  %v4951 = vadd.f32 0.0, %v4950
  %v4952 = vpop.f32.mrf.mxu0
  %v4953 = vadd.f32 0.0, %v4952
  %4954 = vmatmul.bf16.gmra.mxu0 %v4898
  %v4955 = vpop.f32.mrf.mxu0
  %v4956 = vadd.f32 0.0, %v4955
  %v4957 = vpop.f32.mrf.mxu0
  %v4958 = vadd.f32 0.0, %v4957
  %4959 = vmatmul.bf16.gmra.mxu0 %v4899
  %v4960 = vpop.f32.mrf.mxu0
  %v4961 = vadd.f32 0.0, %v4960
  %v4962 = vpop.f32.mrf.mxu0
  %v4963 = vadd.f32 0.0, %v4962
  %4964 = vmatmul.bf16.gmra.mxu0 %v4900
  %v4965 = vpop.f32.mrf.mxu0
  %v4966 = vadd.f32 0.0, %v4965
  %v4967 = vpop.f32.mrf.mxu0
  %v4968 = vadd.f32 0.0, %v4967
  %4969 = vmatmul.bf16.gmra.mxu0 %v4901
  %v4970 = vpop.f32.mrf.mxu0
  %v4971 = vadd.f32 0.0, %v4970
  %v4972 = vpop.f32.mrf.mxu0
  %v4973 = vadd.f32 0.0, %v4972
  %4974 = vdwg.mxu0
  %v4975 = vpack.c.bf16 %v3717, %v3717
  %v4976 = vpack.c.bf16 %v4938, %v4936
  %v4977 = vpack.c.bf16 %v4943, %v4941
  %v4978 = vpack.c.bf16 %v4948, %v4946
  %v4979 = vpack.c.bf16 %v4953, %v4951
  %v4980 = vpack.c.bf16 %v4958, %v4956
  %v4981 = vpack.c.bf16 %v4963, %v4961
  %v4982 = vpack.c.bf16 %v4968, %v4966
  %v4983 = vpack.c.bf16 %v4973, %v4971
  %4985 = vrot.lane.b32.xlu0 %v4975, 32
  %v4986 = vpop.permute.xlu0 %4985
  %v4988 = vsel %vm628, %v4976, 0
  %v4991 = vsel %vm628, %v4977, 0
  %v4994 = vsel %vm628, %v4978, 0
  %v4997 = vsel %vm628, %v4979, 0
  %v5000 = vsel %vm628, %v4980, 0
  %v5003 = vsel %vm628, %v4981, 0
  %v5006 = vsel %vm628, %v4982, 0
  %v5009 = vsel %vm628, %v4983, 0
  %v5012 = vsel %vm1358, %v4986, 0
  %5014 = vmatpush.bf16.msra.mxu0 0
  %5015 = vmatpush.bf16.msra.mxu0 0
  %5016 = vmatpush.bf16.msra.mxu0 0
  %5017 = vmatpush.bf16.msra.mxu0 0
  %5018 = vmatpush.bf16.msra.mxu0 0
  %5019 = vmatpush.bf16.msra.mxu0 0
  %5020 = vmatpush.bf16.msra.mxu0 0
  %5021 = vmatpush.bf16.msra.mxu0 %v5012
  %5022 = vmatmul.bf16.gmra.mxu0 %v4988
  %v5023 = vpop.f32.mrf.mxu0
  %v5024 = vadd.f32 0.0, %v5023
  %v5025 = vpop.f32.mrf.mxu0
  %v5026 = vadd.f32 0.0, %v5025
  %5027 = vmatmul.bf16.gmra.mxu0 %v4991
  %v5028 = vpop.f32.mrf.mxu0
  %v5029 = vadd.f32 0.0, %v5028
  %v5030 = vpop.f32.mrf.mxu0
  %v5031 = vadd.f32 0.0, %v5030
  %5032 = vmatmul.bf16.gmra.mxu0 %v4994
  %v5033 = vpop.f32.mrf.mxu0
  %v5034 = vadd.f32 0.0, %v5033
  %v5035 = vpop.f32.mrf.mxu0
  %v5036 = vadd.f32 0.0, %v5035
  %5037 = vmatmul.bf16.gmra.mxu0 %v4997
  %v5038 = vpop.f32.mrf.mxu0
  %v5039 = vadd.f32 0.0, %v5038
  %v5040 = vpop.f32.mrf.mxu0
  %v5041 = vadd.f32 0.0, %v5040
  %5042 = vmatmul.bf16.gmra.mxu0 %v5000
  %v5043 = vpop.f32.mrf.mxu0
  %v5044 = vadd.f32 0.0, %v5043
  %v5045 = vpop.f32.mrf.mxu0
  %v5046 = vadd.f32 0.0, %v5045
  %5047 = vmatmul.bf16.gmra.mxu0 %v5003
  %v5048 = vpop.f32.mrf.mxu0
  %v5049 = vadd.f32 0.0, %v5048
  %v5050 = vpop.f32.mrf.mxu0
  %v5051 = vadd.f32 0.0, %v5050
  %5052 = vmatmul.bf16.gmra.mxu0 %v5006
  %v5053 = vpop.f32.mrf.mxu0
  %v5054 = vadd.f32 0.0, %v5053
  %v5055 = vpop.f32.mrf.mxu0
  %v5056 = vadd.f32 0.0, %v5055
  %5057 = vmatmul.bf16.gmra.mxu0 %v5009
  %v5058 = vpop.f32.mrf.mxu0
  %v5059 = vadd.f32 0.0, %v5058
  %v5060 = vpop.f32.mrf.mxu0
  %v5061 = vadd.f32 0.0, %v5060
  %5062 = vdwg.mxu0
  %5064 = vrot.lane.b32.xlu0 %v4604, 32
  %v5065 = vpop.permute.xlu0 %5064
  %v5067 = vsel %vm628, %v4605, 0
  %v5070 = vsel %vm628, %v4606, 0
  %v5073 = vsel %vm628, %v4607, 0
  %v5076 = vsel %vm628, %v4608, 0
  %v5079 = vsel %vm628, %v4609, 0
  %v5082 = vsel %vm628, %v4610, 0
  %v5085 = vsel %vm628, %v4611, 0
  %v5088 = vsel %vm628, %v4612, 0
  %v5091 = vsel %vm1358, %v5065, 0
  %5093 = vmatpush.bf16.msra.mxu0 0
  %5094 = vmatpush.bf16.msra.mxu0 0
  %5095 = vmatpush.bf16.msra.mxu0 0
  %5096 = vmatpush.bf16.msra.mxu0 0
  %5097 = vmatpush.bf16.msra.mxu0 0
  %5098 = vmatpush.bf16.msra.mxu0 0
  %5099 = vmatpush.bf16.msra.mxu0 0
  %5100 = vmatpush.bf16.msra.mxu0 %v5091
  %5101 = vmatmul.bf16.gmra.mxu0 %v5067
  %v5102 = vpop.f32.mrf.mxu0
  %v5103 = vadd.f32 %v5024, %v5102
  %v5104 = vpop.f32.mrf.mxu0
  %v5105 = vadd.f32 %v5026, %v5104
  %5106 = vmatmul.bf16.gmra.mxu0 %v5070
  %v5107 = vpop.f32.mrf.mxu0
  %v5108 = vadd.f32 %v5029, %v5107
  %v5109 = vpop.f32.mrf.mxu0
  %v5110 = vadd.f32 %v5031, %v5109
  %5111 = vmatmul.bf16.gmra.mxu0 %v5073
  %v5112 = vpop.f32.mrf.mxu0
  %v5113 = vadd.f32 %v5034, %v5112
  %v5114 = vpop.f32.mrf.mxu0
  %v5115 = vadd.f32 %v5036, %v5114
  %5116 = vmatmul.bf16.gmra.mxu0 %v5076
  %v5117 = vpop.f32.mrf.mxu0
  %v5118 = vadd.f32 %v5039, %v5117
  %v5119 = vpop.f32.mrf.mxu0
  %v5120 = vadd.f32 %v5041, %v5119
  %5121 = vmatmul.bf16.gmra.mxu0 %v5079
  %v5122 = vpop.f32.mrf.mxu0
  %v5123 = vadd.f32 %v5044, %v5122
  %v5124 = vpop.f32.mrf.mxu0
  %v5125 = vadd.f32 %v5046, %v5124
  %5126 = vmatmul.bf16.gmra.mxu0 %v5082
  %v5127 = vpop.f32.mrf.mxu0
  %v5128 = vadd.f32 %v5049, %v5127
  %v5129 = vpop.f32.mrf.mxu0
  %v5130 = vadd.f32 %v5051, %v5129
  %5131 = vmatmul.bf16.gmra.mxu0 %v5085
  %v5132 = vpop.f32.mrf.mxu0
  %v5133 = vadd.f32 %v5054, %v5132
  %v5134 = vpop.f32.mrf.mxu0
  %v5135 = vadd.f32 %v5056, %v5134
  %5136 = vmatmul.bf16.gmra.mxu0 %v5088
  %v5137 = vpop.f32.mrf.mxu0
  %v5138 = vadd.f32 %v5059, %v5137
  %v5139 = vpop.f32.mrf.mxu0
  %v5140 = vadd.f32 %v5061, %v5139
  %5141 = vdwg.mxu0
  %5142 = vrot.lane.b32.xlu0 %v4226, 112
  %v5143 = vpop.permute.xlu0 %5142
  %5144 = vrot.lane.b32.xlu0 %v4227, 112
  %v5145 = vpop.permute.xlu0 %5144
  %5146 = vrot.lane.b32.xlu0 %v4228, 112
  %v5147 = vpop.permute.xlu0 %5146
  %5148 = vrot.lane.b32.xlu0 %v4229, 112
  %v5149 = vpop.permute.xlu0 %5148
  %5150 = vrot.lane.b32.xlu0 %v4230, 112
  %v5151 = vpop.permute.xlu0 %5150
  %5152 = vrot.lane.b32.xlu0 %v4231, 112
  %v5153 = vpop.permute.xlu0 %5152
  %5154 = vrot.lane.b32.xlu0 %v4232, 112
  %v5155 = vpop.permute.xlu0 %5154
  %5156 = vrot.lane.b32.xlu0 %v4233, 112
  %v5157 = vpop.permute.xlu0 %5156
  %5158 = vrot.lane.b32.xlu0 %v4234, 80
  %v5159 = vpop.permute.xlu0 %5158
  %5160 = vrot.lane.b32.xlu0 %v4235, 80
  %v5161 = vpop.permute.xlu0 %5160
  %5162 = vrot.lane.b32.xlu0 %v4236, 80
  %v5163 = vpop.permute.xlu0 %5162
  %5164 = vrot.lane.b32.xlu0 %v4237, 80
  %v5165 = vpop.permute.xlu0 %5164
  %5166 = vrot.lane.b32.xlu0 %v4238, 80
  %v5167 = vpop.permute.xlu0 %5166
  %5168 = vrot.lane.b32.xlu0 %v4239, 80
  %v5169 = vpop.permute.xlu0 %5168
  %5170 = vrot.lane.b32.xlu0 %v4240, 80
  %v5171 = vpop.permute.xlu0 %5170
  %5172 = vrot.lane.b32.xlu0 %v4241, 80
  %v5173 = vpop.permute.xlu0 %5172
  %v5175 = vsel %vm628, %v5143, 0
  %v5178 = vsel %vm628, %v5145, 0
  %v5181 = vsel %vm628, %v5147, 0
  %v5184 = vsel %vm628, %v5149, 0
  %v5187 = vsel %vm628, %v5151, 0
  %v5190 = vsel %vm628, %v5153, 0
  %v5193 = vsel %vm628, %v5155, 0
  %v5196 = vsel %vm628, %v5157, 0
  %v5199 = vsel %vm628, %v5159, 0
  %v5202 = vsel %vm628, %v5161, 0
  %v5205 = vsel %vm628, %v5163, 0
  %v5208 = vsel %vm628, %v5165, 0
  %v5211 = vsel %vm628, %v5167, 0
  %v5214 = vsel %vm628, %v5169, 0
  %v5217 = vsel %vm628, %v5171, 0
  %v5220 = vsel %vm628, %v5173, 0
  %5222 = vmatpush.bf16.xpose.msra.mxu0 %v5220
  %5223 = vmatpush.bf16.xpose.msra.mxu0 %v5217
  %5224 = vmatpush.bf16.xpose.msra.mxu0 %v5214
  %5225 = vmatpush.bf16.xpose.msra.mxu0 %v5211
  %5226 = vmatpush.bf16.xpose.msra.mxu0 %v5208
  %5227 = vmatpush.bf16.xpose.msra.mxu0 %v5205
  %5228 = vmatpush.bf16.xpose.msra.mxu0 %v5202
  %5229 = vmatpush.bf16.xpose.msra.mxu0 %v5199
  %5230 = vmatmul.bf16.gmra.mxu0 %v5175
  %v5231 = vpop.f32.mrf.mxu0
  %v5232 = vadd.f32 %v4242, %v5231
  %v5233 = vpop.f32.mrf.mxu0
  %v5234 = vadd.f32 %v4243, %v5233
  %5235 = vmatmul.bf16.gmra.mxu0 %v5178
  %v5236 = vpop.f32.mrf.mxu0
  %v5237 = vadd.f32 %v4244, %v5236
  %v5238 = vpop.f32.mrf.mxu0
  %v5239 = vadd.f32 %v4245, %v5238
  %5240 = vmatmul.bf16.gmra.mxu0 %v5181
  %v5241 = vpop.f32.mrf.mxu0
  %v5242 = vadd.f32 %v4246, %v5241
  %v5243 = vpop.f32.mrf.mxu0
  %v5244 = vadd.f32 %v4247, %v5243
  %5245 = vmatmul.bf16.gmra.mxu0 %v5184
  %v5246 = vpop.f32.mrf.mxu0
  %v5247 = vadd.f32 %v4248, %v5246
  %v5248 = vpop.f32.mrf.mxu0
  %v5249 = vadd.f32 %v4249, %v5248
  %5250 = vmatmul.bf16.gmra.mxu0 %v5187
  %v5251 = vpop.f32.mrf.mxu0
  %v5252 = vadd.f32 %v4250, %v5251
  %v5253 = vpop.f32.mrf.mxu0
  %v5254 = vadd.f32 %v4251, %v5253
  %5255 = vmatmul.bf16.gmra.mxu0 %v5190
  %v5256 = vpop.f32.mrf.mxu0
  %v5257 = vadd.f32 %v4252, %v5256
  %v5258 = vpop.f32.mrf.mxu0
  %v5259 = vadd.f32 %v4253, %v5258
  %5260 = vmatmul.bf16.gmra.mxu0 %v5193
  %v5261 = vpop.f32.mrf.mxu0
  %v5262 = vadd.f32 %v4254, %v5261
  %v5263 = vpop.f32.mrf.mxu0
  %v5264 = vadd.f32 %v4255, %v5263
  %5265 = vmatmul.bf16.gmra.mxu0 %v5196
  %v5266 = vpop.f32.mrf.mxu0
  %v5267 = vadd.f32 %v4256, %v5266
  %v5268 = vpop.f32.mrf.mxu0
  %v5269 = vadd.f32 %v4257, %v5268
  %5270 = vdwg.mxu0
  %5271 = vmax.xlane.f32.xlu0 %v5232
  %v5272 = vpop.xlane.xlu0 %5271
  %5273 = vmax.xlane.f32.xlu0 %v5234
  %v5274 = vpop.xlane.xlu0 %5273
  %5275 = vmax.xlane.f32.xlu0 %v5237
  %v5276 = vpop.xlane.xlu0 %5275
  %5277 = vmax.xlane.f32.xlu0 %v5239
  %v5278 = vpop.xlane.xlu0 %5277
  %5279 = vmax.xlane.f32.xlu0 %v5242
  %v5280 = vpop.xlane.xlu0 %5279
  %5281 = vmax.xlane.f32.xlu0 %v5244
  %v5282 = vpop.xlane.xlu0 %5281
  %5283 = vmax.xlane.f32.xlu0 %v5247
  %v5284 = vpop.xlane.xlu0 %5283
  %5285 = vmax.xlane.f32.xlu0 %v5249
  %v5286 = vpop.xlane.xlu0 %5285
  %5287 = vmax.xlane.f32.xlu0 %v5252
  %v5288 = vpop.xlane.xlu0 %5287
  %5289 = vmax.xlane.f32.xlu0 %v5254
  %v5290 = vpop.xlane.xlu0 %5289
  %5291 = vmax.xlane.f32.xlu0 %v5257
  %v5292 = vpop.xlane.xlu0 %5291
  %5293 = vmax.xlane.f32.xlu0 %v5259
  %v5294 = vpop.xlane.xlu0 %5293
  %5295 = vmax.xlane.f32.xlu0 %v5262
  %v5296 = vpop.xlane.xlu0 %5295
  %5297 = vmax.xlane.f32.xlu0 %v5264
  %v5298 = vpop.xlane.xlu0 %5297
  %5299 = vmax.xlane.f32.xlu0 %v5267
  %v5300 = vpop.xlane.xlu0 %5299
  %5301 = vmax.xlane.f32.xlu0 %v5269
  %v5302 = vpop.xlane.xlu0 %5301
  %v5303 = vsub.f32 %v5232, %v5272
  %v5304 = vsub.f32 %v5234, %v5274
  %v5305 = vsub.f32 %v5237, %v5276
  %v5306 = vsub.f32 %v5239, %v5278
  %v5307 = vsub.f32 %v5242, %v5280
  %v5308 = vsub.f32 %v5244, %v5282
  %v5309 = vsub.f32 %v5247, %v5284
  %v5310 = vsub.f32 %v5249, %v5286
  %v5311 = vsub.f32 %v5252, %v5288
  %v5312 = vsub.f32 %v5254, %v5290
  %v5313 = vsub.f32 %v5257, %v5292
  %v5314 = vsub.f32 %v5259, %v5294
  %v5315 = vsub.f32 %v5262, %v5296
  %v5316 = vsub.f32 %v5264, %v5298
  %v5317 = vsub.f32 %v5267, %v5300
  %v5318 = vsub.f32 %v5269, %v5302
  %v5319 = vmul.f32 %v5303, 1.442695
  %v5320 = vpow.pop %v5319
  %v5321 = vmul.f32 %v5304, 1.442695
  %v5322 = vpow.pop %v5321
  %v5323 = vmul.f32 %v5305, 1.442695
  %v5324 = vpow.pop %v5323
  %v5325 = vmul.f32 %v5306, 1.442695
  %v5326 = vpow.pop %v5325
  %v5327 = vmul.f32 %v5307, 1.442695
  %v5328 = vpow.pop %v5327
  %v5329 = vmul.f32 %v5308, 1.442695
  %v5330 = vpow.pop %v5329
  %v5331 = vmul.f32 %v5309, 1.442695
  %v5332 = vpow.pop %v5331
  %v5333 = vmul.f32 %v5310, 1.442695
  %v5334 = vpow.pop %v5333
  %v5335 = vmul.f32 %v5311, 1.442695
  %v5336 = vpow.pop %v5335
  %v5337 = vmul.f32 %v5312, 1.442695
  %v5338 = vpow.pop %v5337
  %v5339 = vmul.f32 %v5313, 1.442695
  %v5340 = vpow.pop %v5339
  %v5341 = vmul.f32 %v5314, 1.442695
  %v5342 = vpow.pop %v5341
  %v5343 = vmul.f32 %v5315, 1.442695
  %v5344 = vpow.pop %v5343
  %v5345 = vmul.f32 %v5316, 1.442695
  %v5346 = vpow.pop %v5345
  %v5347 = vmul.f32 %v5317, 1.442695
  %v5348 = vpow.pop %v5347
  %v5349 = vmul.f32 %v5318, 1.442695
  %v5350 = vpow.pop %v5349
  %5351 = vadd.xlane.f32.xlu0 %v5320
  %v5352 = vpop.xlane.xlu0 %5351
  %5353 = vadd.xlane.f32.xlu0 %v5322
  %v5354 = vpop.xlane.xlu0 %5353
  %5355 = vadd.xlane.f32.xlu0 %v5324
  %v5356 = vpop.xlane.xlu0 %5355
  %5357 = vadd.xlane.f32.xlu0 %v5326
  %v5358 = vpop.xlane.xlu0 %5357
  %5359 = vadd.xlane.f32.xlu0 %v5328
  %v5360 = vpop.xlane.xlu0 %5359
  %5361 = vadd.xlane.f32.xlu0 %v5330
  %v5362 = vpop.xlane.xlu0 %5361
  %5363 = vadd.xlane.f32.xlu0 %v5332
  %v5364 = vpop.xlane.xlu0 %5363
  %5365 = vadd.xlane.f32.xlu0 %v5334
  %v5366 = vpop.xlane.xlu0 %5365
  %5367 = vadd.xlane.f32.xlu0 %v5336
  %v5368 = vpop.xlane.xlu0 %5367
  %5369 = vadd.xlane.f32.xlu0 %v5338
  %v5370 = vpop.xlane.xlu0 %5369
  %5371 = vadd.xlane.f32.xlu0 %v5340
  %v5372 = vpop.xlane.xlu0 %5371
  %5373 = vadd.xlane.f32.xlu0 %v5342
  %v5374 = vpop.xlane.xlu0 %5373
  %5375 = vadd.xlane.f32.xlu0 %v5344
  %v5376 = vpop.xlane.xlu0 %5375
  %5377 = vadd.xlane.f32.xlu0 %v5346
  %v5378 = vpop.xlane.xlu0 %5377
  %5379 = vadd.xlane.f32.xlu0 %v5348
  %v5380 = vpop.xlane.xlu0 %5379
  %5381 = vadd.xlane.f32.xlu0 %v5350
  %v5382 = vpop.xlane.xlu0 %5381
  %v5383 = vrcp.pop %v5352
  %v5384 = vrcp.pop %v5354
  %v5385 = vrcp.pop %v5356
  %v5386 = vrcp.pop %v5358
  %v5387 = vrcp.pop %v5360
  %v5388 = vrcp.pop %v5362
  %v5389 = vrcp.pop %v5364
  %v5390 = vrcp.pop %v5366
  %v5391 = vrcp.pop %v5368
  %v5392 = vrcp.pop %v5370
  %v5393 = vrcp.pop %v5372
  %v5394 = vrcp.pop %v5374
  %v5395 = vrcp.pop %v5376
  %v5396 = vrcp.pop %v5378
  %v5397 = vrcp.pop %v5380
  %v5398 = vrcp.pop %v5382
  %v5399 = vmul.f32 %v5320, %v5383
  %v5400 = vmul.f32 %v5322, %v5384
  %v5401 = vmul.f32 %v5324, %v5385
  %v5402 = vmul.f32 %v5326, %v5386
  %v5403 = vmul.f32 %v5328, %v5387
  %v5404 = vmul.f32 %v5330, %v5388
  %v5405 = vmul.f32 %v5332, %v5389
  %v5406 = vmul.f32 %v5334, %v5390
  %v5407 = vmul.f32 %v5336, %v5391
  %v5408 = vmul.f32 %v5338, %v5392
  %v5409 = vmul.f32 %v5340, %v5393
  %v5410 = vmul.f32 %v5342, %v5394
  %v5411 = vmul.f32 %v5344, %v5395
  %v5412 = vmul.f32 %v5346, %v5396
  %v5413 = vmul.f32 %v5348, %v5397
  %v5414 = vmul.f32 %v5350, %v5398
  %v5415 = vpack.c.bf16 %v5400, %v5399
  %v5416 = vpack.c.bf16 %v5402, %v5401
  %v5417 = vpack.c.bf16 %v5404, %v5403
  %v5418 = vpack.c.bf16 %v5406, %v5405
  %v5419 = vpack.c.bf16 %v5408, %v5407
  %v5420 = vpack.c.bf16 %v5410, %v5409
  %v5421 = vpack.c.bf16 %v5412, %v5411
  %v5422 = vpack.c.bf16 %v5414, %v5413
  %5423 = vrot.lane.b32.xlu0 %v4234, 48
  %v5424 = vpop.permute.xlu0 %5423
  %5425 = vrot.lane.b32.xlu0 %v4235, 48
  %v5426 = vpop.permute.xlu0 %5425
  %5427 = vrot.lane.b32.xlu0 %v4236, 48
  %v5428 = vpop.permute.xlu0 %5427
  %5429 = vrot.lane.b32.xlu0 %v4237, 48
  %v5430 = vpop.permute.xlu0 %5429
  %5431 = vrot.lane.b32.xlu0 %v4238, 48
  %v5432 = vpop.permute.xlu0 %5431
  %5433 = vrot.lane.b32.xlu0 %v4239, 48
  %v5434 = vpop.permute.xlu0 %5433
  %5435 = vrot.lane.b32.xlu0 %v4240, 48
  %v5436 = vpop.permute.xlu0 %5435
  %5437 = vrot.lane.b32.xlu0 %v4241, 48
  %v5438 = vpop.permute.xlu0 %5437
  %5447 = vmatpush.bf16.msra.mxu0 %v5438
  %5448 = vmatpush.bf16.msra.mxu0 %v5436
  %5449 = vmatpush.bf16.msra.mxu0 %v5434
  %5450 = vmatpush.bf16.msra.mxu0 %v5432
  %5451 = vmatpush.bf16.msra.mxu0 %v5430
  %5452 = vmatpush.bf16.msra.mxu0 %v5428
  %5453 = vmatpush.bf16.msra.mxu0 %v5426
  %5454 = vmatpush.bf16.msra.mxu0 %v5424
  %5455 = vmatmul.bf16.gmra.mxu0 %v5415
  %v5456 = vpop.f32.mrf.mxu0
  %v5457 = vadd.f32 0.0, %v5456
  %v5458 = vpop.f32.mrf.mxu0
  %v5459 = vadd.f32 0.0, %v5458
  %5460 = vmatmul.bf16.gmra.mxu0 %v5416
  %v5461 = vpop.f32.mrf.mxu0
  %v5462 = vadd.f32 0.0, %v5461
  %v5463 = vpop.f32.mrf.mxu0
  %v5464 = vadd.f32 0.0, %v5463
  %5465 = vmatmul.bf16.gmra.mxu0 %v5417
  %v5466 = vpop.f32.mrf.mxu0
  %v5467 = vadd.f32 0.0, %v5466
  %v5468 = vpop.f32.mrf.mxu0
  %v5469 = vadd.f32 0.0, %v5468
  %5470 = vmatmul.bf16.gmra.mxu0 %v5418
  %v5471 = vpop.f32.mrf.mxu0
  %v5472 = vadd.f32 0.0, %v5471
  %v5473 = vpop.f32.mrf.mxu0
  %v5474 = vadd.f32 0.0, %v5473
  %5475 = vmatmul.bf16.gmra.mxu0 %v5419
  %v5476 = vpop.f32.mrf.mxu0
  %v5477 = vadd.f32 0.0, %v5476
  %v5478 = vpop.f32.mrf.mxu0
  %v5479 = vadd.f32 0.0, %v5478
  %5480 = vmatmul.bf16.gmra.mxu0 %v5420
  %v5481 = vpop.f32.mrf.mxu0
  %v5482 = vadd.f32 0.0, %v5481
  %v5483 = vpop.f32.mrf.mxu0
  %v5484 = vadd.f32 0.0, %v5483
  %5485 = vmatmul.bf16.gmra.mxu0 %v5421
  %v5486 = vpop.f32.mrf.mxu0
  %v5487 = vadd.f32 0.0, %v5486
  %v5488 = vpop.f32.mrf.mxu0
  %v5489 = vadd.f32 0.0, %v5488
  %5490 = vmatmul.bf16.gmra.mxu0 %v5422
  %v5491 = vpop.f32.mrf.mxu0
  %v5492 = vadd.f32 0.0, %v5491
  %v5493 = vpop.f32.mrf.mxu0
  %v5494 = vadd.f32 0.0, %v5493
  %5495 = vdwg.mxu0
  %v5496 = vpack.c.bf16 %v3719, %v3719
  %v5497 = vpack.c.bf16 %v5459, %v5457
  %v5498 = vpack.c.bf16 %v5464, %v5462
  %v5499 = vpack.c.bf16 %v5469, %v5467
  %v5500 = vpack.c.bf16 %v5474, %v5472
  %v5501 = vpack.c.bf16 %v5479, %v5477
  %v5502 = vpack.c.bf16 %v5484, %v5482
  %v5503 = vpack.c.bf16 %v5489, %v5487
  %v5504 = vpack.c.bf16 %v5494, %v5492
  %5506 = vrot.lane.b32.xlu0 %v5496, 32
  %v5507 = vpop.permute.xlu0 %5506
  %v5509 = vsel %vm628, %v5497, 0
  %v5512 = vsel %vm628, %v5498, 0
  %v5515 = vsel %vm628, %v5499, 0
  %v5518 = vsel %vm628, %v5500, 0
  %v5521 = vsel %vm628, %v5501, 0
  %v5524 = vsel %vm628, %v5502, 0
  %v5527 = vsel %vm628, %v5503, 0
  %v5530 = vsel %vm628, %v5504, 0
  %v5533 = vsel %vm1358, %v5507, 0
  %5535 = vmatpush.bf16.msra.mxu0 0
  %5536 = vmatpush.bf16.msra.mxu0 0
  %5537 = vmatpush.bf16.msra.mxu0 0
  %5538 = vmatpush.bf16.msra.mxu0 0
  %5539 = vmatpush.bf16.msra.mxu0 0
  %5540 = vmatpush.bf16.msra.mxu0 0
  %5541 = vmatpush.bf16.msra.mxu0 0
  %5542 = vmatpush.bf16.msra.mxu0 %v5533
  %5543 = vmatmul.bf16.gmra.mxu0 %v5509
  %v5544 = vpop.f32.mrf.mxu0
  %v5545 = vadd.f32 0.0, %v5544
  %v5546 = vpop.f32.mrf.mxu0
  %v5547 = vadd.f32 0.0, %v5546
  %5548 = vmatmul.bf16.gmra.mxu0 %v5512
  %v5549 = vpop.f32.mrf.mxu0
  %v5550 = vadd.f32 0.0, %v5549
  %v5551 = vpop.f32.mrf.mxu0
  %v5552 = vadd.f32 0.0, %v5551
  %5553 = vmatmul.bf16.gmra.mxu0 %v5515
  %v5554 = vpop.f32.mrf.mxu0
  %v5555 = vadd.f32 0.0, %v5554
  %v5556 = vpop.f32.mrf.mxu0
  %v5557 = vadd.f32 0.0, %v5556
  %5558 = vmatmul.bf16.gmra.mxu0 %v5518
  %v5559 = vpop.f32.mrf.mxu0
  %v5560 = vadd.f32 0.0, %v5559
  %v5561 = vpop.f32.mrf.mxu0
  %v5562 = vadd.f32 0.0, %v5561
  %5563 = vmatmul.bf16.gmra.mxu0 %v5521
  %v5564 = vpop.f32.mrf.mxu0
  %v5565 = vadd.f32 0.0, %v5564
  %v5566 = vpop.f32.mrf.mxu0
  %v5567 = vadd.f32 0.0, %v5566
  %5568 = vmatmul.bf16.gmra.mxu0 %v5524
  %v5569 = vpop.f32.mrf.mxu0
  %v5570 = vadd.f32 0.0, %v5569
  %v5571 = vpop.f32.mrf.mxu0
  %v5572 = vadd.f32 0.0, %v5571
  %5573 = vmatmul.bf16.gmra.mxu0 %v5527
  %v5574 = vpop.f32.mrf.mxu0
  %v5575 = vadd.f32 0.0, %v5574
  %v5576 = vpop.f32.mrf.mxu0
  %v5577 = vadd.f32 0.0, %v5576
  %5578 = vmatmul.bf16.gmra.mxu0 %v5530
  %v5579 = vpop.f32.mrf.mxu0
  %v5580 = vadd.f32 0.0, %v5579
  %v5581 = vpop.f32.mrf.mxu0
  %v5582 = vadd.f32 0.0, %v5581
  %5583 = vdwg.mxu0
  %v5584 = vadd.f32 %v5103, %v5545
  %v5585 = vadd.f32 %v5105, %v5547
  %v5586 = vadd.f32 %v5108, %v5550
  %v5587 = vadd.f32 %v5110, %v5552
  %v5588 = vadd.f32 %v5113, %v5555
  %v5589 = vadd.f32 %v5115, %v5557
  %v5590 = vadd.f32 %v5118, %v5560
  %v5591 = vadd.f32 %v5120, %v5562
  %v5592 = vadd.f32 %v5123, %v5565
  %v5593 = vadd.f32 %v5125, %v5567
  %v5594 = vadd.f32 %v5128, %v5570
  %v5595 = vadd.f32 %v5130, %v5572
  %v5596 = vadd.f32 %v5133, %v5575
  %v5597 = vadd.f32 %v5135, %v5577
  %v5598 = vadd.f32 %v5138, %v5580
  %v5599 = vadd.f32 %v5140, %v5582
  %5600 = vrot.lane.b32.xlu0 %v4226, 104
  %v5601 = vpop.permute.xlu0 %5600
  %5602 = vrot.lane.b32.xlu0 %v4227, 104
  %v5603 = vpop.permute.xlu0 %5602
  %5604 = vrot.lane.b32.xlu0 %v4228, 104
  %v5605 = vpop.permute.xlu0 %5604
  %5606 = vrot.lane.b32.xlu0 %v4229, 104
  %v5607 = vpop.permute.xlu0 %5606
  %5608 = vrot.lane.b32.xlu0 %v4230, 104
  %v5609 = vpop.permute.xlu0 %5608
  %5610 = vrot.lane.b32.xlu0 %v4231, 104
  %v5611 = vpop.permute.xlu0 %5610
  %5612 = vrot.lane.b32.xlu0 %v4232, 104
  %v5613 = vpop.permute.xlu0 %5612
  %5614 = vrot.lane.b32.xlu0 %v4233, 104
  %v5615 = vpop.permute.xlu0 %5614
  %5616 = vrot.lane.b32.xlu0 %v4234, 72
  %v5617 = vpop.permute.xlu0 %5616
  %5618 = vrot.lane.b32.xlu0 %v4235, 72
  %v5619 = vpop.permute.xlu0 %5618
  %5620 = vrot.lane.b32.xlu0 %v4236, 72
  %v5621 = vpop.permute.xlu0 %5620
  %5622 = vrot.lane.b32.xlu0 %v4237, 72
  %v5623 = vpop.permute.xlu0 %5622
  %5624 = vrot.lane.b32.xlu0 %v4238, 72
  %v5625 = vpop.permute.xlu0 %5624
  %5626 = vrot.lane.b32.xlu0 %v4239, 72
  %v5627 = vpop.permute.xlu0 %5626
  %5628 = vrot.lane.b32.xlu0 %v4240, 72
  %v5629 = vpop.permute.xlu0 %5628
  %5630 = vrot.lane.b32.xlu0 %v4241, 72
  %v5631 = vpop.permute.xlu0 %5630
  %v5633 = vsel %vm628, %v5601, 0
  %v5636 = vsel %vm628, %v5603, 0
  %v5639 = vsel %vm628, %v5605, 0
  %v5642 = vsel %vm628, %v5607, 0
  %v5645 = vsel %vm628, %v5609, 0
  %v5648 = vsel %vm628, %v5611, 0
  %v5651 = vsel %vm628, %v5613, 0
  %v5654 = vsel %vm628, %v5615, 0
  %v5657 = vsel %vm628, %v5617, 0
  %v5660 = vsel %vm628, %v5619, 0
  %v5663 = vsel %vm628, %v5621, 0
  %v5666 = vsel %vm628, %v5623, 0
  %v5669 = vsel %vm628, %v5625, 0
  %v5672 = vsel %vm628, %v5627, 0
  %v5675 = vsel %vm628, %v5629, 0
  %v5678 = vsel %vm628, %v5631, 0
  %5680 = vmatpush.bf16.xpose.msra.mxu0 %v5678
  %5681 = vmatpush.bf16.xpose.msra.mxu0 %v5675
  %5682 = vmatpush.bf16.xpose.msra.mxu0 %v5672
  %5683 = vmatpush.bf16.xpose.msra.mxu0 %v5669
  %5684 = vmatpush.bf16.xpose.msra.mxu0 %v5666
  %5685 = vmatpush.bf16.xpose.msra.mxu0 %v5663
  %5686 = vmatpush.bf16.xpose.msra.mxu0 %v5660
  %5687 = vmatpush.bf16.xpose.msra.mxu0 %v5657
  %5688 = vmatmul.bf16.gmra.mxu0 %v5633
  %v5689 = vpop.f32.mrf.mxu0
  %v5690 = vadd.f32 %v4242, %v5689
  %v5691 = vpop.f32.mrf.mxu0
  %v5692 = vadd.f32 %v4243, %v5691
  %5693 = vmatmul.bf16.gmra.mxu0 %v5636
  %v5694 = vpop.f32.mrf.mxu0
  %v5695 = vadd.f32 %v4244, %v5694
  %v5696 = vpop.f32.mrf.mxu0
  %v5697 = vadd.f32 %v4245, %v5696
  %5698 = vmatmul.bf16.gmra.mxu0 %v5639
  %v5699 = vpop.f32.mrf.mxu0
  %v5700 = vadd.f32 %v4246, %v5699
  %v5701 = vpop.f32.mrf.mxu0
  %v5702 = vadd.f32 %v4247, %v5701
  %5703 = vmatmul.bf16.gmra.mxu0 %v5642
  %v5704 = vpop.f32.mrf.mxu0
  %v5705 = vadd.f32 %v4248, %v5704
  %v5706 = vpop.f32.mrf.mxu0
  %v5707 = vadd.f32 %v4249, %v5706
  %5708 = vmatmul.bf16.gmra.mxu0 %v5645
  %v5709 = vpop.f32.mrf.mxu0
  %v5710 = vadd.f32 %v4250, %v5709
  %v5711 = vpop.f32.mrf.mxu0
  %v5712 = vadd.f32 %v4251, %v5711
  %5713 = vmatmul.bf16.gmra.mxu0 %v5648
  %v5714 = vpop.f32.mrf.mxu0
  %v5715 = vadd.f32 %v4252, %v5714
  %v5716 = vpop.f32.mrf.mxu0
  %v5717 = vadd.f32 %v4253, %v5716
  %5718 = vmatmul.bf16.gmra.mxu0 %v5651
  %v5719 = vpop.f32.mrf.mxu0
  %v5720 = vadd.f32 %v4254, %v5719
  %v5721 = vpop.f32.mrf.mxu0
  %v5722 = vadd.f32 %v4255, %v5721
  %5723 = vmatmul.bf16.gmra.mxu0 %v5654
  %v5724 = vpop.f32.mrf.mxu0
  %v5725 = vadd.f32 %v4256, %v5724
  %v5726 = vpop.f32.mrf.mxu0
  %v5727 = vadd.f32 %v4257, %v5726
  %5728 = vdwg.mxu0
  %5729 = vmax.xlane.f32.xlu0 %v5690
  %v5730 = vpop.xlane.xlu0 %5729
  %5731 = vmax.xlane.f32.xlu0 %v5692
  %v5732 = vpop.xlane.xlu0 %5731
  %5733 = vmax.xlane.f32.xlu0 %v5695
  %v5734 = vpop.xlane.xlu0 %5733
  %5735 = vmax.xlane.f32.xlu0 %v5697
  %v5736 = vpop.xlane.xlu0 %5735
  %5737 = vmax.xlane.f32.xlu0 %v5700
  %v5738 = vpop.xlane.xlu0 %5737
  %5739 = vmax.xlane.f32.xlu0 %v5702
  %v5740 = vpop.xlane.xlu0 %5739
  %5741 = vmax.xlane.f32.xlu0 %v5705
  %v5742 = vpop.xlane.xlu0 %5741
  %5743 = vmax.xlane.f32.xlu0 %v5707
  %v5744 = vpop.xlane.xlu0 %5743
  %5745 = vmax.xlane.f32.xlu0 %v5710
  %v5746 = vpop.xlane.xlu0 %5745
  %5747 = vmax.xlane.f32.xlu0 %v5712
  %v5748 = vpop.xlane.xlu0 %5747
  %5749 = vmax.xlane.f32.xlu0 %v5715
  %v5750 = vpop.xlane.xlu0 %5749
  %5751 = vmax.xlane.f32.xlu0 %v5717
  %v5752 = vpop.xlane.xlu0 %5751
  %5753 = vmax.xlane.f32.xlu0 %v5720
  %v5754 = vpop.xlane.xlu0 %5753
  %5755 = vmax.xlane.f32.xlu0 %v5722
  %v5756 = vpop.xlane.xlu0 %5755
  %5757 = vmax.xlane.f32.xlu0 %v5725
  %v5758 = vpop.xlane.xlu0 %5757
  %5759 = vmax.xlane.f32.xlu0 %v5727
  %v5760 = vpop.xlane.xlu0 %5759
  %v5761 = vsub.f32 %v5690, %v5730
  %v5762 = vsub.f32 %v5692, %v5732
  %v5763 = vsub.f32 %v5695, %v5734
  %v5764 = vsub.f32 %v5697, %v5736
  %v5765 = vsub.f32 %v5700, %v5738
  %v5766 = vsub.f32 %v5702, %v5740
  %v5767 = vsub.f32 %v5705, %v5742
  %v5768 = vsub.f32 %v5707, %v5744
  %v5769 = vsub.f32 %v5710, %v5746
  %v5770 = vsub.f32 %v5712, %v5748
  %v5771 = vsub.f32 %v5715, %v5750
  %v5772 = vsub.f32 %v5717, %v5752
  %v5773 = vsub.f32 %v5720, %v5754
  %v5774 = vsub.f32 %v5722, %v5756
  %v5775 = vsub.f32 %v5725, %v5758
  %v5776 = vsub.f32 %v5727, %v5760
  %v5777 = vmul.f32 %v5761, 1.442695
  %v5778 = vpow.pop %v5777
  %v5779 = vmul.f32 %v5762, 1.442695
  %v5780 = vpow.pop %v5779
  %v5781 = vmul.f32 %v5763, 1.442695
  %v5782 = vpow.pop %v5781
  %v5783 = vmul.f32 %v5764, 1.442695
  %v5784 = vpow.pop %v5783
  %v5785 = vmul.f32 %v5765, 1.442695
  %v5786 = vpow.pop %v5785
  %v5787 = vmul.f32 %v5766, 1.442695
  %v5788 = vpow.pop %v5787
  %v5789 = vmul.f32 %v5767, 1.442695
  %v5790 = vpow.pop %v5789
  %v5791 = vmul.f32 %v5768, 1.442695
  %v5792 = vpow.pop %v5791
  %v5793 = vmul.f32 %v5769, 1.442695
  %v5794 = vpow.pop %v5793
  %v5795 = vmul.f32 %v5770, 1.442695
  %v5796 = vpow.pop %v5795
  %v5797 = vmul.f32 %v5771, 1.442695
  %v5798 = vpow.pop %v5797
  %v5799 = vmul.f32 %v5772, 1.442695
  %v5800 = vpow.pop %v5799
  %v5801 = vmul.f32 %v5773, 1.442695
  %v5802 = vpow.pop %v5801
  %v5803 = vmul.f32 %v5774, 1.442695
  %v5804 = vpow.pop %v5803
  %v5805 = vmul.f32 %v5775, 1.442695
  %v5806 = vpow.pop %v5805
  %v5807 = vmul.f32 %v5776, 1.442695
  %v5808 = vpow.pop %v5807
  %5809 = vadd.xlane.f32.xlu0 %v5778
  %v5810 = vpop.xlane.xlu0 %5809
  %5811 = vadd.xlane.f32.xlu0 %v5780
  %v5812 = vpop.xlane.xlu0 %5811
  %5813 = vadd.xlane.f32.xlu0 %v5782
  %v5814 = vpop.xlane.xlu0 %5813
  %5815 = vadd.xlane.f32.xlu0 %v5784
  %v5816 = vpop.xlane.xlu0 %5815
  %5817 = vadd.xlane.f32.xlu0 %v5786
  %v5818 = vpop.xlane.xlu0 %5817
  %5819 = vadd.xlane.f32.xlu0 %v5788
  %v5820 = vpop.xlane.xlu0 %5819
  %5821 = vadd.xlane.f32.xlu0 %v5790
  %v5822 = vpop.xlane.xlu0 %5821
  %5823 = vadd.xlane.f32.xlu0 %v5792
  %v5824 = vpop.xlane.xlu0 %5823
  %5825 = vadd.xlane.f32.xlu0 %v5794
  %v5826 = vpop.xlane.xlu0 %5825
  %5827 = vadd.xlane.f32.xlu0 %v5796
  %v5828 = vpop.xlane.xlu0 %5827
  %5829 = vadd.xlane.f32.xlu0 %v5798
  %v5830 = vpop.xlane.xlu0 %5829
  %5831 = vadd.xlane.f32.xlu0 %v5800
  %v5832 = vpop.xlane.xlu0 %5831
  %5833 = vadd.xlane.f32.xlu0 %v5802
  %v5834 = vpop.xlane.xlu0 %5833
  %5835 = vadd.xlane.f32.xlu0 %v5804
  %v5836 = vpop.xlane.xlu0 %5835
  %5837 = vadd.xlane.f32.xlu0 %v5806
  %v5838 = vpop.xlane.xlu0 %5837
  %5839 = vadd.xlane.f32.xlu0 %v5808
  %v5840 = vpop.xlane.xlu0 %5839
  %v5841 = vrcp.pop %v5810
  %v5842 = vrcp.pop %v5812
  %v5843 = vrcp.pop %v5814
  %v5844 = vrcp.pop %v5816
  %v5845 = vrcp.pop %v5818
  %v5846 = vrcp.pop %v5820
  %v5847 = vrcp.pop %v5822
  %v5848 = vrcp.pop %v5824
  %v5849 = vrcp.pop %v5826
  %v5850 = vrcp.pop %v5828
  %v5851 = vrcp.pop %v5830
  %v5852 = vrcp.pop %v5832
  %v5853 = vrcp.pop %v5834
  %v5854 = vrcp.pop %v5836
  %v5855 = vrcp.pop %v5838
  %v5856 = vrcp.pop %v5840
  %v5857 = vmul.f32 %v5778, %v5841
  %v5858 = vmul.f32 %v5780, %v5842
  %v5859 = vmul.f32 %v5782, %v5843
  %v5860 = vmul.f32 %v5784, %v5844
  %v5861 = vmul.f32 %v5786, %v5845
  %v5862 = vmul.f32 %v5788, %v5846
  %v5863 = vmul.f32 %v5790, %v5847
  %v5864 = vmul.f32 %v5792, %v5848
  %v5865 = vmul.f32 %v5794, %v5849
  %v5866 = vmul.f32 %v5796, %v5850
  %v5867 = vmul.f32 %v5798, %v5851
  %v5868 = vmul.f32 %v5800, %v5852
  %v5869 = vmul.f32 %v5802, %v5853
  %v5870 = vmul.f32 %v5804, %v5854
  %v5871 = vmul.f32 %v5806, %v5855
  %v5872 = vmul.f32 %v5808, %v5856
  %v5873 = vpack.c.bf16 %v5858, %v5857
  %v5874 = vpack.c.bf16 %v5860, %v5859
  %v5875 = vpack.c.bf16 %v5862, %v5861
  %v5876 = vpack.c.bf16 %v5864, %v5863
  %v5877 = vpack.c.bf16 %v5866, %v5865
  %v5878 = vpack.c.bf16 %v5868, %v5867
  %v5879 = vpack.c.bf16 %v5870, %v5869
  %v5880 = vpack.c.bf16 %v5872, %v5871
  %5881 = vrot.lane.b32.xlu0 %v4234, 40
  %v5882 = vpop.permute.xlu0 %5881
  %5883 = vrot.lane.b32.xlu0 %v4235, 40
  %v5884 = vpop.permute.xlu0 %5883
  %5885 = vrot.lane.b32.xlu0 %v4236, 40
  %v5886 = vpop.permute.xlu0 %5885
  %5887 = vrot.lane.b32.xlu0 %v4237, 40
  %v5888 = vpop.permute.xlu0 %5887
  %5889 = vrot.lane.b32.xlu0 %v4238, 40
  %v5890 = vpop.permute.xlu0 %5889
  %5891 = vrot.lane.b32.xlu0 %v4239, 40
  %v5892 = vpop.permute.xlu0 %5891
  %5893 = vrot.lane.b32.xlu0 %v4240, 40
  %v5894 = vpop.permute.xlu0 %5893
  %5895 = vrot.lane.b32.xlu0 %v4241, 40
  %v5896 = vpop.permute.xlu0 %5895
  %5905 = vmatpush.bf16.msra.mxu0 %v5896
  %5906 = vmatpush.bf16.msra.mxu0 %v5894
  %5907 = vmatpush.bf16.msra.mxu0 %v5892
  %5908 = vmatpush.bf16.msra.mxu0 %v5890
  %5909 = vmatpush.bf16.msra.mxu0 %v5888
  %5910 = vmatpush.bf16.msra.mxu0 %v5886
  %5911 = vmatpush.bf16.msra.mxu0 %v5884
  %5912 = vmatpush.bf16.msra.mxu0 %v5882
  %5913 = vmatmul.bf16.gmra.mxu0 %v5873
  %v5914 = vpop.f32.mrf.mxu0
  %v5915 = vadd.f32 0.0, %v5914
  %v5916 = vpop.f32.mrf.mxu0
  %v5917 = vadd.f32 0.0, %v5916
  %5918 = vmatmul.bf16.gmra.mxu0 %v5874
  %v5919 = vpop.f32.mrf.mxu0
  %v5920 = vadd.f32 0.0, %v5919
  %v5921 = vpop.f32.mrf.mxu0
  %v5922 = vadd.f32 0.0, %v5921
  %5923 = vmatmul.bf16.gmra.mxu0 %v5875
  %v5924 = vpop.f32.mrf.mxu0
  %v5925 = vadd.f32 0.0, %v5924
  %v5926 = vpop.f32.mrf.mxu0
  %v5927 = vadd.f32 0.0, %v5926
  %5928 = vmatmul.bf16.gmra.mxu0 %v5876
  %v5929 = vpop.f32.mrf.mxu0
  %v5930 = vadd.f32 0.0, %v5929
  %v5931 = vpop.f32.mrf.mxu0
  %v5932 = vadd.f32 0.0, %v5931
  %5933 = vmatmul.bf16.gmra.mxu0 %v5877
  %v5934 = vpop.f32.mrf.mxu0
  %v5935 = vadd.f32 0.0, %v5934
  %v5936 = vpop.f32.mrf.mxu0
  %v5937 = vadd.f32 0.0, %v5936
  %5938 = vmatmul.bf16.gmra.mxu0 %v5878
  %v5939 = vpop.f32.mrf.mxu0
  %v5940 = vadd.f32 0.0, %v5939
  %v5941 = vpop.f32.mrf.mxu0
  %v5942 = vadd.f32 0.0, %v5941
  %5943 = vmatmul.bf16.gmra.mxu0 %v5879
  %v5944 = vpop.f32.mrf.mxu0
  %v5945 = vadd.f32 0.0, %v5944
  %v5946 = vpop.f32.mrf.mxu0
  %v5947 = vadd.f32 0.0, %v5946
  %5948 = vmatmul.bf16.gmra.mxu0 %v5880
  %v5949 = vpop.f32.mrf.mxu0
  %v5950 = vadd.f32 0.0, %v5949
  %v5951 = vpop.f32.mrf.mxu0
  %v5952 = vadd.f32 0.0, %v5951
  %5953 = vdwg.mxu0
  %v5954 = vpack.c.bf16 %v3721, %v3721
  %v5955 = vpack.c.bf16 %v5917, %v5915
  %v5956 = vpack.c.bf16 %v5922, %v5920
  %v5957 = vpack.c.bf16 %v5927, %v5925
  %v5958 = vpack.c.bf16 %v5932, %v5930
  %v5959 = vpack.c.bf16 %v5937, %v5935
  %v5960 = vpack.c.bf16 %v5942, %v5940
  %v5961 = vpack.c.bf16 %v5947, %v5945
  %v5962 = vpack.c.bf16 %v5952, %v5950
  %5964 = vrot.lane.b32.xlu0 %v5954, 32
  %v5965 = vpop.permute.xlu0 %5964
  %v5967 = vsel %vm628, %v5955, 0
  %v5970 = vsel %vm628, %v5956, 0
  %v5973 = vsel %vm628, %v5957, 0
  %v5976 = vsel %vm628, %v5958, 0
  %v5979 = vsel %vm628, %v5959, 0
  %v5982 = vsel %vm628, %v5960, 0
  %v5985 = vsel %vm628, %v5961, 0
  %v5988 = vsel %vm628, %v5962, 0
  %v5991 = vsel %vm1358, %v5965, 0
  %5993 = vmatpush.bf16.msra.mxu0 0
  %5994 = vmatpush.bf16.msra.mxu0 0
  %5995 = vmatpush.bf16.msra.mxu0 0
  %5996 = vmatpush.bf16.msra.mxu0 0
  %5997 = vmatpush.bf16.msra.mxu0 0
  %5998 = vmatpush.bf16.msra.mxu0 0
  %5999 = vmatpush.bf16.msra.mxu0 0
  %6000 = vmatpush.bf16.msra.mxu0 %v5991
  %6001 = vmatmul.bf16.gmra.mxu0 %v5967
  %v6002 = vpop.f32.mrf.mxu0
  %v6003 = vadd.f32 0.0, %v6002
  %v6004 = vpop.f32.mrf.mxu0
  %v6005 = vadd.f32 0.0, %v6004
  %6006 = vmatmul.bf16.gmra.mxu0 %v5970
  %v6007 = vpop.f32.mrf.mxu0
  %v6008 = vadd.f32 0.0, %v6007
  %v6009 = vpop.f32.mrf.mxu0
  %v6010 = vadd.f32 0.0, %v6009
  %6011 = vmatmul.bf16.gmra.mxu0 %v5973
  %v6012 = vpop.f32.mrf.mxu0
  %v6013 = vadd.f32 0.0, %v6012
  %v6014 = vpop.f32.mrf.mxu0
  %v6015 = vadd.f32 0.0, %v6014
  %6016 = vmatmul.bf16.gmra.mxu0 %v5976
  %v6017 = vpop.f32.mrf.mxu0
  %v6018 = vadd.f32 0.0, %v6017
  %v6019 = vpop.f32.mrf.mxu0
  %v6020 = vadd.f32 0.0, %v6019
  %6021 = vmatmul.bf16.gmra.mxu0 %v5979
  %v6022 = vpop.f32.mrf.mxu0
  %v6023 = vadd.f32 0.0, %v6022
  %v6024 = vpop.f32.mrf.mxu0
  %v6025 = vadd.f32 0.0, %v6024
  %6026 = vmatmul.bf16.gmra.mxu0 %v5982
  %v6027 = vpop.f32.mrf.mxu0
  %v6028 = vadd.f32 0.0, %v6027
  %v6029 = vpop.f32.mrf.mxu0
  %v6030 = vadd.f32 0.0, %v6029
  %6031 = vmatmul.bf16.gmra.mxu0 %v5985
  %v6032 = vpop.f32.mrf.mxu0
  %v6033 = vadd.f32 0.0, %v6032
  %v6034 = vpop.f32.mrf.mxu0
  %v6035 = vadd.f32 0.0, %v6034
  %6036 = vmatmul.bf16.gmra.mxu0 %v5988
  %v6037 = vpop.f32.mrf.mxu0
  %v6038 = vadd.f32 0.0, %v6037
  %v6039 = vpop.f32.mrf.mxu0
  %v6040 = vadd.f32 0.0, %v6039
  %6041 = vdwg.mxu0
  %v6042 = vadd.f32 %v5584, %v6003
  %v6043 = vadd.f32 %v5585, %v6005
  %v6044 = vadd.f32 %v5586, %v6008
  %v6045 = vadd.f32 %v5587, %v6010
  %v6046 = vadd.f32 %v5588, %v6013
  %v6047 = vadd.f32 %v5589, %v6015
  %v6048 = vadd.f32 %v5590, %v6018
  %v6049 = vadd.f32 %v5591, %v6020
  %v6050 = vadd.f32 %v5592, %v6023
  %v6051 = vadd.f32 %v5593, %v6025
  %v6052 = vadd.f32 %v5594, %v6028
  %v6053 = vadd.f32 %v5595, %v6030
  %v6054 = vadd.f32 %v5596, %v6033
  %v6055 = vadd.f32 %v5597, %v6035
  %v6056 = vadd.f32 %v5598, %v6038
  %v6057 = vadd.f32 %v5599, %v6040
  %v6058 = vadd.f32 %v3679, %v6042
  %v6059 = vadd.f32 %v3680, %v6043
  %v6060 = vadd.f32 %v3681, %v6044
  %v6061 = vadd.f32 %v3682, %v6045
  %v6062 = vadd.f32 %v3683, %v6046
  %v6063 = vadd.f32 %v3684, %v6047
  %v6064 = vadd.f32 %v3685, %v6048
  %v6065 = vadd.f32 %v3686, %v6049
  %v6066 = vadd.f32 %v3687, %v6050
  %v6067 = vadd.f32 %v3688, %v6051
  %v6068 = vadd.f32 %v3689, %v6052
  %v6069 = vadd.f32 %v3690, %v6053
  %v6070 = vadd.f32 %v3691, %v6054
  %v6071 = vadd.f32 %v3692, %v6055
  %v6072 = vadd.f32 %v3693, %v6056
  %v6073 = vadd.f32 %v3694, %v6057
  %v6074 = vperm.slane %v3713, 4
  %v6075 = vadd.f32 %v6058, %v6074
  %v6076 = vadd.f32 %v6059, %v6074
  %v6077 = vadd.f32 %v6060, %v6074
  %v6078 = vadd.f32 %v6061, %v6074
  %v6079 = vadd.f32 %v6062, %v6074
  %v6080 = vadd.f32 %v6063, %v6074
  %v6081 = vadd.f32 %v6064, %v6074
  %v6082 = vadd.f32 %v6065, %v6074
  %v6083 = vadd.f32 %v6066, %v6074
  %v6084 = vadd.f32 %v6067, %v6074
  %v6085 = vadd.f32 %v6068, %v6074
  %v6086 = vadd.f32 %v6069, %v6074
  %v6087 = vadd.f32 %v6070, %v6074
  %v6088 = vadd.f32 %v6071, %v6074
  %v6089 = vadd.f32 %v6072, %v6074
  %v6090 = vadd.f32 %v6073, %v6074
  %v6091 = vsel %vm78, %v6075, 0.0
  %6092 = vadd.xlane.f32.xlu0 %v6091
  %v6093 = vpop.xlane.xlu0 %6092
  %v6094 = vsel %vm78, %v6076, 0.0
  %6095 = vadd.xlane.f32.xlu0 %v6094
  %v6096 = vpop.xlane.xlu0 %6095
  %v6097 = vsel %vm78, %v6077, 0.0
  %6098 = vadd.xlane.f32.xlu0 %v6097
  %v6099 = vpop.xlane.xlu0 %6098
  %v6100 = vsel %vm78, %v6078, 0.0
  %6101 = vadd.xlane.f32.xlu0 %v6100
  %v6102 = vpop.xlane.xlu0 %6101
  %v6103 = vsel %vm78, %v6079, 0.0
  %6104 = vadd.xlane.f32.xlu0 %v6103
  %v6105 = vpop.xlane.xlu0 %6104
  %v6106 = vsel %vm78, %v6080, 0.0
  %6107 = vadd.xlane.f32.xlu0 %v6106
  %v6108 = vpop.xlane.xlu0 %6107
  %v6109 = vsel %vm78, %v6081, 0.0
  %6110 = vadd.xlane.f32.xlu0 %v6109
  %v6111 = vpop.xlane.xlu0 %6110
  %v6112 = vsel %vm78, %v6082, 0.0
  %6113 = vadd.xlane.f32.xlu0 %v6112
  %v6114 = vpop.xlane.xlu0 %6113
  %v6115 = vsel %vm78, %v6083, 0.0
  %6116 = vadd.xlane.f32.xlu0 %v6115
  %v6117 = vpop.xlane.xlu0 %6116
  %v6118 = vsel %vm78, %v6084, 0.0
  %6119 = vadd.xlane.f32.xlu0 %v6118
  %v6120 = vpop.xlane.xlu0 %6119
  %v6121 = vsel %vm78, %v6085, 0.0
  %6122 = vadd.xlane.f32.xlu0 %v6121
  %v6123 = vpop.xlane.xlu0 %6122
  %v6124 = vsel %vm78, %v6086, 0.0
  %6125 = vadd.xlane.f32.xlu0 %v6124
  %v6126 = vpop.xlane.xlu0 %6125
  %v6127 = vsel %vm78, %v6087, 0.0
  %6128 = vadd.xlane.f32.xlu0 %v6127
  %v6129 = vpop.xlane.xlu0 %6128
  %v6130 = vsel %vm78, %v6088, 0.0
  %6131 = vadd.xlane.f32.xlu0 %v6130
  %v6132 = vpop.xlane.xlu0 %6131
  %v6133 = vsel %vm78, %v6089, 0.0
  %6134 = vadd.xlane.f32.xlu0 %v6133
  %v6135 = vpop.xlane.xlu0 %6134
  %v6136 = vsel %vm78, %v6090, 0.0
  %6137 = vadd.xlane.f32.xlu0 %v6136
  %v6138 = vpop.xlane.xlu0 %6137
  %v6139 = vmul.f32 %v6093, %v133
  %v6140 = vmul.f32 %v6096, %v133
  %v6141 = vmul.f32 %v6099, %v133
  %v6142 = vmul.f32 %v6102, %v133
  %v6143 = vmul.f32 %v6105, %v133
  %v6144 = vmul.f32 %v6108, %v133
  %v6145 = vmul.f32 %v6111, %v133
  %v6146 = vmul.f32 %v6114, %v133
  %v6147 = vmul.f32 %v6117, %v133
  %v6148 = vmul.f32 %v6120, %v133
  %v6149 = vmul.f32 %v6123, %v133
  %v6150 = vmul.f32 %v6126, %v133
  %v6151 = vmul.f32 %v6129, %v133
  %v6152 = vmul.f32 %v6132, %v133
  %v6153 = vmul.f32 %v6135, %v133
  %v6154 = vmul.f32 %v6138, %v133
  %v6155 = vsub.f32 %v6075, %v6139
  %v6156 = vsub.f32 %v6076, %v6140
  %v6157 = vsub.f32 %v6077, %v6141
  %v6158 = vsub.f32 %v6078, %v6142
  %v6159 = vsub.f32 %v6079, %v6143
  %v6160 = vsub.f32 %v6080, %v6144
  %v6161 = vsub.f32 %v6081, %v6145
  %v6162 = vsub.f32 %v6082, %v6146
  %v6163 = vsub.f32 %v6083, %v6147
  %v6164 = vsub.f32 %v6084, %v6148
  %v6165 = vsub.f32 %v6085, %v6149
  %v6166 = vsub.f32 %v6086, %v6150
  %v6167 = vsub.f32 %v6087, %v6151
  %v6168 = vsub.f32 %v6088, %v6152
  %v6169 = vsub.f32 %v6089, %v6153
  %v6170 = vsub.f32 %v6090, %v6154
  %v6171 = vmul.f32 %v6155, %v6155
  %v6172 = vmul.f32 %v6156, %v6156
  %v6173 = vmul.f32 %v6157, %v6157
  %v6174 = vmul.f32 %v6158, %v6158
  %v6175 = vmul.f32 %v6159, %v6159
  %v6176 = vmul.f32 %v6160, %v6160
  %v6177 = vmul.f32 %v6161, %v6161
  %v6178 = vmul.f32 %v6162, %v6162
  %v6179 = vmul.f32 %v6163, %v6163
  %v6180 = vmul.f32 %v6164, %v6164
  %v6181 = vmul.f32 %v6165, %v6165
  %v6182 = vmul.f32 %v6166, %v6166
  %v6183 = vmul.f32 %v6167, %v6167
  %v6184 = vmul.f32 %v6168, %v6168
  %v6185 = vmul.f32 %v6169, %v6169
  %v6186 = vmul.f32 %v6170, %v6170
  %v6187 = vsel %vm78, %v6171, 0.0
  %6188 = vadd.xlane.f32.xlu0 %v6187
  %v6189 = vpop.xlane.xlu0 %6188
  %v6190 = vsel %vm78, %v6172, 0.0
  %6191 = vadd.xlane.f32.xlu0 %v6190
  %v6192 = vpop.xlane.xlu0 %6191
  %v6193 = vsel %vm78, %v6173, 0.0
  %6194 = vadd.xlane.f32.xlu0 %v6193
  %v6195 = vpop.xlane.xlu0 %6194
  %v6196 = vsel %vm78, %v6174, 0.0
  %6197 = vadd.xlane.f32.xlu0 %v6196
  %v6198 = vpop.xlane.xlu0 %6197
  %v6199 = vsel %vm78, %v6175, 0.0
  %6200 = vadd.xlane.f32.xlu0 %v6199
  %v6201 = vpop.xlane.xlu0 %6200
  %v6202 = vsel %vm78, %v6176, 0.0
  %6203 = vadd.xlane.f32.xlu0 %v6202
  %v6204 = vpop.xlane.xlu0 %6203
  %v6205 = vsel %vm78, %v6177, 0.0
  %6206 = vadd.xlane.f32.xlu0 %v6205
  %v6207 = vpop.xlane.xlu0 %6206
  %v6208 = vsel %vm78, %v6178, 0.0
  %6209 = vadd.xlane.f32.xlu0 %v6208
  %v6210 = vpop.xlane.xlu0 %6209
  %v6211 = vsel %vm78, %v6179, 0.0
  %6212 = vadd.xlane.f32.xlu0 %v6211
  %v6213 = vpop.xlane.xlu0 %6212
  %v6214 = vsel %vm78, %v6180, 0.0
  %6215 = vadd.xlane.f32.xlu0 %v6214
  %v6216 = vpop.xlane.xlu0 %6215
  %v6217 = vsel %vm78, %v6181, 0.0
  %6218 = vadd.xlane.f32.xlu0 %v6217
  %v6219 = vpop.xlane.xlu0 %6218
  %v6220 = vsel %vm78, %v6182, 0.0
  %6221 = vadd.xlane.f32.xlu0 %v6220
  %v6222 = vpop.xlane.xlu0 %6221
  %v6223 = vsel %vm78, %v6183, 0.0
  %6224 = vadd.xlane.f32.xlu0 %v6223
  %v6225 = vpop.xlane.xlu0 %6224
  %v6226 = vsel %vm78, %v6184, 0.0
  %6227 = vadd.xlane.f32.xlu0 %v6226
  %v6228 = vpop.xlane.xlu0 %6227
  %v6229 = vsel %vm78, %v6185, 0.0
  %6230 = vadd.xlane.f32.xlu0 %v6229
  %v6231 = vpop.xlane.xlu0 %6230
  %v6232 = vsel %vm78, %v6186, 0.0
  %6233 = vadd.xlane.f32.xlu0 %v6232
  %v6234 = vpop.xlane.xlu0 %6233
  %v6235 = vmul.f32 %v6189, %v133
  %v6236 = vmul.f32 %v6192, %v133
  %v6237 = vmul.f32 %v6195, %v133
  %v6238 = vmul.f32 %v6198, %v133
  %v6239 = vmul.f32 %v6201, %v133
  %v6240 = vmul.f32 %v6204, %v133
  %v6241 = vmul.f32 %v6207, %v133
  %v6242 = vmul.f32 %v6210, %v133
  %v6243 = vmul.f32 %v6213, %v133
  %v6244 = vmul.f32 %v6216, %v133
  %v6245 = vmul.f32 %v6219, %v133
  %v6246 = vmul.f32 %v6222, %v133
  %v6247 = vmul.f32 %v6225, %v133
  %v6248 = vmul.f32 %v6228, %v133
  %v6249 = vmul.f32 %v6231, %v133
  %v6250 = vmul.f32 %v6234, %v133
  %v6251 = vadd.f32 %v6235, 1e-05
  %v6252 = vadd.f32 %v6236, 1e-05
  %v6253 = vadd.f32 %v6237, 1e-05
  %v6254 = vadd.f32 %v6238, 1e-05
  %v6255 = vadd.f32 %v6239, 1e-05
  %v6256 = vadd.f32 %v6240, 1e-05
  %v6257 = vadd.f32 %v6241, 1e-05
  %v6258 = vadd.f32 %v6242, 1e-05
  %v6259 = vadd.f32 %v6243, 1e-05
  %v6260 = vadd.f32 %v6244, 1e-05
  %v6261 = vadd.f32 %v6245, 1e-05
  %v6262 = vadd.f32 %v6246, 1e-05
  %v6263 = vadd.f32 %v6247, 1e-05
  %v6264 = vadd.f32 %v6248, 1e-05
  %v6265 = vadd.f32 %v6249, 1e-05
  %v6266 = vadd.f32 %v6250, 1e-05
  %v6267 = vrsqrt.pop %v6251
  %v6268 = vmul.f32 %v6267, %v6251
  %v6269 = vmul.f32 %v6268, %v6267
  %v6270 = vmul.f32 0.5, %v6269
  %v6271 = vsub.f32 1.5, %v6270
  %v6272 = vmul.f32 %v6267, %v6271
  %vm6273 = vweird.f32 %v6251
  %vm6274 = vweird.f32 %v6267
  %vm6275 = vmor %vm6273, %vm6274
  %v6276 = vsel %vm6275, %v6267, %v6272
  %v6277 = vrsqrt.pop %v6252
  %v6278 = vmul.f32 %v6277, %v6252
  %v6279 = vmul.f32 %v6278, %v6277
  %v6280 = vmul.f32 0.5, %v6279
  %v6281 = vsub.f32 1.5, %v6280
  %v6282 = vmul.f32 %v6277, %v6281
  %vm6283 = vweird.f32 %v6252
  %vm6284 = vweird.f32 %v6277
  %vm6285 = vmor %vm6283, %vm6284
  %v6286 = vsel %vm6285, %v6277, %v6282
  %v6287 = vrsqrt.pop %v6253
  %v6288 = vmul.f32 %v6287, %v6253
  %v6289 = vmul.f32 %v6288, %v6287
  %v6290 = vmul.f32 0.5, %v6289
  %v6291 = vsub.f32 1.5, %v6290
  %v6292 = vmul.f32 %v6287, %v6291
  %vm6293 = vweird.f32 %v6253
  %vm6294 = vweird.f32 %v6287
  %vm6295 = vmor %vm6293, %vm6294
  %v6296 = vsel %vm6295, %v6287, %v6292
  %v6297 = vrsqrt.pop %v6254
  %v6298 = vmul.f32 %v6297, %v6254
  %v6299 = vmul.f32 %v6298, %v6297
  %v6300 = vmul.f32 0.5, %v6299
  %v6301 = vsub.f32 1.5, %v6300
  %v6302 = vmul.f32 %v6297, %v6301
  %vm6303 = vweird.f32 %v6254
  %vm6304 = vweird.f32 %v6297
  %vm6305 = vmor %vm6303, %vm6304
  %v6306 = vsel %vm6305, %v6297, %v6302
  %v6307 = vrsqrt.pop %v6255
  %v6308 = vmul.f32 %v6307, %v6255
  %v6309 = vmul.f32 %v6308, %v6307
  %v6310 = vmul.f32 0.5, %v6309
  %v6311 = vsub.f32 1.5, %v6310
  %v6312 = vmul.f32 %v6307, %v6311
  %vm6313 = vweird.f32 %v6255
  %vm6314 = vweird.f32 %v6307
  %vm6315 = vmor %vm6313, %vm6314
  %v6316 = vsel %vm6315, %v6307, %v6312
  %v6317 = vrsqrt.pop %v6256
  %v6318 = vmul.f32 %v6317, %v6256
  %v6319 = vmul.f32 %v6318, %v6317
  %v6320 = vmul.f32 0.5, %v6319
  %v6321 = vsub.f32 1.5, %v6320
  %v6322 = vmul.f32 %v6317, %v6321
  %vm6323 = vweird.f32 %v6256
  %vm6324 = vweird.f32 %v6317
  %vm6325 = vmor %vm6323, %vm6324
  %v6326 = vsel %vm6325, %v6317, %v6322
  %v6327 = vrsqrt.pop %v6257
  %v6328 = vmul.f32 %v6327, %v6257
  %v6329 = vmul.f32 %v6328, %v6327
  %v6330 = vmul.f32 0.5, %v6329
  %v6331 = vsub.f32 1.5, %v6330
  %v6332 = vmul.f32 %v6327, %v6331
  %vm6333 = vweird.f32 %v6257
  %vm6334 = vweird.f32 %v6327
  %vm6335 = vmor %vm6333, %vm6334
  %v6336 = vsel %vm6335, %v6327, %v6332
  %v6337 = vrsqrt.pop %v6258
  %v6338 = vmul.f32 %v6337, %v6258
  %v6339 = vmul.f32 %v6338, %v6337
  %v6340 = vmul.f32 0.5, %v6339
  %v6341 = vsub.f32 1.5, %v6340
  %v6342 = vmul.f32 %v6337, %v6341
  %vm6343 = vweird.f32 %v6258
  %vm6344 = vweird.f32 %v6337
  %vm6345 = vmor %vm6343, %vm6344
  %v6346 = vsel %vm6345, %v6337, %v6342
  %v6347 = vrsqrt.pop %v6259
  %v6348 = vmul.f32 %v6347, %v6259
  %v6349 = vmul.f32 %v6348, %v6347
  %v6350 = vmul.f32 0.5, %v6349
  %v6351 = vsub.f32 1.5, %v6350
  %v6352 = vmul.f32 %v6347, %v6351
  %vm6353 = vweird.f32 %v6259
  %vm6354 = vweird.f32 %v6347
  %vm6355 = vmor %vm6353, %vm6354
  %v6356 = vsel %vm6355, %v6347, %v6352
  %v6357 = vrsqrt.pop %v6260
  %v6358 = vmul.f32 %v6357, %v6260
  %v6359 = vmul.f32 %v6358, %v6357
  %v6360 = vmul.f32 0.5, %v6359
  %v6361 = vsub.f32 1.5, %v6360
  %v6362 = vmul.f32 %v6357, %v6361
  %vm6363 = vweird.f32 %v6260
  %vm6364 = vweird.f32 %v6357
  %vm6365 = vmor %vm6363, %vm6364
  %v6366 = vsel %vm6365, %v6357, %v6362
  %v6367 = vrsqrt.pop %v6261
  %v6368 = vmul.f32 %v6367, %v6261
  %v6369 = vmul.f32 %v6368, %v6367
  %v6370 = vmul.f32 0.5, %v6369
  %v6371 = vsub.f32 1.5, %v6370
  %v6372 = vmul.f32 %v6367, %v6371
  %vm6373 = vweird.f32 %v6261
  %vm6374 = vweird.f32 %v6367
  %vm6375 = vmor %vm6373, %vm6374
  %v6376 = vsel %vm6375, %v6367, %v6372
  %v6377 = vrsqrt.pop %v6262
  %v6378 = vmul.f32 %v6377, %v6262
  %v6379 = vmul.f32 %v6378, %v6377
  %v6380 = vmul.f32 0.5, %v6379
  %v6381 = vsub.f32 1.5, %v6380
  %v6382 = vmul.f32 %v6377, %v6381
  %vm6383 = vweird.f32 %v6262
  %vm6384 = vweird.f32 %v6377
  %vm6385 = vmor %vm6383, %vm6384
  %v6386 = vsel %vm6385, %v6377, %v6382
  %v6387 = vrsqrt.pop %v6263
  %v6388 = vmul.f32 %v6387, %v6263
  %v6389 = vmul.f32 %v6388, %v6387
  %v6390 = vmul.f32 0.5, %v6389
  %v6391 = vsub.f32 1.5, %v6390
  %v6392 = vmul.f32 %v6387, %v6391
  %vm6393 = vweird.f32 %v6263
  %vm6394 = vweird.f32 %v6387
  %vm6395 = vmor %vm6393, %vm6394
  %v6396 = vsel %vm6395, %v6387, %v6392
  %v6397 = vrsqrt.pop %v6264
  %v6398 = vmul.f32 %v6397, %v6264
  %v6399 = vmul.f32 %v6398, %v6397
  %v6400 = vmul.f32 0.5, %v6399
  %v6401 = vsub.f32 1.5, %v6400
  %v6402 = vmul.f32 %v6397, %v6401
  %vm6403 = vweird.f32 %v6264
  %vm6404 = vweird.f32 %v6397
  %vm6405 = vmor %vm6403, %vm6404
  %v6406 = vsel %vm6405, %v6397, %v6402
  %v6407 = vrsqrt.pop %v6265
  %v6408 = vmul.f32 %v6407, %v6265
  %v6409 = vmul.f32 %v6408, %v6407
  %v6410 = vmul.f32 0.5, %v6409
  %v6411 = vsub.f32 1.5, %v6410
  %v6412 = vmul.f32 %v6407, %v6411
  %vm6413 = vweird.f32 %v6265
  %vm6414 = vweird.f32 %v6407
  %vm6415 = vmor %vm6413, %vm6414
  %v6416 = vsel %vm6415, %v6407, %v6412
  %v6417 = vrsqrt.pop %v6266
  %v6418 = vmul.f32 %v6417, %v6266
  %v6419 = vmul.f32 %v6418, %v6417
  %v6420 = vmul.f32 0.5, %v6419
  %v6421 = vsub.f32 1.5, %v6420
  %v6422 = vmul.f32 %v6417, %v6421
  %vm6423 = vweird.f32 %v6266
  %vm6424 = vweird.f32 %v6417
  %vm6425 = vmor %vm6423, %vm6424
  %v6426 = vsel %vm6425, %v6417, %v6422
  %v6427 = vmul.f32 %v6155, %v6276
  %v6428 = vmul.f32 %v6156, %v6286
  %v6429 = vmul.f32 %v6157, %v6296
  %v6430 = vmul.f32 %v6158, %v6306
  %v6431 = vmul.f32 %v6159, %v6316
  %v6432 = vmul.f32 %v6160, %v6326
  %v6433 = vmul.f32 %v6161, %v6336
  %v6434 = vmul.f32 %v6162, %v6346
  %v6435 = vmul.f32 %v6163, %v6356
  %v6436 = vmul.f32 %v6164, %v6366
  %v6437 = vmul.f32 %v6165, %v6376
  %v6438 = vmul.f32 %v6166, %v6386
  %v6439 = vmul.f32 %v6167, %v6396
  %v6440 = vmul.f32 %v6168, %v6406
  %v6441 = vmul.f32 %v6169, %v6416
  %v6442 = vmul.f32 %v6170, %v6426
  %v6443 = vperm.slane %v3713, 2
  %v6444 = vmul.f32 %v6427, %v6443
  %v6445 = vmul.f32 %v6428, %v6443
  %v6446 = vmul.f32 %v6429, %v6443
  %v6447 = vmul.f32 %v6430, %v6443
  %v6448 = vmul.f32 %v6431, %v6443
  %v6449 = vmul.f32 %v6432, %v6443
  %v6450 = vmul.f32 %v6433, %v6443
  %v6451 = vmul.f32 %v6434, %v6443
  %v6452 = vmul.f32 %v6435, %v6443
  %v6453 = vmul.f32 %v6436, %v6443
  %v6454 = vmul.f32 %v6437, %v6443
  %v6455 = vmul.f32 %v6438, %v6443
  %v6456 = vmul.f32 %v6439, %v6443
  %v6457 = vmul.f32 %v6440, %v6443
  %v6458 = vmul.f32 %v6441, %v6443
  %v6459 = vmul.f32 %v6442, %v6443
  %v6460 = vperm.slane %v3713, 3
  %v6461 = vadd.f32 %v6444, %v6460
  %v6462 = vadd.f32 %v6445, %v6460
  %v6463 = vadd.f32 %v6446, %v6460
  %v6464 = vadd.f32 %v6447, %v6460
  %v6465 = vadd.f32 %v6448, %v6460
  %v6466 = vadd.f32 %v6449, %v6460
  %v6467 = vadd.f32 %v6450, %v6460
  %v6468 = vadd.f32 %v6451, %v6460
  %v6469 = vadd.f32 %v6452, %v6460
  %v6470 = vadd.f32 %v6453, %v6460
  %v6471 = vadd.f32 %v6454, %v6460
  %v6472 = vadd.f32 %v6455, %v6460
  %v6473 = vadd.f32 %v6456, %v6460
  %v6474 = vadd.f32 %v6457, %v6460
  %v6475 = vadd.f32 %v6458, %v6460
  %v6476 = vadd.f32 %v6459, %v6460
  %v6477 = vpack.c.bf16 %v6462, %v6461
  %v6478 = vpack.c.bf16 %v6464, %v6463
  %v6479 = vpack.c.bf16 %v6466, %v6465
  %v6480 = vpack.c.bf16 %v6468, %v6467
  %v6481 = vpack.c.bf16 %v6470, %v6469
  %v6482 = vpack.c.bf16 %v6472, %v6471
  %v6483 = vpack.c.bf16 %v6474, %v6473
  %v6484 = vpack.c.bf16 %v6476, %v6475
  %v6485 = vpack.c.bf16 %v3718, %v3716
  %v6486 = vpack.c.bf16 %v3722, %v3720
  %v6487 = vperm.slane %v3713, 7
  %v6489 = vsel %vm78, %v6477, 0
  %v6492 = vsel %vm78, %v6478, 0
  %v6495 = vsel %vm78, %v6479, 0
  %v6498 = vsel %vm78, %v6480, 0
  %v6501 = vsel %vm78, %v6481, 0
  %v6504 = vsel %vm78, %v6482, 0
  %v6507 = vsel %vm78, %v6483, 0
  %v6510 = vsel %vm78, %v6484, 0
  %6512 = vmatpush.bf16.msra.mxu0 0
  %6513 = vmatpush.bf16.msra.mxu0 0
  %6514 = vmatpush.bf16.msra.mxu0 0
  %6515 = vmatpush.bf16.msra.mxu0 0
  %6516 = vmatpush.bf16.msra.mxu0 0
  %6517 = vmatpush.bf16.msra.mxu0 0
  %6518 = vmatpush.bf16.msra.mxu0 %v6486
  %6519 = vmatpush.bf16.msra.mxu0 %v6485
  %6520 = vmatmul.bf16.gmra.mxu0 %v6489
  %v6521 = vpop.f32.mrf.mxu0
  %v6522 = vadd.f32 %v6487, %v6521
  %v6523 = vpop.f32.mrf.mxu0
  %v6524 = vadd.f32 %v6487, %v6523
  %6525 = vmatmul.bf16.gmra.mxu0 %v6492
  %v6526 = vpop.f32.mrf.mxu0
  %v6527 = vadd.f32 %v6487, %v6526
  %v6528 = vpop.f32.mrf.mxu0
  %v6529 = vadd.f32 %v6487, %v6528
  %6530 = vmatmul.bf16.gmra.mxu0 %v6495
  %v6531 = vpop.f32.mrf.mxu0
  %v6532 = vadd.f32 %v6487, %v6531
  %v6533 = vpop.f32.mrf.mxu0
  %v6534 = vadd.f32 %v6487, %v6533
  %6535 = vmatmul.bf16.gmra.mxu0 %v6498
  %v6536 = vpop.f32.mrf.mxu0
  %v6537 = vadd.f32 %v6487, %v6536
  %v6538 = vpop.f32.mrf.mxu0
  %v6539 = vadd.f32 %v6487, %v6538
  %6540 = vmatmul.bf16.gmra.mxu0 %v6501
  %v6541 = vpop.f32.mrf.mxu0
  %v6542 = vadd.f32 %v6487, %v6541
  %v6543 = vpop.f32.mrf.mxu0
  %v6544 = vadd.f32 %v6487, %v6543
  %6545 = vmatmul.bf16.gmra.mxu0 %v6504
  %v6546 = vpop.f32.mrf.mxu0
  %v6547 = vadd.f32 %v6487, %v6546
  %v6548 = vpop.f32.mrf.mxu0
  %v6549 = vadd.f32 %v6487, %v6548
  %6550 = vmatmul.bf16.gmra.mxu0 %v6507
  %v6551 = vpop.f32.mrf.mxu0
  %v6552 = vadd.f32 %v6487, %v6551
  %v6553 = vpop.f32.mrf.mxu0
  %v6554 = vadd.f32 %v6487, %v6553
  %6555 = vmatmul.bf16.gmra.mxu0 %v6510
  %v6556 = vpop.f32.mrf.mxu0
  %v6557 = vadd.f32 %v6487, %v6556
  %v6558 = vpop.f32.mrf.mxu0
  %v6559 = vadd.f32 %v6487, %v6558
  %6560 = vdwg.mxu0
  %v6561 = vmul.f32 %v6522, 0.5
  %v6562 = vmul.f32 %v6524, 0.5
  %v6563 = vmul.f32 %v6527, 0.5
  %v6564 = vmul.f32 %v6529, 0.5
  %v6565 = vmul.f32 %v6532, 0.5
  %v6566 = vmul.f32 %v6534, 0.5
  %v6567 = vmul.f32 %v6537, 0.5
  %v6568 = vmul.f32 %v6539, 0.5
  %v6569 = vmul.f32 %v6542, 0.5
  %v6570 = vmul.f32 %v6544, 0.5
  %v6571 = vmul.f32 %v6547, 0.5
  %v6572 = vmul.f32 %v6549, 0.5
  %v6573 = vmul.f32 %v6552, 0.5
  %v6574 = vmul.f32 %v6554, 0.5
  %v6575 = vmul.f32 %v6557, 0.5
  %v6576 = vmul.f32 %v6559, 0.5
  %v6577 = vmul.f32 %v6522, 0.70710677
  %v6578 = vmul.f32 %v6524, 0.70710677
  %v6579 = vmul.f32 %v6527, 0.70710677
  %v6580 = vmul.f32 %v6529, 0.70710677
  %v6581 = vmul.f32 %v6532, 0.70710677
  %v6582 = vmul.f32 %v6534, 0.70710677
  %v6583 = vmul.f32 %v6537, 0.70710677
  %v6584 = vmul.f32 %v6539, 0.70710677
  %v6585 = vmul.f32 %v6542, 0.70710677
  %v6586 = vmul.f32 %v6544, 0.70710677
  %v6587 = vmul.f32 %v6547, 0.70710677
  %v6588 = vmul.f32 %v6549, 0.70710677
  %v6589 = vmul.f32 %v6552, 0.70710677
  %v6590 = vmul.f32 %v6554, 0.70710677
  %v6591 = vmul.f32 %v6557, 0.70710677
  %v6592 = vmul.f32 %v6559, 0.70710677
  %v6593 = vmul.f32 %v6577, %v6577
  %v6594 = vmin.f32 16.0, %v6593
  %v6595 = vmul.f32 %v6594, 2.1237322e-06
  %v6596 = vadd.f32 %v6595, 0.00028619796
  %v6597 = vmul.f32 %v6594, %v6596
  %v6598 = vadd.f32 %v6597, 0.0036580483
  %v6599 = vmul.f32 %v6594, %v6598
  %v6600 = vadd.f32 %v6599, 0.05243302
  %v6601 = vmul.f32 %v6594, %v6600
  %v6602 = vadd.f32 %v6601, 0.18741608
  %v6603 = vmul.f32 %v6594, %v6602
  %v6604 = vadd.f32 %v6603, 1.1283791
  %v6605 = vmul.f32 %v6577, %v6604
  %v6606 = vmul.f32 %v6594, 3.8918573e-05
  %v6607 = vadd.f32 %v6606, 0.001143296
  %v6608 = vmul.f32 %v6594, %v6607
  %v6609 = vadd.f32 %v6608, 0.014752088
  %v6610 = vmul.f32 %v6594, %v6609
  %v6611 = vadd.f32 %v6610, 0.112945676
  %v6612 = vmul.f32 %v6594, %v6611
  %v6613 = vadd.f32 %v6612, 0.4994258
  %v6614 = vmul.f32 %v6594, %v6613
  %v6615 = vadd.f32 %v6614, 1.0
  %v6616 = vrcp.pop %v6615
  %v6617 = vmul.f32 %v6615, %v6616
  %v6618 = vsub.f32 1.0, %v6617
  %v6619 = vmul.f32 %v6616, %v6618
  %v6620 = vadd.f32 %v6616, %v6619
  %vm6621 = vweird.f32 %v6615
  %vm6622 = vweird.f32 %v6616
  %vm6623 = vmor %vm6621, %vm6622
  %v6624 = vsel %vm6623, %v6616, %v6620
  %v6625 = vand.u32 2147483647, %v6615
  %vm6626 = vcmp.eq.f32.partialorder %v6625, 8.507059e+37
  %v6627 = vand.u32 %v6615, 2147483648
  %v6628 = vor.u32 1.1754944e-38, %v6627
  %v6629 = vsel %vm6626, %v6628, %v6624
  %v6630 = vmul.f32 %v6605, %v6629
  %v6631 = vmin.f32 %v6630, 1.0
  %v6632 = vmax.f32 %v6631, -1.0
  %v6633 = vmul.f32 %v6578, %v6578
  %v6634 = vmin.f32 16.0, %v6633
  %v6635 = vmul.f32 %v6634, 2.1237322e-06
  %v6636 = vadd.f32 %v6635, 0.00028619796
  %v6637 = vmul.f32 %v6634, %v6636
  %v6638 = vadd.f32 %v6637, 0.0036580483
  %v6639 = vmul.f32 %v6634, %v6638
  %v6640 = vadd.f32 %v6639, 0.05243302
  %v6641 = vmul.f32 %v6634, %v6640
  %v6642 = vadd.f32 %v6641, 0.18741608
  %v6643 = vmul.f32 %v6634, %v6642
  %v6644 = vadd.f32 %v6643, 1.1283791
  %v6645 = vmul.f32 %v6578, %v6644
  %v6646 = vmul.f32 %v6634, 3.8918573e-05
  %v6647 = vadd.f32 %v6646, 0.001143296
  %v6648 = vmul.f32 %v6634, %v6647
  %v6649 = vadd.f32 %v6648, 0.014752088
  %v6650 = vmul.f32 %v6634, %v6649
  %v6651 = vadd.f32 %v6650, 0.112945676
  %v6652 = vmul.f32 %v6634, %v6651
  %v6653 = vadd.f32 %v6652, 0.4994258
  %v6654 = vmul.f32 %v6634, %v6653
  %v6655 = vadd.f32 %v6654, 1.0
  %v6656 = vrcp.pop %v6655
  %v6657 = vmul.f32 %v6655, %v6656
  %v6658 = vsub.f32 1.0, %v6657
  %v6659 = vmul.f32 %v6656, %v6658
  %v6660 = vadd.f32 %v6656, %v6659
  %vm6661 = vweird.f32 %v6655
  %vm6662 = vweird.f32 %v6656
  %vm6663 = vmor %vm6661, %vm6662
  %v6664 = vsel %vm6663, %v6656, %v6660
  %v6665 = vand.u32 2147483647, %v6655
  %vm6666 = vcmp.eq.f32.partialorder %v6665, 8.507059e+37
  %v6667 = vand.u32 %v6655, 2147483648
  %v6668 = vor.u32 1.1754944e-38, %v6667
  %v6669 = vsel %vm6666, %v6668, %v6664
  %v6670 = vmul.f32 %v6645, %v6669
  %v6671 = vmin.f32 %v6670, 1.0
  %v6672 = vmax.f32 %v6671, -1.0
  %v6673 = vmul.f32 %v6579, %v6579
  %v6674 = vmin.f32 16.0, %v6673
  %v6675 = vmul.f32 %v6674, 2.1237322e-06
  %v6676 = vadd.f32 %v6675, 0.00028619796
  %v6677 = vmul.f32 %v6674, %v6676
  %v6678 = vadd.f32 %v6677, 0.0036580483
  %v6679 = vmul.f32 %v6674, %v6678
  %v6680 = vadd.f32 %v6679, 0.05243302
  %v6681 = vmul.f32 %v6674, %v6680
  %v6682 = vadd.f32 %v6681, 0.18741608
  %v6683 = vmul.f32 %v6674, %v6682
  %v6684 = vadd.f32 %v6683, 1.1283791
  %v6685 = vmul.f32 %v6579, %v6684
  %v6686 = vmul.f32 %v6674, 3.8918573e-05
  %v6687 = vadd.f32 %v6686, 0.001143296
  %v6688 = vmul.f32 %v6674, %v6687
  %v6689 = vadd.f32 %v6688, 0.014752088
  %v6690 = vmul.f32 %v6674, %v6689
  %v6691 = vadd.f32 %v6690, 0.112945676
  %v6692 = vmul.f32 %v6674, %v6691
  %v6693 = vadd.f32 %v6692, 0.4994258
  %v6694 = vmul.f32 %v6674, %v6693
  %v6695 = vadd.f32 %v6694, 1.0
  %v6696 = vrcp.pop %v6695
  %v6697 = vmul.f32 %v6695, %v6696
  %v6698 = vsub.f32 1.0, %v6697
  %v6699 = vmul.f32 %v6696, %v6698
  %v6700 = vadd.f32 %v6696, %v6699
  %vm6701 = vweird.f32 %v6695
  %vm6702 = vweird.f32 %v6696
  %vm6703 = vmor %vm6701, %vm6702
  %v6704 = vsel %vm6703, %v6696, %v6700
  %v6705 = vand.u32 2147483647, %v6695
  %vm6706 = vcmp.eq.f32.partialorder %v6705, 8.507059e+37
  %v6707 = vand.u32 %v6695, 2147483648
  %v6708 = vor.u32 1.1754944e-38, %v6707
  %v6709 = vsel %vm6706, %v6708, %v6704
  %v6710 = vmul.f32 %v6685, %v6709
  %v6711 = vmin.f32 %v6710, 1.0
  %v6712 = vmax.f32 %v6711, -1.0
  %v6713 = vmul.f32 %v6580, %v6580
  %v6714 = vmin.f32 16.0, %v6713
  %v6715 = vmul.f32 %v6714, 2.1237322e-06
  %v6716 = vadd.f32 %v6715, 0.00028619796
  %v6717 = vmul.f32 %v6714, %v6716
  %v6718 = vadd.f32 %v6717, 0.0036580483
  %v6719 = vmul.f32 %v6714, %v6718
  %v6720 = vadd.f32 %v6719, 0.05243302
  %v6721 = vmul.f32 %v6714, %v6720
  %v6722 = vadd.f32 %v6721, 0.18741608
  %v6723 = vmul.f32 %v6714, %v6722
  %v6724 = vadd.f32 %v6723, 1.1283791
  %v6725 = vmul.f32 %v6580, %v6724
  %v6726 = vmul.f32 %v6714, 3.8918573e-05
  %v6727 = vadd.f32 %v6726, 0.001143296
  %v6728 = vmul.f32 %v6714, %v6727
  %v6729 = vadd.f32 %v6728, 0.014752088
  %v6730 = vmul.f32 %v6714, %v6729
  %v6731 = vadd.f32 %v6730, 0.112945676
  %v6732 = vmul.f32 %v6714, %v6731
  %v6733 = vadd.f32 %v6732, 0.4994258
  %v6734 = vmul.f32 %v6714, %v6733
  %v6735 = vadd.f32 %v6734, 1.0
  %v6736 = vrcp.pop %v6735
  %v6737 = vmul.f32 %v6735, %v6736
  %v6738 = vsub.f32 1.0, %v6737
  %v6739 = vmul.f32 %v6736, %v6738
  %v6740 = vadd.f32 %v6736, %v6739
  %vm6741 = vweird.f32 %v6735
  %vm6742 = vweird.f32 %v6736
  %vm6743 = vmor %vm6741, %vm6742
  %v6744 = vsel %vm6743, %v6736, %v6740
  %v6745 = vand.u32 2147483647, %v6735
  %vm6746 = vcmp.eq.f32.partialorder %v6745, 8.507059e+37
  %v6747 = vand.u32 %v6735, 2147483648
  %v6748 = vor.u32 1.1754944e-38, %v6747
  %v6749 = vsel %vm6746, %v6748, %v6744
  %v6750 = vmul.f32 %v6725, %v6749
  %v6751 = vmin.f32 %v6750, 1.0
  %v6752 = vmax.f32 %v6751, -1.0
  %v6753 = vmul.f32 %v6581, %v6581
  %v6754 = vmin.f32 16.0, %v6753
  %v6755 = vmul.f32 %v6754, 2.1237322e-06
  %v6756 = vadd.f32 %v6755, 0.00028619796
  %v6757 = vmul.f32 %v6754, %v6756
  %v6758 = vadd.f32 %v6757, 0.0036580483
  %v6759 = vmul.f32 %v6754, %v6758
  %v6760 = vadd.f32 %v6759, 0.05243302
  %v6761 = vmul.f32 %v6754, %v6760
  %v6762 = vadd.f32 %v6761, 0.18741608
  %v6763 = vmul.f32 %v6754, %v6762
  %v6764 = vadd.f32 %v6763, 1.1283791
  %v6765 = vmul.f32 %v6581, %v6764
  %v6766 = vmul.f32 %v6754, 3.8918573e-05
  %v6767 = vadd.f32 %v6766, 0.001143296
  %v6768 = vmul.f32 %v6754, %v6767
  %v6769 = vadd.f32 %v6768, 0.014752088
  %v6770 = vmul.f32 %v6754, %v6769
  %v6771 = vadd.f32 %v6770, 0.112945676
  %v6772 = vmul.f32 %v6754, %v6771
  %v6773 = vadd.f32 %v6772, 0.4994258
  %v6774 = vmul.f32 %v6754, %v6773
  %v6775 = vadd.f32 %v6774, 1.0
  %v6776 = vrcp.pop %v6775
  %v6777 = vmul.f32 %v6775, %v6776
  %v6778 = vsub.f32 1.0, %v6777
  %v6779 = vmul.f32 %v6776, %v6778
  %v6780 = vadd.f32 %v6776, %v6779
  %vm6781 = vweird.f32 %v6775
  %vm6782 = vweird.f32 %v6776
  %vm6783 = vmor %vm6781, %vm6782
  %v6784 = vsel %vm6783, %v6776, %v6780
  %v6785 = vand.u32 2147483647, %v6775
  %vm6786 = vcmp.eq.f32.partialorder %v6785, 8.507059e+37
  %v6787 = vand.u32 %v6775, 2147483648
  %v6788 = vor.u32 1.1754944e-38, %v6787
  %v6789 = vsel %vm6786, %v6788, %v6784
  %v6790 = vmul.f32 %v6765, %v6789
  %v6791 = vmin.f32 %v6790, 1.0
  %v6792 = vmax.f32 %v6791, -1.0
  %v6793 = vmul.f32 %v6582, %v6582
  %v6794 = vmin.f32 16.0, %v6793
  %v6795 = vmul.f32 %v6794, 2.1237322e-06
  %v6796 = vadd.f32 %v6795, 0.00028619796
  %v6797 = vmul.f32 %v6794, %v6796
  %v6798 = vadd.f32 %v6797, 0.0036580483
  %v6799 = vmul.f32 %v6794, %v6798
  %v6800 = vadd.f32 %v6799, 0.05243302
  %v6801 = vmul.f32 %v6794, %v6800
  %v6802 = vadd.f32 %v6801, 0.18741608
  %v6803 = vmul.f32 %v6794, %v6802
  %v6804 = vadd.f32 %v6803, 1.1283791
  %v6805 = vmul.f32 %v6582, %v6804
  %v6806 = vmul.f32 %v6794, 3.8918573e-05
  %v6807 = vadd.f32 %v6806, 0.001143296
  %v6808 = vmul.f32 %v6794, %v6807
  %v6809 = vadd.f32 %v6808, 0.014752088
  %v6810 = vmul.f32 %v6794, %v6809
  %v6811 = vadd.f32 %v6810, 0.112945676
  %v6812 = vmul.f32 %v6794, %v6811
  %v6813 = vadd.f32 %v6812, 0.4994258
  %v6814 = vmul.f32 %v6794, %v6813
  %v6815 = vadd.f32 %v6814, 1.0
  %v6816 = vrcp.pop %v6815
  %v6817 = vmul.f32 %v6815, %v6816
  %v6818 = vsub.f32 1.0, %v6817
  %v6819 = vmul.f32 %v6816, %v6818
  %v6820 = vadd.f32 %v6816, %v6819
  %vm6821 = vweird.f32 %v6815
  %vm6822 = vweird.f32 %v6816
  %vm6823 = vmor %vm6821, %vm6822
  %v6824 = vsel %vm6823, %v6816, %v6820
  %v6825 = vand.u32 2147483647, %v6815
  %vm6826 = vcmp.eq.f32.partialorder %v6825, 8.507059e+37
  %v6827 = vand.u32 %v6815, 2147483648
  %v6828 = vor.u32 1.1754944e-38, %v6827
  %v6829 = vsel %vm6826, %v6828, %v6824
  %v6830 = vmul.f32 %v6805, %v6829
  %v6831 = vmin.f32 %v6830, 1.0
  %v6832 = vmax.f32 %v6831, -1.0
  %v6833 = vmul.f32 %v6583, %v6583
  %v6834 = vmin.f32 16.0, %v6833
  %v6835 = vmul.f32 %v6834, 2.1237322e-06
  %v6836 = vadd.f32 %v6835, 0.00028619796
  %v6837 = vmul.f32 %v6834, %v6836
  %v6838 = vadd.f32 %v6837, 0.0036580483
  %v6839 = vmul.f32 %v6834, %v6838
  %v6840 = vadd.f32 %v6839, 0.05243302
  %v6841 = vmul.f32 %v6834, %v6840
  %v6842 = vadd.f32 %v6841, 0.18741608
  %v6843 = vmul.f32 %v6834, %v6842
  %v6844 = vadd.f32 %v6843, 1.1283791
  %v6845 = vmul.f32 %v6583, %v6844
  %v6846 = vmul.f32 %v6834, 3.8918573e-05
  %v6847 = vadd.f32 %v6846, 0.001143296
  %v6848 = vmul.f32 %v6834, %v6847
  %v6849 = vadd.f32 %v6848, 0.014752088
  %v6850 = vmul.f32 %v6834, %v6849
  %v6851 = vadd.f32 %v6850, 0.112945676
  %v6852 = vmul.f32 %v6834, %v6851
  %v6853 = vadd.f32 %v6852, 0.4994258
  %v6854 = vmul.f32 %v6834, %v6853
  %v6855 = vadd.f32 %v6854, 1.0
  %v6856 = vrcp.pop %v6855
  %v6857 = vmul.f32 %v6855, %v6856
  %v6858 = vsub.f32 1.0, %v6857
  %v6859 = vmul.f32 %v6856, %v6858
  %v6860 = vadd.f32 %v6856, %v6859
  %vm6861 = vweird.f32 %v6855
  %vm6862 = vweird.f32 %v6856
  %vm6863 = vmor %vm6861, %vm6862
  %v6864 = vsel %vm6863, %v6856, %v6860
  %v6865 = vand.u32 2147483647, %v6855
  %vm6866 = vcmp.eq.f32.partialorder %v6865, 8.507059e+37
  %v6867 = vand.u32 %v6855, 2147483648
  %v6868 = vor.u32 1.1754944e-38, %v6867
  %v6869 = vsel %vm6866, %v6868, %v6864
  %v6870 = vmul.f32 %v6845, %v6869
  %v6871 = vmin.f32 %v6870, 1.0
  %v6872 = vmax.f32 %v6871, -1.0
  %v6873 = vmul.f32 %v6584, %v6584
  %v6874 = vmin.f32 16.0, %v6873
  %v6875 = vmul.f32 %v6874, 2.1237322e-06
  %v6876 = vadd.f32 %v6875, 0.00028619796
  %v6877 = vmul.f32 %v6874, %v6876
  %v6878 = vadd.f32 %v6877, 0.0036580483
  %v6879 = vmul.f32 %v6874, %v6878
  %v6880 = vadd.f32 %v6879, 0.05243302
  %v6881 = vmul.f32 %v6874, %v6880
  %v6882 = vadd.f32 %v6881, 0.18741608
  %v6883 = vmul.f32 %v6874, %v6882
  %v6884 = vadd.f32 %v6883, 1.1283791
  %v6885 = vmul.f32 %v6584, %v6884
  %v6886 = vmul.f32 %v6874, 3.8918573e-05
  %v6887 = vadd.f32 %v6886, 0.001143296
  %v6888 = vmul.f32 %v6874, %v6887
  %v6889 = vadd.f32 %v6888, 0.014752088
  %v6890 = vmul.f32 %v6874, %v6889
  %v6891 = vadd.f32 %v6890, 0.112945676
  %v6892 = vmul.f32 %v6874, %v6891
  %v6893 = vadd.f32 %v6892, 0.4994258
  %v6894 = vmul.f32 %v6874, %v6893
  %v6895 = vadd.f32 %v6894, 1.0
  %v6896 = vrcp.pop %v6895
  %v6897 = vmul.f32 %v6895, %v6896
  %v6898 = vsub.f32 1.0, %v6897
  %v6899 = vmul.f32 %v6896, %v6898
  %v6900 = vadd.f32 %v6896, %v6899
  %vm6901 = vweird.f32 %v6895
  %vm6902 = vweird.f32 %v6896
  %vm6903 = vmor %vm6901, %vm6902
  %v6904 = vsel %vm6903, %v6896, %v6900
  %v6905 = vand.u32 2147483647, %v6895
  %vm6906 = vcmp.eq.f32.partialorder %v6905, 8.507059e+37
  %v6907 = vand.u32 %v6895, 2147483648
  %v6908 = vor.u32 1.1754944e-38, %v6907
  %v6909 = vsel %vm6906, %v6908, %v6904
  %v6910 = vmul.f32 %v6885, %v6909
  %v6911 = vmin.f32 %v6910, 1.0
  %v6912 = vmax.f32 %v6911, -1.0
  %v6913 = vmul.f32 %v6585, %v6585
  %v6914 = vmin.f32 16.0, %v6913
  %v6915 = vmul.f32 %v6914, 2.1237322e-06
  %v6916 = vadd.f32 %v6915, 0.00028619796
  %v6917 = vmul.f32 %v6914, %v6916
  %v6918 = vadd.f32 %v6917, 0.0036580483
  %v6919 = vmul.f32 %v6914, %v6918
  %v6920 = vadd.f32 %v6919, 0.05243302
  %v6921 = vmul.f32 %v6914, %v6920
  %v6922 = vadd.f32 %v6921, 0.18741608
  %v6923 = vmul.f32 %v6914, %v6922
  %v6924 = vadd.f32 %v6923, 1.1283791
  %v6925 = vmul.f32 %v6585, %v6924
  %v6926 = vmul.f32 %v6914, 3.8918573e-05
  %v6927 = vadd.f32 %v6926, 0.001143296
  %v6928 = vmul.f32 %v6914, %v6927
  %v6929 = vadd.f32 %v6928, 0.014752088
  %v6930 = vmul.f32 %v6914, %v6929
  %v6931 = vadd.f32 %v6930, 0.112945676
  %v6932 = vmul.f32 %v6914, %v6931
  %v6933 = vadd.f32 %v6932, 0.4994258
  %v6934 = vmul.f32 %v6914, %v6933
  %v6935 = vadd.f32 %v6934, 1.0
  %v6936 = vrcp.pop %v6935
  %v6937 = vmul.f32 %v6935, %v6936
  %v6938 = vsub.f32 1.0, %v6937
  %v6939 = vmul.f32 %v6936, %v6938
  %v6940 = vadd.f32 %v6936, %v6939
  %vm6941 = vweird.f32 %v6935
  %vm6942 = vweird.f32 %v6936
  %vm6943 = vmor %vm6941, %vm6942
  %v6944 = vsel %vm6943, %v6936, %v6940
  %v6945 = vand.u32 2147483647, %v6935
  %vm6946 = vcmp.eq.f32.partialorder %v6945, 8.507059e+37
  %v6947 = vand.u32 %v6935, 2147483648
  %v6948 = vor.u32 1.1754944e-38, %v6947
  %v6949 = vsel %vm6946, %v6948, %v6944
  %v6950 = vmul.f32 %v6925, %v6949
  %v6951 = vmin.f32 %v6950, 1.0
  %v6952 = vmax.f32 %v6951, -1.0
  %v6953 = vmul.f32 %v6586, %v6586
  %v6954 = vmin.f32 16.0, %v6953
  %v6955 = vmul.f32 %v6954, 2.1237322e-06
  %v6956 = vadd.f32 %v6955, 0.00028619796
  %v6957 = vmul.f32 %v6954, %v6956
  %v6958 = vadd.f32 %v6957, 0.0036580483
  %v6959 = vmul.f32 %v6954, %v6958
  %v6960 = vadd.f32 %v6959, 0.05243302
  %v6961 = vmul.f32 %v6954, %v6960
  %v6962 = vadd.f32 %v6961, 0.18741608
  %v6963 = vmul.f32 %v6954, %v6962
  %v6964 = vadd.f32 %v6963, 1.1283791
  %v6965 = vmul.f32 %v6586, %v6964
  %v6966 = vmul.f32 %v6954, 3.8918573e-05
  %v6967 = vadd.f32 %v6966, 0.001143296
  %v6968 = vmul.f32 %v6954, %v6967
  %v6969 = vadd.f32 %v6968, 0.014752088
  %v6970 = vmul.f32 %v6954, %v6969
  %v6971 = vadd.f32 %v6970, 0.112945676
  %v6972 = vmul.f32 %v6954, %v6971
  %v6973 = vadd.f32 %v6972, 0.4994258
  %v6974 = vmul.f32 %v6954, %v6973
  %v6975 = vadd.f32 %v6974, 1.0
  %v6976 = vrcp.pop %v6975
  %v6977 = vmul.f32 %v6975, %v6976
  %v6978 = vsub.f32 1.0, %v6977
  %v6979 = vmul.f32 %v6976, %v6978
  %v6980 = vadd.f32 %v6976, %v6979
  %vm6981 = vweird.f32 %v6975
  %vm6982 = vweird.f32 %v6976
  %vm6983 = vmor %vm6981, %vm6982
  %v6984 = vsel %vm6983, %v6976, %v6980
  %v6985 = vand.u32 2147483647, %v6975
  %vm6986 = vcmp.eq.f32.partialorder %v6985, 8.507059e+37
  %v6987 = vand.u32 %v6975, 2147483648
  %v6988 = vor.u32 1.1754944e-38, %v6987
  %v6989 = vsel %vm6986, %v6988, %v6984
  %v6990 = vmul.f32 %v6965, %v6989
  %v6991 = vmin.f32 %v6990, 1.0
  %v6992 = vmax.f32 %v6991, -1.0
  %v6993 = vmul.f32 %v6587, %v6587
  %v6994 = vmin.f32 16.0, %v6993
  %v6995 = vmul.f32 %v6994, 2.1237322e-06
  %v6996 = vadd.f32 %v6995, 0.00028619796
  %v6997 = vmul.f32 %v6994, %v6996
  %v6998 = vadd.f32 %v6997, 0.0036580483
  %v6999 = vmul.f32 %v6994, %v6998
  %v7000 = vadd.f32 %v6999, 0.05243302
  %v7001 = vmul.f32 %v6994, %v7000
  %v7002 = vadd.f32 %v7001, 0.18741608
  %v7003 = vmul.f32 %v6994, %v7002
  %v7004 = vadd.f32 %v7003, 1.1283791
  %v7005 = vmul.f32 %v6587, %v7004
  %v7006 = vmul.f32 %v6994, 3.8918573e-05
  %v7007 = vadd.f32 %v7006, 0.001143296
  %v7008 = vmul.f32 %v6994, %v7007
  %v7009 = vadd.f32 %v7008, 0.014752088
  %v7010 = vmul.f32 %v6994, %v7009
  %v7011 = vadd.f32 %v7010, 0.112945676
  %v7012 = vmul.f32 %v6994, %v7011
  %v7013 = vadd.f32 %v7012, 0.4994258
  %v7014 = vmul.f32 %v6994, %v7013
  %v7015 = vadd.f32 %v7014, 1.0
  %v7016 = vrcp.pop %v7015
  %v7017 = vmul.f32 %v7015, %v7016
  %v7018 = vsub.f32 1.0, %v7017
  %v7019 = vmul.f32 %v7016, %v7018
  %v7020 = vadd.f32 %v7016, %v7019
  %vm7021 = vweird.f32 %v7015
  %vm7022 = vweird.f32 %v7016
  %vm7023 = vmor %vm7021, %vm7022
  %v7024 = vsel %vm7023, %v7016, %v7020
  %v7025 = vand.u32 2147483647, %v7015
  %vm7026 = vcmp.eq.f32.partialorder %v7025, 8.507059e+37
  %v7027 = vand.u32 %v7015, 2147483648
  %v7028 = vor.u32 1.1754944e-38, %v7027
  %v7029 = vsel %vm7026, %v7028, %v7024
  %v7030 = vmul.f32 %v7005, %v7029
  %v7031 = vmin.f32 %v7030, 1.0
  %v7032 = vmax.f32 %v7031, -1.0
  %v7033 = vmul.f32 %v6588, %v6588
  %v7034 = vmin.f32 16.0, %v7033
  %v7035 = vmul.f32 %v7034, 2.1237322e-06
  %v7036 = vadd.f32 %v7035, 0.00028619796
  %v7037 = vmul.f32 %v7034, %v7036
  %v7038 = vadd.f32 %v7037, 0.0036580483
  %v7039 = vmul.f32 %v7034, %v7038
  %v7040 = vadd.f32 %v7039, 0.05243302
  %v7041 = vmul.f32 %v7034, %v7040
  %v7042 = vadd.f32 %v7041, 0.18741608
  %v7043 = vmul.f32 %v7034, %v7042
  %v7044 = vadd.f32 %v7043, 1.1283791
  %v7045 = vmul.f32 %v6588, %v7044
  %v7046 = vmul.f32 %v7034, 3.8918573e-05
  %v7047 = vadd.f32 %v7046, 0.001143296
  %v7048 = vmul.f32 %v7034, %v7047
  %v7049 = vadd.f32 %v7048, 0.014752088
  %v7050 = vmul.f32 %v7034, %v7049
  %v7051 = vadd.f32 %v7050, 0.112945676
  %v7052 = vmul.f32 %v7034, %v7051
  %v7053 = vadd.f32 %v7052, 0.4994258
  %v7054 = vmul.f32 %v7034, %v7053
  %v7055 = vadd.f32 %v7054, 1.0
  %v7056 = vrcp.pop %v7055
  %v7057 = vmul.f32 %v7055, %v7056
  %v7058 = vsub.f32 1.0, %v7057
  %v7059 = vmul.f32 %v7056, %v7058
  %v7060 = vadd.f32 %v7056, %v7059
  %vm7061 = vweird.f32 %v7055
  %vm7062 = vweird.f32 %v7056
  %vm7063 = vmor %vm7061, %vm7062
  %v7064 = vsel %vm7063, %v7056, %v7060
  %v7065 = vand.u32 2147483647, %v7055
  %vm7066 = vcmp.eq.f32.partialorder %v7065, 8.507059e+37
  %v7067 = vand.u32 %v7055, 2147483648
  %v7068 = vor.u32 1.1754944e-38, %v7067
  %v7069 = vsel %vm7066, %v7068, %v7064
  %v7070 = vmul.f32 %v7045, %v7069
  %v7071 = vmin.f32 %v7070, 1.0
  %v7072 = vmax.f32 %v7071, -1.0
  %v7073 = vmul.f32 %v6589, %v6589
  %v7074 = vmin.f32 16.0, %v7073
  %v7075 = vmul.f32 %v7074, 2.1237322e-06
  %v7076 = vadd.f32 %v7075, 0.00028619796
  %v7077 = vmul.f32 %v7074, %v7076
  %v7078 = vadd.f32 %v7077, 0.0036580483
  %v7079 = vmul.f32 %v7074, %v7078
  %v7080 = vadd.f32 %v7079, 0.05243302
  %v7081 = vmul.f32 %v7074, %v7080
  %v7082 = vadd.f32 %v7081, 0.18741608
  %v7083 = vmul.f32 %v7074, %v7082
  %v7084 = vadd.f32 %v7083, 1.1283791
  %v7085 = vmul.f32 %v6589, %v7084
  %v7086 = vmul.f32 %v7074, 3.8918573e-05
  %v7087 = vadd.f32 %v7086, 0.001143296
  %v7088 = vmul.f32 %v7074, %v7087
  %v7089 = vadd.f32 %v7088, 0.014752088
  %v7090 = vmul.f32 %v7074, %v7089
  %v7091 = vadd.f32 %v7090, 0.112945676
  %v7092 = vmul.f32 %v7074, %v7091
  %v7093 = vadd.f32 %v7092, 0.4994258
  %v7094 = vmul.f32 %v7074, %v7093
  %v7095 = vadd.f32 %v7094, 1.0
  %v7096 = vrcp.pop %v7095
  %v7097 = vmul.f32 %v7095, %v7096
  %v7098 = vsub.f32 1.0, %v7097
  %v7099 = vmul.f32 %v7096, %v7098
  %v7100 = vadd.f32 %v7096, %v7099
  %vm7101 = vweird.f32 %v7095
  %vm7102 = vweird.f32 %v7096
  %vm7103 = vmor %vm7101, %vm7102
  %v7104 = vsel %vm7103, %v7096, %v7100
  %v7105 = vand.u32 2147483647, %v7095
  %vm7106 = vcmp.eq.f32.partialorder %v7105, 8.507059e+37
  %v7107 = vand.u32 %v7095, 2147483648
  %v7108 = vor.u32 1.1754944e-38, %v7107
  %v7109 = vsel %vm7106, %v7108, %v7104
  %v7110 = vmul.f32 %v7085, %v7109
  %v7111 = vmin.f32 %v7110, 1.0
  %v7112 = vmax.f32 %v7111, -1.0
  %v7113 = vmul.f32 %v6590, %v6590
  %v7114 = vmin.f32 16.0, %v7113
  %v7115 = vmul.f32 %v7114, 2.1237322e-06
  %v7116 = vadd.f32 %v7115, 0.00028619796
  %v7117 = vmul.f32 %v7114, %v7116
  %v7118 = vadd.f32 %v7117, 0.0036580483
  %v7119 = vmul.f32 %v7114, %v7118
  %v7120 = vadd.f32 %v7119, 0.05243302
  %v7121 = vmul.f32 %v7114, %v7120
  %v7122 = vadd.f32 %v7121, 0.18741608
  %v7123 = vmul.f32 %v7114, %v7122
  %v7124 = vadd.f32 %v7123, 1.1283791
  %v7125 = vmul.f32 %v6590, %v7124
  %v7126 = vmul.f32 %v7114, 3.8918573e-05
  %v7127 = vadd.f32 %v7126, 0.001143296
  %v7128 = vmul.f32 %v7114, %v7127
  %v7129 = vadd.f32 %v7128, 0.014752088
  %v7130 = vmul.f32 %v7114, %v7129
  %v7131 = vadd.f32 %v7130, 0.112945676
  %v7132 = vmul.f32 %v7114, %v7131
  %v7133 = vadd.f32 %v7132, 0.4994258
  %v7134 = vmul.f32 %v7114, %v7133
  %v7135 = vadd.f32 %v7134, 1.0
  %v7136 = vrcp.pop %v7135
  %v7137 = vmul.f32 %v7135, %v7136
  %v7138 = vsub.f32 1.0, %v7137
  %v7139 = vmul.f32 %v7136, %v7138
  %v7140 = vadd.f32 %v7136, %v7139
  %vm7141 = vweird.f32 %v7135
  %vm7142 = vweird.f32 %v7136
  %vm7143 = vmor %vm7141, %vm7142
  %v7144 = vsel %vm7143, %v7136, %v7140
  %v7145 = vand.u32 2147483647, %v7135
  %vm7146 = vcmp.eq.f32.partialorder %v7145, 8.507059e+37
  %v7147 = vand.u32 %v7135, 2147483648
  %v7148 = vor.u32 1.1754944e-38, %v7147
  %v7149 = vsel %vm7146, %v7148, %v7144
  %v7150 = vmul.f32 %v7125, %v7149
  %v7151 = vmin.f32 %v7150, 1.0
  %v7152 = vmax.f32 %v7151, -1.0
  %v7153 = vmul.f32 %v6591, %v6591
  %v7154 = vmin.f32 16.0, %v7153
  %v7155 = vmul.f32 %v7154, 2.1237322e-06
  %v7156 = vadd.f32 %v7155, 0.00028619796
  %v7157 = vmul.f32 %v7154, %v7156
  %v7158 = vadd.f32 %v7157, 0.0036580483
  %v7159 = vmul.f32 %v7154, %v7158
  %v7160 = vadd.f32 %v7159, 0.05243302
  %v7161 = vmul.f32 %v7154, %v7160
  %v7162 = vadd.f32 %v7161, 0.18741608
  %v7163 = vmul.f32 %v7154, %v7162
  %v7164 = vadd.f32 %v7163, 1.1283791
  %v7165 = vmul.f32 %v6591, %v7164
  %v7166 = vmul.f32 %v7154, 3.8918573e-05
  %v7167 = vadd.f32 %v7166, 0.001143296
  %v7168 = vmul.f32 %v7154, %v7167
  %v7169 = vadd.f32 %v7168, 0.014752088
  %v7170 = vmul.f32 %v7154, %v7169
  %v7171 = vadd.f32 %v7170, 0.112945676
  %v7172 = vmul.f32 %v7154, %v7171
  %v7173 = vadd.f32 %v7172, 0.4994258
  %v7174 = vmul.f32 %v7154, %v7173
  %v7175 = vadd.f32 %v7174, 1.0
  %v7176 = vrcp.pop %v7175
  %v7177 = vmul.f32 %v7175, %v7176
  %v7178 = vsub.f32 1.0, %v7177
  %v7179 = vmul.f32 %v7176, %v7178
  %v7180 = vadd.f32 %v7176, %v7179
  %vm7181 = vweird.f32 %v7175
  %vm7182 = vweird.f32 %v7176
  %vm7183 = vmor %vm7181, %vm7182
  %v7184 = vsel %vm7183, %v7176, %v7180
  %v7185 = vand.u32 2147483647, %v7175
  %vm7186 = vcmp.eq.f32.partialorder %v7185, 8.507059e+37
  %v7187 = vand.u32 %v7175, 2147483648
  %v7188 = vor.u32 1.1754944e-38, %v7187
  %v7189 = vsel %vm7186, %v7188, %v7184
  %v7190 = vmul.f32 %v7165, %v7189
  %v7191 = vmin.f32 %v7190, 1.0
  %v7192 = vmax.f32 %v7191, -1.0
  %v7193 = vmul.f32 %v6592, %v6592
  %v7194 = vmin.f32 16.0, %v7193
  %v7195 = vmul.f32 %v7194, 2.1237322e-06
  %v7196 = vadd.f32 %v7195, 0.00028619796
  %v7197 = vmul.f32 %v7194, %v7196
  %v7198 = vadd.f32 %v7197, 0.0036580483
  %v7199 = vmul.f32 %v7194, %v7198
  %v7200 = vadd.f32 %v7199, 0.05243302
  %v7201 = vmul.f32 %v7194, %v7200
  %v7202 = vadd.f32 %v7201, 0.18741608
  %v7203 = vmul.f32 %v7194, %v7202
  %v7204 = vadd.f32 %v7203, 1.1283791
  %v7205 = vmul.f32 %v6592, %v7204
  %v7206 = vmul.f32 %v7194, 3.8918573e-05
  %v7207 = vadd.f32 %v7206, 0.001143296
  %v7208 = vmul.f32 %v7194, %v7207
  %v7209 = vadd.f32 %v7208, 0.014752088
  %v7210 = vmul.f32 %v7194, %v7209
  %v7211 = vadd.f32 %v7210, 0.112945676
  %v7212 = vmul.f32 %v7194, %v7211
  %v7213 = vadd.f32 %v7212, 0.4994258
  %v7214 = vmul.f32 %v7194, %v7213
  %v7215 = vadd.f32 %v7214, 1.0
  %v7216 = vrcp.pop %v7215
  %v7217 = vmul.f32 %v7215, %v7216
  %v7218 = vsub.f32 1.0, %v7217
  %v7219 = vmul.f32 %v7216, %v7218
  %v7220 = vadd.f32 %v7216, %v7219
  %vm7221 = vweird.f32 %v7215
  %vm7222 = vweird.f32 %v7216
  %vm7223 = vmor %vm7221, %vm7222
  %v7224 = vsel %vm7223, %v7216, %v7220
  %v7225 = vand.u32 2147483647, %v7215
  %vm7226 = vcmp.eq.f32.partialorder %v7225, 8.507059e+37
  %v7227 = vand.u32 %v7215, 2147483648
  %v7228 = vor.u32 1.1754944e-38, %v7227
  %v7229 = vsel %vm7226, %v7228, %v7224
  %v7230 = vmul.f32 %v7205, %v7229
  %v7231 = vmin.f32 %v7230, 1.0
  %v7232 = vmax.f32 %v7231, -1.0
  %v7233 = vadd.f32 %v6632, 1.0
  %v7234 = vadd.f32 %v6672, 1.0
  %v7235 = vadd.f32 %v6712, 1.0
  %v7236 = vadd.f32 %v6752, 1.0
  %v7237 = vadd.f32 %v6792, 1.0
  %v7238 = vadd.f32 %v6832, 1.0
  %v7239 = vadd.f32 %v6872, 1.0
  %v7240 = vadd.f32 %v6912, 1.0
  %v7241 = vadd.f32 %v6952, 1.0
  %v7242 = vadd.f32 %v6992, 1.0
  %v7243 = vadd.f32 %v7032, 1.0
  %v7244 = vadd.f32 %v7072, 1.0
  %v7245 = vadd.f32 %v7112, 1.0
  %v7246 = vadd.f32 %v7152, 1.0
  %v7247 = vadd.f32 %v7192, 1.0
  %v7248 = vadd.f32 %v7232, 1.0
  %v7249 = vmul.f32 %v6561, %v7233
  %v7250 = vmul.f32 %v6562, %v7234
  %v7251 = vmul.f32 %v6563, %v7235
  %v7252 = vmul.f32 %v6564, %v7236
  %v7253 = vmul.f32 %v6565, %v7237
  %v7254 = vmul.f32 %v6566, %v7238
  %v7255 = vmul.f32 %v6567, %v7239
  %v7256 = vmul.f32 %v6568, %v7240
  %v7257 = vmul.f32 %v6569, %v7241
  %v7258 = vmul.f32 %v6570, %v7242
  %v7259 = vmul.f32 %v6571, %v7243
  %v7260 = vmul.f32 %v6572, %v7244
  %v7261 = vmul.f32 %v6573, %v7245
  %v7262 = vmul.f32 %v6574, %v7246
  %v7263 = vmul.f32 %v6575, %v7247
  %v7264 = vmul.f32 %v6576, %v7248
  %v7265 = vpack.c.bf16 %v7250, %v7249
  %v7266 = vpack.c.bf16 %v7252, %v7251
  %v7267 = vpack.c.bf16 %v7254, %v7253
  %v7268 = vpack.c.bf16 %v7256, %v7255
  %v7269 = vpack.c.bf16 %v7258, %v7257
  %v7270 = vpack.c.bf16 %v7260, %v7259
  %v7271 = vpack.c.bf16 %v7262, %v7261
  %v7272 = vpack.c.bf16 %v7264, %v7263
  %v7273 = vpack.c.bf16 %v3725, %v3724
  %v7274 = vpack.c.bf16 %v3727, %v3726
  %v7275 = vpack.c.bf16 %v3729, %v3728
  %v7276 = vpack.c.bf16 %v3731, %v3730
  %v7277 = vpack.c.bf16 %v3733, %v3732
  %v7278 = vpack.c.bf16 %v3735, %v3734
  %v7279 = vpack.c.bf16 %v3737, %v3736
  %v7280 = vpack.c.bf16 %v3739, %v3738
  %v7281 = vperm.slane %v3713, 5
  %7282 = vmatpush.bf16.msra.mxu0 %v7280
  %7283 = vmatpush.bf16.msra.mxu0 %v7279
  %7284 = vmatpush.bf16.msra.mxu0 %v7278
  %7285 = vmatpush.bf16.msra.mxu0 %v7277
  %7286 = vmatpush.bf16.msra.mxu0 %v7276
  %7287 = vmatpush.bf16.msra.mxu0 %v7275
  %7288 = vmatpush.bf16.msra.mxu0 %v7274
  %7289 = vmatpush.bf16.msra.mxu0 %v7273
  %7290 = vmatmul.bf16.gmra.mxu0 %v7265
  %v7291 = vpop.f32.mrf.mxu0
  %v7292 = vadd.f32 %v7281, %v7291
  %v7293 = vpop.f32.mrf.mxu0
  %v7294 = vadd.f32 %v7281, %v7293
  %7295 = vmatmul.bf16.gmra.mxu0 %v7266
  %v7296 = vpop.f32.mrf.mxu0
  %v7297 = vadd.f32 %v7281, %v7296
  %v7298 = vpop.f32.mrf.mxu0
  %v7299 = vadd.f32 %v7281, %v7298
  %7300 = vmatmul.bf16.gmra.mxu0 %v7267
  %v7301 = vpop.f32.mrf.mxu0
  %v7302 = vadd.f32 %v7281, %v7301
  %v7303 = vpop.f32.mrf.mxu0
  %v7304 = vadd.f32 %v7281, %v7303
  %7305 = vmatmul.bf16.gmra.mxu0 %v7268
  %v7306 = vpop.f32.mrf.mxu0
  %v7307 = vadd.f32 %v7281, %v7306
  %v7308 = vpop.f32.mrf.mxu0
  %v7309 = vadd.f32 %v7281, %v7308
  %7310 = vmatmul.bf16.gmra.mxu0 %v7269
  %v7311 = vpop.f32.mrf.mxu0
  %v7312 = vadd.f32 %v7281, %v7311
  %v7313 = vpop.f32.mrf.mxu0
  %v7314 = vadd.f32 %v7281, %v7313
  %7315 = vmatmul.bf16.gmra.mxu0 %v7270
  %v7316 = vpop.f32.mrf.mxu0
  %v7317 = vadd.f32 %v7281, %v7316
  %v7318 = vpop.f32.mrf.mxu0
  %v7319 = vadd.f32 %v7281, %v7318
  %7320 = vmatmul.bf16.gmra.mxu0 %v7271
  %v7321 = vpop.f32.mrf.mxu0
  %v7322 = vadd.f32 %v7281, %v7321
  %v7323 = vpop.f32.mrf.mxu0
  %v7324 = vadd.f32 %v7281, %v7323
  %7325 = vmatmul.bf16.gmra.mxu0 %v7272
  %v7326 = vpop.f32.mrf.mxu0
  %v7327 = vadd.f32 %v7281, %v7326
  %v7328 = vpop.f32.mrf.mxu0
  %v7329 = vadd.f32 %v7281, %v7328
  %7330 = vdwg.mxu0
  %v7331 = vadd.f32 %v6075, %v7292
  %v7332 = vadd.f32 %v6076, %v7294
  %v7333 = vadd.f32 %v6077, %v7297
  %v7334 = vadd.f32 %v6078, %v7299
  %v7335 = vadd.f32 %v6079, %v7302
  %v7336 = vadd.f32 %v6080, %v7304
  %v7337 = vadd.f32 %v6081, %v7307
  %v7338 = vadd.f32 %v6082, %v7309
  %v7339 = vadd.f32 %v6083, %v7312
  %v7340 = vadd.f32 %v6084, %v7314
  %v7341 = vadd.f32 %v6085, %v7317
  %v7342 = vadd.f32 %v6086, %v7319
  %v7343 = vadd.f32 %v6087, %v7322
  %v7344 = vadd.f32 %v6088, %v7324
  %v7345 = vadd.f32 %v6089, %v7327
  %v7346 = vadd.f32 %v6090, %v7329
  %7347 = vst.msk [vmem:[%s5] sm:$0xff] %vm78, %v7331
  %7348 = vst.msk [vmem:[%s5 + $0x8] sm:$0xff] %vm78, %v7332
  %7349 = vst.msk [vmem:[%s5 + $0x10] sm:$0xff] %vm78, %v7333
  %7350 = vst.msk [vmem:[%s5 + $0x18] sm:$0xff] %vm78, %v7334
  %7351 = vst.msk [vmem:[%s5 + $0x20] sm:$0xff] %vm78, %v7335
  %7352 = vst.msk [vmem:[%s5 + $0x28] sm:$0xff] %vm78, %v7336
  %7353 = vst.msk [vmem:[%s5 + $0x30] sm:$0xff] %vm78, %v7337
  %7354 = vst.msk [vmem:[%s5 + $0x38] sm:$0xff] %vm78, %v7338
  %7355 = vst.msk [vmem:[%s5 + $0x40] sm:$0xff] %vm78, %v7339
  %7356 = vst.msk [vmem:[%s5 + $0x48] sm:$0xff] %vm78, %v7340
  %7357 = vst.msk [vmem:[%s5 + $0x50] sm:$0xff] %vm78, %v7341
  %7358 = vst.msk [vmem:[%s5 + $0x58] sm:$0xff] %vm78, %v7342
  %7359 = vst.msk [vmem:[%s5 + $0x60] sm:$0xff] %vm78, %v7343
  %7360 = vst.msk [vmem:[%s5 + $0x68] sm:$0xff] %vm78, %v7344
  %7361 = vst.msk [vmem:[%s5 + $0x70] sm:$0xff] %vm78, %v7345
  %7362 = vst.msk [vmem:[%s5 + $0x78] sm:$0xff] %vm78, %v7346
  // Predicated region
  $region22: #{tpu_custom_call.1} parent=0 // pred_check
    _
  $region23: #{tpu_custom_call.1} parent=0 // pred_check_branch
    %7364 = sbr.rel (0) target = $region25
  $region24: #{tpu_custom_call.1} parent=0 // pred_region
    _
  $region25: #{tpu_custom_call.1} parent=0 // pred_fallthru
    _
  // Predicated region
  $region26: #{tpu_custom_call.1} parent=0 // pred_check
    _
  $region27: #{tpu_custom_call.1} parent=0 // pred_check_branch
    %7366 = sbr.rel (0) target = $region29
  $region28: #{tpu_custom_call.1} parent=0 // pred_region
    _
  $region29: #{tpu_custom_call.1} parent=0 // pred_fallthru
    _

</llo_original>
